<compile_context>
chip_gen: v5e
topology: v5e:2x2
jax: 0.10.0
libtpu: 0.0.40
codegen_flags: <defaults>
</compile_context>

<pallas_src>
import functools
import math
from collections import namedtuple

import jax
import jax.numpy as jnp
from jax import lax
from jax.experimental import pallas as pl
from jax.experimental.pallas import tpu as pltpu

EPS = 1e-5      # nn.LayerNorm default eps
NEG = -1e9      # additive-mask "minus infinity"

Config = namedtuple("Config", ["hidden_dim", "n_heads", "n_layers", "pff_dim",
                               "vocab_size", "dropout"])


# ----------------------------------------------------------------------------
# In-kernel helpers
# ----------------------------------------------------------------------------
def _layernorm(x, w, b):
    # x: (L, D); w, b: (1, D)
    mu = jnp.mean(x, axis=-1, keepdims=True)
    var = jnp.mean((x - mu) ** 2, axis=-1, keepdims=True)
    return (x - mu) * lax.rsqrt(var + EPS) * w + b


def _mha(xn, kv, add_mask, wq_t, bq, wk_t, bk, wv_t, bv, wo_t, bo, n_heads):
    """nn.MultiheadAttention(xn, kv, kv) with additive mask, all heads batched.

    xn: (Lq, D)   kv: (Lk, D)   add_mask: (Lq, Lk) or (1, Lk) additive float.
    Weights are pre-transposed: q = xn @ wq_t + bq, etc.
    """
    Lq, D = xn.shape
    Lk = kv.shape[0]
    hd = D // n_heads

    q = jnp.dot(xn, wq_t, preferred_element_type=jnp.float32) + bq   # (Lq, D)
    k = jnp.dot(kv, wk_t, preferred_element_type=jnp.float32) + bk   # (Lk, D)
    v = jnp.dot(kv, wv_t, preferred_element_type=jnp.float32) + bv   # (Lk, D)

    # head-major layout (H, L, hd); one batched contraction over all heads.
    qh = q.reshape(Lq, n_heads, hd).transpose(1, 0, 2)
    kh = k.reshape(Lk, n_heads, hd).transpose(1, 0, 2)
    vh = v.reshape(Lk, n_heads, hd).transpose(1, 0, 2)

    s = lax.dot_general(qh, kh, (((2,), (2,)), ((0,), (0,))),
                        preferred_element_type=jnp.float32)          # (H, Lq, Lk)
    s = s * (1.0 / math.sqrt(hd)) + add_mask[None]
    s = s - jnp.max(s, axis=-1, keepdims=True)
    p = jnp.exp(s)
    p = p * pl.reciprocal(jnp.sum(p, axis=-1, keepdims=True), approx=True)

    ctx = lax.dot_general(p, vh, (((2,), (1,)), ((0,), (0,))),
                          preferred_element_type=jnp.float32)        # (H, Lq, hd)
    ctx = ctx.transpose(1, 0, 2).reshape(Lq, D)
    return jnp.dot(ctx, wo_t, preferred_element_type=jnp.float32) + bo


# ----------------------------------------------------------------------------
# Fused whole-decoder kernel (one grid step = one batch element)
# ----------------------------------------------------------------------------
def _decoder_kernel(*refs, n_heads, n_layers, fusion, vocab, emb_scale):
    if fusion:
        (ids_ref, emem_ref, dmask_ref, emask_ref, hmem_ref, hmask_ref,
         table_ref, lnw_ref, lnb_ref,
         wq_ref, wk_ref, wv_ref, wo_ref, bq_ref, bk_ref, bv_ref, bo_ref,
         w1_ref, b1_ref, w2_ref, b2_ref, fw_ref, fb_ref, o_ref) = refs
    else:
        (ids_ref, emem_ref, dmask_ref, emask_ref,
         table_ref, lnw_ref, lnb_ref,
         wq_ref, wk_ref, wv_ref, wo_ref, bq_ref, bk_ref, bv_ref, bo_ref,
         w1_ref, b1_ref, w2_ref, b2_ref, fw_ref, fb_ref, o_ref) = refs

    # ---- embeddings: tok_emb[ids] * sqrt(D)  (exact one-hot MXU gather) ----
    # TODO(synk): for production vocab sizes the table will not fit VMEM;
    # switch to a row-DMA gather (memory_space=pl.ANY + make_async_copy) or do
    # the lookup in XLA outside the kernel.
    ids = ids_ref[0]                                              # (L, 1) int32
    L = ids.shape[0]
    iota = lax.broadcasted_iota(jnp.int32, (L, vocab), 1)         # (L, V)
    onehot = (iota == ids).astype(jnp.float32)
    x = jnp.dot(onehot, table_ref[...],
                preferred_element_type=jnp.float32) * emb_scale   # (L, D)

    e_mem = emem_ref[0].astype(jnp.float32)                       # (Se, D)
    d_mask = dmask_ref[...]                                       # (L, L) additive
    e_mask = emask_ref[0]                                         # (1, Se) additive
    if fusion:
        h_mem = hmem_ref[0].astype(jnp.float32)                   # (Sh, D)
        h_mask = hmask_ref[0]                                     # (1, Sh) additive

    # ---- n_layers DecoderLayers, x stays in VMEM/vregs the whole time ----
    for l in range(n_layers):
        # sublayer 0: masked self-attention (q = k = v = LN(x))
        xn = _layernorm(x, lnw_ref[l, 0], lnb_ref[l, 0])
        x = x + _mha(xn, xn, d_mask,
                     wq_ref[l, 0], bq_ref[l, 0], wk_ref[l, 0], bk_ref[l, 0],
                     wv_ref[l, 0], bv_ref[l, 0], wo_ref[l, 0], bo_ref[l, 0],
                     n_heads)
        # sublayer 1: cross-attention over encoder memory
        xn = _layernorm(x, lnw_ref[l, 1], lnb_ref[l, 1])
        x = x + _mha(xn, e_mem, e_mask,
                     wq_ref[l, 1], bq_ref[l, 1], wk_ref[l, 1], bk_ref[l, 1],
                     wv_ref[l, 1], bv_ref[l, 1], wo_ref[l, 1], bo_ref[l, 1],
                     n_heads)
        sub = 2
        if fusion:
            # sublayer 2: history attention
            xn = _layernorm(x, lnw_ref[l, 2], lnb_ref[l, 2])
            x = x + _mha(xn, h_mem, h_mask,
                         wq_ref[l, 2], bq_ref[l, 2], wk_ref[l, 2], bk_ref[l, 2],
                         wv_ref[l, 2], bv_ref[l, 2], wo_ref[l, 2], bo_ref[l, 2],
                         n_heads)
            sub = 3
        # last sublayer: position-wise FFN
        xn = _layernorm(x, lnw_ref[l, sub], lnb_ref[l, sub])
        h = jnp.maximum(
            jnp.dot(xn, w1_ref[l], preferred_element_type=jnp.float32) + b1_ref[l],
            0.0)
        x = x + jnp.dot(h, w2_ref[l], preferred_element_type=jnp.float32) + b2_ref[l]

    # ---- final LayerNorm ----
    o_ref[0] = _layernorm(x, fw_ref[...], fb_ref[...]).astype(o_ref.dtype)


# ----------------------------------------------------------------------------
# pallas_call wrapper
# ----------------------------------------------------------------------------
def _full_spec(shape):
    # Parameter replicated across the batch grid (loaded once, reused).
    n = len(shape)
    return pl.BlockSpec(shape, lambda b, _n=n: (0,) * _n)


def decoder_forward(params, cfg, fusion_flag, ids, e_mem, e_mask, d_mask,
                    h_mem=None, h_mask=None):
    B, Ld = ids.shape
    Se = e_mem.shape[1]
    D, V = cfg.hidden_dim, cfg.vocab_size

    ids3 = ids.astype(jnp.int32)[:, :, None]                      # (B, Ld, 1)
    d_mask_f = d_mask.astype(jnp.float32)                         # (Ld, Ld) additive
    e_add = jnp.where(e_mask, NEG, 0.0).astype(jnp.float32)[:, None, :]   # (B,1,Se)

    inputs = [ids3, e_mem.astype(jnp.float32), d_mask_f, e_add]
    in_specs = [pl.BlockSpec((1, Ld, 1), lambda b: (b, 0, 0)),
                pl.BlockSpec((1, Se, D), lambda b: (b, 0, 0)),
                _full_spec((Ld, Ld)),
                pl.BlockSpec((1, 1, Se), lambda b: (b, 0, 0))]

    if fusion_flag:
        Sh = h_mem.shape[1]
        h_add = jnp.where(h_mask, NEG, 0.0).astype(jnp.float32)[:, None, :]
        inputs += [h_mem.astype(jnp.float32), h_add]
        in_specs += [pl.BlockSpec((1, Sh, D), lambda b: (b, 0, 0)),
                     pl.BlockSpec((1, 1, Sh), lambda b: (b, 0, 0))]

    weight_inputs = [params["embed"], params["ln_w"], params["ln_b"],
                     params["wq_t"], params["wk_t"], params["wv_t"], params["wo_t"],
                     params["bq"], params["bk"], params["bv"], params["bo"],
                     params["w1_t"], params["b1"], params["w2_t"], params["b2"],
                     params["final_ln_w"], params["final_ln_b"]]
    inputs += weight_inputs
    in_specs += [_full_spec(tuple(w.shape)) for w in weight_inputs]

    kernel = functools.partial(_decoder_kernel,
                               n_heads=cfg.n_heads, n_layers=cfg.n_layers,
                               fusion=fusion_flag, vocab=V,
                               emb_scale=math.sqrt(D))

    return pl.pallas_call(
        kernel,
        out_shape=jax.ShapeDtypeStruct((B, Ld, D), jnp.float32),
        grid=(B,),
        in_specs=in_specs,
        out_specs=pl.BlockSpec((1, Ld, D), lambda b: (b, 0, 0)),
        compiler_params=pltpu.CompilerParams(dimension_semantics=("parallel",)),
    )(*inputs)


# ----------------------------------------------------------------------------
# Parameter init (deterministic, in-script).  Weights are stored PRE-TRANSPOSED
# relative to PyTorch nn.Linear / nn.MultiheadAttention (wq_t = Wq.T, etc.) so
# the kernel never transposes.
# ----------------------------------------------------------------------------
def init_decoder_params(key, cfg, fusion_flag):
    D, F, V = cfg.hidden_dim, cfg.pff_dim, cfg.vocab_size
    nL = cfg.n_layers
    n_attn = 3 if fusion_flag else 2
    n_sub = n_attn + 1

    ks = jax.random.split(key, 8)

    def dense(k, shape):
        return 0.05 * jax.random.normal(k, shape, jnp.float32)

    return {
        "embed": dense(ks[0], (V, D)),
        "wq_t": dense(ks[1], (nL, n_attn, D, D)),
        "wk_t": dense(ks[2], (nL, n_attn, D, D)),
        "wv_t": dense(ks[3], (nL, n_attn, D, D)),
        "wo_t": dense(ks[4], (nL, n_attn, D, D)),
        "bq": jnp.zeros((nL, n_attn, 1, D), jnp.float32),
        "bk": jnp.zeros((nL, n_attn, 1, D), jnp.float32),
        "bv": jnp.zeros((nL, n_attn, 1, D), jnp.float32),
        "bo": jnp.zeros((nL, n_attn, 1, D), jnp.float32),
        "w1_t": dense(ks[5], (nL, D, F)),     # == W1.T per layer
        "b1": jnp.zeros((nL, 1, F), jnp.float32),
        "w2_t": dense(ks[6], (nL, F, D)),     # == W2.T per layer
        "b2": jnp.zeros((nL, 1, D), jnp.float32),
        "ln_w": jnp.ones((nL, n_sub, 1, D), jnp.float32),
        "ln_b": jnp.zeros((nL, n_sub, 1, D), jnp.float32),
        "final_ln_w": jnp.ones((1, D), jnp.float32),
        "final_ln_b": jnp.zeros((1, D), jnp.float32),
    }


# ----------------------------------------------------------------------------
# Demo
# ----------------------------------------------------------------------------
if __name__ == "__main__":
    cfg = Config(hidden_dim=32, n_heads=4, n_layers=2, pff_dim=64,
                 vocab_size=64, dropout=0.1)
    fusion_flag = True

    B, Ld, Se, Sh = 2, 8, 8, 8
    key = jax.random.PRNGKey(0)
    k_ids, k_e, k_h, k_par = jax.random.split(key, 4)

    ids = jax.random.randint(k_ids, (B, Ld), 0, cfg.vocab_size, dtype=jnp.int32)
    e_mem = jax.random.normal(k_e, (B, Se, cfg.hidden_dim), jnp.float32)
    h_mem = jax.random.normal(k_h, (B, Sh, cfg.hidden_dim), jnp.float32)

    # Causal additive decoder mask (0 allowed / -1e9 disallowed).
    d_mask = jnp.where(jnp.triu(jnp.ones((Ld, Ld), jnp.float32), 1) > 0, NEG, 0.0)
    # Key-padding masks (True = padded / ignored), as in PyTorch.
    e_mask = jnp.array([[False] * Se, [False] * (Se - 2) + [True] * 2])
    h_mask = jnp.array([[False] * (Sh - 3) + [True] * 3, [False] * Sh])

    params = init_decoder_params(k_par, cfg, fusion_flag)

    out = decoder_forward(params, cfg, fusion_flag, ids, e_mem, e_mask, d_mask,
                          h_mem, h_mask)
    out = jax.block_until_ready(out)

    assert out.shape == (B, Ld, cfg.hidden_dim), out.shape
    assert bool(jnp.all(jnp.isfinite(out)))
    print("KERNEL_OK")
</pallas_src>

<mosaic_0001>
module attributes {stable_mosaic.version = 11 : i64} {
  func.func @_decoder_kernel(%arg0: i32, %arg1: memref<1x8x1xi32, #tpu.memory_space<vmem>>, %arg2: memref<1x8x32xf32, #tpu.memory_space<vmem>>, %arg3: memref<8x8xf32, #tpu.memory_space<vmem>>, %arg4: memref<1x1x8xf32, #tpu.memory_space<vmem>>, %arg5: memref<1x8x32xf32, #tpu.memory_space<vmem>>, %arg6: memref<1x1x8xf32, #tpu.memory_space<vmem>>, %arg7: memref<64x32xf32, #tpu.memory_space<vmem>>, %arg8: memref<2x4x1x32xf32, #tpu.memory_space<vmem>>, %arg9: memref<2x4x1x32xf32, #tpu.memory_space<vmem>>, %arg10: memref<2x3x32x32xf32, #tpu.memory_space<vmem>>, %arg11: memref<2x3x32x32xf32, #tpu.memory_space<vmem>>, %arg12: memref<2x3x32x32xf32, #tpu.memory_space<vmem>>, %arg13: memref<2x3x32x32xf32, #tpu.memory_space<vmem>>, %arg14: memref<2x3x1x32xf32, #tpu.memory_space<vmem>>, %arg15: memref<2x3x1x32xf32, #tpu.memory_space<vmem>>, %arg16: memref<2x3x1x32xf32, #tpu.memory_space<vmem>>, %arg17: memref<2x3x1x32xf32, #tpu.memory_space<vmem>>, %arg18: memref<2x32x64xf32, #tpu.memory_space<vmem>>, %arg19: memref<2x1x64xf32, #tpu.memory_space<vmem>>, %arg20: memref<2x64x32xf32, #tpu.memory_space<vmem>>, %arg21: memref<2x1x32xf32, #tpu.memory_space<vmem>>, %arg22: memref<1x32xf32, #tpu.memory_space<vmem>>, %arg23: memref<1x32xf32, #tpu.memory_space<vmem>>, %arg24: memref<1x8x32xf32, #tpu.memory_space<vmem>>) attributes {dimension_semantics = [#tpu.dimension_semantics<parallel>], iteration_bounds = array<i64: 2>, scalar_prefetch = 0 : i64, scratch_operands = 0 : i64, tpu.core_type = #tpu.core_type<tc>, window_params = [{transform_indices = @transform_0, window_bounds = array<i64: 1, 8, 1>}, {transform_indices = @transform_1, window_bounds = array<i64: 1, 8, 32>}, {pipeline_mode = #tpu.pipeline_mode<synchronous>, transform_indices = @transform_2, window_bounds = array<i64: 8, 8>}, {transform_indices = @transform_3, window_bounds = array<i64: 1, 1, 8>}, {transform_indices = @transform_4, window_bounds = array<i64: 1, 8, 32>}, {transform_indices = @transform_5, window_bounds = array<i64: 1, 1, 8>}, {pipeline_mode = #tpu.pipeline_mode<synchronous>, transform_indices = @transform_6, window_bounds = array<i64: 64, 32>}, {pipeline_mode = #tpu.pipeline_mode<synchronous>, transform_indices = @transform_7, window_bounds = array<i64: 2, 4, 1, 32>}, {pipeline_mode = #tpu.pipeline_mode<synchronous>, transform_indices = @transform_8, window_bounds = array<i64: 2, 4, 1, 32>}, {pipeline_mode = #tpu.pipeline_mode<synchronous>, transform_indices = @transform_9, window_bounds = array<i64: 2, 3, 32, 32>}, {pipeline_mode = #tpu.pipeline_mode<synchronous>, transform_indices = @transform_10, window_bounds = array<i64: 2, 3, 32, 32>}, {pipeline_mode = #tpu.pipeline_mode<synchronous>, transform_indices = @transform_11, window_bounds = array<i64: 2, 3, 32, 32>}, {pipeline_mode = #tpu.pipeline_mode<synchronous>, transform_indices = @transform_12, window_bounds = array<i64: 2, 3, 32, 32>}, {pipeline_mode = #tpu.pipeline_mode<synchronous>, transform_indices = @transform_13, window_bounds = array<i64: 2, 3, 1, 32>}, {pipeline_mode = #tpu.pipeline_mode<synchronous>, transform_indices = @transform_14, window_bounds = array<i64: 2, 3, 1, 32>}, {pipeline_mode = #tpu.pipeline_mode<synchronous>, transform_indices = @transform_15, window_bounds = array<i64: 2, 3, 1, 32>}, {pipeline_mode = #tpu.pipeline_mode<synchronous>, transform_indices = @transform_16, window_bounds = array<i64: 2, 3, 1, 32>}, {pipeline_mode = #tpu.pipeline_mode<synchronous>, transform_indices = @transform_17, window_bounds = array<i64: 2, 32, 64>}, {pipeline_mode = #tpu.pipeline_mode<synchronous>, transform_indices = @transform_18, window_bounds = array<i64: 2, 1, 64>}, {pipeline_mode = #tpu.pipeline_mode<synchronous>, transform_indices = @transform_19, window_bounds = array<i64: 2, 64, 32>}, {pipeline_mode = #tpu.pipeline_mode<synchronous>, transform_indices = @transform_20, window_bounds = array<i64: 2, 1, 32>}, {pipeline_mode = #tpu.pipeline_mode<synchronous>, transform_indices = @transform_21, window_bounds = array<i64: 1, 32>}, {pipeline_mode = #tpu.pipeline_mode<synchronous>, transform_indices = @transform_22, window_bounds = array<i64: 1, 32>}, {transform_indices = @transform_23, window_bounds = array<i64: 1, 8, 32>}]} {
    %c0 = arith.constant 0 : index
    %c0_0 = arith.constant 0 : index
    %c0_1 = arith.constant 0 : index
    %0 = vector.load %arg1[%c0, %c0_0, %c0_1] : memref<1x8x1xi32, #tpu.memory_space<vmem>>, vector<1x8x1xi32>
    %1 = vector.shape_cast %0 : vector<1x8x1xi32> to vector<8x1xi32>
    %2 = tpu.iota {dimensions = array<i32: 1>} : vector<8x64xi32>
    %3 = vector.broadcast %1 : vector<8x1xi32> to vector<8x64xi32>
    %4 = arith.cmpi eq, %2, %3 : vector<8x64xi32>
    %5 = arith.extui %4 : vector<8x64xi1> to vector<8x64xi32>
    %6 = arith.sitofp %5 : vector<8x64xi32> to vector<8x64xf32>
    %c0_2 = arith.constant 0 : index
    %c0_3 = arith.constant 0 : index
    %7 = vector.load %arg7[%c0_2, %c0_3] : memref<64x32xf32, #tpu.memory_space<vmem>>, vector<64x32xf32>
    %cst = arith.constant dense<0.000000e+00> : vector<8x32xf32>
    %8 = tpu.matmul %6, %7, %cst {dimension_numbers = #tpu.dot_dimension_numbers<[1], [0], [0], [1], [0, 0, 1, 1], [], []>} : vector<8x64xf32>, vector<64x32xf32>, vector<8x32xf32> -> vector<8x32xf32>
    %cst_4 = arith.constant 5.65685415 : f32
    %9 = vector.broadcast %cst_4 : f32 to vector<8x32xf32>
    %10 = arith.mulf %8, %9 : vector<8x32xf32>
    %c0_5 = arith.constant 0 : index
    %c0_6 = arith.constant 0 : index
    %c0_7 = arith.constant 0 : index
    %11 = vector.load %arg2[%c0_5, %c0_6, %c0_7] : memref<1x8x32xf32, #tpu.memory_space<vmem>>, vector<1x8x32xf32>
    %12 = vector.shape_cast %11 : vector<1x8x32xf32> to vector<8x32xf32>
    %c0_8 = arith.constant 0 : index
    %c0_9 = arith.constant 0 : index
    %13 = vector.load %arg3[%c0_8, %c0_9] : memref<8x8xf32, #tpu.memory_space<vmem>>, vector<8x8xf32>
    %c0_10 = arith.constant 0 : index
    %c0_11 = arith.constant 0 : index
    %c0_12 = arith.constant 0 : index
    %14 = vector.load %arg4[%c0_10, %c0_11, %c0_12] : memref<1x1x8xf32, #tpu.memory_space<vmem>>, vector<1x1x8xf32>
    %15 = vector.shape_cast %14 : vector<1x1x8xf32> to vector<1x8xf32>
    %c0_13 = arith.constant 0 : index
    %c0_14 = arith.constant 0 : index
    %c0_15 = arith.constant 0 : index
    %16 = vector.load %arg5[%c0_13, %c0_14, %c0_15] : memref<1x8x32xf32, #tpu.memory_space<vmem>>, vector<1x8x32xf32>
    %17 = vector.shape_cast %16 : vector<1x8x32xf32> to vector<8x32xf32>
    %c0_16 = arith.constant 0 : index
    %c0_17 = arith.constant 0 : index
    %c0_18 = arith.constant 0 : index
    %18 = vector.load %arg6[%c0_16, %c0_17, %c0_18] : memref<1x1x8xf32, #tpu.memory_space<vmem>>, vector<1x1x8xf32>
    %19 = vector.shape_cast %18 : vector<1x1x8xf32> to vector<1x8xf32>
    %c0_19 = arith.constant 0 : index
    %c0_20 = arith.constant 0 : index
    %c0_21 = arith.constant 0 : index
    %c0_22 = arith.constant 0 : index
    %20 = vector.load %arg8[%c0_19, %c0_20, %c0_21, %c0_22] : memref<2x4x1x32xf32, #tpu.memory_space<vmem>>, vector<1x1x1x32xf32>
    %21 = vector.shape_cast %20 : vector<1x1x1x32xf32> to vector<1x32xf32>
    %c0_23 = arith.constant 0 : index
    %c0_24 = arith.constant 0 : index
    %c0_25 = arith.constant 0 : index
    %c0_26 = arith.constant 0 : index
    %22 = vector.load %arg9[%c0_23, %c0_24, %c0_25, %c0_26] : memref<2x4x1x32xf32, #tpu.memory_space<vmem>>, vector<1x1x1x32xf32>
    %23 = vector.shape_cast %22 : vector<1x1x1x32xf32> to vector<1x32xf32>
    %cst_27 = arith.constant dense<0.000000e+00> : vector<8xf32>
    %24 = vector.multi_reduction <add>, %10, %cst_27 [1] : vector<8x32xf32> to vector<8xf32>
    %25 = vector.shape_cast %24 : vector<8xf32> to vector<8x1xf32>
    %cst_28 = arith.constant 3.200000e+01 : f32
    %26 = vector.broadcast %cst_28 : f32 to vector<8x1xf32>
    %27 = arith.divf %25, %26 : vector<8x1xf32>
    %28 = vector.broadcast %27 : vector<8x1xf32> to vector<8x32xf32>
    %29 = arith.subf %10, %28 : vector<8x32xf32>
    %30 = arith.mulf %29, %29 : vector<8x32xf32>
    %cst_29 = arith.constant dense<0.000000e+00> : vector<8xf32>
    %31 = vector.multi_reduction <add>, %30, %cst_29 [1] : vector<8x32xf32> to vector<8xf32>
    %32 = vector.shape_cast %31 : vector<8xf32> to vector<8x1xf32>
    %cst_30 = arith.constant 3.200000e+01 : f32
    %33 = vector.broadcast %cst_30 : f32 to vector<8x1xf32>
    %34 = arith.divf %32, %33 : vector<8x1xf32>
    %35 = vector.broadcast %27 : vector<8x1xf32> to vector<8x32xf32>
    %36 = arith.subf %10, %35 : vector<8x32xf32>
    %cst_31 = arith.constant 9.99999974E-6 : f32
    %37 = vector.broadcast %cst_31 : f32 to vector<8x1xf32>
    %38 = arith.addf %34, %37 : vector<8x1xf32>
    %39 = math.rsqrt %38 : vector<8x1xf32>
    %40 = vector.broadcast %39 : vector<8x1xf32> to vector<8x32xf32>
    %41 = arith.mulf %36, %40 : vector<8x32xf32>
    %42 = vector.broadcast %21 : vector<1x32xf32> to vector<8x32xf32>
    %43 = arith.mulf %41, %42 : vector<8x32xf32>
    %44 = vector.broadcast %23 : vector<1x32xf32> to vector<8x32xf32>
    %45 = arith.addf %43, %44 : vector<8x32xf32>
    %c0_32 = arith.constant 0 : index
    %c0_33 = arith.constant 0 : index
    %c0_34 = arith.constant 0 : index
    %c0_35 = arith.constant 0 : index
    %46 = vector.load %arg10[%c0_32, %c0_33, %c0_34, %c0_35] : memref<2x3x32x32xf32, #tpu.memory_space<vmem>>, vector<1x1x32x32xf32>
    %47 = vector.shape_cast %46 : vector<1x1x32x32xf32> to vector<32x32xf32>
    %c0_36 = arith.constant 0 : index
    %c0_37 = arith.constant 0 : index
    %c0_38 = arith.constant 0 : index
    %c0_39 = arith.constant 0 : index
    %48 = vector.load %arg14[%c0_36, %c0_37, %c0_38, %c0_39] : memref<2x3x1x32xf32, #tpu.memory_space<vmem>>, vector<1x1x1x32xf32>
    %49 = vector.shape_cast %48 : vector<1x1x1x32xf32> to vector<1x32xf32>
    %c0_40 = arith.constant 0 : index
    %c0_41 = arith.constant 0 : index
    %c0_42 = arith.constant 0 : index
    %c0_43 = arith.constant 0 : index
    %50 = vector.load %arg11[%c0_40, %c0_41, %c0_42, %c0_43] : memref<2x3x32x32xf32, #tpu.memory_space<vmem>>, vector<1x1x32x32xf32>
    %51 = vector.shape_cast %50 : vector<1x1x32x32xf32> to vector<32x32xf32>
    %c0_44 = arith.constant 0 : index
    %c0_45 = arith.constant 0 : index
    %c0_46 = arith.constant 0 : index
    %c0_47 = arith.constant 0 : index
    %52 = vector.load %arg15[%c0_44, %c0_45, %c0_46, %c0_47] : memref<2x3x1x32xf32, #tpu.memory_space<vmem>>, vector<1x1x1x32xf32>
    %53 = vector.shape_cast %52 : vector<1x1x1x32xf32> to vector<1x32xf32>
    %c0_48 = arith.constant 0 : index
    %c0_49 = arith.constant 0 : index
    %c0_50 = arith.constant 0 : index
    %c0_51 = arith.constant 0 : index
    %54 = vector.load %arg12[%c0_48, %c0_49, %c0_50, %c0_51] : memref<2x3x32x32xf32, #tpu.memory_space<vmem>>, vector<1x1x32x32xf32>
    %55 = vector.shape_cast %54 : vector<1x1x32x32xf32> to vector<32x32xf32>
    %c0_52 = arith.constant 0 : index
    %c0_53 = arith.constant 0 : index
    %c0_54 = arith.constant 0 : index
    %c0_55 = arith.constant 0 : index
    %56 = vector.load %arg16[%c0_52, %c0_53, %c0_54, %c0_55] : memref<2x3x1x32xf32, #tpu.memory_space<vmem>>, vector<1x1x1x32xf32>
    %57 = vector.shape_cast %56 : vector<1x1x1x32xf32> to vector<1x32xf32>
    %c0_56 = arith.constant 0 : index
    %c0_57 = arith.constant 0 : index
    %c0_58 = arith.constant 0 : index
    %c0_59 = arith.constant 0 : index
    %58 = vector.load %arg13[%c0_56, %c0_57, %c0_58, %c0_59] : memref<2x3x32x32xf32, #tpu.memory_space<vmem>>, vector<1x1x32x32xf32>
    %59 = vector.shape_cast %58 : vector<1x1x32x32xf32> to vector<32x32xf32>
    %c0_60 = arith.constant 0 : index
    %c0_61 = arith.constant 0 : index
    %c0_62 = arith.constant 0 : index
    %c0_63 = arith.constant 0 : index
    %60 = vector.load %arg17[%c0_60, %c0_61, %c0_62, %c0_63] : memref<2x3x1x32xf32, #tpu.memory_space<vmem>>, vector<1x1x1x32xf32>
    %61 = vector.shape_cast %60 : vector<1x1x1x32xf32> to vector<1x32xf32>
    %cst_64 = arith.constant dense<0.000000e+00> : vector<8x32xf32>
    %62 = tpu.matmul %45, %47, %cst_64 {dimension_numbers = #tpu.dot_dimension_numbers<[1], [0], [0], [1], [0, 0, 1, 1], [], []>} : vector<8x32xf32>, vector<32x32xf32>, vector<8x32xf32> -> vector<8x32xf32>
    %63 = vector.broadcast %49 : vector<1x32xf32> to vector<8x32xf32>
    %64 = arith.addf %62, %63 : vector<8x32xf32>
    %cst_65 = arith.constant dense<0.000000e+00> : vector<8x32xf32>
    %65 = tpu.matmul %45, %51, %cst_65 {dimension_numbers = #tpu.dot_dimension_numbers<[1], [0], [0], [1], [0, 0, 1, 1], [], []>} : vector<8x32xf32>, vector<32x32xf32>, vector<8x32xf32> -> vector<8x32xf32>
    %66 = vector.broadcast %53 : vector<1x32xf32> to vector<8x32xf32>
    %67 = arith.addf %65, %66 : vector<8x32xf32>
    %cst_66 = arith.constant dense<0.000000e+00> : vector<8x32xf32>
    %68 = tpu.matmul %45, %55, %cst_66 {dimension_numbers = #tpu.dot_dimension_numbers<[1], [0], [0], [1], [0, 0, 1, 1], [], []>} : vector<8x32xf32>, vector<32x32xf32>, vector<8x32xf32> -> vector<8x32xf32>
    %69 = vector.broadcast %57 : vector<1x32xf32> to vector<8x32xf32>
    %70 = arith.addf %68, %69 : vector<8x32xf32>
    %71 = vector.shape_cast %64 : vector<8x32xf32> to vector<8x4x8xf32>
    %72 = tpu.transpose %71, [1, 0, 2] : vector<8x4x8xf32> -> vector<4x8x8xf32>
    %73 = vector.shape_cast %67 : vector<8x32xf32> to vector<8x4x8xf32>
    %74 = tpu.transpose %73, [1, 0, 2] : vector<8x4x8xf32> -> vector<4x8x8xf32>
    %75 = vector.shape_cast %70 : vector<8x32xf32> to vector<8x4x8xf32>
    %76 = tpu.transpose %75, [1, 0, 2] : vector<8x4x8xf32> -> vector<4x8x8xf32>
    %cst_67 = arith.constant dense<0.000000e+00> : vector<4x8x8xf32>
    %77 = tpu.matmul %72, %74, %cst_67 {dimension_numbers = #tpu.dot_dimension_numbers<[2], [2], [1], [1], [0, 0, 0, 1, 1, 1], [0], [0]>} : vector<4x8x8xf32>, vector<4x8x8xf32>, vector<4x8x8xf32> -> vector<4x8x8xf32>
    %cst_68 = arith.constant 0.353553385 : f32
    %78 = vector.broadcast %cst_68 : f32 to vector<4x8x8xf32>
    %79 = arith.mulf %77, %78 : vector<4x8x8xf32>
    %80 = vector.shape_cast %13 : vector<8x8xf32> to vector<1x8x8xf32>
    %81 = vector.broadcast %80 : vector<1x8x8xf32> to vector<4x8x8xf32>
    %82 = arith.addf %79, %81 : vector<4x8x8xf32>
    %cst_69 = arith.constant dense<0xFF800000> : vector<4x8xf32>
    %83 = vector.multi_reduction <maximumf>, %82, %cst_69 [2] : vector<4x8x8xf32> to vector<4x8xf32>
    %84 = vector.shape_cast %83 : vector<4x8xf32> to vector<4x8x1xf32>
    %85 = vector.broadcast %84 : vector<4x8x1xf32> to vector<4x8x8xf32>
    %86 = arith.subf %82, %85 : vector<4x8x8xf32>
    %87 = math.exp %86 : vector<4x8x8xf32>
    %cst_70 = arith.constant dense<0.000000e+00> : vector<4x8xf32>
    %88 = vector.multi_reduction <add>, %87, %cst_70 [2] : vector<4x8x8xf32> to vector<4x8xf32>
    %89 = vector.shape_cast %88 : vector<4x8xf32> to vector<4x8x1xf32>
    %90 = tpu.reciprocal %89 {approx = true} : vector<4x8x1xf32> -> vector<4x8x1xf32>
    %91 = vector.broadcast %90 : vector<4x8x1xf32> to vector<4x8x8xf32>
    %92 = arith.mulf %87, %91 : vector<4x8x8xf32>
    %cst_71 = arith.constant dense<0.000000e+00> : vector<4x8x8xf32>
    %93 = tpu.matmul %92, %76, %cst_71 {dimension_numbers = #tpu.dot_dimension_numbers<[2], [1], [1], [2], [0, 0, 0, 1, 1, 2], [0], [0]>} : vector<4x8x8xf32>, vector<4x8x8xf32>, vector<4x8x8xf32> -> vector<4x8x8xf32>
    %94 = tpu.transpose %93, [1, 0, 2] : vector<4x8x8xf32> -> vector<8x4x8xf32>
    %95 = vector.shape_cast %94 : vector<8x4x8xf32> to vector<8x32xf32>
    %cst_72 = arith.constant dense<0.000000e+00> : vector<8x32xf32>
    %96 = tpu.matmul %95, %59, %cst_72 {dimension_numbers = #tpu.dot_dimension_numbers<[1], [0], [0], [1], [0, 0, 1, 1], [], []>} : vector<8x32xf32>, vector<32x32xf32>, vector<8x32xf32> -> vector<8x32xf32>
    %97 = vector.broadcast %61 : vector<1x32xf32> to vector<8x32xf32>
    %98 = arith.addf %96, %97 : vector<8x32xf32>
    %99 = arith.addf %10, %98 : vector<8x32xf32>
    %c0_73 = arith.constant 0 : index
    %c1 = arith.constant 1 : index
    %c0_74 = arith.constant 0 : index
    %c0_75 = arith.constant 0 : index
    %100 = vector.load %arg8[%c0_73, %c1, %c0_74, %c0_75] : memref<2x4x1x32xf32, #tpu.memory_space<vmem>>, vector<1x1x1x32xf32>
    %101 = vector.shape_cast %100 : vector<1x1x1x32xf32> to vector<1x32xf32>
    %c0_76 = arith.constant 0 : index
    %c1_77 = arith.constant 1 : index
    %c0_78 = arith.constant 0 : index
    %c0_79 = arith.constant 0 : index
    %102 = vector.load %arg9[%c0_76, %c1_77, %c0_78, %c0_79] : memref<2x4x1x32xf32, #tpu.memory_space<vmem>>, vector<1x1x1x32xf32>
    %103 = vector.shape_cast %102 : vector<1x1x1x32xf32> to vector<1x32xf32>
    %cst_80 = arith.constant dense<0.000000e+00> : vector<8xf32>
    %104 = vector.multi_reduction <add>, %99, %cst_80 [1] : vector<8x32xf32> to vector<8xf32>
    %105 = vector.shape_cast %104 : vector<8xf32> to vector<8x1xf32>
    %cst_81 = arith.constant 3.200000e+01 : f32
    %106 = vector.broadcast %cst_81 : f32 to vector<8x1xf32>
    %107 = arith.divf %105, %106 : vector<8x1xf32>
    %108 = vector.broadcast %107 : vector<8x1xf32> to vector<8x32xf32>
    %109 = arith.subf %99, %108 : vector<8x32xf32>
    %110 = arith.mulf %109, %109 : vector<8x32xf32>
    %cst_82 = arith.constant dense<0.000000e+00> : vector<8xf32>
    %111 = vector.multi_reduction <add>, %110, %cst_82 [1] : vector<8x32xf32> to vector<8xf32>
    %112 = vector.shape_cast %111 : vector<8xf32> to vector<8x1xf32>
    %cst_83 = arith.constant 3.200000e+01 : f32
    %113 = vector.broadcast %cst_83 : f32 to vector<8x1xf32>
    %114 = arith.divf %112, %113 : vector<8x1xf32>
    %115 = vector.broadcast %107 : vector<8x1xf32> to vector<8x32xf32>
    %116 = arith.subf %99, %115 : vector<8x32xf32>
    %cst_84 = arith.constant 9.99999974E-6 : f32
    %117 = vector.broadcast %cst_84 : f32 to vector<8x1xf32>
    %118 = arith.addf %114, %117 : vector<8x1xf32>
    %119 = math.rsqrt %118 : vector<8x1xf32>
    %120 = vector.broadcast %119 : vector<8x1xf32> to vector<8x32xf32>
    %121 = arith.mulf %116, %120 : vector<8x32xf32>
    %122 = vector.broadcast %101 : vector<1x32xf32> to vector<8x32xf32>
    %123 = arith.mulf %121, %122 : vector<8x32xf32>
    %124 = vector.broadcast %103 : vector<1x32xf32> to vector<8x32xf32>
    %125 = arith.addf %123, %124 : vector<8x32xf32>
    %c0_85 = arith.constant 0 : index
    %c1_86 = arith.constant 1 : index
    %c0_87 = arith.constant 0 : index
    %c0_88 = arith.constant 0 : index
    %126 = vector.load %arg10[%c0_85, %c1_86, %c0_87, %c0_88] : memref<2x3x32x32xf32, #tpu.memory_space<vmem>>, vector<1x1x32x32xf32>
    %127 = vector.shape_cast %126 : vector<1x1x32x32xf32> to vector<32x32xf32>
    %c0_89 = arith.constant 0 : index
    %c1_90 = arith.constant 1 : index
    %c0_91 = arith.constant 0 : index
    %c0_92 = arith.constant 0 : index
    %128 = vector.load %arg14[%c0_89, %c1_90, %c0_91, %c0_92] : memref<2x3x1x32xf32, #tpu.memory_space<vmem>>, vector<1x1x1x32xf32>
    %129 = vector.shape_cast %128 : vector<1x1x1x32xf32> to vector<1x32xf32>
    %c0_93 = arith.constant 0 : index
    %c1_94 = arith.constant 1 : index
    %c0_95 = arith.constant 0 : index
    %c0_96 = arith.constant 0 : index
    %130 = vector.load %arg11[%c0_93, %c1_94, %c0_95, %c0_96] : memref<2x3x32x32xf32, #tpu.memory_space<vmem>>, vector<1x1x32x32xf32>
    %131 = vector.shape_cast %130 : vector<1x1x32x32xf32> to vector<32x32xf32>
    %c0_97 = arith.constant 0 : index
    %c1_98 = arith.constant 1 : index
    %c0_99 = arith.constant 0 : index
    %c0_100 = arith.constant 0 : index
    %132 = vector.load %arg15[%c0_97, %c1_98, %c0_99, %c0_100] : memref<2x3x1x32xf32, #tpu.memory_space<vmem>>, vector<1x1x1x32xf32>
    %133 = vector.shape_cast %132 : vector<1x1x1x32xf32> to vector<1x32xf32>
    %c0_101 = arith.constant 0 : index
    %c1_102 = arith.constant 1 : index
    %c0_103 = arith.constant 0 : index
    %c0_104 = arith.constant 0 : index
    %134 = vector.load %arg12[%c0_101, %c1_102, %c0_103, %c0_104] : memref<2x3x32x32xf32, #tpu.memory_space<vmem>>, vector<1x1x32x32xf32>
    %135 = vector.shape_cast %134 : vector<1x1x32x32xf32> to vector<32x32xf32>
    %c0_105 = arith.constant 0 : index
    %c1_106 = arith.constant 1 : index
    %c0_107 = arith.constant 0 : index
    %c0_108 = arith.constant 0 : index
    %136 = vector.load %arg16[%c0_105, %c1_106, %c0_107, %c0_108] : memref<2x3x1x32xf32, #tpu.memory_space<vmem>>, vector<1x1x1x32xf32>
    %137 = vector.shape_cast %136 : vector<1x1x1x32xf32> to vector<1x32xf32>
    %c0_109 = arith.constant 0 : index
    %c1_110 = arith.constant 1 : index
    %c0_111 = arith.constant 0 : index
    %c0_112 = arith.constant 0 : index
    %138 = vector.load %arg13[%c0_109, %c1_110, %c0_111, %c0_112] : memref<2x3x32x32xf32, #tpu.memory_space<vmem>>, vector<1x1x32x32xf32>
    %139 = vector.shape_cast %138 : vector<1x1x32x32xf32> to vector<32x32xf32>
    %c0_113 = arith.constant 0 : index
    %c1_114 = arith.constant 1 : index
    %c0_115 = arith.constant 0 : index
    %c0_116 = arith.constant 0 : index
    %140 = vector.load %arg17[%c0_113, %c1_114, %c0_115, %c0_116] : memref<2x3x1x32xf32, #tpu.memory_space<vmem>>, vector<1x1x1x32xf32>
    %141 = vector.shape_cast %140 : vector<1x1x1x32xf32> to vector<1x32xf32>
    %cst_117 = arith.constant dense<0.000000e+00> : vector<8x32xf32>
    %142 = tpu.matmul %125, %127, %cst_117 {dimension_numbers = #tpu.dot_dimension_numbers<[1], [0], [0], [1], [0, 0, 1, 1], [], []>} : vector<8x32xf32>, vector<32x32xf32>, vector<8x32xf32> -> vector<8x32xf32>
    %143 = vector.broadcast %129 : vector<1x32xf32> to vector<8x32xf32>
    %144 = arith.addf %142, %143 : vector<8x32xf32>
    %cst_118 = arith.constant dense<0.000000e+00> : vector<8x32xf32>
    %145 = tpu.matmul %12, %131, %cst_118 {dimension_numbers = #tpu.dot_dimension_numbers<[1], [0], [0], [1], [0, 0, 1, 1], [], []>} : vector<8x32xf32>, vector<32x32xf32>, vector<8x32xf32> -> vector<8x32xf32>
    %146 = vector.broadcast %133 : vector<1x32xf32> to vector<8x32xf32>
    %147 = arith.addf %145, %146 : vector<8x32xf32>
    %cst_119 = arith.constant dense<0.000000e+00> : vector<8x32xf32>
    %148 = tpu.matmul %12, %135, %cst_119 {dimension_numbers = #tpu.dot_dimension_numbers<[1], [0], [0], [1], [0, 0, 1, 1], [], []>} : vector<8x32xf32>, vector<32x32xf32>, vector<8x32xf32> -> vector<8x32xf32>
    %149 = vector.broadcast %137 : vector<1x32xf32> to vector<8x32xf32>
    %150 = arith.addf %148, %149 : vector<8x32xf32>
    %151 = vector.shape_cast %144 : vector<8x32xf32> to vector<8x4x8xf32>
    %152 = tpu.transpose %151, [1, 0, 2] : vector<8x4x8xf32> -> vector<4x8x8xf32>
    %153 = vector.shape_cast %147 : vector<8x32xf32> to vector<8x4x8xf32>
    %154 = tpu.transpose %153, [1, 0, 2] : vector<8x4x8xf32> -> vector<4x8x8xf32>
    %155 = vector.shape_cast %150 : vector<8x32xf32> to vector<8x4x8xf32>
    %156 = tpu.transpose %155, [1, 0, 2] : vector<8x4x8xf32> -> vector<4x8x8xf32>
    %cst_120 = arith.constant dense<0.000000e+00> : vector<4x8x8xf32>
    %157 = tpu.matmul %152, %154, %cst_120 {dimension_numbers = #tpu.dot_dimension_numbers<[2], [2], [1], [1], [0, 0, 0, 1, 1, 1], [0], [0]>} : vector<4x8x8xf32>, vector<4x8x8xf32>, vector<4x8x8xf32> -> vector<4x8x8xf32>
    %cst_121 = arith.constant 0.353553385 : f32
    %158 = vector.broadcast %cst_121 : f32 to vector<4x8x8xf32>
    %159 = arith.mulf %157, %158 : vector<4x8x8xf32>
    %160 = vector.shape_cast %15 : vector<1x8xf32> to vector<1x1x8xf32>
    %161 = vector.broadcast %160 : vector<1x1x8xf32> to vector<4x8x8xf32>
    %162 = arith.addf %159, %161 : vector<4x8x8xf32>
    %cst_122 = arith.constant dense<0xFF800000> : vector<4x8xf32>
    %163 = vector.multi_reduction <maximumf>, %162, %cst_122 [2] : vector<4x8x8xf32> to vector<4x8xf32>
    %164 = vector.shape_cast %163 : vector<4x8xf32> to vector<4x8x1xf32>
    %165 = vector.broadcast %164 : vector<4x8x1xf32> to vector<4x8x8xf32>
    %166 = arith.subf %162, %165 : vector<4x8x8xf32>
    %167 = math.exp %166 : vector<4x8x8xf32>
    %cst_123 = arith.constant dense<0.000000e+00> : vector<4x8xf32>
    %168 = vector.multi_reduction <add>, %167, %cst_123 [2] : vector<4x8x8xf32> to vector<4x8xf32>
    %169 = vector.shape_cast %168 : vector<4x8xf32> to vector<4x8x1xf32>
    %170 = tpu.reciprocal %169 {approx = true} : vector<4x8x1xf32> -> vector<4x8x1xf32>
    %171 = vector.broadcast %170 : vector<4x8x1xf32> to vector<4x8x8xf32>
    %172 = arith.mulf %167, %171 : vector<4x8x8xf32>
    %cst_124 = arith.constant dense<0.000000e+00> : vector<4x8x8xf32>
    %173 = tpu.matmul %172, %156, %cst_124 {dimension_numbers = #tpu.dot_dimension_numbers<[2], [1], [1], [2], [0, 0, 0, 1, 1, 2], [0], [0]>} : vector<4x8x8xf32>, vector<4x8x8xf32>, vector<4x8x8xf32> -> vector<4x8x8xf32>
    %174 = tpu.transpose %173, [1, 0, 2] : vector<4x8x8xf32> -> vector<8x4x8xf32>
    %175 = vector.shape_cast %174 : vector<8x4x8xf32> to vector<8x32xf32>
    %cst_125 = arith.constant dense<0.000000e+00> : vector<8x32xf32>
    %176 = tpu.matmul %175, %139, %cst_125 {dimension_numbers = #tpu.dot_dimension_numbers<[1], [0], [0], [1], [0, 0, 1, 1], [], []>} : vector<8x32xf32>, vector<32x32xf32>, vector<8x32xf32> -> vector<8x32xf32>
    %177 = vector.broadcast %141 : vector<1x32xf32> to vector<8x32xf32>
    %178 = arith.addf %176, %177 : vector<8x32xf32>
    %179 = arith.addf %99, %178 : vector<8x32xf32>
    %c0_126 = arith.constant 0 : index
    %c2 = arith.constant 2 : index
    %c0_127 = arith.constant 0 : index
    %c0_128 = arith.constant 0 : index
    %180 = vector.load %arg8[%c0_126, %c2, %c0_127, %c0_128] : memref<2x4x1x32xf32, #tpu.memory_space<vmem>>, vector<1x1x1x32xf32>
    %181 = vector.shape_cast %180 : vector<1x1x1x32xf32> to vector<1x32xf32>
    %c0_129 = arith.constant 0 : index
    %c2_130 = arith.constant 2 : index
    %c0_131 = arith.constant 0 : index
    %c0_132 = arith.constant 0 : index
    %182 = vector.load %arg9[%c0_129, %c2_130, %c0_131, %c0_132] : memref<2x4x1x32xf32, #tpu.memory_space<vmem>>, vector<1x1x1x32xf32>
    %183 = vector.shape_cast %182 : vector<1x1x1x32xf32> to vector<1x32xf32>
    %cst_133 = arith.constant dense<0.000000e+00> : vector<8xf32>
    %184 = vector.multi_reduction <add>, %179, %cst_133 [1] : vector<8x32xf32> to vector<8xf32>
    %185 = vector.shape_cast %184 : vector<8xf32> to vector<8x1xf32>
    %cst_134 = arith.constant 3.200000e+01 : f32
    %186 = vector.broadcast %cst_134 : f32 to vector<8x1xf32>
    %187 = arith.divf %185, %186 : vector<8x1xf32>
    %188 = vector.broadcast %187 : vector<8x1xf32> to vector<8x32xf32>
    %189 = arith.subf %179, %188 : vector<8x32xf32>
    %190 = arith.mulf %189, %189 : vector<8x32xf32>
    %cst_135 = arith.constant dense<0.000000e+00> : vector<8xf32>
    %191 = vector.multi_reduction <add>, %190, %cst_135 [1] : vector<8x32xf32> to vector<8xf32>
    %192 = vector.shape_cast %191 : vector<8xf32> to vector<8x1xf32>
    %cst_136 = arith.constant 3.200000e+01 : f32
    %193 = vector.broadcast %cst_136 : f32 to vector<8x1xf32>
    %194 = arith.divf %192, %193 : vector<8x1xf32>
    %195 = vector.broadcast %187 : vector<8x1xf32> to vector<8x32xf32>
    %196 = arith.subf %179, %195 : vector<8x32xf32>
    %cst_137 = arith.constant 9.99999974E-6 : f32
    %197 = vector.broadcast %cst_137 : f32 to vector<8x1xf32>
    %198 = arith.addf %194, %197 : vector<8x1xf32>
    %199 = math.rsqrt %198 : vector<8x1xf32>
    %200 = vector.broadcast %199 : vector<8x1xf32> to vector<8x32xf32>
    %201 = arith.mulf %196, %200 : vector<8x32xf32>
    %202 = vector.broadcast %181 : vector<1x32xf32> to vector<8x32xf32>
    %203 = arith.mulf %201, %202 : vector<8x32xf32>
    %204 = vector.broadcast %183 : vector<1x32xf32> to vector<8x32xf32>
    %205 = arith.addf %203, %204 : vector<8x32xf32>
    %c0_138 = arith.constant 0 : index
    %c2_139 = arith.constant 2 : index
    %c0_140 = arith.constant 0 : index
    %c0_141 = arith.constant 0 : index
    %206 = vector.load %arg10[%c0_138, %c2_139, %c0_140, %c0_141] : memref<2x3x32x32xf32, #tpu.memory_space<vmem>>, vector<1x1x32x32xf32>
    %207 = vector.shape_cast %206 : vector<1x1x32x32xf32> to vector<32x32xf32>
    %c0_142 = arith.constant 0 : index
    %c2_143 = arith.constant 2 : index
    %c0_144 = arith.constant 0 : index
    %c0_145 = arith.constant 0 : index
    %208 = vector.load %arg14[%c0_142, %c2_143, %c0_144, %c0_145] : memref<2x3x1x32xf32, #tpu.memory_space<vmem>>, vector<1x1x1x32xf32>
    %209 = vector.shape_cast %208 : vector<1x1x1x32xf32> to vector<1x32xf32>
    %c0_146 = arith.constant 0 : index
    %c2_147 = arith.constant 2 : index
    %c0_148 = arith.constant 0 : index
    %c0_149 = arith.constant 0 : index
    %210 = vector.load %arg11[%c0_146, %c2_147, %c0_148, %c0_149] : memref<2x3x32x32xf32, #tpu.memory_space<vmem>>, vector<1x1x32x32xf32>
    %211 = vector.shape_cast %210 : vector<1x1x32x32xf32> to vector<32x32xf32>
    %c0_150 = arith.constant 0 : index
    %c2_151 = arith.constant 2 : index
    %c0_152 = arith.constant 0 : index
    %c0_153 = arith.constant 0 : index
    %212 = vector.load %arg15[%c0_150, %c2_151, %c0_152, %c0_153] : memref<2x3x1x32xf32, #tpu.memory_space<vmem>>, vector<1x1x1x32xf32>
    %213 = vector.shape_cast %212 : vector<1x1x1x32xf32> to vector<1x32xf32>
    %c0_154 = arith.constant 0 : index
    %c2_155 = arith.constant 2 : index
    %c0_156 = arith.constant 0 : index
    %c0_157 = arith.constant 0 : index
    %214 = vector.load %arg12[%c0_154, %c2_155, %c0_156, %c0_157] : memref<2x3x32x32xf32, #tpu.memory_space<vmem>>, vector<1x1x32x32xf32>
    %215 = vector.shape_cast %214 : vector<1x1x32x32xf32> to vector<32x32xf32>
    %c0_158 = arith.constant 0 : index
    %c2_159 = arith.constant 2 : index
    %c0_160 = arith.constant 0 : index
    %c0_161 = arith.constant 0 : index
    %216 = vector.load %arg16[%c0_158, %c2_159, %c0_160, %c0_161] : memref<2x3x1x32xf32, #tpu.memory_space<vmem>>, vector<1x1x1x32xf32>
    %217 = vector.shape_cast %216 : vector<1x1x1x32xf32> to vector<1x32xf32>
    %c0_162 = arith.constant 0 : index
    %c2_163 = arith.constant 2 : index
    %c0_164 = arith.constant 0 : index
    %c0_165 = arith.constant 0 : index
    %218 = vector.load %arg13[%c0_162, %c2_163, %c0_164, %c0_165] : memref<2x3x32x32xf32, #tpu.memory_space<vmem>>, vector<1x1x32x32xf32>
    %219 = vector.shape_cast %218 : vector<1x1x32x32xf32> to vector<32x32xf32>
    %c0_166 = arith.constant 0 : index
    %c2_167 = arith.constant 2 : index
    %c0_168 = arith.constant 0 : index
    %c0_169 = arith.constant 0 : index
    %220 = vector.load %arg17[%c0_166, %c2_167, %c0_168, %c0_169] : memref<2x3x1x32xf32, #tpu.memory_space<vmem>>, vector<1x1x1x32xf32>
    %221 = vector.shape_cast %220 : vector<1x1x1x32xf32> to vector<1x32xf32>
    %cst_170 = arith.constant dense<0.000000e+00> : vector<8x32xf32>
    %222 = tpu.matmul %205, %207, %cst_170 {dimension_numbers = #tpu.dot_dimension_numbers<[1], [0], [0], [1], [0, 0, 1, 1], [], []>} : vector<8x32xf32>, vector<32x32xf32>, vector<8x32xf32> -> vector<8x32xf32>
    %223 = vector.broadcast %209 : vector<1x32xf32> to vector<8x32xf32>
    %224 = arith.addf %222, %223 : vector<8x32xf32>
    %cst_171 = arith.constant dense<0.000000e+00> : vector<8x32xf32>
    %225 = tpu.matmul %17, %211, %cst_171 {dimension_numbers = #tpu.dot_dimension_numbers<[1], [0], [0], [1], [0, 0, 1, 1], [], []>} : vector<8x32xf32>, vector<32x32xf32>, vector<8x32xf32> -> vector<8x32xf32>
    %226 = vector.broadcast %213 : vector<1x32xf32> to vector<8x32xf32>
    %227 = arith.addf %225, %226 : vector<8x32xf32>
    %cst_172 = arith.constant dense<0.000000e+00> : vector<8x32xf32>
    %228 = tpu.matmul %17, %215, %cst_172 {dimension_numbers = #tpu.dot_dimension_numbers<[1], [0], [0], [1], [0, 0, 1, 1], [], []>} : vector<8x32xf32>, vector<32x32xf32>, vector<8x32xf32> -> vector<8x32xf32>
    %229 = vector.broadcast %217 : vector<1x32xf32> to vector<8x32xf32>
    %230 = arith.addf %228, %229 : vector<8x32xf32>
    %231 = vector.shape_cast %224 : vector<8x32xf32> to vector<8x4x8xf32>
    %232 = tpu.transpose %231, [1, 0, 2] : vector<8x4x8xf32> -> vector<4x8x8xf32>
    %233 = vector.shape_cast %227 : vector<8x32xf32> to vector<8x4x8xf32>
    %234 = tpu.transpose %233, [1, 0, 2] : vector<8x4x8xf32> -> vector<4x8x8xf32>
    %235 = vector.shape_cast %230 : vector<8x32xf32> to vector<8x4x8xf32>
    %236 = tpu.transpose %235, [1, 0, 2] : vector<8x4x8xf32> -> vector<4x8x8xf32>
    %cst_173 = arith.constant dense<0.000000e+00> : vector<4x8x8xf32>
    %237 = tpu.matmul %232, %234, %cst_173 {dimension_numbers = #tpu.dot_dimension_numbers<[2], [2], [1], [1], [0, 0, 0, 1, 1, 1], [0], [0]>} : vector<4x8x8xf32>, vector<4x8x8xf32>, vector<4x8x8xf32> -> vector<4x8x8xf32>
    %cst_174 = arith.constant 0.353553385 : f32
    %238 = vector.broadcast %cst_174 : f32 to vector<4x8x8xf32>
    %239 = arith.mulf %237, %238 : vector<4x8x8xf32>
    %240 = vector.shape_cast %19 : vector<1x8xf32> to vector<1x1x8xf32>
    %241 = vector.broadcast %240 : vector<1x1x8xf32> to vector<4x8x8xf32>
    %242 = arith.addf %239, %241 : vector<4x8x8xf32>
    %cst_175 = arith.constant dense<0xFF800000> : vector<4x8xf32>
    %243 = vector.multi_reduction <maximumf>, %242, %cst_175 [2] : vector<4x8x8xf32> to vector<4x8xf32>
    %244 = vector.shape_cast %243 : vector<4x8xf32> to vector<4x8x1xf32>
    %245 = vector.broadcast %244 : vector<4x8x1xf32> to vector<4x8x8xf32>
    %246 = arith.subf %242, %245 : vector<4x8x8xf32>
    %247 = math.exp %246 : vector<4x8x8xf32>
    %cst_176 = arith.constant dense<0.000000e+00> : vector<4x8xf32>
    %248 = vector.multi_reduction <add>, %247, %cst_176 [2] : vector<4x8x8xf32> to vector<4x8xf32>
    %249 = vector.shape_cast %248 : vector<4x8xf32> to vector<4x8x1xf32>
    %250 = tpu.reciprocal %249 {approx = true} : vector<4x8x1xf32> -> vector<4x8x1xf32>
    %251 = vector.broadcast %250 : vector<4x8x1xf32> to vector<4x8x8xf32>
    %252 = arith.mulf %247, %251 : vector<4x8x8xf32>
    %cst_177 = arith.constant dense<0.000000e+00> : vector<4x8x8xf32>
    %253 = tpu.matmul %252, %236, %cst_177 {dimension_numbers = #tpu.dot_dimension_numbers<[2], [1], [1], [2], [0, 0, 0, 1, 1, 2], [0], [0]>} : vector<4x8x8xf32>, vector<4x8x8xf32>, vector<4x8x8xf32> -> vector<4x8x8xf32>
    %254 = tpu.transpose %253, [1, 0, 2] : vector<4x8x8xf32> -> vector<8x4x8xf32>
    %255 = vector.shape_cast %254 : vector<8x4x8xf32> to vector<8x32xf32>
    %cst_178 = arith.constant dense<0.000000e+00> : vector<8x32xf32>
    %256 = tpu.matmul %255, %219, %cst_178 {dimension_numbers = #tpu.dot_dimension_numbers<[1], [0], [0], [1], [0, 0, 1, 1], [], []>} : vector<8x32xf32>, vector<32x32xf32>, vector<8x32xf32> -> vector<8x32xf32>
    %257 = vector.broadcast %221 : vector<1x32xf32> to vector<8x32xf32>
    %258 = arith.addf %256, %257 : vector<8x32xf32>
    %259 = arith.addf %179, %258 : vector<8x32xf32>
    %c0_179 = arith.constant 0 : index
    %c3 = arith.constant 3 : index
    %c0_180 = arith.constant 0 : index
    %c0_181 = arith.constant 0 : index
    %260 = vector.load %arg8[%c0_179, %c3, %c0_180, %c0_181] : memref<2x4x1x32xf32, #tpu.memory_space<vmem>>, vector<1x1x1x32xf32>
    %261 = vector.shape_cast %260 : vector<1x1x1x32xf32> to vector<1x32xf32>
    %c0_182 = arith.constant 0 : index
    %c3_183 = arith.constant 3 : index
    %c0_184 = arith.constant 0 : index
    %c0_185 = arith.constant 0 : index
    %262 = vector.load %arg9[%c0_182, %c3_183, %c0_184, %c0_185] : memref<2x4x1x32xf32, #tpu.memory_space<vmem>>, vector<1x1x1x32xf32>
    %263 = vector.shape_cast %262 : vector<1x1x1x32xf32> to vector<1x32xf32>
    %cst_186 = arith.constant dense<0.000000e+00> : vector<8xf32>
    %264 = vector.multi_reduction <add>, %259, %cst_186 [1] : vector<8x32xf32> to vector<8xf32>
    %265 = vector.shape_cast %264 : vector<8xf32> to vector<8x1xf32>
    %cst_187 = arith.constant 3.200000e+01 : f32
    %266 = vector.broadcast %cst_187 : f32 to vector<8x1xf32>
    %267 = arith.divf %265, %266 : vector<8x1xf32>
    %268 = vector.broadcast %267 : vector<8x1xf32> to vector<8x32xf32>
    %269 = arith.subf %259, %268 : vector<8x32xf32>
    %270 = arith.mulf %269, %269 : vector<8x32xf32>
    %cst_188 = arith.constant dense<0.000000e+00> : vector<8xf32>
    %271 = vector.multi_reduction <add>, %270, %cst_188 [1] : vector<8x32xf32> to vector<8xf32>
    %272 = vector.shape_cast %271 : vector<8xf32> to vector<8x1xf32>
    %cst_189 = arith.constant 3.200000e+01 : f32
    %273 = vector.broadcast %cst_189 : f32 to vector<8x1xf32>
    %274 = arith.divf %272, %273 : vector<8x1xf32>
    %275 = vector.broadcast %267 : vector<8x1xf32> to vector<8x32xf32>
    %276 = arith.subf %259, %275 : vector<8x32xf32>
    %cst_190 = arith.constant 9.99999974E-6 : f32
    %277 = vector.broadcast %cst_190 : f32 to vector<8x1xf32>
    %278 = arith.addf %274, %277 : vector<8x1xf32>
    %279 = math.rsqrt %278 : vector<8x1xf32>
    %280 = vector.broadcast %279 : vector<8x1xf32> to vector<8x32xf32>
    %281 = arith.mulf %276, %280 : vector<8x32xf32>
    %282 = vector.broadcast %261 : vector<1x32xf32> to vector<8x32xf32>
    %283 = arith.mulf %281, %282 : vector<8x32xf32>
    %284 = vector.broadcast %263 : vector<1x32xf32> to vector<8x32xf32>
    %285 = arith.addf %283, %284 : vector<8x32xf32>
    %c0_191 = arith.constant 0 : index
    %c0_192 = arith.constant 0 : index
    %c0_193 = arith.constant 0 : index
    %286 = vector.load %arg18[%c0_191, %c0_192, %c0_193] : memref<2x32x64xf32, #tpu.memory_space<vmem>>, vector<1x32x64xf32>
    %287 = vector.shape_cast %286 : vector<1x32x64xf32> to vector<32x64xf32>
    %cst_194 = arith.constant dense<0.000000e+00> : vector<8x64xf32>
    %288 = tpu.matmul %285, %287, %cst_194 {dimension_numbers = #tpu.dot_dimension_numbers<[1], [0], [0], [1], [0, 0, 1, 1], [], []>} : vector<8x32xf32>, vector<32x64xf32>, vector<8x64xf32> -> vector<8x64xf32>
    %c0_195 = arith.constant 0 : index
    %c0_196 = arith.constant 0 : index
    %c0_197 = arith.constant 0 : index
    %289 = vector.load %arg19[%c0_195, %c0_196, %c0_197] : memref<2x1x64xf32, #tpu.memory_space<vmem>>, vector<1x1x64xf32>
    %290 = vector.shape_cast %289 : vector<1x1x64xf32> to vector<1x64xf32>
    %291 = vector.broadcast %290 : vector<1x64xf32> to vector<8x64xf32>
    %292 = arith.addf %288, %291 : vector<8x64xf32>
    %cst_198 = arith.constant 0.000000e+00 : f32
    %293 = vector.broadcast %cst_198 : f32 to vector<8x64xf32>
    %294 = arith.maximumf %292, %293 : vector<8x64xf32>
    %c0_199 = arith.constant 0 : index
    %c0_200 = arith.constant 0 : index
    %c0_201 = arith.constant 0 : index
    %295 = vector.load %arg20[%c0_199, %c0_200, %c0_201] : memref<2x64x32xf32, #tpu.memory_space<vmem>>, vector<1x64x32xf32>
    %296 = vector.shape_cast %295 : vector<1x64x32xf32> to vector<64x32xf32>
    %cst_202 = arith.constant dense<0.000000e+00> : vector<8x32xf32>
    %297 = tpu.matmul %294, %296, %cst_202 {dimension_numbers = #tpu.dot_dimension_numbers<[1], [0], [0], [1], [0, 0, 1, 1], [], []>} : vector<8x64xf32>, vector<64x32xf32>, vector<8x32xf32> -> vector<8x32xf32>
    %298 = arith.addf %259, %297 : vector<8x32xf32>
    %c0_203 = arith.constant 0 : index
    %c0_204 = arith.constant 0 : index
    %c0_205 = arith.constant 0 : index
    %299 = vector.load %arg21[%c0_203, %c0_204, %c0_205] : memref<2x1x32xf32, #tpu.memory_space<vmem>>, vector<1x1x32xf32>
    %300 = vector.shape_cast %299 : vector<1x1x32xf32> to vector<1x32xf32>
    %301 = vector.broadcast %300 : vector<1x32xf32> to vector<8x32xf32>
    %302 = arith.addf %298, %301 : vector<8x32xf32>
    %c1_206 = arith.constant 1 : index
    %c0_207 = arith.constant 0 : index
    %c0_208 = arith.constant 0 : index
    %c0_209 = arith.constant 0 : index
    %303 = vector.load %arg8[%c1_206, %c0_207, %c0_208, %c0_209] : memref<2x4x1x32xf32, #tpu.memory_space<vmem>>, vector<1x1x1x32xf32>
    %304 = vector.shape_cast %303 : vector<1x1x1x32xf32> to vector<1x32xf32>
    %c1_210 = arith.constant 1 : index
    %c0_211 = arith.constant 0 : index
    %c0_212 = arith.constant 0 : index
    %c0_213 = arith.constant 0 : index
    %305 = vector.load %arg9[%c1_210, %c0_211, %c0_212, %c0_213] : memref<2x4x1x32xf32, #tpu.memory_space<vmem>>, vector<1x1x1x32xf32>
    %306 = vector.shape_cast %305 : vector<1x1x1x32xf32> to vector<1x32xf32>
    %cst_214 = arith.constant dense<0.000000e+00> : vector<8xf32>
    %307 = vector.multi_reduction <add>, %302, %cst_214 [1] : vector<8x32xf32> to vector<8xf32>
    %308 = vector.shape_cast %307 : vector<8xf32> to vector<8x1xf32>
    %cst_215 = arith.constant 3.200000e+01 : f32
    %309 = vector.broadcast %cst_215 : f32 to vector<8x1xf32>
    %310 = arith.divf %308, %309 : vector<8x1xf32>
    %311 = vector.broadcast %310 : vector<8x1xf32> to vector<8x32xf32>
    %312 = arith.subf %302, %311 : vector<8x32xf32>
    %313 = arith.mulf %312, %312 : vector<8x32xf32>
    %cst_216 = arith.constant dense<0.000000e+00> : vector<8xf32>
    %314 = vector.multi_reduction <add>, %313, %cst_216 [1] : vector<8x32xf32> to vector<8xf32>
    %315 = vector.shape_cast %314 : vector<8xf32> to vector<8x1xf32>
    %cst_217 = arith.constant 3.200000e+01 : f32
    %316 = vector.broadcast %cst_217 : f32 to vector<8x1xf32>
    %317 = arith.divf %315, %316 : vector<8x1xf32>
    %318 = vector.broadcast %310 : vector<8x1xf32> to vector<8x32xf32>
    %319 = arith.subf %302, %318 : vector<8x32xf32>
    %cst_218 = arith.constant 9.99999974E-6 : f32
    %320 = vector.broadcast %cst_218 : f32 to vector<8x1xf32>
    %321 = arith.addf %317, %320 : vector<8x1xf32>
    %322 = math.rsqrt %321 : vector<8x1xf32>
    %323 = vector.broadcast %322 : vector<8x1xf32> to vector<8x32xf32>
    %324 = arith.mulf %319, %323 : vector<8x32xf32>
    %325 = vector.broadcast %304 : vector<1x32xf32> to vector<8x32xf32>
    %326 = arith.mulf %324, %325 : vector<8x32xf32>
    %327 = vector.broadcast %306 : vector<1x32xf32> to vector<8x32xf32>
    %328 = arith.addf %326, %327 : vector<8x32xf32>
    %c1_219 = arith.constant 1 : index
    %c0_220 = arith.constant 0 : index
    %c0_221 = arith.constant 0 : index
    %c0_222 = arith.constant 0 : index
    %329 = vector.load %arg10[%c1_219, %c0_220, %c0_221, %c0_222] : memref<2x3x32x32xf32, #tpu.memory_space<vmem>>, vector<1x1x32x32xf32>
    %330 = vector.shape_cast %329 : vector<1x1x32x32xf32> to vector<32x32xf32>
    %c1_223 = arith.constant 1 : index
    %c0_224 = arith.constant 0 : index
    %c0_225 = arith.constant 0 : index
    %c0_226 = arith.constant 0 : index
    %331 = vector.load %arg14[%c1_223, %c0_224, %c0_225, %c0_226] : memref<2x3x1x32xf32, #tpu.memory_space<vmem>>, vector<1x1x1x32xf32>
    %332 = vector.shape_cast %331 : vector<1x1x1x32xf32> to vector<1x32xf32>
    %c1_227 = arith.constant 1 : index
    %c0_228 = arith.constant 0 : index
    %c0_229 = arith.constant 0 : index
    %c0_230 = arith.constant 0 : index
    %333 = vector.load %arg11[%c1_227, %c0_228, %c0_229, %c0_230] : memref<2x3x32x32xf32, #tpu.memory_space<vmem>>, vector<1x1x32x32xf32>
    %334 = vector.shape_cast %333 : vector<1x1x32x32xf32> to vector<32x32xf32>
    %c1_231 = arith.constant 1 : index
    %c0_232 = arith.constant 0 : index
    %c0_233 = arith.constant 0 : index
    %c0_234 = arith.constant 0 : index
    %335 = vector.load %arg15[%c1_231, %c0_232, %c0_233, %c0_234] : memref<2x3x1x32xf32, #tpu.memory_space<vmem>>, vector<1x1x1x32xf32>
    %336 = vector.shape_cast %335 : vector<1x1x1x32xf32> to vector<1x32xf32>
    %c1_235 = arith.constant 1 : index
    %c0_236 = arith.constant 0 : index
    %c0_237 = arith.constant 0 : index
    %c0_238 = arith.constant 0 : index
    %337 = vector.load %arg12[%c1_235, %c0_236, %c0_237, %c0_238] : memref<2x3x32x32xf32, #tpu.memory_space<vmem>>, vector<1x1x32x32xf32>
    %338 = vector.shape_cast %337 : vector<1x1x32x32xf32> to vector<32x32xf32>
    %c1_239 = arith.constant 1 : index
    %c0_240 = arith.constant 0 : index
    %c0_241 = arith.constant 0 : index
    %c0_242 = arith.constant 0 : index
    %339 = vector.load %arg16[%c1_239, %c0_240, %c0_241, %c0_242] : memref<2x3x1x32xf32, #tpu.memory_space<vmem>>, vector<1x1x1x32xf32>
    %340 = vector.shape_cast %339 : vector<1x1x1x32xf32> to vector<1x32xf32>
    %c1_243 = arith.constant 1 : index
    %c0_244 = arith.constant 0 : index
    %c0_245 = arith.constant 0 : index
    %c0_246 = arith.constant 0 : index
    %341 = vector.load %arg13[%c1_243, %c0_244, %c0_245, %c0_246] : memref<2x3x32x32xf32, #tpu.memory_space<vmem>>, vector<1x1x32x32xf32>
    %342 = vector.shape_cast %341 : vector<1x1x32x32xf32> to vector<32x32xf32>
    %c1_247 = arith.constant 1 : index
    %c0_248 = arith.constant 0 : index
    %c0_249 = arith.constant 0 : index
    %c0_250 = arith.constant 0 : index
    %343 = vector.load %arg17[%c1_247, %c0_248, %c0_249, %c0_250] : memref<2x3x1x32xf32, #tpu.memory_space<vmem>>, vector<1x1x1x32xf32>
    %344 = vector.shape_cast %343 : vector<1x1x1x32xf32> to vector<1x32xf32>
    %cst_251 = arith.constant dense<0.000000e+00> : vector<8x32xf32>
    %345 = tpu.matmul %328, %330, %cst_251 {dimension_numbers = #tpu.dot_dimension_numbers<[1], [0], [0], [1], [0, 0, 1, 1], [], []>} : vector<8x32xf32>, vector<32x32xf32>, vector<8x32xf32> -> vector<8x32xf32>
    %346 = vector.broadcast %332 : vector<1x32xf32> to vector<8x32xf32>
    %347 = arith.addf %345, %346 : vector<8x32xf32>
    %cst_252 = arith.constant dense<0.000000e+00> : vector<8x32xf32>
    %348 = tpu.matmul %328, %334, %cst_252 {dimension_numbers = #tpu.dot_dimension_numbers<[1], [0], [0], [1], [0, 0, 1, 1], [], []>} : vector<8x32xf32>, vector<32x32xf32>, vector<8x32xf32> -> vector<8x32xf32>
    %349 = vector.broadcast %336 : vector<1x32xf32> to vector<8x32xf32>
    %350 = arith.addf %348, %349 : vector<8x32xf32>
    %cst_253 = arith.constant dense<0.000000e+00> : vector<8x32xf32>
    %351 = tpu.matmul %328, %338, %cst_253 {dimension_numbers = #tpu.dot_dimension_numbers<[1], [0], [0], [1], [0, 0, 1, 1], [], []>} : vector<8x32xf32>, vector<32x32xf32>, vector<8x32xf32> -> vector<8x32xf32>
    %352 = vector.broadcast %340 : vector<1x32xf32> to vector<8x32xf32>
    %353 = arith.addf %351, %352 : vector<8x32xf32>
    %354 = vector.shape_cast %347 : vector<8x32xf32> to vector<8x4x8xf32>
    %355 = tpu.transpose %354, [1, 0, 2] : vector<8x4x8xf32> -> vector<4x8x8xf32>
    %356 = vector.shape_cast %350 : vector<8x32xf32> to vector<8x4x8xf32>
    %357 = tpu.transpose %356, [1, 0, 2] : vector<8x4x8xf32> -> vector<4x8x8xf32>
    %358 = vector.shape_cast %353 : vector<8x32xf32> to vector<8x4x8xf32>
    %359 = tpu.transpose %358, [1, 0, 2] : vector<8x4x8xf32> -> vector<4x8x8xf32>
    %cst_254 = arith.constant dense<0.000000e+00> : vector<4x8x8xf32>
    %360 = tpu.matmul %355, %357, %cst_254 {dimension_numbers = #tpu.dot_dimension_numbers<[2], [2], [1], [1], [0, 0, 0, 1, 1, 1], [0], [0]>} : vector<4x8x8xf32>, vector<4x8x8xf32>, vector<4x8x8xf32> -> vector<4x8x8xf32>
    %cst_255 = arith.constant 0.353553385 : f32
    %361 = vector.broadcast %cst_255 : f32 to vector<4x8x8xf32>
    %362 = arith.mulf %360, %361 : vector<4x8x8xf32>
    %363 = vector.shape_cast %13 : vector<8x8xf32> to vector<1x8x8xf32>
    %364 = vector.broadcast %363 : vector<1x8x8xf32> to vector<4x8x8xf32>
    %365 = arith.addf %362, %364 : vector<4x8x8xf32>
    %cst_256 = arith.constant dense<0xFF800000> : vector<4x8xf32>
    %366 = vector.multi_reduction <maximumf>, %365, %cst_256 [2] : vector<4x8x8xf32> to vector<4x8xf32>
    %367 = vector.shape_cast %366 : vector<4x8xf32> to vector<4x8x1xf32>
    %368 = vector.broadcast %367 : vector<4x8x1xf32> to vector<4x8x8xf32>
    %369 = arith.subf %365, %368 : vector<4x8x8xf32>
    %370 = math.exp %369 : vector<4x8x8xf32>
    %cst_257 = arith.constant dense<0.000000e+00> : vector<4x8xf32>
    %371 = vector.multi_reduction <add>, %370, %cst_257 [2] : vector<4x8x8xf32> to vector<4x8xf32>
    %372 = vector.shape_cast %371 : vector<4x8xf32> to vector<4x8x1xf32>
    %373 = tpu.reciprocal %372 {approx = true} : vector<4x8x1xf32> -> vector<4x8x1xf32>
    %374 = vector.broadcast %373 : vector<4x8x1xf32> to vector<4x8x8xf32>
    %375 = arith.mulf %370, %374 : vector<4x8x8xf32>
    %cst_258 = arith.constant dense<0.000000e+00> : vector<4x8x8xf32>
    %376 = tpu.matmul %375, %359, %cst_258 {dimension_numbers = #tpu.dot_dimension_numbers<[2], [1], [1], [2], [0, 0, 0, 1, 1, 2], [0], [0]>} : vector<4x8x8xf32>, vector<4x8x8xf32>, vector<4x8x8xf32> -> vector<4x8x8xf32>
    %377 = tpu.transpose %376, [1, 0, 2] : vector<4x8x8xf32> -> vector<8x4x8xf32>
    %378 = vector.shape_cast %377 : vector<8x4x8xf32> to vector<8x32xf32>
    %cst_259 = arith.constant dense<0.000000e+00> : vector<8x32xf32>
    %379 = tpu.matmul %378, %342, %cst_259 {dimension_numbers = #tpu.dot_dimension_numbers<[1], [0], [0], [1], [0, 0, 1, 1], [], []>} : vector<8x32xf32>, vector<32x32xf32>, vector<8x32xf32> -> vector<8x32xf32>
    %380 = vector.broadcast %344 : vector<1x32xf32> to vector<8x32xf32>
    %381 = arith.addf %379, %380 : vector<8x32xf32>
    %382 = arith.addf %302, %381 : vector<8x32xf32>
    %c1_260 = arith.constant 1 : index
    %c1_261 = arith.constant 1 : index
    %c0_262 = arith.constant 0 : index
    %c0_263 = arith.constant 0 : index
    %383 = vector.load %arg8[%c1_260, %c1_261, %c0_262, %c0_263] : memref<2x4x1x32xf32, #tpu.memory_space<vmem>>, vector<1x1x1x32xf32>
    %384 = vector.shape_cast %383 : vector<1x1x1x32xf32> to vector<1x32xf32>
    %c1_264 = arith.constant 1 : index
    %c1_265 = arith.constant 1 : index
    %c0_266 = arith.constant 0 : index
    %c0_267 = arith.constant 0 : index
    %385 = vector.load %arg9[%c1_264, %c1_265, %c0_266, %c0_267] : memref<2x4x1x32xf32, #tpu.memory_space<vmem>>, vector<1x1x1x32xf32>
    %386 = vector.shape_cast %385 : vector<1x1x1x32xf32> to vector<1x32xf32>
    %cst_268 = arith.constant dense<0.000000e+00> : vector<8xf32>
    %387 = vector.multi_reduction <add>, %382, %cst_268 [1] : vector<8x32xf32> to vector<8xf32>
    %388 = vector.shape_cast %387 : vector<8xf32> to vector<8x1xf32>
    %cst_269 = arith.constant 3.200000e+01 : f32
    %389 = vector.broadcast %cst_269 : f32 to vector<8x1xf32>
    %390 = arith.divf %388, %389 : vector<8x1xf32>
    %391 = vector.broadcast %390 : vector<8x1xf32> to vector<8x32xf32>
    %392 = arith.subf %382, %391 : vector<8x32xf32>
    %393 = arith.mulf %392, %392 : vector<8x32xf32>
    %cst_270 = arith.constant dense<0.000000e+00> : vector<8xf32>
    %394 = vector.multi_reduction <add>, %393, %cst_270 [1] : vector<8x32xf32> to vector<8xf32>
    %395 = vector.shape_cast %394 : vector<8xf32> to vector<8x1xf32>
    %cst_271 = arith.constant 3.200000e+01 : f32
    %396 = vector.broadcast %cst_271 : f32 to vector<8x1xf32>
    %397 = arith.divf %395, %396 : vector<8x1xf32>
    %398 = vector.broadcast %390 : vector<8x1xf32> to vector<8x32xf32>
    %399 = arith.subf %382, %398 : vector<8x32xf32>
    %cst_272 = arith.constant 9.99999974E-6 : f32
    %400 = vector.broadcast %cst_272 : f32 to vector<8x1xf32>
    %401 = arith.addf %397, %400 : vector<8x1xf32>
    %402 = math.rsqrt %401 : vector<8x1xf32>
    %403 = vector.broadcast %402 : vector<8x1xf32> to vector<8x32xf32>
    %404 = arith.mulf %399, %403 : vector<8x32xf32>
    %405 = vector.broadcast %384 : vector<1x32xf32> to vector<8x32xf32>
    %406 = arith.mulf %404, %405 : vector<8x32xf32>
    %407 = vector.broadcast %386 : vector<1x32xf32> to vector<8x32xf32>
    %408 = arith.addf %406, %407 : vector<8x32xf32>
    %c1_273 = arith.constant 1 : index
    %c1_274 = arith.constant 1 : index
    %c0_275 = arith.constant 0 : index
    %c0_276 = arith.constant 0 : index
    %409 = vector.load %arg10[%c1_273, %c1_274, %c0_275, %c0_276] : memref<2x3x32x32xf32, #tpu.memory_space<vmem>>, vector<1x1x32x32xf32>
    %410 = vector.shape_cast %409 : vector<1x1x32x32xf32> to vector<32x32xf32>
    %c1_277 = arith.constant 1 : index
    %c1_278 = arith.constant 1 : index
    %c0_279 = arith.constant 0 : index
    %c0_280 = arith.constant 0 : index
    %411 = vector.load %arg14[%c1_277, %c1_278, %c0_279, %c0_280] : memref<2x3x1x32xf32, #tpu.memory_space<vmem>>, vector<1x1x1x32xf32>
    %412 = vector.shape_cast %411 : vector<1x1x1x32xf32> to vector<1x32xf32>
    %c1_281 = arith.constant 1 : index
    %c1_282 = arith.constant 1 : index
    %c0_283 = arith.constant 0 : index
    %c0_284 = arith.constant 0 : index
    %413 = vector.load %arg11[%c1_281, %c1_282, %c0_283, %c0_284] : memref<2x3x32x32xf32, #tpu.memory_space<vmem>>, vector<1x1x32x32xf32>
    %414 = vector.shape_cast %413 : vector<1x1x32x32xf32> to vector<32x32xf32>
    %c1_285 = arith.constant 1 : index
    %c1_286 = arith.constant 1 : index
    %c0_287 = arith.constant 0 : index
    %c0_288 = arith.constant 0 : index
    %415 = vector.load %arg15[%c1_285, %c1_286, %c0_287, %c0_288] : memref<2x3x1x32xf32, #tpu.memory_space<vmem>>, vector<1x1x1x32xf32>
    %416 = vector.shape_cast %415 : vector<1x1x1x32xf32> to vector<1x32xf32>
    %c1_289 = arith.constant 1 : index
    %c1_290 = arith.constant 1 : index
    %c0_291 = arith.constant 0 : index
    %c0_292 = arith.constant 0 : index
    %417 = vector.load %arg12[%c1_289, %c1_290, %c0_291, %c0_292] : memref<2x3x32x32xf32, #tpu.memory_space<vmem>>, vector<1x1x32x32xf32>
    %418 = vector.shape_cast %417 : vector<1x1x32x32xf32> to vector<32x32xf32>
    %c1_293 = arith.constant 1 : index
    %c1_294 = arith.constant 1 : index
    %c0_295 = arith.constant 0 : index
    %c0_296 = arith.constant 0 : index
    %419 = vector.load %arg16[%c1_293, %c1_294, %c0_295, %c0_296] : memref<2x3x1x32xf32, #tpu.memory_space<vmem>>, vector<1x1x1x32xf32>
    %420 = vector.shape_cast %419 : vector<1x1x1x32xf32> to vector<1x32xf32>
    %c1_297 = arith.constant 1 : index
    %c1_298 = arith.constant 1 : index
    %c0_299 = arith.constant 0 : index
    %c0_300 = arith.constant 0 : index
    %421 = vector.load %arg13[%c1_297, %c1_298, %c0_299, %c0_300] : memref<2x3x32x32xf32, #tpu.memory_space<vmem>>, vector<1x1x32x32xf32>
    %422 = vector.shape_cast %421 : vector<1x1x32x32xf32> to vector<32x32xf32>
    %c1_301 = arith.constant 1 : index
    %c1_302 = arith.constant 1 : index
    %c0_303 = arith.constant 0 : index
    %c0_304 = arith.constant 0 : index
    %423 = vector.load %arg17[%c1_301, %c1_302, %c0_303, %c0_304] : memref<2x3x1x32xf32, #tpu.memory_space<vmem>>, vector<1x1x1x32xf32>
    %424 = vector.shape_cast %423 : vector<1x1x1x32xf32> to vector<1x32xf32>
    %cst_305 = arith.constant dense<0.000000e+00> : vector<8x32xf32>
    %425 = tpu.matmul %408, %410, %cst_305 {dimension_numbers = #tpu.dot_dimension_numbers<[1], [0], [0], [1], [0, 0, 1, 1], [], []>} : vector<8x32xf32>, vector<32x32xf32>, vector<8x32xf32> -> vector<8x32xf32>
    %426 = vector.broadcast %412 : vector<1x32xf32> to vector<8x32xf32>
    %427 = arith.addf %425, %426 : vector<8x32xf32>
    %cst_306 = arith.constant dense<0.000000e+00> : vector<8x32xf32>
    %428 = tpu.matmul %12, %414, %cst_306 {dimension_numbers = #tpu.dot_dimension_numbers<[1], [0], [0], [1], [0, 0, 1, 1], [], []>} : vector<8x32xf32>, vector<32x32xf32>, vector<8x32xf32> -> vector<8x32xf32>
    %429 = vector.broadcast %416 : vector<1x32xf32> to vector<8x32xf32>
    %430 = arith.addf %428, %429 : vector<8x32xf32>
    %cst_307 = arith.constant dense<0.000000e+00> : vector<8x32xf32>
    %431 = tpu.matmul %12, %418, %cst_307 {dimension_numbers = #tpu.dot_dimension_numbers<[1], [0], [0], [1], [0, 0, 1, 1], [], []>} : vector<8x32xf32>, vector<32x32xf32>, vector<8x32xf32> -> vector<8x32xf32>
    %432 = vector.broadcast %420 : vector<1x32xf32> to vector<8x32xf32>
    %433 = arith.addf %431, %432 : vector<8x32xf32>
    %434 = vector.shape_cast %427 : vector<8x32xf32> to vector<8x4x8xf32>
    %435 = tpu.transpose %434, [1, 0, 2] : vector<8x4x8xf32> -> vector<4x8x8xf32>
    %436 = vector.shape_cast %430 : vector<8x32xf32> to vector<8x4x8xf32>
    %437 = tpu.transpose %436, [1, 0, 2] : vector<8x4x8xf32> -> vector<4x8x8xf32>
    %438 = vector.shape_cast %433 : vector<8x32xf32> to vector<8x4x8xf32>
    %439 = tpu.transpose %438, [1, 0, 2] : vector<8x4x8xf32> -> vector<4x8x8xf32>
    %cst_308 = arith.constant dense<0.000000e+00> : vector<4x8x8xf32>
    %440 = tpu.matmul %435, %437, %cst_308 {dimension_numbers = #tpu.dot_dimension_numbers<[2], [2], [1], [1], [0, 0, 0, 1, 1, 1], [0], [0]>} : vector<4x8x8xf32>, vector<4x8x8xf32>, vector<4x8x8xf32> -> vector<4x8x8xf32>
    %cst_309 = arith.constant 0.353553385 : f32
    %441 = vector.broadcast %cst_309 : f32 to vector<4x8x8xf32>
    %442 = arith.mulf %440, %441 : vector<4x8x8xf32>
    %443 = vector.shape_cast %15 : vector<1x8xf32> to vector<1x1x8xf32>
    %444 = vector.broadcast %443 : vector<1x1x8xf32> to vector<4x8x8xf32>
    %445 = arith.addf %442, %444 : vector<4x8x8xf32>
    %cst_310 = arith.constant dense<0xFF800000> : vector<4x8xf32>
    %446 = vector.multi_reduction <maximumf>, %445, %cst_310 [2] : vector<4x8x8xf32> to vector<4x8xf32>
    %447 = vector.shape_cast %446 : vector<4x8xf32> to vector<4x8x1xf32>
    %448 = vector.broadcast %447 : vector<4x8x1xf32> to vector<4x8x8xf32>
    %449 = arith.subf %445, %448 : vector<4x8x8xf32>
    %450 = math.exp %449 : vector<4x8x8xf32>
    %cst_311 = arith.constant dense<0.000000e+00> : vector<4x8xf32>
    %451 = vector.multi_reduction <add>, %450, %cst_311 [2] : vector<4x8x8xf32> to vector<4x8xf32>
    %452 = vector.shape_cast %451 : vector<4x8xf32> to vector<4x8x1xf32>
    %453 = tpu.reciprocal %452 {approx = true} : vector<4x8x1xf32> -> vector<4x8x1xf32>
    %454 = vector.broadcast %453 : vector<4x8x1xf32> to vector<4x8x8xf32>
    %455 = arith.mulf %450, %454 : vector<4x8x8xf32>
    %cst_312 = arith.constant dense<0.000000e+00> : vector<4x8x8xf32>
    %456 = tpu.matmul %455, %439, %cst_312 {dimension_numbers = #tpu.dot_dimension_numbers<[2], [1], [1], [2], [0, 0, 0, 1, 1, 2], [0], [0]>} : vector<4x8x8xf32>, vector<4x8x8xf32>, vector<4x8x8xf32> -> vector<4x8x8xf32>
    %457 = tpu.transpose %456, [1, 0, 2] : vector<4x8x8xf32> -> vector<8x4x8xf32>
    %458 = vector.shape_cast %457 : vector<8x4x8xf32> to vector<8x32xf32>
    %cst_313 = arith.constant dense<0.000000e+00> : vector<8x32xf32>
    %459 = tpu.matmul %458, %422, %cst_313 {dimension_numbers = #tpu.dot_dimension_numbers<[1], [0], [0], [1], [0, 0, 1, 1], [], []>} : vector<8x32xf32>, vector<32x32xf32>, vector<8x32xf32> -> vector<8x32xf32>
    %460 = vector.broadcast %424 : vector<1x32xf32> to vector<8x32xf32>
    %461 = arith.addf %459, %460 : vector<8x32xf32>
    %462 = arith.addf %382, %461 : vector<8x32xf32>
    %c1_314 = arith.constant 1 : index
    %c2_315 = arith.constant 2 : index
    %c0_316 = arith.constant 0 : index
    %c0_317 = arith.constant 0 : index
    %463 = vector.load %arg8[%c1_314, %c2_315, %c0_316, %c0_317] : memref<2x4x1x32xf32, #tpu.memory_space<vmem>>, vector<1x1x1x32xf32>
    %464 = vector.shape_cast %463 : vector<1x1x1x32xf32> to vector<1x32xf32>
    %c1_318 = arith.constant 1 : index
    %c2_319 = arith.constant 2 : index
    %c0_320 = arith.constant 0 : index
    %c0_321 = arith.constant 0 : index
    %465 = vector.load %arg9[%c1_318, %c2_319, %c0_320, %c0_321] : memref<2x4x1x32xf32, #tpu.memory_space<vmem>>, vector<1x1x1x32xf32>
    %466 = vector.shape_cast %465 : vector<1x1x1x32xf32> to vector<1x32xf32>
    %cst_322 = arith.constant dense<0.000000e+00> : vector<8xf32>
    %467 = vector.multi_reduction <add>, %462, %cst_322 [1] : vector<8x32xf32> to vector<8xf32>
    %468 = vector.shape_cast %467 : vector<8xf32> to vector<8x1xf32>
    %cst_323 = arith.constant 3.200000e+01 : f32
    %469 = vector.broadcast %cst_323 : f32 to vector<8x1xf32>
    %470 = arith.divf %468, %469 : vector<8x1xf32>
    %471 = vector.broadcast %470 : vector<8x1xf32> to vector<8x32xf32>
    %472 = arith.subf %462, %471 : vector<8x32xf32>
    %473 = arith.mulf %472, %472 : vector<8x32xf32>
    %cst_324 = arith.constant dense<0.000000e+00> : vector<8xf32>
    %474 = vector.multi_reduction <add>, %473, %cst_324 [1] : vector<8x32xf32> to vector<8xf32>
    %475 = vector.shape_cast %474 : vector<8xf32> to vector<8x1xf32>
    %cst_325 = arith.constant 3.200000e+01 : f32
    %476 = vector.broadcast %cst_325 : f32 to vector<8x1xf32>
    %477 = arith.divf %475, %476 : vector<8x1xf32>
    %478 = vector.broadcast %470 : vector<8x1xf32> to vector<8x32xf32>
    %479 = arith.subf %462, %478 : vector<8x32xf32>
    %cst_326 = arith.constant 9.99999974E-6 : f32
    %480 = vector.broadcast %cst_326 : f32 to vector<8x1xf32>
    %481 = arith.addf %477, %480 : vector<8x1xf32>
    %482 = math.rsqrt %481 : vector<8x1xf32>
    %483 = vector.broadcast %482 : vector<8x1xf32> to vector<8x32xf32>
    %484 = arith.mulf %479, %483 : vector<8x32xf32>
    %485 = vector.broadcast %464 : vector<1x32xf32> to vector<8x32xf32>
    %486 = arith.mulf %484, %485 : vector<8x32xf32>
    %487 = vector.broadcast %466 : vector<1x32xf32> to vector<8x32xf32>
    %488 = arith.addf %486, %487 : vector<8x32xf32>
    %c1_327 = arith.constant 1 : index
    %c2_328 = arith.constant 2 : index
    %c0_329 = arith.constant 0 : index
    %c0_330 = arith.constant 0 : index
    %489 = vector.load %arg10[%c1_327, %c2_328, %c0_329, %c0_330] : memref<2x3x32x32xf32, #tpu.memory_space<vmem>>, vector<1x1x32x32xf32>
    %490 = vector.shape_cast %489 : vector<1x1x32x32xf32> to vector<32x32xf32>
    %c1_331 = arith.constant 1 : index
    %c2_332 = arith.constant 2 : index
    %c0_333 = arith.constant 0 : index
    %c0_334 = arith.constant 0 : index
    %491 = vector.load %arg14[%c1_331, %c2_332, %c0_333, %c0_334] : memref<2x3x1x32xf32, #tpu.memory_space<vmem>>, vector<1x1x1x32xf32>
    %492 = vector.shape_cast %491 : vector<1x1x1x32xf32> to vector<1x32xf32>
    %c1_335 = arith.constant 1 : index
    %c2_336 = arith.constant 2 : index
    %c0_337 = arith.constant 0 : index
    %c0_338 = arith.constant 0 : index
    %493 = vector.load %arg11[%c1_335, %c2_336, %c0_337, %c0_338] : memref<2x3x32x32xf32, #tpu.memory_space<vmem>>, vector<1x1x32x32xf32>
    %494 = vector.shape_cast %493 : vector<1x1x32x32xf32> to vector<32x32xf32>
    %c1_339 = arith.constant 1 : index
    %c2_340 = arith.constant 2 : index
    %c0_341 = arith.constant 0 : index
    %c0_342 = arith.constant 0 : index
    %495 = vector.load %arg15[%c1_339, %c2_340, %c0_341, %c0_342] : memref<2x3x1x32xf32, #tpu.memory_space<vmem>>, vector<1x1x1x32xf32>
    %496 = vector.shape_cast %495 : vector<1x1x1x32xf32> to vector<1x32xf32>
    %c1_343 = arith.constant 1 : index
    %c2_344 = arith.constant 2 : index
    %c0_345 = arith.constant 0 : index
    %c0_346 = arith.constant 0 : index
    %497 = vector.load %arg12[%c1_343, %c2_344, %c0_345, %c0_346] : memref<2x3x32x32xf32, #tpu.memory_space<vmem>>, vector<1x1x32x32xf32>
    %498 = vector.shape_cast %497 : vector<1x1x32x32xf32> to vector<32x32xf32>
    %c1_347 = arith.constant 1 : index
    %c2_348 = arith.constant 2 : index
    %c0_349 = arith.constant 0 : index
    %c0_350 = arith.constant 0 : index
    %499 = vector.load %arg16[%c1_347, %c2_348, %c0_349, %c0_350] : memref<2x3x1x32xf32, #tpu.memory_space<vmem>>, vector<1x1x1x32xf32>
    %500 = vector.shape_cast %499 : vector<1x1x1x32xf32> to vector<1x32xf32>
    %c1_351 = arith.constant 1 : index
    %c2_352 = arith.constant 2 : index
    %c0_353 = arith.constant 0 : index
    %c0_354 = arith.constant 0 : index
    %501 = vector.load %arg13[%c1_351, %c2_352, %c0_353, %c0_354] : memref<2x3x32x32xf32, #tpu.memory_space<vmem>>, vector<1x1x32x32xf32>
    %502 = vector.shape_cast %501 : vector<1x1x32x32xf32> to vector<32x32xf32>
    %c1_355 = arith.constant 1 : index
    %c2_356 = arith.constant 2 : index
    %c0_357 = arith.constant 0 : index
    %c0_358 = arith.constant 0 : index
    %503 = vector.load %arg17[%c1_355, %c2_356, %c0_357, %c0_358] : memref<2x3x1x32xf32, #tpu.memory_space<vmem>>, vector<1x1x1x32xf32>
    %504 = vector.shape_cast %503 : vector<1x1x1x32xf32> to vector<1x32xf32>
    %cst_359 = arith.constant dense<0.000000e+00> : vector<8x32xf32>
    %505 = tpu.matmul %488, %490, %cst_359 {dimension_numbers = #tpu.dot_dimension_numbers<[1], [0], [0], [1], [0, 0, 1, 1], [], []>} : vector<8x32xf32>, vector<32x32xf32>, vector<8x32xf32> -> vector<8x32xf32>
    %506 = vector.broadcast %492 : vector<1x32xf32> to vector<8x32xf32>
    %507 = arith.addf %505, %506 : vector<8x32xf32>
    %cst_360 = arith.constant dense<0.000000e+00> : vector<8x32xf32>
    %508 = tpu.matmul %17, %494, %cst_360 {dimension_numbers = #tpu.dot_dimension_numbers<[1], [0], [0], [1], [0, 0, 1, 1], [], []>} : vector<8x32xf32>, vector<32x32xf32>, vector<8x32xf32> -> vector<8x32xf32>
    %509 = vector.broadcast %496 : vector<1x32xf32> to vector<8x32xf32>
    %510 = arith.addf %508, %509 : vector<8x32xf32>
    %cst_361 = arith.constant dense<0.000000e+00> : vector<8x32xf32>
    %511 = tpu.matmul %17, %498, %cst_361 {dimension_numbers = #tpu.dot_dimension_numbers<[1], [0], [0], [1], [0, 0, 1, 1], [], []>} : vector<8x32xf32>, vector<32x32xf32>, vector<8x32xf32> -> vector<8x32xf32>
    %512 = vector.broadcast %500 : vector<1x32xf32> to vector<8x32xf32>
    %513 = arith.addf %511, %512 : vector<8x32xf32>
    %514 = vector.shape_cast %507 : vector<8x32xf32> to vector<8x4x8xf32>
    %515 = tpu.transpose %514, [1, 0, 2] : vector<8x4x8xf32> -> vector<4x8x8xf32>
    %516 = vector.shape_cast %510 : vector<8x32xf32> to vector<8x4x8xf32>
    %517 = tpu.transpose %516, [1, 0, 2] : vector<8x4x8xf32> -> vector<4x8x8xf32>
    %518 = vector.shape_cast %513 : vector<8x32xf32> to vector<8x4x8xf32>
    %519 = tpu.transpose %518, [1, 0, 2] : vector<8x4x8xf32> -> vector<4x8x8xf32>
    %cst_362 = arith.constant dense<0.000000e+00> : vector<4x8x8xf32>
    %520 = tpu.matmul %515, %517, %cst_362 {dimension_numbers = #tpu.dot_dimension_numbers<[2], [2], [1], [1], [0, 0, 0, 1, 1, 1], [0], [0]>} : vector<4x8x8xf32>, vector<4x8x8xf32>, vector<4x8x8xf32> -> vector<4x8x8xf32>
    %cst_363 = arith.constant 0.353553385 : f32
    %521 = vector.broadcast %cst_363 : f32 to vector<4x8x8xf32>
    %522 = arith.mulf %520, %521 : vector<4x8x8xf32>
    %523 = vector.shape_cast %19 : vector<1x8xf32> to vector<1x1x8xf32>
    %524 = vector.broadcast %523 : vector<1x1x8xf32> to vector<4x8x8xf32>
    %525 = arith.addf %522, %524 : vector<4x8x8xf32>
    %cst_364 = arith.constant dense<0xFF800000> : vector<4x8xf32>
    %526 = vector.multi_reduction <maximumf>, %525, %cst_364 [2] : vector<4x8x8xf32> to vector<4x8xf32>
    %527 = vector.shape_cast %526 : vector<4x8xf32> to vector<4x8x1xf32>
    %528 = vector.broadcast %527 : vector<4x8x1xf32> to vector<4x8x8xf32>
    %529 = arith.subf %525, %528 : vector<4x8x8xf32>
    %530 = math.exp %529 : vector<4x8x8xf32>
    %cst_365 = arith.constant dense<0.000000e+00> : vector<4x8xf32>
    %531 = vector.multi_reduction <add>, %530, %cst_365 [2] : vector<4x8x8xf32> to vector<4x8xf32>
    %532 = vector.shape_cast %531 : vector<4x8xf32> to vector<4x8x1xf32>
    %533 = tpu.reciprocal %532 {approx = true} : vector<4x8x1xf32> -> vector<4x8x1xf32>
    %534 = vector.broadcast %533 : vector<4x8x1xf32> to vector<4x8x8xf32>
    %535 = arith.mulf %530, %534 : vector<4x8x8xf32>
    %cst_366 = arith.constant dense<0.000000e+00> : vector<4x8x8xf32>
    %536 = tpu.matmul %535, %519, %cst_366 {dimension_numbers = #tpu.dot_dimension_numbers<[2], [1], [1], [2], [0, 0, 0, 1, 1, 2], [0], [0]>} : vector<4x8x8xf32>, vector<4x8x8xf32>, vector<4x8x8xf32> -> vector<4x8x8xf32>
    %537 = tpu.transpose %536, [1, 0, 2] : vector<4x8x8xf32> -> vector<8x4x8xf32>
    %538 = vector.shape_cast %537 : vector<8x4x8xf32> to vector<8x32xf32>
    %cst_367 = arith.constant dense<0.000000e+00> : vector<8x32xf32>
    %539 = tpu.matmul %538, %502, %cst_367 {dimension_numbers = #tpu.dot_dimension_numbers<[1], [0], [0], [1], [0, 0, 1, 1], [], []>} : vector<8x32xf32>, vector<32x32xf32>, vector<8x32xf32> -> vector<8x32xf32>
    %540 = vector.broadcast %504 : vector<1x32xf32> to vector<8x32xf32>
    %541 = arith.addf %539, %540 : vector<8x32xf32>
    %542 = arith.addf %462, %541 : vector<8x32xf32>
    %c1_368 = arith.constant 1 : index
    %c3_369 = arith.constant 3 : index
    %c0_370 = arith.constant 0 : index
    %c0_371 = arith.constant 0 : index
    %543 = vector.load %arg8[%c1_368, %c3_369, %c0_370, %c0_371] : memref<2x4x1x32xf32, #tpu.memory_space<vmem>>, vector<1x1x1x32xf32>
    %544 = vector.shape_cast %543 : vector<1x1x1x32xf32> to vector<1x32xf32>
    %c1_372 = arith.constant 1 : index
    %c3_373 = arith.constant 3 : index
    %c0_374 = arith.constant 0 : index
    %c0_375 = arith.constant 0 : index
    %545 = vector.load %arg9[%c1_372, %c3_373, %c0_374, %c0_375] : memref<2x4x1x32xf32, #tpu.memory_space<vmem>>, vector<1x1x1x32xf32>
    %546 = vector.shape_cast %545 : vector<1x1x1x32xf32> to vector<1x32xf32>
    %cst_376 = arith.constant dense<0.000000e+00> : vector<8xf32>
    %547 = vector.multi_reduction <add>, %542, %cst_376 [1] : vector<8x32xf32> to vector<8xf32>
    %548 = vector.shape_cast %547 : vector<8xf32> to vector<8x1xf32>
    %cst_377 = arith.constant 3.200000e+01 : f32
    %549 = vector.broadcast %cst_377 : f32 to vector<8x1xf32>
    %550 = arith.divf %548, %549 : vector<8x1xf32>
    %551 = vector.broadcast %550 : vector<8x1xf32> to vector<8x32xf32>
    %552 = arith.subf %542, %551 : vector<8x32xf32>
    %553 = arith.mulf %552, %552 : vector<8x32xf32>
    %cst_378 = arith.constant dense<0.000000e+00> : vector<8xf32>
    %554 = vector.multi_reduction <add>, %553, %cst_378 [1] : vector<8x32xf32> to vector<8xf32>
    %555 = vector.shape_cast %554 : vector<8xf32> to vector<8x1xf32>
    %cst_379 = arith.constant 3.200000e+01 : f32
    %556 = vector.broadcast %cst_379 : f32 to vector<8x1xf32>
    %557 = arith.divf %555, %556 : vector<8x1xf32>
    %558 = vector.broadcast %550 : vector<8x1xf32> to vector<8x32xf32>
    %559 = arith.subf %542, %558 : vector<8x32xf32>
    %cst_380 = arith.constant 9.99999974E-6 : f32
    %560 = vector.broadcast %cst_380 : f32 to vector<8x1xf32>
    %561 = arith.addf %557, %560 : vector<8x1xf32>
    %562 = math.rsqrt %561 : vector<8x1xf32>
    %563 = vector.broadcast %562 : vector<8x1xf32> to vector<8x32xf32>
    %564 = arith.mulf %559, %563 : vector<8x32xf32>
    %565 = vector.broadcast %544 : vector<1x32xf32> to vector<8x32xf32>
    %566 = arith.mulf %564, %565 : vector<8x32xf32>
    %567 = vector.broadcast %546 : vector<1x32xf32> to vector<8x32xf32>
    %568 = arith.addf %566, %567 : vector<8x32xf32>
    %c1_381 = arith.constant 1 : index
    %c0_382 = arith.constant 0 : index
    %c0_383 = arith.constant 0 : index
    %569 = vector.load %arg18[%c1_381, %c0_382, %c0_383] : memref<2x32x64xf32, #tpu.memory_space<vmem>>, vector<1x32x64xf32>
    %570 = vector.shape_cast %569 : vector<1x32x64xf32> to vector<32x64xf32>
    %cst_384 = arith.constant dense<0.000000e+00> : vector<8x64xf32>
    %571 = tpu.matmul %568, %570, %cst_384 {dimension_numbers = #tpu.dot_dimension_numbers<[1], [0], [0], [1], [0, 0, 1, 1], [], []>} : vector<8x32xf32>, vector<32x64xf32>, vector<8x64xf32> -> vector<8x64xf32>
    %c1_385 = arith.constant 1 : index
    %c0_386 = arith.constant 0 : index
    %c0_387 = arith.constant 0 : index
    %572 = vector.load %arg19[%c1_385, %c0_386, %c0_387] : memref<2x1x64xf32, #tpu.memory_space<vmem>>, vector<1x1x64xf32>
    %573 = vector.shape_cast %572 : vector<1x1x64xf32> to vector<1x64xf32>
    %574 = vector.broadcast %573 : vector<1x64xf32> to vector<8x64xf32>
    %575 = arith.addf %571, %574 : vector<8x64xf32>
    %cst_388 = arith.constant 0.000000e+00 : f32
    %576 = vector.broadcast %cst_388 : f32 to vector<8x64xf32>
    %577 = arith.maximumf %575, %576 : vector<8x64xf32>
    %c1_389 = arith.constant 1 : index
    %c0_390 = arith.constant 0 : index
    %c0_391 = arith.constant 0 : index
    %578 = vector.load %arg20[%c1_389, %c0_390, %c0_391] : memref<2x64x32xf32, #tpu.memory_space<vmem>>, vector<1x64x32xf32>
    %579 = vector.shape_cast %578 : vector<1x64x32xf32> to vector<64x32xf32>
    %cst_392 = arith.constant dense<0.000000e+00> : vector<8x32xf32>
    %580 = tpu.matmul %577, %579, %cst_392 {dimension_numbers = #tpu.dot_dimension_numbers<[1], [0], [0], [1], [0, 0, 1, 1], [], []>} : vector<8x64xf32>, vector<64x32xf32>, vector<8x32xf32> -> vector<8x32xf32>
    %581 = arith.addf %542, %580 : vector<8x32xf32>
    %c1_393 = arith.constant 1 : index
    %c0_394 = arith.constant 0 : index
    %c0_395 = arith.constant 0 : index
    %582 = vector.load %arg21[%c1_393, %c0_394, %c0_395] : memref<2x1x32xf32, #tpu.memory_space<vmem>>, vector<1x1x32xf32>
    %583 = vector.shape_cast %582 : vector<1x1x32xf32> to vector<1x32xf32>
    %584 = vector.broadcast %583 : vector<1x32xf32> to vector<8x32xf32>
    %585 = arith.addf %581, %584 : vector<8x32xf32>
    %c0_396 = arith.constant 0 : index
    %c0_397 = arith.constant 0 : index
    %586 = vector.load %arg22[%c0_396, %c0_397] : memref<1x32xf32, #tpu.memory_space<vmem>>, vector<1x32xf32>
    %c0_398 = arith.constant 0 : index
    %c0_399 = arith.constant 0 : index
    %587 = vector.load %arg23[%c0_398, %c0_399] : memref<1x32xf32, #tpu.memory_space<vmem>>, vector<1x32xf32>
    %cst_400 = arith.constant dense<0.000000e+00> : vector<8xf32>
    %588 = vector.multi_reduction <add>, %585, %cst_400 [1] : vector<8x32xf32> to vector<8xf32>
    %589 = vector.shape_cast %588 : vector<8xf32> to vector<8x1xf32>
    %cst_401 = arith.constant 3.200000e+01 : f32
    %590 = vector.broadcast %cst_401 : f32 to vector<8x1xf32>
    %591 = arith.divf %589, %590 : vector<8x1xf32>
    %592 = vector.broadcast %591 : vector<8x1xf32> to vector<8x32xf32>
    %593 = arith.subf %585, %592 : vector<8x32xf32>
    %594 = arith.mulf %593, %593 : vector<8x32xf32>
    %cst_402 = arith.constant dense<0.000000e+00> : vector<8xf32>
    %595 = vector.multi_reduction <add>, %594, %cst_402 [1] : vector<8x32xf32> to vector<8xf32>
    %596 = vector.shape_cast %595 : vector<8xf32> to vector<8x1xf32>
    %cst_403 = arith.constant 3.200000e+01 : f32
    %597 = vector.broadcast %cst_403 : f32 to vector<8x1xf32>
    %598 = arith.divf %596, %597 : vector<8x1xf32>
    %599 = vector.broadcast %591 : vector<8x1xf32> to vector<8x32xf32>
    %600 = arith.subf %585, %599 : vector<8x32xf32>
    %cst_404 = arith.constant 9.99999974E-6 : f32
    %601 = vector.broadcast %cst_404 : f32 to vector<8x1xf32>
    %602 = arith.addf %598, %601 : vector<8x1xf32>
    %603 = math.rsqrt %602 : vector<8x1xf32>
    %604 = vector.broadcast %603 : vector<8x1xf32> to vector<8x32xf32>
    %605 = arith.mulf %600, %604 : vector<8x32xf32>
    %606 = vector.broadcast %586 : vector<1x32xf32> to vector<8x32xf32>
    %607 = arith.mulf %605, %606 : vector<8x32xf32>
    %608 = vector.broadcast %587 : vector<1x32xf32> to vector<8x32xf32>
    %609 = arith.addf %607, %608 : vector<8x32xf32>
    %c0_405 = arith.constant 0 : index
    %c0_406 = arith.constant 0 : index
    %c0_407 = arith.constant 0 : index
    %610 = vector.load %arg24[%c0_405, %c0_406, %c0_407] : memref<1x8x32xf32, #tpu.memory_space<vmem>>, vector<1x8x32xf32>
    %611 = vector.shape_cast %610 : vector<1x8x32xf32> to vector<8x32xf32>
    %612 = vector.shape_cast %609 : vector<8x32xf32> to vector<1x8x32xf32>
    tpu.vector_store %arg24[%c0_405, %c0_406, %c0_407], %612 {strides = array<i32>} : memref<1x8x32xf32, #tpu.memory_space<vmem>>, vector<1x8x32xf32>,
    return
  }
  func.func @transform_0(%arg0: i32) -> (i32, i32, i32) {
    %c0_i32 = arith.constant 0 : i32
    %c0_i32_0 = arith.constant 0 : i32
    %c0_i32_1 = arith.constant 0 : i32
    return %arg0, %c0_i32, %c0_i32_0 : i32, i32, i32
  }
  func.func @transform_1(%arg0: i32) -> (i32, i32, i32) {
    %c0_i32 = arith.constant 0 : i32
    %c0_i32_0 = arith.constant 0 : i32
    %c0_i32_1 = arith.constant 0 : i32
    return %arg0, %c0_i32, %c0_i32_0 : i32, i32, i32
  }
  func.func @transform_2(%arg0: i32) -> (i32, i32) {
    %c0_i32 = arith.constant 0 : i32
    %c0_i32_0 = arith.constant 0 : i32
    %c0_i32_1 = arith.constant 0 : i32
    return %c0_i32, %c0_i32_0 : i32, i32
  }
  func.func @transform_3(%arg0: i32) -> (i32, i32, i32) {
    %c0_i32 = arith.constant 0 : i32
    %c0_i32_0 = arith.constant 0 : i32
    %c0_i32_1 = arith.constant 0 : i32
    return %arg0, %c0_i32, %c0_i32_0 : i32, i32, i32
  }
  func.func @transform_4(%arg0: i32) -> (i32, i32, i32) {
    %c0_i32 = arith.constant 0 : i32
    %c0_i32_0 = arith.constant 0 : i32
    %c0_i32_1 = arith.constant 0 : i32
    return %arg0, %c0_i32, %c0_i32_0 : i32, i32, i32
  }
  func.func @transform_5(%arg0: i32) -> (i32, i32, i32) {
    %c0_i32 = arith.constant 0 : i32
    %c0_i32_0 = arith.constant 0 : i32
    %c0_i32_1 = arith.constant 0 : i32
    return %arg0, %c0_i32, %c0_i32_0 : i32, i32, i32
  }
  func.func @transform_6(%arg0: i32) -> (i32, i32) {
    %c0_i32 = arith.constant 0 : i32
    %c0_i32_0 = arith.constant 0 : i32
    %c0_i32_1 = arith.constant 0 : i32
    return %c0_i32, %c0_i32_0 : i32, i32
  }
  func.func @transform_7(%arg0: i32) -> (i32, i32, i32, i32) {
    %c0_i32 = arith.constant 0 : i32
    %c0_i32_0 = arith.constant 0 : i32
    %c0_i32_1 = arith.constant 0 : i32
    %c0_i32_2 = arith.constant 0 : i32
    %c0_i32_3 = arith.constant 0 : i32
    return %c0_i32, %c0_i32_0, %c0_i32_1, %c0_i32_2 : i32, i32, i32, i32
  }
  func.func @transform_8(%arg0: i32) -> (i32, i32, i32, i32) {
    %c0_i32 = arith.constant 0 : i32
    %c0_i32_0 = arith.constant 0 : i32
    %c0_i32_1 = arith.constant 0 : i32
    %c0_i32_2 = arith.constant 0 : i32
    %c0_i32_3 = arith.constant 0 : i32
    return %c0_i32, %c0_i32_0, %c0_i32_1, %c0_i32_2 : i32, i32, i32, i32
  }
  func.func @transform_9(%arg0: i32) -> (i32, i32, i32, i32) {
    %c0_i32 = arith.constant 0 : i32
    %c0_i32_0 = arith.constant 0 : i32
    %c0_i32_1 = arith.constant 0 : i32
    %c0_i32_2 = arith.constant 0 : i32
    %c0_i32_3 = arith.constant 0 : i32
    return %c0_i32, %c0_i32_0, %c0_i32_1, %c0_i32_2 : i32, i32, i32, i32
  }
  func.func @transform_10(%arg0: i32) -> (i32, i32, i32, i32) {
    %c0_i32 = arith.constant 0 : i32
    %c0_i32_0 = arith.constant 0 : i32
    %c0_i32_1 = arith.constant 0 : i32
    %c0_i32_2 = arith.constant 0 : i32
    %c0_i32_3 = arith.constant 0 : i32
    return %c0_i32, %c0_i32_0, %c0_i32_1, %c0_i32_2 : i32, i32, i32, i32
  }
  func.func @transform_11(%arg0: i32) -> (i32, i32, i32, i32) {
    %c0_i32 = arith.constant 0 : i32
    %c0_i32_0 = arith.constant 0 : i32
    %c0_i32_1 = arith.constant 0 : i32
    %c0_i32_2 = arith.constant 0 : i32
    %c0_i32_3 = arith.constant 0 : i32
    return %c0_i32, %c0_i32_0, %c0_i32_1, %c0_i32_2 : i32, i32, i32, i32
  }
  func.func @transform_12(%arg0: i32) -> (i32, i32, i32, i32) {
    %c0_i32 = arith.constant 0 : i32
    %c0_i32_0 = arith.constant 0 : i32
    %c0_i32_1 = arith.constant 0 : i32
    %c0_i32_2 = arith.constant 0 : i32
    %c0_i32_3 = arith.constant 0 : i32
    return %c0_i32, %c0_i32_0, %c0_i32_1, %c0_i32_2 : i32, i32, i32, i32
  }
  func.func @transform_13(%arg0: i32) -> (i32, i32, i32, i32) {
    %c0_i32 = arith.constant 0 : i32
    %c0_i32_0 = arith.constant 0 : i32
    %c0_i32_1 = arith.constant 0 : i32
    %c0_i32_2 = arith.constant 0 : i32
    %c0_i32_3 = arith.constant 0 : i32
    return %c0_i32, %c0_i32_0, %c0_i32_1, %c0_i32_2 : i32, i32, i32, i32
  }
  func.func @transform_14(%arg0: i32) -> (i32, i32, i32, i32) {
    %c0_i32 = arith.constant 0 : i32
    %c0_i32_0 = arith.constant 0 : i32
    %c0_i32_1 = arith.constant 0 : i32
    %c0_i32_2 = arith.constant 0 : i32
    %c0_i32_3 = arith.constant 0 : i32
    return %c0_i32, %c0_i32_0, %c0_i32_1, %c0_i32_2 : i32, i32, i32, i32
  }
  func.func @transform_15(%arg0: i32) -> (i32, i32, i32, i32) {
    %c0_i32 = arith.constant 0 : i32
    %c0_i32_0 = arith.constant 0 : i32
    %c0_i32_1 = arith.constant 0 : i32
    %c0_i32_2 = arith.constant 0 : i32
    %c0_i32_3 = arith.constant 0 : i32
    return %c0_i32, %c0_i32_0, %c0_i32_1, %c0_i32_2 : i32, i32, i32, i32
  }
  func.func @transform_16(%arg0: i32) -> (i32, i32, i32, i32) {
    %c0_i32 = arith.constant 0 : i32
    %c0_i32_0 = arith.constant 0 : i32
    %c0_i32_1 = arith.constant 0 : i32
    %c0_i32_2 = arith.constant 0 : i32
    %c0_i32_3 = arith.constant 0 : i32
    return %c0_i32, %c0_i32_0, %c0_i32_1, %c0_i32_2 : i32, i32, i32, i32
  }
  func.func @transform_17(%arg0: i32) -> (i32, i32, i32) {
    %c0_i32 = arith.constant 0 : i32
    %c0_i32_0 = arith.constant 0 : i32
    %c0_i32_1 = arith.constant 0 : i32
    %c0_i32_2 = arith.constant 0 : i32
    return %c0_i32, %c0_i32_0, %c0_i32_1 : i32, i32, i32
  }
  func.func @transform_18(%arg0: i32) -> (i32, i32, i32) {
    %c0_i32 = arith.constant 0 : i32
    %c0_i32_0 = arith.constant 0 : i32
    %c0_i32_1 = arith.constant 0 : i32
    %c0_i32_2 = arith.constant 0 : i32
    return %c0_i32, %c0_i32_0, %c0_i32_1 : i32, i32, i32
  }
  func.func @transform_19(%arg0: i32) -> (i32, i32, i32) {
    %c0_i32 = arith.constant 0 : i32
    %c0_i32_0 = arith.constant 0 : i32
    %c0_i32_1 = arith.constant 0 : i32
    %c0_i32_2 = arith.constant 0 : i32
    return %c0_i32, %c0_i32_0, %c0_i32_1 : i32, i32, i32
  }
  func.func @transform_20(%arg0: i32) -> (i32, i32, i32) {
    %c0_i32 = arith.constant 0 : i32
    %c0_i32_0 = arith.constant 0 : i32
    %c0_i32_1 = arith.constant 0 : i32
    %c0_i32_2 = arith.constant 0 : i32
    return %c0_i32, %c0_i32_0, %c0_i32_1 : i32, i32, i32
  }
  func.func @transform_21(%arg0: i32) -> (i32, i32) {
    %c0_i32 = arith.constant 0 : i32
    %c0_i32_0 = arith.constant 0 : i32
    %c0_i32_1 = arith.constant 0 : i32
    return %c0_i32, %c0_i32_0 : i32, i32
  }
  func.func @transform_22(%arg0: i32) -> (i32, i32) {
    %c0_i32 = arith.constant 0 : i32
    %c0_i32_0 = arith.constant 0 : i32
    %c0_i32_1 = arith.constant 0 : i32
    return %c0_i32, %c0_i32_0 : i32, i32
  }
  func.func @transform_23(%arg0: i32) -> (i32, i32, i32) {
    %c0_i32 = arith.constant 0 : i32
    %c0_i32_0 = arith.constant 0 : i32
    %c0_i32_1 = arith.constant 0 : i32
    return %arg0, %c0_i32, %c0_i32_0 : i32, i32, i32
  }
}

</mosaic_0001>

<llo_original>
// kernel: tpu_custom_call.1
$region0: #{tpu_custom_call.1}
  #allocation0 [shape = 'u32[]', space=smem, size = 0x4, offset = 0x4, fixed_abs, tag = 'smem constant byte address 0x4 - core index']
  #allocation1 [shape = 'u32[72,128]{1,0:T(1,128)}', space=vmem, size = 0x9000, scoped, tag = 'internal scratch']
  %s0 = inlined_call_operand.vmem [shape: s32[2,8,1], index: 0, kind: input, shape index: {}]
  %s1 = inlined_call_operand.hbm [shape: f32[2,8,32], index: 1, kind: input, shape index: {}]
  %s2 = inlined_call_operand.hbm [shape: f32[8,8], index: 2, kind: input, shape index: {}]
  %s3 = inlined_call_operand.hbm [shape: f32[2,1,8], index: 3, kind: input, shape index: {}]
  %s4 = inlined_call_operand.hbm [shape: f32[2,8,32], index: 4, kind: input, shape index: {}]
  %s5 = inlined_call_operand.hbm [shape: f32[2,1,8], index: 5, kind: input, shape index: {}]
  %s6 = inlined_call_operand.vmem [shape: f32[64,32], index: 6, kind: input, shape index: {}]
  %s7 = inlined_call_operand.hbm [shape: f32[2,4,1,32], index: 7, kind: input, shape index: {}]
  %s8 = inlined_call_operand.hbm [shape: f32[2,4,1,32], index: 8, kind: input, shape index: {}]
  %s9 = inlined_call_operand.vmem [shape: f32[2,3,32,32], index: 9, kind: input, shape index: {}]
  %s10 = inlined_call_operand.hbm [shape: f32[2,3,32,32], index: 10, kind: input, shape index: {}]
  %s11 = inlined_call_operand.hbm [shape: f32[2,3,32,32], index: 11, kind: input, shape index: {}]
  %s12 = inlined_call_operand.hbm [shape: f32[2,3,32,32], index: 12, kind: input, shape index: {}]
  %s13 = inlined_call_operand.hbm [shape: f32[2,3,1,32], index: 13, kind: input, shape index: {}]
  %s14 = inlined_call_operand.hbm [shape: f32[2,3,1,32], index: 14, kind: input, shape index: {}]
  %s15 = inlined_call_operand.hbm [shape: f32[2,3,1,32], index: 15, kind: input, shape index: {}]
  %s16 = inlined_call_operand.hbm [shape: f32[2,3,1,32], index: 16, kind: input, shape index: {}]
  %s17 = inlined_call_operand.vmem [shape: f32[2,32,64], index: 17, kind: input, shape index: {}]
  %s18 = inlined_call_operand.hbm [shape: f32[2,1,64], index: 18, kind: input, shape index: {}]
  %s19 = inlined_call_operand.vmem [shape: f32[2,64,32], index: 19, kind: input, shape index: {}]
  %s20 = inlined_call_operand.vmem [shape: f32[2,1,32], index: 20, kind: input, shape index: {}]
  %s21 = inlined_call_operand.vmem [shape: f32[1,32], index: 21, kind: input, shape index: {}]
  %s22 = inlined_call_operand.vmem [shape: f32[1,32], index: 22, kind: input, shape index: {}]
  %s23 = inlined_call_operand.hbm [shape: f32[2,8,32], index: 23, kind: output, shape index: {}]
  %s24 = sld [smem:[#allocation0]]
  $region185: #{tpu_custom_call.1} parent=0
    _
  %s26 = ssub.s32 1, %s24
  %s27 = scalar_select 0, %s26, %s24
  $region1: #{tpu_custom_call.1} parent=0
    #allocation2 [shape = 'u8[8192]{0}', space=vmem, size = 0x2000, scoped, tag = 'input window, operand 1']
    #allocation3 [shape = 's32[2]{0}', space=sflag, size = 0x8, scoped, tag = 'scoped memory for tpu_custom_call.1']
    #allocation4 [shape = 's32[2]{0}', space=sflag, size = 0x8, scoped, tag = 'scoped memory for tpu_custom_call.1']
    #allocation5 [shape = 'u8[4096]{0}', space=vmem, size = 0x1000, scoped, tag = 'input window, operand 2, single buffered']
    #allocation6 [shape = 's32[1]{0}', space=sflag, size = 0x4, scoped, tag = 'scoped memory for tpu_custom_call.1']
    #allocation7 [shape = 'u8[1024]{0}', space=vmem, size = 0x400, scoped, tag = 'input window, operand 3']
    #allocation8 [shape = 'u8[8192]{0}', space=vmem, size = 0x2000, scoped, tag = 'input window, operand 4']
    #allocation9 [shape = 'u8[1024]{0}', space=vmem, size = 0x400, scoped, tag = 'input window, operand 5']
    #allocation10 [shape = 'u8[4096]{0}', space=vmem, size = 0x1000, scoped, tag = 'input window, operand 7, single buffered']
    #allocation11 [shape = 'u8[4096]{0}', space=vmem, size = 0x1000, scoped, tag = 'input window, operand 8, single buffered']
    #allocation12 [shape = 's32[1]{0}', space=sflag, size = 0x4, scoped, tag = 'scoped memory for tpu_custom_call.1']
    #allocation13 [shape = 'u8[98304]{0}', space=vmem, size = 0x18000, scoped, tag = 'input window, operand 10, single buffered']
    #allocation14 [shape = 'u8[98304]{0}', space=vmem, size = 0x18000, scoped, tag = 'input window, operand 11, single buffered']
    #allocation15 [shape = 's32[1]{0}', space=sflag, size = 0x4, scoped, tag = 'scoped memory for tpu_custom_call.1']
    #allocation16 [shape = 'u8[98304]{0}', space=vmem, size = 0x18000, scoped, tag = 'input window, operand 12, single buffered']
    #allocation17 [shape = 'u8[3072]{0}', space=vmem, size = 0xc00, scoped, tag = 'input window, operand 13, single buffered']
    #allocation18 [shape = 's32[1]{0}', space=sflag, size = 0x4, scoped, tag = 'scoped memory for tpu_custom_call.1']
    #allocation19 [shape = 'u8[3072]{0}', space=vmem, size = 0xc00, scoped, tag = 'input window, operand 14, single buffered']
    #allocation20 [shape = 'u8[3072]{0}', space=vmem, size = 0xc00, scoped, tag = 'input window, operand 15, single buffered']
    #allocation21 [shape = 's32[1]{0}', space=sflag, size = 0x4, scoped, tag = 'scoped memory for tpu_custom_call.1']
    #allocation22 [shape = 'u8[3072]{0}', space=vmem, size = 0xc00, scoped, tag = 'input window, operand 16, single buffered']
    #allocation23 [shape = 'u8[1024]{0}', space=vmem, size = 0x400, scoped, tag = 'input window, operand 18, single buffered']
    #allocation24 [shape = 's32[1]{0}', space=sflag, size = 0x4, scoped, tag = 'scoped memory for tpu_custom_call.1']
    #allocation25 [shape = 'u8[8192]{0}', space=vmem, size = 0x2000, scoped, tag = 'output window, operand 0']
    %28 = vsyncpa [#allocation3], 0
    %s29 = scalar_lea.sflag [#allocation3], 1
    %30 = vsyncpa %s29, 0
    %31 = vsyncpa [#allocation6], 0
    %32 = vsyncpa [#allocation12], 0
    %33 = vsyncpa [#allocation15], 0
    %34 = vsyncpa [#allocation18], 0
    %35 = vsyncpa [#allocation21], 0
    %36 = vsyncpa [#allocation24], 0
    %37 = vsyncpa [#allocation4], 0
    %s38 = scalar_lea.sflag [#allocation4], 1
    %39 = vsyncpa %s38, 0
    loop: start=0, step=1, limit=4
    $region2: #{tpu_custom_call.1} parent=1 // loop_pre_header
      _
    $region3: #{tpu_custom_call.1} parent=1 // loop_header
      %s41 = sphi 0, %s45
      %p42 = scmp.ge.s32.totalorder %s41, 4
      %s51 = sphi 0, %s53
      %s54 = sphi 0, %s51
      %s55 = sphi 0, %s54
      %s71 = sphi 0, %s55
      %s77 = sphi 0, %s79
      %s80 = sphi 0, %s77
      %s81 = sphi 0, %s80
      %s97 = sphi 0, %s81
      %s101 = sphi 0, %s101
      %s103 = sphi 0, %s101
      %s104 = sphi 0, %s103
      %s118 = sphi 0, %s104
      %s124 = sphi 0, %s126
      %s127 = sphi 0, %s124
      %s128 = sphi 0, %s127
      %s144 = sphi 0, %s128
      %s150 = sphi 0, %s152
      %s153 = sphi 0, %s150
      %s154 = sphi 0, %s153
      %s170 = sphi 0, %s154
      %s176 = sphi 0, %s178
      %s179 = sphi 0, %s176
      %s180 = sphi 0, %s179
      %s196 = sphi 0, %s180
      %s200 = sphi 0, %s200
      %s202 = sphi 0, %s200
      %s203 = sphi 0, %s202
      %s217 = sphi 0, %s203
      %s221 = sphi 0, %s221
      %s223 = sphi 0, %s221
      %s224 = sphi 0, %s223
      %s238 = sphi 0, %s224
      %s242 = sphi 0, %s242
      %s244 = sphi 0, %s242
      %s245 = sphi 0, %s244
      %s259 = sphi 0, %s245
      %s263 = sphi 0, %s263
      %s265 = sphi 0, %s263
      %s266 = sphi 0, %s265
      %s280 = sphi 0, %s266
      %s284 = sphi 0, %s284
      %s286 = sphi 0, %s284
      %s287 = sphi 0, %s286
      %s301 = sphi 0, %s287
      %s305 = sphi 0, %s305
      %s307 = sphi 0, %s305
      %s308 = sphi 0, %s307
      %s322 = sphi 0, %s308
      %s326 = sphi 0, %s326
      %s328 = sphi 0, %s326
      %s329 = sphi 0, %s328
      %s343 = sphi 0, %s329
      %s347 = sphi 0, %s347
      %s349 = sphi 0, %s347
      %s350 = sphi 0, %s349
      %s364 = sphi 0, %s350
      %s368 = sphi 0, %s368
      %s370 = sphi 0, %s368
      %s371 = sphi 0, %s370
      %s385 = sphi 0, %s371
      %s389 = sphi 0, %s389
      %s391 = sphi 0, %s389
      %s392 = sphi 0, %s391
      %s406 = sphi 0, %s392
      %s410 = sphi 0, %s410
      %s412 = sphi 0, %s410
      %s413 = sphi 0, %s412
      %s427 = sphi 0, %s413
      %s431 = sphi 0, %s431
      %s433 = sphi 0, %s431
      %s434 = sphi 0, %s433
      %s448 = sphi 0, %s434
      %s452 = sphi 0, %s452
      %s454 = sphi 0, %s452
      %s455 = sphi 0, %s454
      %s469 = sphi 0, %s455
      %s473 = sphi 0, %s473
      %s475 = sphi 0, %s473
      %s476 = sphi 0, %s475
      %s490 = sphi 0, %s476
      %s494 = sphi 0, %s494
      %s496 = sphi 0, %s494
      %s497 = sphi 0, %s496
      %s511 = sphi 0, %s497
      %s515 = sphi 0, %s515
      %s517 = sphi 0, %s515
      %s518 = sphi 0, %s517
      %s532 = sphi 0, %s518
      %s536 = sphi 0, %s536
      %s538 = sphi 0, %s536
      %s539 = sphi 0, %s538
      %s553 = sphi 0, %s539
      %s559 = sphi 0, %s561
      %s562 = sphi 0, %s559
      %s563 = sphi 0, %s562
      %s579 = sphi 0, %s563
    $region4: #{tpu_custom_call.1} parent=1 // loop_header_branch
      %44 = sbr.rel (%p42) target = $region8
    $region5: #{tpu_custom_call.1} parent=1 // loop_body
      %s46 = ssub.s32 %s41, 1
      %s47 = ssub.s32 %s41, 2
      %s48 = sadd.s32 %s41, 1
      %s49 = ssub.s32 %s41, %s48
      %p50 = scmp.eq.s32.totalorder %s49, 0
      %s52 = sadd.s32 %s51, 1
      %s53 = scalar_select %p50, %s51, %s52
      %p56 = pneg %p50
      %p57 = scmp.eq.s32.totalorder %s41, 1
      %p58 = por %p56, %p57
      %p59 = scmp.ne.s32.totalorder %s51, %s54
      %p60 = scmp.eq.s32.totalorder %s41, 0
      %p61 = por %p59, %p60
      %p62 = scmp.ne.s32.totalorder %s51, %s54
      %p63 = scmp.eq.s32.totalorder %s46, 1
      %p64 = por %p62, %p63
      %p65 = scmp.ne.s32.totalorder %s54, %s55
      %p66 = scmp.eq.s32.totalorder %s46, 0
      %p67 = por %p65, %p66
      %p68 = scmp.ne.s32.totalorder %s54, %s55
      %p69 = scmp.eq.s32.totalorder %s47, 1
      %p70 = por %p68, %p69
      %p72 = scmp.ne.s32.totalorder %s55, %s71
      %p73 = scmp.eq.s32.totalorder %s47, 0
      %p74 = por %p72, %p73
      %s75 = ssub.s32 %s41, %s48
      %p76 = scmp.eq.s32.totalorder %s75, 0
      %s78 = sadd.s32 %s77, 1
      %s79 = scalar_select %p76, %s77, %s78
      %p82 = pneg %p76
      %p83 = scmp.eq.s32.totalorder %s41, 1
      %p84 = por %p82, %p83
      %p85 = scmp.ne.s32.totalorder %s77, %s80
      %p86 = scmp.eq.s32.totalorder %s41, 0
      %p87 = por %p85, %p86
      %p88 = scmp.ne.s32.totalorder %s77, %s80
      %p89 = scmp.eq.s32.totalorder %s46, 1
      %p90 = por %p88, %p89
      %p91 = scmp.ne.s32.totalorder %s80, %s81
      %p92 = scmp.eq.s32.totalorder %s46, 0
      %p93 = por %p91, %p92
      %p94 = scmp.ne.s32.totalorder %s80, %s81
      %p95 = scmp.eq.s32.totalorder %s47, 1
      %p96 = por %p94, %p95
      %p98 = scmp.ne.s32.totalorder %s81, %s97
      %p99 = scmp.eq.s32.totalorder %s47, 0
      %p100 = por %p98, %p99
      %s102 = sadd.s32 %s101, 1
      %p105 = scmp.eq.s32.totalorder %s41, 1
      %p106 = scmp.ne.s32.totalorder %s101, %s103
      %p107 = scmp.eq.s32.totalorder %s41, 0
      %p108 = por %p106, %p107
      %p109 = scmp.ne.s32.totalorder %s101, %s103
      %p110 = scmp.eq.s32.totalorder %s46, 1
      %p111 = por %p109, %p110
      %p112 = scmp.ne.s32.totalorder %s103, %s104
      %p113 = scmp.eq.s32.totalorder %s46, 0
      %p114 = por %p112, %p113
      %p115 = scmp.ne.s32.totalorder %s103, %s104
      %p116 = scmp.eq.s32.totalorder %s47, 1
      %p117 = por %p115, %p116
      %p119 = scmp.ne.s32.totalorder %s104, %s118
      %p120 = scmp.eq.s32.totalorder %s47, 0
      %p121 = por %p119, %p120
      %s122 = ssub.s32 %s41, %s48
      %p123 = scmp.eq.s32.totalorder %s122, 0
      %s125 = sadd.s32 %s124, 1
      %s126 = scalar_select %p123, %s124, %s125
      %p129 = pneg %p123
      %p130 = scmp.eq.s32.totalorder %s41, 1
      %p131 = por %p129, %p130
      %p132 = scmp.ne.s32.totalorder %s124, %s127
      %p133 = scmp.eq.s32.totalorder %s41, 0
      %p134 = por %p132, %p133
      %p135 = scmp.ne.s32.totalorder %s124, %s127
      %p136 = scmp.eq.s32.totalorder %s46, 1
      %p137 = por %p135, %p136
      %p138 = scmp.ne.s32.totalorder %s127, %s128
      %p139 = scmp.eq.s32.totalorder %s46, 0
      %p140 = por %p138, %p139
      %p141 = scmp.ne.s32.totalorder %s127, %s128
      %p142 = scmp.eq.s32.totalorder %s47, 1
      %p143 = por %p141, %p142
      %p145 = scmp.ne.s32.totalorder %s128, %s144
      %p146 = scmp.eq.s32.totalorder %s47, 0
      %p147 = por %p145, %p146
      %s148 = ssub.s32 %s41, %s48
      %p149 = scmp.eq.s32.totalorder %s148, 0
      %s151 = sadd.s32 %s150, 1
      %s152 = scalar_select %p149, %s150, %s151
      %p155 = pneg %p149
      %p156 = scmp.eq.s32.totalorder %s41, 1
      %p157 = por %p155, %p156
      %p158 = scmp.ne.s32.totalorder %s150, %s153
      %p159 = scmp.eq.s32.totalorder %s41, 0
      %p160 = por %p158, %p159
      %p161 = scmp.ne.s32.totalorder %s150, %s153
      %p162 = scmp.eq.s32.totalorder %s46, 1
      %p163 = por %p161, %p162
      %p164 = scmp.ne.s32.totalorder %s153, %s154
      %p165 = scmp.eq.s32.totalorder %s46, 0
      %p166 = por %p164, %p165
      %p167 = scmp.ne.s32.totalorder %s153, %s154
      %p168 = scmp.eq.s32.totalorder %s47, 1
      %p169 = por %p167, %p168
      %p171 = scmp.ne.s32.totalorder %s154, %s170
      %p172 = scmp.eq.s32.totalorder %s47, 0
      %p173 = por %p171, %p172
      %s174 = ssub.s32 %s41, %s48
      %p175 = scmp.eq.s32.totalorder %s174, 0
      %s177 = sadd.s32 %s176, 1
      %s178 = scalar_select %p175, %s176, %s177
      %p181 = pneg %p175
      %p182 = scmp.eq.s32.totalorder %s41, 1
      %p183 = por %p181, %p182
      %p184 = scmp.ne.s32.totalorder %s176, %s179
      %p185 = scmp.eq.s32.totalorder %s41, 0
      %p186 = por %p184, %p185
      %p187 = scmp.ne.s32.totalorder %s176, %s179
      %p188 = scmp.eq.s32.totalorder %s46, 1
      %p189 = por %p187, %p188
      %p190 = scmp.ne.s32.totalorder %s179, %s180
      %p191 = scmp.eq.s32.totalorder %s46, 0
      %p192 = por %p190, %p191
      %p193 = scmp.ne.s32.totalorder %s179, %s180
      %p194 = scmp.eq.s32.totalorder %s47, 1
      %p195 = por %p193, %p194
      %p197 = scmp.ne.s32.totalorder %s180, %s196
      %p198 = scmp.eq.s32.totalorder %s47, 0
      %p199 = por %p197, %p198
      %s201 = sadd.s32 %s200, 1
      %p204 = scmp.eq.s32.totalorder %s41, 1
      %p205 = scmp.ne.s32.totalorder %s200, %s202
      %p206 = scmp.eq.s32.totalorder %s41, 0
      %p207 = por %p205, %p206
      %p208 = scmp.ne.s32.totalorder %s200, %s202
      %p209 = scmp.eq.s32.totalorder %s46, 1
      %p210 = por %p208, %p209
      %p211 = scmp.ne.s32.totalorder %s202, %s203
      %p212 = scmp.eq.s32.totalorder %s46, 0
      %p213 = por %p211, %p212
      %p214 = scmp.ne.s32.totalorder %s202, %s203
      %p215 = scmp.eq.s32.totalorder %s47, 1
      %p216 = por %p214, %p215
      %p218 = scmp.ne.s32.totalorder %s203, %s217
      %p219 = scmp.eq.s32.totalorder %s47, 0
      %p220 = por %p218, %p219
      %s222 = sadd.s32 %s221, 1
      %p225 = scmp.eq.s32.totalorder %s41, 1
      %p226 = scmp.ne.s32.totalorder %s221, %s223
      %p227 = scmp.eq.s32.totalorder %s41, 0
      %p228 = por %p226, %p227
      %p229 = scmp.ne.s32.totalorder %s221, %s223
      %p230 = scmp.eq.s32.totalorder %s46, 1
      %p231 = por %p229, %p230
      %p232 = scmp.ne.s32.totalorder %s223, %s224
      %p233 = scmp.eq.s32.totalorder %s46, 0
      %p234 = por %p232, %p233
      %p235 = scmp.ne.s32.totalorder %s223, %s224
      %p236 = scmp.eq.s32.totalorder %s47, 1
      %p237 = por %p235, %p236
      %p239 = scmp.ne.s32.totalorder %s224, %s238
      %p240 = scmp.eq.s32.totalorder %s47, 0
      %p241 = por %p239, %p240
      %s243 = sadd.s32 %s242, 1
      %p246 = scmp.eq.s32.totalorder %s41, 1
      %p247 = scmp.ne.s32.totalorder %s242, %s244
      %p248 = scmp.eq.s32.totalorder %s41, 0
      %p249 = por %p247, %p248
      %p250 = scmp.ne.s32.totalorder %s242, %s244
      %p251 = scmp.eq.s32.totalorder %s46, 1
      %p252 = por %p250, %p251
      %p253 = scmp.ne.s32.totalorder %s244, %s245
      %p254 = scmp.eq.s32.totalorder %s46, 0
      %p255 = por %p253, %p254
      %p256 = scmp.ne.s32.totalorder %s244, %s245
      %p257 = scmp.eq.s32.totalorder %s47, 1
      %p258 = por %p256, %p257
      %p260 = scmp.ne.s32.totalorder %s245, %s259
      %p261 = scmp.eq.s32.totalorder %s47, 0
      %p262 = por %p260, %p261
      %s264 = sadd.s32 %s263, 1
      %p267 = scmp.eq.s32.totalorder %s41, 1
      %p268 = scmp.ne.s32.totalorder %s263, %s265
      %p269 = scmp.eq.s32.totalorder %s41, 0
      %p270 = por %p268, %p269
      %p271 = scmp.ne.s32.totalorder %s263, %s265
      %p272 = scmp.eq.s32.totalorder %s46, 1
      %p273 = por %p271, %p272
      %p274 = scmp.ne.s32.totalorder %s265, %s266
      %p275 = scmp.eq.s32.totalorder %s46, 0
      %p276 = por %p274, %p275
      %p277 = scmp.ne.s32.totalorder %s265, %s266
      %p278 = scmp.eq.s32.totalorder %s47, 1
      %p279 = por %p277, %p278
      %p281 = scmp.ne.s32.totalorder %s266, %s280
      %p282 = scmp.eq.s32.totalorder %s47, 0
      %p283 = por %p281, %p282
      %s285 = sadd.s32 %s284, 1
      %p288 = scmp.eq.s32.totalorder %s41, 1
      %p289 = scmp.ne.s32.totalorder %s284, %s286
      %p290 = scmp.eq.s32.totalorder %s41, 0
      %p291 = por %p289, %p290
      %p292 = scmp.ne.s32.totalorder %s284, %s286
      %p293 = scmp.eq.s32.totalorder %s46, 1
      %p294 = por %p292, %p293
      %p295 = scmp.ne.s32.totalorder %s286, %s287
      %p296 = scmp.eq.s32.totalorder %s46, 0
      %p297 = por %p295, %p296
      %p298 = scmp.ne.s32.totalorder %s286, %s287
      %p299 = scmp.eq.s32.totalorder %s47, 1
      %p300 = por %p298, %p299
      %p302 = scmp.ne.s32.totalorder %s287, %s301
      %p303 = scmp.eq.s32.totalorder %s47, 0
      %p304 = por %p302, %p303
      %s306 = sadd.s32 %s305, 1
      %p309 = scmp.eq.s32.totalorder %s41, 1
      %p310 = scmp.ne.s32.totalorder %s305, %s307
      %p311 = scmp.eq.s32.totalorder %s41, 0
      %p312 = por %p310, %p311
      %p313 = scmp.ne.s32.totalorder %s305, %s307
      %p314 = scmp.eq.s32.totalorder %s46, 1
      %p315 = por %p313, %p314
      %p316 = scmp.ne.s32.totalorder %s307, %s308
      %p317 = scmp.eq.s32.totalorder %s46, 0
      %p318 = por %p316, %p317
      %p319 = scmp.ne.s32.totalorder %s307, %s308
      %p320 = scmp.eq.s32.totalorder %s47, 1
      %p321 = por %p319, %p320
      %p323 = scmp.ne.s32.totalorder %s308, %s322
      %p324 = scmp.eq.s32.totalorder %s47, 0
      %p325 = por %p323, %p324
      %s327 = sadd.s32 %s326, 1
      %p330 = scmp.eq.s32.totalorder %s41, 1
      %p331 = scmp.ne.s32.totalorder %s326, %s328
      %p332 = scmp.eq.s32.totalorder %s41, 0
      %p333 = por %p331, %p332
      %p334 = scmp.ne.s32.totalorder %s326, %s328
      %p335 = scmp.eq.s32.totalorder %s46, 1
      %p336 = por %p334, %p335
      %p337 = scmp.ne.s32.totalorder %s328, %s329
      %p338 = scmp.eq.s32.totalorder %s46, 0
      %p339 = por %p337, %p338
      %p340 = scmp.ne.s32.totalorder %s328, %s329
      %p341 = scmp.eq.s32.totalorder %s47, 1
      %p342 = por %p340, %p341
      %p344 = scmp.ne.s32.totalorder %s329, %s343
      %p345 = scmp.eq.s32.totalorder %s47, 0
      %p346 = por %p344, %p345
      %s348 = sadd.s32 %s347, 1
      %p351 = scmp.eq.s32.totalorder %s41, 1
      %p352 = scmp.ne.s32.totalorder %s347, %s349
      %p353 = scmp.eq.s32.totalorder %s41, 0
      %p354 = por %p352, %p353
      %p355 = scmp.ne.s32.totalorder %s347, %s349
      %p356 = scmp.eq.s32.totalorder %s46, 1
      %p357 = por %p355, %p356
      %p358 = scmp.ne.s32.totalorder %s349, %s350
      %p359 = scmp.eq.s32.totalorder %s46, 0
      %p360 = por %p358, %p359
      %p361 = scmp.ne.s32.totalorder %s349, %s350
      %p362 = scmp.eq.s32.totalorder %s47, 1
      %p363 = por %p361, %p362
      %p365 = scmp.ne.s32.totalorder %s350, %s364
      %p366 = scmp.eq.s32.totalorder %s47, 0
      %p367 = por %p365, %p366
      %s369 = sadd.s32 %s368, 1
      %p372 = scmp.eq.s32.totalorder %s41, 1
      %p373 = scmp.ne.s32.totalorder %s368, %s370
      %p374 = scmp.eq.s32.totalorder %s41, 0
      %p375 = por %p373, %p374
      %p376 = scmp.ne.s32.totalorder %s368, %s370
      %p377 = scmp.eq.s32.totalorder %s46, 1
      %p378 = por %p376, %p377
      %p379 = scmp.ne.s32.totalorder %s370, %s371
      %p380 = scmp.eq.s32.totalorder %s46, 0
      %p381 = por %p379, %p380
      %p382 = scmp.ne.s32.totalorder %s370, %s371
      %p383 = scmp.eq.s32.totalorder %s47, 1
      %p384 = por %p382, %p383
      %p386 = scmp.ne.s32.totalorder %s371, %s385
      %p387 = scmp.eq.s32.totalorder %s47, 0
      %p388 = por %p386, %p387
      %s390 = sadd.s32 %s389, 1
      %p393 = scmp.eq.s32.totalorder %s41, 1
      %p394 = scmp.ne.s32.totalorder %s389, %s391
      %p395 = scmp.eq.s32.totalorder %s41, 0
      %p396 = por %p394, %p395
      %p397 = scmp.ne.s32.totalorder %s389, %s391
      %p398 = scmp.eq.s32.totalorder %s46, 1
      %p399 = por %p397, %p398
      %p400 = scmp.ne.s32.totalorder %s391, %s392
      %p401 = scmp.eq.s32.totalorder %s46, 0
      %p402 = por %p400, %p401
      %p403 = scmp.ne.s32.totalorder %s391, %s392
      %p404 = scmp.eq.s32.totalorder %s47, 1
      %p405 = por %p403, %p404
      %p407 = scmp.ne.s32.totalorder %s392, %s406
      %p408 = scmp.eq.s32.totalorder %s47, 0
      %p409 = por %p407, %p408
      %s411 = sadd.s32 %s410, 1
      %p414 = scmp.eq.s32.totalorder %s41, 1
      %p415 = scmp.ne.s32.totalorder %s410, %s412
      %p416 = scmp.eq.s32.totalorder %s41, 0
      %p417 = por %p415, %p416
      %p418 = scmp.ne.s32.totalorder %s410, %s412
      %p419 = scmp.eq.s32.totalorder %s46, 1
      %p420 = por %p418, %p419
      %p421 = scmp.ne.s32.totalorder %s412, %s413
      %p422 = scmp.eq.s32.totalorder %s46, 0
      %p423 = por %p421, %p422
      %p424 = scmp.ne.s32.totalorder %s412, %s413
      %p425 = scmp.eq.s32.totalorder %s47, 1
      %p426 = por %p424, %p425
      %p428 = scmp.ne.s32.totalorder %s413, %s427
      %p429 = scmp.eq.s32.totalorder %s47, 0
      %p430 = por %p428, %p429
      %s432 = sadd.s32 %s431, 1
      %p435 = scmp.eq.s32.totalorder %s41, 1
      %p436 = scmp.ne.s32.totalorder %s431, %s433
      %p437 = scmp.eq.s32.totalorder %s41, 0
      %p438 = por %p436, %p437
      %p439 = scmp.ne.s32.totalorder %s431, %s433
      %p440 = scmp.eq.s32.totalorder %s46, 1
      %p441 = por %p439, %p440
      %p442 = scmp.ne.s32.totalorder %s433, %s434
      %p443 = scmp.eq.s32.totalorder %s46, 0
      %p444 = por %p442, %p443
      %p445 = scmp.ne.s32.totalorder %s433, %s434
      %p446 = scmp.eq.s32.totalorder %s47, 1
      %p447 = por %p445, %p446
      %p449 = scmp.ne.s32.totalorder %s434, %s448
      %p450 = scmp.eq.s32.totalorder %s47, 0
      %p451 = por %p449, %p450
      %s453 = sadd.s32 %s452, 1
      %p456 = scmp.eq.s32.totalorder %s41, 1
      %p457 = scmp.ne.s32.totalorder %s452, %s454
      %p458 = scmp.eq.s32.totalorder %s41, 0
      %p459 = por %p457, %p458
      %p460 = scmp.ne.s32.totalorder %s452, %s454
      %p461 = scmp.eq.s32.totalorder %s46, 1
      %p462 = por %p460, %p461
      %p463 = scmp.ne.s32.totalorder %s454, %s455
      %p464 = scmp.eq.s32.totalorder %s46, 0
      %p465 = por %p463, %p464
      %p466 = scmp.ne.s32.totalorder %s454, %s455
      %p467 = scmp.eq.s32.totalorder %s47, 1
      %p468 = por %p466, %p467
      %p470 = scmp.ne.s32.totalorder %s455, %s469
      %p471 = scmp.eq.s32.totalorder %s47, 0
      %p472 = por %p470, %p471
      %s474 = sadd.s32 %s473, 1
      %p477 = scmp.eq.s32.totalorder %s41, 1
      %p478 = scmp.ne.s32.totalorder %s473, %s475
      %p479 = scmp.eq.s32.totalorder %s41, 0
      %p480 = por %p478, %p479
      %p481 = scmp.ne.s32.totalorder %s473, %s475
      %p482 = scmp.eq.s32.totalorder %s46, 1
      %p483 = por %p481, %p482
      %p484 = scmp.ne.s32.totalorder %s475, %s476
      %p485 = scmp.eq.s32.totalorder %s46, 0
      %p486 = por %p484, %p485
      %p487 = scmp.ne.s32.totalorder %s475, %s476
      %p488 = scmp.eq.s32.totalorder %s47, 1
      %p489 = por %p487, %p488
      %p491 = scmp.ne.s32.totalorder %s476, %s490
      %p492 = scmp.eq.s32.totalorder %s47, 0
      %p493 = por %p491, %p492
      %s495 = sadd.s32 %s494, 1
      %p498 = scmp.eq.s32.totalorder %s41, 1
      %p499 = scmp.ne.s32.totalorder %s494, %s496
      %p500 = scmp.eq.s32.totalorder %s41, 0
      %p501 = por %p499, %p500
      %p502 = scmp.ne.s32.totalorder %s494, %s496
      %p503 = scmp.eq.s32.totalorder %s46, 1
      %p504 = por %p502, %p503
      %p505 = scmp.ne.s32.totalorder %s496, %s497
      %p506 = scmp.eq.s32.totalorder %s46, 0
      %p507 = por %p505, %p506
      %p508 = scmp.ne.s32.totalorder %s496, %s497
      %p509 = scmp.eq.s32.totalorder %s47, 1
      %p510 = por %p508, %p509
      %p512 = scmp.ne.s32.totalorder %s497, %s511
      %p513 = scmp.eq.s32.totalorder %s47, 0
      %p514 = por %p512, %p513
      %s516 = sadd.s32 %s515, 1
      %p519 = scmp.eq.s32.totalorder %s41, 1
      %p520 = scmp.ne.s32.totalorder %s515, %s517
      %p521 = scmp.eq.s32.totalorder %s41, 0
      %p522 = por %p520, %p521
      %p523 = scmp.ne.s32.totalorder %s515, %s517
      %p524 = scmp.eq.s32.totalorder %s46, 1
      %p525 = por %p523, %p524
      %p526 = scmp.ne.s32.totalorder %s517, %s518
      %p527 = scmp.eq.s32.totalorder %s46, 0
      %p528 = por %p526, %p527
      %p529 = scmp.ne.s32.totalorder %s517, %s518
      %p530 = scmp.eq.s32.totalorder %s47, 1
      %p531 = por %p529, %p530
      %p533 = scmp.ne.s32.totalorder %s518, %s532
      %p534 = scmp.eq.s32.totalorder %s47, 0
      %p535 = por %p533, %p534
      %s537 = sadd.s32 %s536, 1
      %p540 = scmp.eq.s32.totalorder %s41, 1
      %p541 = scmp.ne.s32.totalorder %s536, %s538
      %p542 = scmp.eq.s32.totalorder %s41, 0
      %p543 = por %p541, %p542
      %p544 = scmp.ne.s32.totalorder %s536, %s538
      %p545 = scmp.eq.s32.totalorder %s46, 1
      %p546 = por %p544, %p545
      %p547 = scmp.ne.s32.totalorder %s538, %s539
      %p548 = scmp.eq.s32.totalorder %s46, 0
      %p549 = por %p547, %p548
      %p550 = scmp.ne.s32.totalorder %s538, %s539
      %p551 = scmp.eq.s32.totalorder %s47, 1
      %p552 = por %p550, %p551
      %p554 = scmp.ne.s32.totalorder %s539, %s553
      %p555 = scmp.eq.s32.totalorder %s47, 0
      %p556 = por %p554, %p555
      %s557 = ssub.s32 %s41, %s48
      %p558 = scmp.eq.s32.totalorder %s557, 0
      %s560 = sadd.s32 %s559, 1
      %s561 = scalar_select %p558, %s559, %s560
      %p564 = pneg %p558
      %p565 = scmp.eq.s32.totalorder %s41, 1
      %p566 = por %p564, %p565
      %p567 = scmp.ne.s32.totalorder %s559, %s562
      %p568 = scmp.eq.s32.totalorder %s41, 0
      %p569 = por %p567, %p568
      %p570 = scmp.ne.s32.totalorder %s559, %s562
      %p571 = scmp.eq.s32.totalorder %s46, 1
      %p572 = por %p570, %p571
      %p573 = scmp.ne.s32.totalorder %s562, %s563
      %p574 = scmp.eq.s32.totalorder %s46, 0
      %p575 = por %p573, %p574
      %p576 = scmp.ne.s32.totalorder %s562, %s563
      %p577 = scmp.eq.s32.totalorder %s47, 1
      %p578 = por %p576, %p577
      %p580 = scmp.ne.s32.totalorder %s563, %s579
      %p581 = scmp.eq.s32.totalorder %s47, 0
      %p582 = por %p580, %p581
      %p583 = scmp.le.s32.totalorder 1, %s41
      %p584 = scmp.lt.s32.totalorder %s41, 3
      %p585 = pnand %p583, %p584
      %p586 = pneg %p585
      // Predicated region
      $region9: #{tpu_custom_call.1} parent=5 // pred_check
        _
      $region10: #{tpu_custom_call.1} parent=5 // pred_check_branch
        %588 = sbr.rel (%p585) target = $region12
      $region11: #{tpu_custom_call.1} parent=5 // pred_region
        %s589 = ssub.s32 %s41, 1
        // Predicated region
        $region13: #{tpu_custom_call.1} parent=11 // pred_check
          %p590 = pneg %p114
        $region14: #{tpu_custom_call.1} parent=11 // pred_check_branch
          %592 = sbr.rel (%p590) target = $region16
        $region15: #{tpu_custom_call.1} parent=11 // pred_region
          %594 = vsyncadd [#allocation6], 0
          %s596 = sshll.u32 %s2, 4
          %s597 = int_to_ptr.hbm [resolvable:$true] %s596
          %s598 = sshll.u32 [#allocation5], 4
          %s599 = int_to_ptr.vmem [resolvable:$true] %s598
          %601 = dma.hbm_to_vmem [thread:$0]  %s597, 128, %s599, [#allocation6]
        $region16: #{tpu_custom_call.1} parent=11 // pred_fallthru
          _
        // Predicated region
        $region17: #{tpu_custom_call.1} parent=11 // pred_check
          %p602 = pneg %p213
        $region18: #{tpu_custom_call.1} parent=11 // pred_check_branch
          %604 = sbr.rel (%p602) target = $region20
        $region19: #{tpu_custom_call.1} parent=11 // pred_region
          _
        $region20: #{tpu_custom_call.1} parent=11 // pred_fallthru
          _
        // Predicated region
        $region21: #{tpu_custom_call.1} parent=11 // pred_check
          %p605 = pneg %p234
        $region22: #{tpu_custom_call.1} parent=11 // pred_check_branch
          %607 = sbr.rel (%p605) target = $region24
        $region23: #{tpu_custom_call.1} parent=11 // pred_region
          %609 = vsyncadd [#allocation6], 0
          %s610 = sshll.u32 %s7, 4
          %s611 = int_to_ptr.hbm [resolvable:$true] %s610
          %s612 = sshll.u32 [#allocation10], 4
          %s613 = int_to_ptr.vmem [resolvable:$true] %s612
          %618 = dma.hbm_to_vmem [thread:$0]  %s611, 128, %s613, [#allocation6], 16, 16, 1
        $region24: #{tpu_custom_call.1} parent=11 // pred_fallthru
          _
        // Predicated region
        $region25: #{tpu_custom_call.1} parent=11 // pred_check
          %p619 = pneg %p255
        $region26: #{tpu_custom_call.1} parent=11 // pred_check_branch
          %621 = sbr.rel (%p619) target = $region28
        $region27: #{tpu_custom_call.1} parent=11 // pred_region
          %623 = vsyncadd [#allocation12], 0
          %s624 = sshll.u32 %s8, 4
          %s625 = int_to_ptr.hbm [resolvable:$true] %s624
          %s626 = sshll.u32 [#allocation11], 4
          %s627 = int_to_ptr.vmem [resolvable:$true] %s626
          %632 = dma.hbm_to_vmem [thread:$0]  %s625, 128, %s627, [#allocation12], 16, 16, 1
        $region28: #{tpu_custom_call.1} parent=11 // pred_fallthru
          _
        // Predicated region
        $region29: #{tpu_custom_call.1} parent=11 // pred_check
          %p633 = pneg %p276
        $region30: #{tpu_custom_call.1} parent=11 // pred_check_branch
          %635 = sbr.rel (%p633) target = $region32
        $region31: #{tpu_custom_call.1} parent=11 // pred_region
          _
        $region32: #{tpu_custom_call.1} parent=11 // pred_fallthru
          _
        // Predicated region
        $region33: #{tpu_custom_call.1} parent=11 // pred_check
          %p636 = pneg %p297
        $region34: #{tpu_custom_call.1} parent=11 // pred_check_branch
          %638 = sbr.rel (%p636) target = $region36
        $region35: #{tpu_custom_call.1} parent=11 // pred_region
          %640 = vsyncadd [#allocation12], 0
          %s641 = sshll.u32 %s10, 4
          %s642 = int_to_ptr.hbm [resolvable:$true] %s641
          %s643 = sshll.u32 [#allocation13], 4
          %s644 = int_to_ptr.vmem [resolvable:$true] %s643
          %649 = dma.hbm_to_vmem [thread:$0]  %s642, 3072, %s644, [#allocation12], 128, 128, 8
        $region36: #{tpu_custom_call.1} parent=11 // pred_fallthru
          _
        // Predicated region
        $region37: #{tpu_custom_call.1} parent=11 // pred_check
          %p650 = pneg %p318
        $region38: #{tpu_custom_call.1} parent=11 // pred_check_branch
          %652 = sbr.rel (%p650) target = $region40
        $region39: #{tpu_custom_call.1} parent=11 // pred_region
          %654 = vsyncadd [#allocation15], 0
          %s655 = sshll.u32 %s11, 4
          %s656 = int_to_ptr.hbm [resolvable:$true] %s655
          %s657 = sshll.u32 [#allocation14], 4
          %s658 = int_to_ptr.vmem [resolvable:$true] %s657
          %663 = dma.hbm_to_vmem [thread:$0]  %s656, 3072, %s658, [#allocation15], 128, 128, 8
        $region40: #{tpu_custom_call.1} parent=11 // pred_fallthru
          _
        // Predicated region
        $region41: #{tpu_custom_call.1} parent=11 // pred_check
          %p664 = pneg %p339
        $region42: #{tpu_custom_call.1} parent=11 // pred_check_branch
          %666 = sbr.rel (%p664) target = $region44
        $region43: #{tpu_custom_call.1} parent=11 // pred_region
          %668 = vsyncadd [#allocation15], 0
          %s669 = sshll.u32 %s12, 4
          %s670 = int_to_ptr.hbm [resolvable:$true] %s669
          %s671 = sshll.u32 [#allocation16], 4
          %s672 = int_to_ptr.vmem [resolvable:$true] %s671
          %677 = dma.hbm_to_vmem [thread:$0]  %s670, 3072, %s672, [#allocation15], 128, 128, 8
        $region44: #{tpu_custom_call.1} parent=11 // pred_fallthru
          _
        // Predicated region
        $region45: #{tpu_custom_call.1} parent=11 // pred_check
          %p678 = pneg %p360
        $region46: #{tpu_custom_call.1} parent=11 // pred_check_branch
          %680 = sbr.rel (%p678) target = $region48
        $region47: #{tpu_custom_call.1} parent=11 // pred_region
          %682 = vsyncadd [#allocation18], 0
          %s683 = sshll.u32 %s13, 4
          %s684 = int_to_ptr.hbm [resolvable:$true] %s683
          %s685 = sshll.u32 [#allocation17], 4
          %s686 = int_to_ptr.vmem [resolvable:$true] %s685
          %691 = dma.hbm_to_vmem [thread:$0]  %s684, 96, %s686, [#allocation18], 16, 16, 1
        $region48: #{tpu_custom_call.1} parent=11 // pred_fallthru
          _
        // Predicated region
        $region49: #{tpu_custom_call.1} parent=11 // pred_check
          %p692 = pneg %p381
        $region50: #{tpu_custom_call.1} parent=11 // pred_check_branch
          %694 = sbr.rel (%p692) target = $region52
        $region51: #{tpu_custom_call.1} parent=11 // pred_region
          %696 = vsyncadd [#allocation18], 0
          %s697 = sshll.u32 %s14, 4
          %s698 = int_to_ptr.hbm [resolvable:$true] %s697
          %s699 = sshll.u32 [#allocation19], 4
          %s700 = int_to_ptr.vmem [resolvable:$true] %s699
          %705 = dma.hbm_to_vmem [thread:$0]  %s698, 96, %s700, [#allocation18], 16, 16, 1
        $region52: #{tpu_custom_call.1} parent=11 // pred_fallthru
          _
        // Predicated region
        $region53: #{tpu_custom_call.1} parent=11 // pred_check
          %p706 = pneg %p402
        $region54: #{tpu_custom_call.1} parent=11 // pred_check_branch
          %708 = sbr.rel (%p706) target = $region56
        $region55: #{tpu_custom_call.1} parent=11 // pred_region
          %710 = vsyncadd [#allocation21], 0
          %s711 = sshll.u32 %s15, 4
          %s712 = int_to_ptr.hbm [resolvable:$true] %s711
          %s713 = sshll.u32 [#allocation20], 4
          %s714 = int_to_ptr.vmem [resolvable:$true] %s713
          %719 = dma.hbm_to_vmem [thread:$0]  %s712, 96, %s714, [#allocation21], 16, 16, 1
        $region56: #{tpu_custom_call.1} parent=11 // pred_fallthru
          _
        // Predicated region
        $region57: #{tpu_custom_call.1} parent=11 // pred_check
          %p720 = pneg %p423
        $region58: #{tpu_custom_call.1} parent=11 // pred_check_branch
          %722 = sbr.rel (%p720) target = $region60
        $region59: #{tpu_custom_call.1} parent=11 // pred_region
          %724 = vsyncadd [#allocation21], 0
          %s725 = sshll.u32 %s16, 4
          %s726 = int_to_ptr.hbm [resolvable:$true] %s725
          %s727 = sshll.u32 [#allocation22], 4
          %s728 = int_to_ptr.vmem [resolvable:$true] %s727
          %733 = dma.hbm_to_vmem [thread:$0]  %s726, 96, %s728, [#allocation21], 16, 16, 1
        $region60: #{tpu_custom_call.1} parent=11 // pred_fallthru
          _
        // Predicated region
        $region61: #{tpu_custom_call.1} parent=11 // pred_check
          %p734 = pneg %p444
        $region62: #{tpu_custom_call.1} parent=11 // pred_check_branch
          %736 = sbr.rel (%p734) target = $region64
        $region63: #{tpu_custom_call.1} parent=11 // pred_region
          _
        $region64: #{tpu_custom_call.1} parent=11 // pred_fallthru
          _
        // Predicated region
        $region65: #{tpu_custom_call.1} parent=11 // pred_check
          %p737 = pneg %p465
        $region66: #{tpu_custom_call.1} parent=11 // pred_check_branch
          %739 = sbr.rel (%p737) target = $region68
        $region67: #{tpu_custom_call.1} parent=11 // pred_region
          %741 = vsyncadd [#allocation24], 0
          %s742 = sshll.u32 %s18, 4
          %s743 = int_to_ptr.hbm [resolvable:$true] %s742
          %s744 = sshll.u32 [#allocation23], 4
          %s745 = int_to_ptr.vmem [resolvable:$true] %s744
          %750 = dma.hbm_to_vmem [thread:$0]  %s743, 32, %s745, [#allocation24], 16, 16, 1
        $region68: #{tpu_custom_call.1} parent=11 // pred_fallthru
          _
        // Predicated region
        $region69: #{tpu_custom_call.1} parent=11 // pred_check
          %p751 = pneg %p486
        $region70: #{tpu_custom_call.1} parent=11 // pred_check_branch
          %753 = sbr.rel (%p751) target = $region72
        $region71: #{tpu_custom_call.1} parent=11 // pred_region
          _
        $region72: #{tpu_custom_call.1} parent=11 // pred_fallthru
          _
        // Predicated region
        $region73: #{tpu_custom_call.1} parent=11 // pred_check
          %p754 = pneg %p507
        $region74: #{tpu_custom_call.1} parent=11 // pred_check_branch
          %756 = sbr.rel (%p754) target = $region76
        $region75: #{tpu_custom_call.1} parent=11 // pred_region
          _
        $region76: #{tpu_custom_call.1} parent=11 // pred_fallthru
          _
        // Predicated region
        $region77: #{tpu_custom_call.1} parent=11 // pred_check
          %p757 = pneg %p528
        $region78: #{tpu_custom_call.1} parent=11 // pred_check_branch
          %759 = sbr.rel (%p757) target = $region80
        $region79: #{tpu_custom_call.1} parent=11 // pred_region
          _
        $region80: #{tpu_custom_call.1} parent=11 // pred_fallthru
          _
        // Predicated region
        $region81: #{tpu_custom_call.1} parent=11 // pred_check
          %p760 = pneg %p549
        $region82: #{tpu_custom_call.1} parent=11 // pred_check_branch
          %762 = sbr.rel (%p760) target = $region84
        $region83: #{tpu_custom_call.1} parent=11 // pred_region
          _
        $region84: #{tpu_custom_call.1} parent=11 // pred_fallthru
          _
      $region12: #{tpu_custom_call.1} parent=5 // pred_fallthru
        _
      %p763 = scmp.lt.s32.totalorder %s41, 2
      // Predicated region
      $region85: #{tpu_custom_call.1} parent=5 // pred_check
        %p764 = pneg %p763
      $region86: #{tpu_custom_call.1} parent=5 // pred_check_branch
        %766 = sbr.rel (%p764) target = $region88
      $region87: #{tpu_custom_call.1} parent=5 // pred_region
        // Predicated region
        $region89: #{tpu_custom_call.1} parent=87 // pred_check
          %p767 = pneg %p61
        $region90: #{tpu_custom_call.1} parent=87 // pred_check_branch
          %769 = sbr.rel (%p767) target = $region92
        $region91: #{tpu_custom_call.1} parent=87 // pred_region
          %p770 = scmp.lt.s32.totalorder %s41, 1
          %s771 = scalar_select %p770, %s41, 1
          %s772 = smul.addr %s771, 8
          %s773 = scalar_lea.vmem %s0, %s772
        $region92: #{tpu_custom_call.1} parent=87 // pred_fallthru
          _
        // Predicated region
        $region93: #{tpu_custom_call.1} parent=87 // pred_check
          %p774 = pneg %p87
        $region94: #{tpu_custom_call.1} parent=87 // pred_check_branch
          %776 = sbr.rel (%p774) target = $region96
        $region95: #{tpu_custom_call.1} parent=87 // pred_region
          %s777 = sand.u32 %s41, 1
          %s778 = scalar_lea.sflag [#allocation3], %s777
          %s779 = sand.u32 %s77, 1
          %s780 = smul.addr %s779, 8
          %s781 = scalar_lea.vmem [#allocation2], %s780
          %783 = vsyncadd %s778, 0
          %s784 = smul.addr %s41, 8
          %s785 = scalar_lea.hbm %s1, %s784
          %s787 = sshll.u32 %s785, 4
          %s788 = int_to_ptr.hbm [resolvable:$true] %s787
          %s789 = sshll.u32 %s781, 4
          %s790 = int_to_ptr.vmem [resolvable:$true] %s789
          %792 = dma.hbm_to_vmem [thread:$0]  %s788, 128, %s790, %s778
        $region96: #{tpu_custom_call.1} parent=87 // pred_fallthru
          _
        // Predicated region
        $region97: #{tpu_custom_call.1} parent=87 // pred_check
          %p793 = pneg %p134
        $region98: #{tpu_custom_call.1} parent=87 // pred_check_branch
          %795 = sbr.rel (%p793) target = $region100
        $region99: #{tpu_custom_call.1} parent=87 // pred_region
          %s796 = sand.u32 %s41, 1
          %s797 = scalar_lea.sflag [#allocation3], %s796
          %s798 = sand.u32 %s124, 1
          %s799 = scalar_lea.vmem [#allocation7], %s798
          %801 = vsyncadd %s797, 0
          %s802 = scalar_lea.hbm %s3, %s41
          %s804 = sshll.u32 %s802, 4
          %s805 = int_to_ptr.hbm [resolvable:$true] %s804
          %s806 = sshll.u32 %s799, 4
          %s807 = int_to_ptr.vmem [resolvable:$true] %s806
          %809 = dma.hbm_to_vmem [thread:$0]  %s805, 16, %s807, %s797
        $region100: #{tpu_custom_call.1} parent=87 // pred_fallthru
          _
        // Predicated region
        $region101: #{tpu_custom_call.1} parent=87 // pred_check
          %p810 = pneg %p160
        $region102: #{tpu_custom_call.1} parent=87 // pred_check_branch
          %812 = sbr.rel (%p810) target = $region104
        $region103: #{tpu_custom_call.1} parent=87 // pred_region
          %s813 = sand.u32 %s41, 1
          %s814 = scalar_lea.sflag [#allocation3], %s813
          %s815 = sand.u32 %s150, 1
          %s816 = smul.addr %s815, 8
          %s817 = scalar_lea.vmem [#allocation8], %s816
          %819 = vsyncadd %s814, 0
          %s820 = smul.addr %s41, 8
          %s821 = scalar_lea.hbm %s4, %s820
          %s823 = sshll.u32 %s821, 4
          %s824 = int_to_ptr.hbm [resolvable:$true] %s823
          %s825 = sshll.u32 %s817, 4
          %s826 = int_to_ptr.vmem [resolvable:$true] %s825
          %828 = dma.hbm_to_vmem [thread:$0]  %s824, 128, %s826, %s814
        $region104: #{tpu_custom_call.1} parent=87 // pred_fallthru
          _
        // Predicated region
        $region105: #{tpu_custom_call.1} parent=87 // pred_check
          %p829 = pneg %p186
        $region106: #{tpu_custom_call.1} parent=87 // pred_check_branch
          %831 = sbr.rel (%p829) target = $region108
        $region107: #{tpu_custom_call.1} parent=87 // pred_region
          %s832 = sand.u32 %s41, 1
          %s833 = scalar_lea.sflag [#allocation3], %s832
          %s834 = sand.u32 %s176, 1
          %s835 = scalar_lea.vmem [#allocation9], %s834
          %837 = vsyncadd %s833, 0
          %s838 = scalar_lea.hbm %s5, %s41
          %s840 = sshll.u32 %s838, 4
          %s841 = int_to_ptr.hbm [resolvable:$true] %s840
          %s842 = sshll.u32 %s835, 4
          %s843 = int_to_ptr.vmem [resolvable:$true] %s842
          %845 = dma.hbm_to_vmem [thread:$0]  %s841, 16, %s843, %s833
        $region108: #{tpu_custom_call.1} parent=87 // pred_fallthru
          _
      $region88: #{tpu_custom_call.1} parent=5 // pred_fallthru
        _
      %p846 = scmp.le.s32.totalorder 1, %s41
      %p847 = scmp.lt.s32.totalorder %s41, 3
      %p848 = pnand %p846, %p847
      %p849 = pneg %p848
      // Predicated region
      $region109: #{tpu_custom_call.1} parent=5 // pred_check
        _
      $region110: #{tpu_custom_call.1} parent=5 // pred_check_branch
        %851 = sbr.rel (%p848) target = $region112
      $region111: #{tpu_custom_call.1} parent=5 // pred_region
        %s852 = ssub.s32 %s41, 1
        %s853 = sand.u32 %s46, 1
        %s854 = scalar_lea.sflag [#allocation3], %s853
        %s855 = sand.u32 %s80, 1
        %s856 = smul.addr %s855, 8
        %s857 = scalar_lea.vmem [#allocation2], %s856
        // Predicated region
        $region113: #{tpu_custom_call.1} parent=111 // pred_check
          %p858 = pneg %p93
        $region114: #{tpu_custom_call.1} parent=111 // pred_check_branch
          %860 = sbr.rel (%p858) target = $region116
        $region115: #{tpu_custom_call.1} parent=111 // pred_region
          %862 = dma.done %s854, 128
        $region116: #{tpu_custom_call.1} parent=111 // pred_fallthru
          _
        // Predicated region
        $region117: #{tpu_custom_call.1} parent=111 // pred_check
          %p863 = pneg %p114
        $region118: #{tpu_custom_call.1} parent=111 // pred_check_branch
          %865 = sbr.rel (%p863) target = $region120
        $region119: #{tpu_custom_call.1} parent=111 // pred_region
          %867 = dma.done [#allocation6], 128
        $region120: #{tpu_custom_call.1} parent=111 // pred_fallthru
          _
        %s868 = sand.u32 %s46, 1
        %s869 = scalar_lea.sflag [#allocation3], %s868
        %s870 = sand.u32 %s127, 1
        %s871 = scalar_lea.vmem [#allocation7], %s870
        // Predicated region
        $region121: #{tpu_custom_call.1} parent=111 // pred_check
          %p872 = pneg %p140
        $region122: #{tpu_custom_call.1} parent=111 // pred_check_branch
          %874 = sbr.rel (%p872) target = $region124
        $region123: #{tpu_custom_call.1} parent=111 // pred_region
          %876 = dma.done %s869, 16
        $region124: #{tpu_custom_call.1} parent=111 // pred_fallthru
          _
        %s877 = sand.u32 %s46, 1
        %s878 = scalar_lea.sflag [#allocation3], %s877
        %s879 = sand.u32 %s153, 1
        %s880 = smul.addr %s879, 8
        %s881 = scalar_lea.vmem [#allocation8], %s880
        // Predicated region
        $region125: #{tpu_custom_call.1} parent=111 // pred_check
          %p882 = pneg %p166
        $region126: #{tpu_custom_call.1} parent=111 // pred_check_branch
          %884 = sbr.rel (%p882) target = $region128
        $region127: #{tpu_custom_call.1} parent=111 // pred_region
          %886 = dma.done %s878, 128
        $region128: #{tpu_custom_call.1} parent=111 // pred_fallthru
          _
        %s887 = sand.u32 %s46, 1
        %s888 = scalar_lea.sflag [#allocation3], %s887
        %s889 = sand.u32 %s179, 1
        %s890 = scalar_lea.vmem [#allocation9], %s889
        // Predicated region
        $region129: #{tpu_custom_call.1} parent=111 // pred_check
          %p891 = pneg %p192
        $region130: #{tpu_custom_call.1} parent=111 // pred_check_branch
          %893 = sbr.rel (%p891) target = $region132
        $region131: #{tpu_custom_call.1} parent=111 // pred_region
          %895 = dma.done %s888, 16
        $region132: #{tpu_custom_call.1} parent=111 // pred_fallthru
          _
        // Predicated region
        $region133: #{tpu_custom_call.1} parent=111 // pred_check
          %p896 = pneg %p234
        $region134: #{tpu_custom_call.1} parent=111 // pred_check_branch
          %898 = sbr.rel (%p896) target = $region136
        $region135: #{tpu_custom_call.1} parent=111 // pred_region
          %900 = dma.done [#allocation6], 128
        $region136: #{tpu_custom_call.1} parent=111 // pred_fallthru
          _
        // Predicated region
        $region137: #{tpu_custom_call.1} parent=111 // pred_check
          %p901 = pneg %p255
        $region138: #{tpu_custom_call.1} parent=111 // pred_check_branch
          %903 = sbr.rel (%p901) target = $region140
        $region139: #{tpu_custom_call.1} parent=111 // pred_region
          %905 = dma.done [#allocation12], 128
        $region140: #{tpu_custom_call.1} parent=111 // pred_fallthru
          _
        // Predicated region
        $region141: #{tpu_custom_call.1} parent=111 // pred_check
          %p906 = pneg %p297
        $region142: #{tpu_custom_call.1} parent=111 // pred_check_branch
          %908 = sbr.rel (%p906) target = $region144
        $region143: #{tpu_custom_call.1} parent=111 // pred_region
          %910 = dma.done [#allocation12], 3072
        $region144: #{tpu_custom_call.1} parent=111 // pred_fallthru
          _
        // Predicated region
        $region145: #{tpu_custom_call.1} parent=111 // pred_check
          %p911 = pneg %p318
        $region146: #{tpu_custom_call.1} parent=111 // pred_check_branch
          %913 = sbr.rel (%p911) target = $region148
        $region147: #{tpu_custom_call.1} parent=111 // pred_region
          %915 = dma.done [#allocation15], 3072
        $region148: #{tpu_custom_call.1} parent=111 // pred_fallthru
          _
        // Predicated region
        $region149: #{tpu_custom_call.1} parent=111 // pred_check
          %p916 = pneg %p339
        $region150: #{tpu_custom_call.1} parent=111 // pred_check_branch
          %918 = sbr.rel (%p916) target = $region152
        $region151: #{tpu_custom_call.1} parent=111 // pred_region
          %920 = dma.done [#allocation15], 3072
        $region152: #{tpu_custom_call.1} parent=111 // pred_fallthru
          _
        // Predicated region
        $region153: #{tpu_custom_call.1} parent=111 // pred_check
          %p921 = pneg %p360
        $region154: #{tpu_custom_call.1} parent=111 // pred_check_branch
          %923 = sbr.rel (%p921) target = $region156
        $region155: #{tpu_custom_call.1} parent=111 // pred_region
          %925 = dma.done [#allocation18], 96
        $region156: #{tpu_custom_call.1} parent=111 // pred_fallthru
          _
        // Predicated region
        $region157: #{tpu_custom_call.1} parent=111 // pred_check
          %p926 = pneg %p381
        $region158: #{tpu_custom_call.1} parent=111 // pred_check_branch
          %928 = sbr.rel (%p926) target = $region160
        $region159: #{tpu_custom_call.1} parent=111 // pred_region
          %930 = dma.done [#allocation18], 96
        $region160: #{tpu_custom_call.1} parent=111 // pred_fallthru
          _
        // Predicated region
        $region161: #{tpu_custom_call.1} parent=111 // pred_check
          %p931 = pneg %p402
        $region162: #{tpu_custom_call.1} parent=111 // pred_check_branch
          %933 = sbr.rel (%p931) target = $region164
        $region163: #{tpu_custom_call.1} parent=111 // pred_region
          %935 = dma.done [#allocation21], 96
        $region164: #{tpu_custom_call.1} parent=111 // pred_fallthru
          _
        // Predicated region
        $region165: #{tpu_custom_call.1} parent=111 // pred_check
          %p936 = pneg %p423
        $region166: #{tpu_custom_call.1} parent=111 // pred_check_branch
          %938 = sbr.rel (%p936) target = $region168
        $region167: #{tpu_custom_call.1} parent=111 // pred_region
          %940 = dma.done [#allocation21], 96
        $region168: #{tpu_custom_call.1} parent=111 // pred_fallthru
          _
        // Predicated region
        $region169: #{tpu_custom_call.1} parent=111 // pred_check
          %p941 = pneg %p465
        $region170: #{tpu_custom_call.1} parent=111 // pred_check_branch
          %943 = sbr.rel (%p941) target = $region172
        $region171: #{tpu_custom_call.1} parent=111 // pred_region
          %945 = dma.done [#allocation24], 32
        $region172: #{tpu_custom_call.1} parent=111 // pred_fallthru
          _
        %p946 = scmp.lt.s32.totalorder %s46, 1
        %s947 = scalar_select %p946, %s46, 1
        %s948 = smul.addr %s947, 8
        %s949 = scalar_lea.vmem %s0, %s948
        %p950 = pneg %p67
        %p951 = pneg %p64
        %s952 = sand.u32 %s46, 1
        %s953 = scalar_lea.sflag [#allocation3], %s952
        %s954 = sand.u32 %s80, 1
        %s955 = smul.addr %s954, 8
        %s956 = scalar_lea.vmem [#allocation2], %s955
        %p957 = pneg %p93
        %p958 = pneg %p90
        %p959 = pneg %p114
        %p960 = pneg %p111
        %s961 = sand.u32 %s46, 1
        %s962 = scalar_lea.sflag [#allocation3], %s961
        %s963 = sand.u32 %s127, 1
        %s964 = scalar_lea.vmem [#allocation7], %s963
        %p965 = pneg %p140
        %p966 = pneg %p137
        %s967 = sand.u32 %s46, 1
        %s968 = scalar_lea.sflag [#allocation3], %s967
        %s969 = sand.u32 %s153, 1
        %s970 = smul.addr %s969, 8
        %s971 = scalar_lea.vmem [#allocation8], %s970
        %p972 = pneg %p166
        %p973 = pneg %p163
        %s974 = sand.u32 %s46, 1
        %s975 = scalar_lea.sflag [#allocation3], %s974
        %s976 = sand.u32 %s179, 1
        %s977 = scalar_lea.vmem [#allocation9], %s976
        %p978 = pneg %p192
        %p979 = pneg %p189
        %p980 = pneg %p213
        %p981 = pneg %p210
        %p982 = pneg %p234
        %p983 = pneg %p231
        %p984 = pneg %p255
        %p985 = pneg %p252
        %p986 = pneg %p276
        %p987 = pneg %p273
        %p988 = pneg %p297
        %p989 = pneg %p294
        %p990 = pneg %p318
        %p991 = pneg %p315
        %p992 = pneg %p339
        %p993 = pneg %p336
        %p994 = pneg %p360
        %p995 = pneg %p357
        %p996 = pneg %p381
        %p997 = pneg %p378
        %p998 = pneg %p402
        %p999 = pneg %p399
        %p1000 = pneg %p423
        %p1001 = pneg %p420
        %p1002 = pneg %p444
        %p1003 = pneg %p441
        %p1004 = pneg %p465
        %p1005 = pneg %p462
        %p1006 = pneg %p486
        %p1007 = pneg %p483
        %p1008 = pneg %p507
        %p1009 = pneg %p504
        %p1010 = pneg %p528
        %p1011 = pneg %p525
        %p1012 = pneg %p549
        %p1013 = pneg %p546
        %p1014 = pneg %p575
        %p1015 = pneg %p572
        %s1016 = sand.u32 %s562, 1
        %s1017 = scalar_lea.sflag [#allocation4], %s1016
        %s1018 = sand.u32 %s562, 1
        %s1019 = smul.addr %s1018, 8
        %s1020 = scalar_lea.vmem [#allocation25], %s1019
        %p1021 = scmp.lt.s32.totalorder %s46, 1
        %s1022 = scalar_select %p1021, %s46, 1
        %s1023 = smul.addr %s1022, 8
        %s1024 = scalar_lea.vmem %s0, %s1023
        %v1025 = vld [vmem:[%s1024] sm:$0xff]
        %v1026 = vlaneseq
        %v1027 = vand.u32 %v1026, 127
        %1028 = vset.pattern.permute.xlu0 0
        %1029 = vperm.xlu0 %1028, %v1025
        %v1030 = vpop.permute.xlu0 %1029
        %vm1031 = vcmp.eq.s32.totalorder %v1027, %v1030
        %v1032 = vsel %vm1031, 1, 0
        %v1033 = vcvt.s32.f32 %v1032
        %v1034 = vld [vmem:[%s6] sm:$0xff]
        %v1035 = vld [vmem:[%s6 + $0x8] sm:$0xff]
        %v1036 = vld [vmem:[%s6 + $0x10] sm:$0xff]
        %v1037 = vld [vmem:[%s6 + $0x18] sm:$0xff]
        %v1038 = vld [vmem:[%s6 + $0x20] sm:$0xff]
        %v1039 = vld [vmem:[%s6 + $0x28] sm:$0xff]
        %v1040 = vld [vmem:[%s6 + $0x30] sm:$0xff]
        %v1041 = vld [vmem:[%s6 + $0x38] sm:$0xff]
        %vm1042 = vcmask 523264
        %v1044 = vsel %vm1042, %v1033, 0
        %1046 = vmatpush.msra.mxu0 0.0
        %1047 = vmatpush.msra.mxu0 0.0
        %1048 = vmatpush.msra.mxu0 0.0
        %1049 = vmatpush.msra.mxu0 0.0
        %1050 = vmatpush.msra.mxu0 0.0
        %1051 = vmatpush.msra.mxu0 0.0
        %1052 = vmatpush.msra.mxu0 0.0
        %1053 = vmatpush.msra.mxu0 0.0
        %1054 = vmatpush.msra.mxu0 %v1041
        %1055 = vmatpush.msra.mxu0 %v1040
        %1056 = vmatpush.msra.mxu0 %v1039
        %1057 = vmatpush.msra.mxu0 %v1038
        %1058 = vmatpush.msra.mxu0 %v1037
        %1059 = vmatpush.msra.mxu0 %v1036
        %1060 = vmatpush.msra.mxu0 %v1035
        %1061 = vmatpush.msra.mxu0 %v1034
        %1062 = vmatmul.f32.gmra.mxu0 %v1044
        %v1063 = vpop.f32.mrf.mxu0
        %v1064 = vadd.f32 0.0, %v1063
        %1065 = vdwg.mxu0
        %v1066 = vmul.f32 %v1064, 5.656854
        %v1067 = vld [vmem:[%s857] sm:$0xff]
        %v1068 = vld [vmem:[#allocation5] sm:$0xff]
        %v1069 = vld [vmem:[%s871] sm:$0x1]
        %v1070 = vld [vmem:[%s881] sm:$0xff]
        %v1071 = vld [vmem:[%s890] sm:$0x1]
        %v1072 = vld [vmem:[#allocation10] sm:$0x1]
        %v1073 = vld [vmem:[#allocation11] sm:$0x1]
        %vm1074 = vcmask 261120
        %v1075 = vsel %vm1074, %v1066, 0.0
        %1076 = vadd.xlane.f32.xlu0 %v1075
        %v1077 = vpop.xlane.xlu0 %1076
        %v1078 = vrcp.pop 32.0
        %v1079 = vmul.f32 32.0, %v1078
        %v1080 = vsub.f32 1.0, %v1079
        %v1081 = vmul.f32 %v1078, %v1080
        %v1082 = vadd.f32 %v1078, %v1081
        %vm1083 = vweird.f32 %v1078
        %v1084 = vsel %vm1083, %v1078, %v1082
        %v1085 = vmul.f32 %v1077, %v1084
        %v1086 = vsub.f32 %v1066, %v1085
        %v1087 = vmul.f32 %v1086, %v1086
        %v1088 = vsel %vm1074, %v1087, 0.0
        %1089 = vadd.xlane.f32.xlu0 %v1088
        %v1090 = vpop.xlane.xlu0 %1089
        %v1091 = vmul.f32 %v1090, %v1084
        %v1092 = vadd.f32 %v1091, 1e-05
        %v1093 = vrsqrt.pop %v1092
        %v1094 = vmul.f32 %v1093, %v1092
        %v1095 = vmul.f32 %v1094, %v1093
        %v1096 = vmul.f32 0.5, %v1095
        %v1097 = vsub.f32 1.5, %v1096
        %v1098 = vmul.f32 %v1093, %v1097
        %vm1099 = vweird.f32 %v1092
        %vm1100 = vweird.f32 %v1093
        %vm1101 = vmor %vm1099, %vm1100
        %v1102 = vsel %vm1101, %v1093, %v1098
        %v1103 = vmul.f32 %v1086, %v1102
        %v1105 = vperm.slane %v1072, 0
        %v1107 = vmul.f32 %v1103, %v1105
        %v1109 = vperm.slane %v1073, 0
        %v1111 = vadd.f32 %v1107, %v1109
        %v1112 = vld [vmem:[%s9] sm:$0xff]
        %v1113 = vld [vmem:[%s9 + $0x8] sm:$0xff]
        %v1114 = vld [vmem:[%s9 + $0x10] sm:$0xff]
        %v1115 = vld [vmem:[%s9 + $0x18] sm:$0xff]
        %v1116 = vld [vmem:[#allocation17] sm:$0x1]
        %v1117 = vld [vmem:[#allocation13] sm:$0xff]
        %v1118 = vld [vmem:[#allocation13 + $0x8] sm:$0xff]
        %v1119 = vld [vmem:[#allocation13 + $0x10] sm:$0xff]
        %v1120 = vld [vmem:[#allocation13 + $0x18] sm:$0xff]
        %v1121 = vld [vmem:[#allocation19] sm:$0x1]
        %v1122 = vld [vmem:[#allocation14] sm:$0xff]
        %v1123 = vld [vmem:[#allocation14 + $0x8] sm:$0xff]
        %v1124 = vld [vmem:[#allocation14 + $0x10] sm:$0xff]
        %v1125 = vld [vmem:[#allocation14 + $0x18] sm:$0xff]
        %v1126 = vld [vmem:[#allocation20] sm:$0x1]
        %v1127 = vld [vmem:[#allocation16] sm:$0xff]
        %v1128 = vld [vmem:[#allocation16 + $0x8] sm:$0xff]
        %v1129 = vld [vmem:[#allocation16 + $0x10] sm:$0xff]
        %v1130 = vld [vmem:[#allocation16 + $0x18] sm:$0xff]
        %v1131 = vld [vmem:[#allocation22] sm:$0x1]
        %v1133 = vperm.slane %v1116, 0
        %v1136 = vsel %vm1074, %v1111, 0
        %1138 = vmatpush.msra.mxu0 0.0
        %1139 = vmatpush.msra.mxu0 0.0
        %1140 = vmatpush.msra.mxu0 0.0
        %1141 = vmatpush.msra.mxu0 0.0
        %1142 = vmatpush.msra.mxu0 0.0
        %1143 = vmatpush.msra.mxu0 0.0
        %1144 = vmatpush.msra.mxu0 0.0
        %1145 = vmatpush.msra.mxu0 0.0
        %1146 = vmatpush.msra.mxu0 0.0
        %1147 = vmatpush.msra.mxu0 0.0
        %1148 = vmatpush.msra.mxu0 0.0
        %1149 = vmatpush.msra.mxu0 0.0
        %1150 = vmatpush.msra.mxu0 %v1115
        %1151 = vmatpush.msra.mxu0 %v1114
        %1152 = vmatpush.msra.mxu0 %v1113
        %1153 = vmatpush.msra.mxu0 %v1112
        %1154 = vmatmul.f32.gmra.mxu0 %v1136
        %v1155 = vpop.f32.mrf.mxu0
        %v1156 = vadd.f32 %v1133, %v1155
        %1157 = vdwg.mxu0
        %v1159 = vperm.slane %v1121, 0
        %1161 = vmatpush.msra.mxu0 0.0
        %1162 = vmatpush.msra.mxu0 0.0
        %1163 = vmatpush.msra.mxu0 0.0
        %1164 = vmatpush.msra.mxu0 0.0
        %1165 = vmatpush.msra.mxu0 0.0
        %1166 = vmatpush.msra.mxu0 0.0
        %1167 = vmatpush.msra.mxu0 0.0
        %1168 = vmatpush.msra.mxu0 0.0
        %1169 = vmatpush.msra.mxu0 0.0
        %1170 = vmatpush.msra.mxu0 0.0
        %1171 = vmatpush.msra.mxu0 0.0
        %1172 = vmatpush.msra.mxu0 0.0
        %1173 = vmatpush.msra.mxu0 %v1120
        %1174 = vmatpush.msra.mxu0 %v1119
        %1175 = vmatpush.msra.mxu0 %v1118
        %1176 = vmatpush.msra.mxu0 %v1117
        %1177 = vmatmul.f32.gmra.mxu0 %v1136
        %v1178 = vpop.f32.mrf.mxu0
        %v1179 = vadd.f32 %v1159, %v1178
        %1180 = vdwg.mxu0
        %v1182 = vperm.slane %v1126, 0
        %1184 = vmatpush.msra.mxu0 0.0
        %1185 = vmatpush.msra.mxu0 0.0
        %1186 = vmatpush.msra.mxu0 0.0
        %1187 = vmatpush.msra.mxu0 0.0
        %1188 = vmatpush.msra.mxu0 0.0
        %1189 = vmatpush.msra.mxu0 0.0
        %1190 = vmatpush.msra.mxu0 0.0
        %1191 = vmatpush.msra.mxu0 0.0
        %1192 = vmatpush.msra.mxu0 0.0
        %1193 = vmatpush.msra.mxu0 0.0
        %1194 = vmatpush.msra.mxu0 0.0
        %1195 = vmatpush.msra.mxu0 0.0
        %1196 = vmatpush.msra.mxu0 %v1125
        %1197 = vmatpush.msra.mxu0 %v1124
        %1198 = vmatpush.msra.mxu0 %v1123
        %1199 = vmatpush.msra.mxu0 %v1122
        %1200 = vmatmul.f32.gmra.mxu0 %v1136
        %v1201 = vpop.f32.mrf.mxu0
        %v1202 = vadd.f32 %v1182, %v1201
        %1203 = vdwg.mxu0
        %1205 = vrot.lane.b32.xlu0 %v1156, 120
        %v1206 = vpop.permute.xlu0 %1205
        %1208 = vrot.lane.b32.xlu0 %v1156, 112
        %v1209 = vpop.permute.xlu0 %1208
        %1211 = vrot.lane.b32.xlu0 %v1156, 104
        %v1212 = vpop.permute.xlu0 %1211
        %v1214 = vrot.slane %v1209, 4
        %vm1215 = vcmask 1047556
        %v1216 = vsel %vm1215, %v1214, %v1156
        %v1217 = vrot.slane %v1156, 4
        %v1218 = vsel %vm1215, %v1209, %v1217
        %v1220 = vunpack.c.l.s4 1983009808
        %v1221 = vunpack.c.0.s8 %v1220
        %v1222 = vperm.slane %v1216, %v1221
        %v1224 = vunpack.c.l.s4 1983009808
        %v1225 = vunpack.c.0.s8 %v1224
        %v1226 = vperm.slane %v1218, %v1225
        %v1227 = vrot.slane %v1212, 4
        %v1228 = vsel %vm1215, %v1227, %v1206
        %v1229 = vrot.slane %v1206, 4
        %v1230 = vsel %vm1215, %v1212, %v1229
        %v1232 = vunpack.c.l.s4 1983009808
        %v1233 = vunpack.c.0.s8 %v1232
        %v1234 = vperm.slane %v1228, %v1233
        %v1236 = vunpack.c.l.s4 1983009808
        %v1237 = vunpack.c.0.s8 %v1236
        %v1238 = vperm.slane %v1230, %v1237
        %v1239 = vrot.slane %v1234, 4
        %v1240 = vsel %vm1215, %v1239, %v1222
        %v1241 = vrot.slane %v1222, 4
        %v1242 = vsel %vm1215, %v1234, %v1241
        %v1244 = vunpack.c.l.s4 1934713408
        %v1245 = vunpack.c.0.s8 %v1244
        %v1246 = vperm.slane %v1240, %v1245
        %v1248 = vunpack.c.l.s4 1934713408
        %v1249 = vunpack.c.0.s8 %v1248
        %v1250 = vperm.slane %v1242, %v1249
        %v1251 = vrot.slane %v1238, 4
        %v1252 = vsel %vm1215, %v1251, %v1226
        %v1253 = vrot.slane %v1226, 4
        %v1254 = vsel %vm1215, %v1238, %v1253
        %v1256 = vunpack.c.l.s4 1934713408
        %v1257 = vunpack.c.0.s8 %v1256
        %v1258 = vperm.slane %v1252, %v1257
        %v1260 = vunpack.c.l.s4 1934713408
        %v1261 = vunpack.c.0.s8 %v1260
        %v1262 = vperm.slane %v1254, %v1261
        %v1263 = vrot.slane %v1246, 4
        %v1264 = vsel %vm1215, 0.0, %v1263
        %v1265 = vrot.slane %v1250, 4
        %v1266 = vsel %vm1215, 0.0, %v1265
        %v1267 = vrot.slane %v1258, 4
        %v1268 = vsel %vm1215, 0.0, %v1267
        %v1269 = vrot.slane %v1262, 4
        %v1270 = vsel %vm1215, 0.0, %v1269
        %v1271 = vsel %vm1215, %v1265, %v1246
        %v1273 = vunpack.c.l.s4 1983009808
        %v1274 = vunpack.c.0.s8 %v1273
        %v1275 = vperm.slane %v1271, %v1274
        %v1276 = vrot.slane %v1266, 4
        %v1277 = vsel %vm1215, %v1276, %v1264
        %v1279 = vunpack.c.l.s4 1983009808
        %v1280 = vunpack.c.0.s8 %v1279
        %v1281 = vperm.slane %v1277, %v1280
        %v1282 = vsel %vm1215, %v1269, %v1258
        %v1284 = vunpack.c.l.s4 1983009808
        %v1285 = vunpack.c.0.s8 %v1284
        %v1286 = vperm.slane %v1282, %v1285
        %v1287 = vrot.slane %v1270, 4
        %v1288 = vsel %vm1215, %v1287, %v1268
        %v1290 = vunpack.c.l.s4 1983009808
        %v1291 = vunpack.c.0.s8 %v1290
        %v1292 = vperm.slane %v1288, %v1291
        %v1293 = vrot.slane %v1281, 4
        %v1294 = vsel %vm1215, %v1293, %v1275
        %v1295 = vrot.slane %v1275, 4
        %v1296 = vsel %vm1215, %v1281, %v1295
        %v1298 = vunpack.c.l.s4 1934713408
        %v1299 = vunpack.c.0.s8 %v1298
        %v1300 = vperm.slane %v1294, %v1299
        %v1302 = vunpack.c.l.s4 1934713408
        %v1303 = vunpack.c.0.s8 %v1302
        %v1304 = vperm.slane %v1296, %v1303
        %v1305 = vrot.slane %v1292, 4
        %v1306 = vsel %vm1215, %v1305, %v1286
        %v1307 = vrot.slane %v1286, 4
        %v1308 = vsel %vm1215, %v1292, %v1307
        %v1310 = vunpack.c.l.s4 1934713408
        %v1311 = vunpack.c.0.s8 %v1310
        %v1312 = vperm.slane %v1306, %v1311
        %v1314 = vunpack.c.l.s4 1934713408
        %v1315 = vunpack.c.0.s8 %v1314
        %v1316 = vperm.slane %v1308, %v1315
        %v1317 = vrot.slane %v1312, 4
        %v1318 = vsel %vm1215, %v1317, %v1300
        %v1319 = vrot.slane %v1300, 4
        %v1320 = vsel %vm1215, %v1312, %v1319
        %v1321 = vrot.slane %v1316, 4
        %v1322 = vsel %vm1215, %v1321, %v1304
        %v1323 = vrot.slane %v1304, 4
        %v1324 = vsel %vm1215, %v1316, %v1323
        %1326 = vrot.lane.b32.xlu0 %v1179, 120
        %v1327 = vpop.permute.xlu0 %1326
        %1329 = vrot.lane.b32.xlu0 %v1179, 112
        %v1330 = vpop.permute.xlu0 %1329
        %1332 = vrot.lane.b32.xlu0 %v1179, 104
        %v1333 = vpop.permute.xlu0 %1332
        %v1335 = vrot.slane %v1330, 4
        %v1336 = vsel %vm1215, %v1335, %v1179
        %v1337 = vrot.slane %v1179, 4
        %v1338 = vsel %vm1215, %v1330, %v1337
        %v1340 = vunpack.c.l.s4 1983009808
        %v1341 = vunpack.c.0.s8 %v1340
        %v1342 = vperm.slane %v1336, %v1341
        %v1344 = vunpack.c.l.s4 1983009808
        %v1345 = vunpack.c.0.s8 %v1344
        %v1346 = vperm.slane %v1338, %v1345
        %v1347 = vrot.slane %v1333, 4
        %v1348 = vsel %vm1215, %v1347, %v1327
        %v1349 = vrot.slane %v1327, 4
        %v1350 = vsel %vm1215, %v1333, %v1349
        %v1352 = vunpack.c.l.s4 1983009808
        %v1353 = vunpack.c.0.s8 %v1352
        %v1354 = vperm.slane %v1348, %v1353
        %v1356 = vunpack.c.l.s4 1983009808
        %v1357 = vunpack.c.0.s8 %v1356
        %v1358 = vperm.slane %v1350, %v1357
        %v1359 = vrot.slane %v1354, 4
        %v1360 = vsel %vm1215, %v1359, %v1342
        %v1361 = vrot.slane %v1342, 4
        %v1362 = vsel %vm1215, %v1354, %v1361
        %v1364 = vunpack.c.l.s4 1934713408
        %v1365 = vunpack.c.0.s8 %v1364
        %v1366 = vperm.slane %v1360, %v1365
        %v1368 = vunpack.c.l.s4 1934713408
        %v1369 = vunpack.c.0.s8 %v1368
        %v1370 = vperm.slane %v1362, %v1369
        %v1371 = vrot.slane %v1358, 4
        %v1372 = vsel %vm1215, %v1371, %v1346
        %v1373 = vrot.slane %v1346, 4
        %v1374 = vsel %vm1215, %v1358, %v1373
        %v1376 = vunpack.c.l.s4 1934713408
        %v1377 = vunpack.c.0.s8 %v1376
        %v1378 = vperm.slane %v1372, %v1377
        %v1380 = vunpack.c.l.s4 1934713408
        %v1381 = vunpack.c.0.s8 %v1380
        %v1382 = vperm.slane %v1374, %v1381
        %v1383 = vrot.slane %v1366, 4
        %v1384 = vsel %vm1215, 0.0, %v1383
        %v1385 = vrot.slane %v1370, 4
        %v1386 = vsel %vm1215, 0.0, %v1385
        %v1387 = vrot.slane %v1378, 4
        %v1388 = vsel %vm1215, 0.0, %v1387
        %v1389 = vrot.slane %v1382, 4
        %v1390 = vsel %vm1215, 0.0, %v1389
        %v1391 = vsel %vm1215, %v1385, %v1366
        %v1393 = vunpack.c.l.s4 1983009808
        %v1394 = vunpack.c.0.s8 %v1393
        %v1395 = vperm.slane %v1391, %v1394
        %v1396 = vrot.slane %v1386, 4
        %v1397 = vsel %vm1215, %v1396, %v1384
        %v1399 = vunpack.c.l.s4 1983009808
        %v1400 = vunpack.c.0.s8 %v1399
        %v1401 = vperm.slane %v1397, %v1400
        %v1402 = vsel %vm1215, %v1389, %v1378
        %v1404 = vunpack.c.l.s4 1983009808
        %v1405 = vunpack.c.0.s8 %v1404
        %v1406 = vperm.slane %v1402, %v1405
        %v1407 = vrot.slane %v1390, 4
        %v1408 = vsel %vm1215, %v1407, %v1388
        %v1410 = vunpack.c.l.s4 1983009808
        %v1411 = vunpack.c.0.s8 %v1410
        %v1412 = vperm.slane %v1408, %v1411
        %v1413 = vrot.slane %v1401, 4
        %v1414 = vsel %vm1215, %v1413, %v1395
        %v1415 = vrot.slane %v1395, 4
        %v1416 = vsel %vm1215, %v1401, %v1415
        %v1418 = vunpack.c.l.s4 1934713408
        %v1419 = vunpack.c.0.s8 %v1418
        %v1420 = vperm.slane %v1414, %v1419
        %v1422 = vunpack.c.l.s4 1934713408
        %v1423 = vunpack.c.0.s8 %v1422
        %v1424 = vperm.slane %v1416, %v1423
        %v1425 = vrot.slane %v1412, 4
        %v1426 = vsel %vm1215, %v1425, %v1406
        %v1427 = vrot.slane %v1406, 4
        %v1428 = vsel %vm1215, %v1412, %v1427
        %v1430 = vunpack.c.l.s4 1934713408
        %v1431 = vunpack.c.0.s8 %v1430
        %v1432 = vperm.slane %v1426, %v1431
        %v1434 = vunpack.c.l.s4 1934713408
        %v1435 = vunpack.c.0.s8 %v1434
        %v1436 = vperm.slane %v1428, %v1435
        %v1437 = vrot.slane %v1432, 4
        %v1438 = vsel %vm1215, %v1437, %v1420
        %v1439 = vrot.slane %v1420, 4
        %v1440 = vsel %vm1215, %v1432, %v1439
        %v1441 = vrot.slane %v1436, 4
        %v1442 = vsel %vm1215, %v1441, %v1424
        %v1443 = vrot.slane %v1424, 4
        %v1444 = vsel %vm1215, %v1436, %v1443
        %1446 = vrot.lane.b32.xlu0 %v1202, 120
        %v1447 = vpop.permute.xlu0 %1446
        %1449 = vrot.lane.b32.xlu0 %v1202, 112
        %v1450 = vpop.permute.xlu0 %1449
        %1452 = vrot.lane.b32.xlu0 %v1202, 104
        %v1453 = vpop.permute.xlu0 %1452
        %v1455 = vrot.slane %v1450, 4
        %v1456 = vsel %vm1215, %v1455, %v1202
        %v1457 = vrot.slane %v1202, 4
        %v1458 = vsel %vm1215, %v1450, %v1457
        %v1460 = vunpack.c.l.s4 1983009808
        %v1461 = vunpack.c.0.s8 %v1460
        %v1462 = vperm.slane %v1456, %v1461
        %v1464 = vunpack.c.l.s4 1983009808
        %v1465 = vunpack.c.0.s8 %v1464
        %v1466 = vperm.slane %v1458, %v1465
        %v1467 = vrot.slane %v1453, 4
        %v1468 = vsel %vm1215, %v1467, %v1447
        %v1469 = vrot.slane %v1447, 4
        %v1470 = vsel %vm1215, %v1453, %v1469
        %v1472 = vunpack.c.l.s4 1983009808
        %v1473 = vunpack.c.0.s8 %v1472
        %v1474 = vperm.slane %v1468, %v1473
        %v1476 = vunpack.c.l.s4 1983009808
        %v1477 = vunpack.c.0.s8 %v1476
        %v1478 = vperm.slane %v1470, %v1477
        %v1479 = vrot.slane %v1474, 4
        %v1480 = vsel %vm1215, %v1479, %v1462
        %v1481 = vrot.slane %v1462, 4
        %v1482 = vsel %vm1215, %v1474, %v1481
        %v1484 = vunpack.c.l.s4 1934713408
        %v1485 = vunpack.c.0.s8 %v1484
        %v1486 = vperm.slane %v1480, %v1485
        %v1488 = vunpack.c.l.s4 1934713408
        %v1489 = vunpack.c.0.s8 %v1488
        %v1490 = vperm.slane %v1482, %v1489
        %v1491 = vrot.slane %v1478, 4
        %v1492 = vsel %vm1215, %v1491, %v1466
        %v1493 = vrot.slane %v1466, 4
        %v1494 = vsel %vm1215, %v1478, %v1493
        %v1496 = vunpack.c.l.s4 1934713408
        %v1497 = vunpack.c.0.s8 %v1496
        %v1498 = vperm.slane %v1492, %v1497
        %v1500 = vunpack.c.l.s4 1934713408
        %v1501 = vunpack.c.0.s8 %v1500
        %v1502 = vperm.slane %v1494, %v1501
        %v1503 = vrot.slane %v1486, 4
        %v1504 = vsel %vm1215, 0.0, %v1503
        %v1505 = vrot.slane %v1490, 4
        %v1506 = vsel %vm1215, 0.0, %v1505
        %v1507 = vrot.slane %v1498, 4
        %v1508 = vsel %vm1215, 0.0, %v1507
        %v1509 = vrot.slane %v1502, 4
        %v1510 = vsel %vm1215, 0.0, %v1509
        %v1511 = vsel %vm1215, %v1505, %v1486
        %v1513 = vunpack.c.l.s4 1983009808
        %v1514 = vunpack.c.0.s8 %v1513
        %v1515 = vperm.slane %v1511, %v1514
        %v1516 = vrot.slane %v1506, 4
        %v1517 = vsel %vm1215, %v1516, %v1504
        %v1519 = vunpack.c.l.s4 1983009808
        %v1520 = vunpack.c.0.s8 %v1519
        %v1521 = vperm.slane %v1517, %v1520
        %v1522 = vsel %vm1215, %v1509, %v1498
        %v1524 = vunpack.c.l.s4 1983009808
        %v1525 = vunpack.c.0.s8 %v1524
        %v1526 = vperm.slane %v1522, %v1525
        %v1527 = vrot.slane %v1510, 4
        %v1528 = vsel %vm1215, %v1527, %v1508
        %v1530 = vunpack.c.l.s4 1983009808
        %v1531 = vunpack.c.0.s8 %v1530
        %v1532 = vperm.slane %v1528, %v1531
        %v1533 = vrot.slane %v1521, 4
        %v1534 = vsel %vm1215, %v1533, %v1515
        %v1535 = vrot.slane %v1515, 4
        %v1536 = vsel %vm1215, %v1521, %v1535
        %v1538 = vunpack.c.l.s4 1934713408
        %v1539 = vunpack.c.0.s8 %v1538
        %v1540 = vperm.slane %v1534, %v1539
        %v1542 = vunpack.c.l.s4 1934713408
        %v1543 = vunpack.c.0.s8 %v1542
        %v1544 = vperm.slane %v1536, %v1543
        %v1545 = vrot.slane %v1532, 4
        %v1546 = vsel %vm1215, %v1545, %v1526
        %v1547 = vrot.slane %v1526, 4
        %v1548 = vsel %vm1215, %v1532, %v1547
        %v1550 = vunpack.c.l.s4 1934713408
        %v1551 = vunpack.c.0.s8 %v1550
        %v1552 = vperm.slane %v1546, %v1551
        %v1554 = vunpack.c.l.s4 1934713408
        %v1555 = vunpack.c.0.s8 %v1554
        %v1556 = vperm.slane %v1548, %v1555
        %v1557 = vrot.slane %v1552, 4
        %v1558 = vsel %vm1215, %v1557, %v1540
        %v1559 = vrot.slane %v1540, 4
        %v1560 = vsel %vm1215, %v1552, %v1559
        %v1561 = vrot.slane %v1556, 4
        %v1562 = vsel %vm1215, %v1561, %v1544
        %v1563 = vrot.slane %v1544, 4
        %v1564 = vsel %vm1215, %v1556, %v1563
        %vm1565 = vcmask 64512
        %v1567 = vsel %vm1565, %v1318, 0
        %v1570 = vsel %vm1565, %v1438, 0
        %1572 = vmatpush.xpose.msra.mxu0 0.0
        %1573 = vmatpush.xpose.msra.mxu0 0.0
        %1574 = vmatpush.xpose.msra.mxu0 0.0
        %1575 = vmatpush.xpose.msra.mxu0 0.0
        %1576 = vmatpush.xpose.msra.mxu0 0.0
        %1577 = vmatpush.xpose.msra.mxu0 0.0
        %1578 = vmatpush.xpose.msra.mxu0 0.0
        %1579 = vmatpush.xpose.msra.mxu0 0.0
        %1580 = vmatpush.xpose.msra.mxu0 0.0
        %1581 = vmatpush.xpose.msra.mxu0 0.0
        %1582 = vmatpush.xpose.msra.mxu0 0.0
        %1583 = vmatpush.xpose.msra.mxu0 0.0
        %1584 = vmatpush.xpose.msra.mxu0 0.0
        %1585 = vmatpush.xpose.msra.mxu0 0.0
        %1586 = vmatpush.xpose.msra.mxu0 0.0
        %1587 = vmatpush.xpose.msra.mxu0 %v1570
        %1588 = vmatmul.f32.gmra.mxu0 %v1567
        %v1589 = vpop.f32.mrf.mxu0
        %v1590 = vadd.f32 0.0, %v1589
        %1591 = vdwg.mxu0
        %v1593 = vsel %vm1565, %v1320, 0
        %v1596 = vsel %vm1565, %v1440, 0
        %1598 = vmatpush.xpose.msra.mxu0 0.0
        %1599 = vmatpush.xpose.msra.mxu0 0.0
        %1600 = vmatpush.xpose.msra.mxu0 0.0
        %1601 = vmatpush.xpose.msra.mxu0 0.0
        %1602 = vmatpush.xpose.msra.mxu0 0.0
        %1603 = vmatpush.xpose.msra.mxu0 0.0
        %1604 = vmatpush.xpose.msra.mxu0 0.0
        %1605 = vmatpush.xpose.msra.mxu0 0.0
        %1606 = vmatpush.xpose.msra.mxu0 0.0
        %1607 = vmatpush.xpose.msra.mxu0 0.0
        %1608 = vmatpush.xpose.msra.mxu0 0.0
        %1609 = vmatpush.xpose.msra.mxu0 0.0
        %1610 = vmatpush.xpose.msra.mxu0 0.0
        %1611 = vmatpush.xpose.msra.mxu0 0.0
        %1612 = vmatpush.xpose.msra.mxu0 0.0
        %1613 = vmatpush.xpose.msra.mxu0 %v1596
        %1614 = vmatmul.f32.gmra.mxu0 %v1593
        %v1615 = vpop.f32.mrf.mxu0
        %v1616 = vadd.f32 0.0, %v1615
        %1617 = vdwg.mxu0
        %v1619 = vsel %vm1565, %v1322, 0
        %v1622 = vsel %vm1565, %v1442, 0
        %1624 = vmatpush.xpose.msra.mxu0 0.0
        %1625 = vmatpush.xpose.msra.mxu0 0.0
        %1626 = vmatpush.xpose.msra.mxu0 0.0
        %1627 = vmatpush.xpose.msra.mxu0 0.0
        %1628 = vmatpush.xpose.msra.mxu0 0.0
        %1629 = vmatpush.xpose.msra.mxu0 0.0
        %1630 = vmatpush.xpose.msra.mxu0 0.0
        %1631 = vmatpush.xpose.msra.mxu0 0.0
        %1632 = vmatpush.xpose.msra.mxu0 0.0
        %1633 = vmatpush.xpose.msra.mxu0 0.0
        %1634 = vmatpush.xpose.msra.mxu0 0.0
        %1635 = vmatpush.xpose.msra.mxu0 0.0
        %1636 = vmatpush.xpose.msra.mxu0 0.0
        %1637 = vmatpush.xpose.msra.mxu0 0.0
        %1638 = vmatpush.xpose.msra.mxu0 0.0
        %1639 = vmatpush.xpose.msra.mxu0 %v1622
        %1640 = vmatmul.f32.gmra.mxu0 %v1619
        %v1641 = vpop.f32.mrf.mxu0
        %v1642 = vadd.f32 0.0, %v1641
        %1643 = vdwg.mxu0
        %v1645 = vsel %vm1565, %v1324, 0
        %v1648 = vsel %vm1565, %v1444, 0
        %1650 = vmatpush.xpose.msra.mxu0 0.0
        %1651 = vmatpush.xpose.msra.mxu0 0.0
        %1652 = vmatpush.xpose.msra.mxu0 0.0
        %1653 = vmatpush.xpose.msra.mxu0 0.0
        %1654 = vmatpush.xpose.msra.mxu0 0.0
        %1655 = vmatpush.xpose.msra.mxu0 0.0
        %1656 = vmatpush.xpose.msra.mxu0 0.0
        %1657 = vmatpush.xpose.msra.mxu0 0.0
        %1658 = vmatpush.xpose.msra.mxu0 0.0
        %1659 = vmatpush.xpose.msra.mxu0 0.0
        %1660 = vmatpush.xpose.msra.mxu0 0.0
        %1661 = vmatpush.xpose.msra.mxu0 0.0
        %1662 = vmatpush.xpose.msra.mxu0 0.0
        %1663 = vmatpush.xpose.msra.mxu0 0.0
        %1664 = vmatpush.xpose.msra.mxu0 0.0
        %1665 = vmatpush.xpose.msra.mxu0 %v1648
        %1666 = vmatmul.f32.gmra.mxu0 %v1645
        %v1667 = vpop.f32.mrf.mxu0
        %v1668 = vadd.f32 0.0, %v1667
        %1669 = vdwg.mxu0
        %v1670 = vmul.f32 %v1590, 0.35355338
        %v1671 = vmul.f32 %v1616, 0.35355338
        %v1672 = vmul.f32 %v1642, 0.35355338
        %v1673 = vmul.f32 %v1668, 0.35355338
        %v1674 = vadd.f32 %v1670, %v1068
        %v1675 = vadd.f32 %v1671, %v1068
        %v1676 = vadd.f32 %v1672, %v1068
        %v1677 = vadd.f32 %v1673, %v1068
        %v1678 = vsel %vm1565, %v1674, -inf
        %1679 = vmax.xlane.f32.xlu0 %v1678
        %v1680 = vpop.xlane.xlu0 %1679
        %v1681 = vsel %vm1565, %v1675, -inf
        %1682 = vmax.xlane.f32.xlu0 %v1681
        %v1683 = vpop.xlane.xlu0 %1682
        %v1684 = vsel %vm1565, %v1676, -inf
        %1685 = vmax.xlane.f32.xlu0 %v1684
        %v1686 = vpop.xlane.xlu0 %1685
        %v1687 = vsel %vm1565, %v1677, -inf
        %1688 = vmax.xlane.f32.xlu0 %v1687
        %v1689 = vpop.xlane.xlu0 %1688
        %v1690 = vsub.f32 %v1674, %v1680
        %v1691 = vsub.f32 %v1675, %v1683
        %v1692 = vsub.f32 %v1676, %v1686
        %v1693 = vsub.f32 %v1677, %v1689
        %v1694 = vmul.f32 %v1690, 1.442695
        %v1695 = vpow.pop %v1694
        %v1696 = vmul.f32 %v1691, 1.442695
        %v1697 = vpow.pop %v1696
        %v1698 = vmul.f32 %v1692, 1.442695
        %v1699 = vpow.pop %v1698
        %v1700 = vmul.f32 %v1693, 1.442695
        %v1701 = vpow.pop %v1700
        %v1702 = vsel %vm1565, %v1695, 0.0
        %1703 = vadd.xlane.f32.xlu0 %v1702
        %v1704 = vpop.xlane.xlu0 %1703
        %v1705 = vsel %vm1565, %v1697, 0.0
        %1706 = vadd.xlane.f32.xlu0 %v1705
        %v1707 = vpop.xlane.xlu0 %1706
        %v1708 = vsel %vm1565, %v1699, 0.0
        %1709 = vadd.xlane.f32.xlu0 %v1708
        %v1710 = vpop.xlane.xlu0 %1709
        %v1711 = vsel %vm1565, %v1701, 0.0
        %1712 = vadd.xlane.f32.xlu0 %v1711
        %v1713 = vpop.xlane.xlu0 %1712
        %v1714 = vrcp.pop %v1704
        %v1715 = vrcp.pop %v1707
        %v1716 = vrcp.pop %v1710
        %v1717 = vrcp.pop %v1713
        %v1718 = vmul.f32 %v1695, %v1714
        %v1719 = vmul.f32 %v1697, %v1715
        %v1720 = vmul.f32 %v1699, %v1716
        %v1721 = vmul.f32 %v1701, %v1717
        %v1723 = vsel %vm1565, %v1718, 0
        %1725 = vmatpush.msra.mxu0 0.0
        %1726 = vmatpush.msra.mxu0 0.0
        %1727 = vmatpush.msra.mxu0 0.0
        %1728 = vmatpush.msra.mxu0 0.0
        %1729 = vmatpush.msra.mxu0 0.0
        %1730 = vmatpush.msra.mxu0 0.0
        %1731 = vmatpush.msra.mxu0 0.0
        %1732 = vmatpush.msra.mxu0 0.0
        %1733 = vmatpush.msra.mxu0 0.0
        %1734 = vmatpush.msra.mxu0 0.0
        %1735 = vmatpush.msra.mxu0 0.0
        %1736 = vmatpush.msra.mxu0 0.0
        %1737 = vmatpush.msra.mxu0 0.0
        %1738 = vmatpush.msra.mxu0 0.0
        %1739 = vmatpush.msra.mxu0 0.0
        %1740 = vmatpush.msra.mxu0 %v1558
        %1741 = vmatmul.f32.gmra.mxu0 %v1723
        %v1742 = vpop.f32.mrf.mxu0
        %v1743 = vadd.f32 0.0, %v1742
        %1744 = vdwg.mxu0
        %v1746 = vsel %vm1565, %v1719, 0
        %1748 = vmatpush.msra.mxu0 0.0
        %1749 = vmatpush.msra.mxu0 0.0
        %1750 = vmatpush.msra.mxu0 0.0
        %1751 = vmatpush.msra.mxu0 0.0
        %1752 = vmatpush.msra.mxu0 0.0
        %1753 = vmatpush.msra.mxu0 0.0
        %1754 = vmatpush.msra.mxu0 0.0
        %1755 = vmatpush.msra.mxu0 0.0
        %1756 = vmatpush.msra.mxu0 0.0
        %1757 = vmatpush.msra.mxu0 0.0
        %1758 = vmatpush.msra.mxu0 0.0
        %1759 = vmatpush.msra.mxu0 0.0
        %1760 = vmatpush.msra.mxu0 0.0
        %1761 = vmatpush.msra.mxu0 0.0
        %1762 = vmatpush.msra.mxu0 0.0
        %1763 = vmatpush.msra.mxu0 %v1560
        %1764 = vmatmul.f32.gmra.mxu0 %v1746
        %v1765 = vpop.f32.mrf.mxu0
        %v1766 = vadd.f32 0.0, %v1765
        %1767 = vdwg.mxu0
        %v1769 = vsel %vm1565, %v1720, 0
        %1771 = vmatpush.msra.mxu0 0.0
        %1772 = vmatpush.msra.mxu0 0.0
        %1773 = vmatpush.msra.mxu0 0.0
        %1774 = vmatpush.msra.mxu0 0.0
        %1775 = vmatpush.msra.mxu0 0.0
        %1776 = vmatpush.msra.mxu0 0.0
        %1777 = vmatpush.msra.mxu0 0.0
        %1778 = vmatpush.msra.mxu0 0.0
        %1779 = vmatpush.msra.mxu0 0.0
        %1780 = vmatpush.msra.mxu0 0.0
        %1781 = vmatpush.msra.mxu0 0.0
        %1782 = vmatpush.msra.mxu0 0.0
        %1783 = vmatpush.msra.mxu0 0.0
        %1784 = vmatpush.msra.mxu0 0.0
        %1785 = vmatpush.msra.mxu0 0.0
        %1786 = vmatpush.msra.mxu0 %v1562
        %1787 = vmatmul.f32.gmra.mxu0 %v1769
        %v1788 = vpop.f32.mrf.mxu0
        %v1789 = vadd.f32 0.0, %v1788
        %1790 = vdwg.mxu0
        %v1792 = vsel %vm1565, %v1721, 0
        %1794 = vmatpush.msra.mxu0 0.0
        %1795 = vmatpush.msra.mxu0 0.0
        %1796 = vmatpush.msra.mxu0 0.0
        %1797 = vmatpush.msra.mxu0 0.0
        %1798 = vmatpush.msra.mxu0 0.0
        %1799 = vmatpush.msra.mxu0 0.0
        %1800 = vmatpush.msra.mxu0 0.0
        %1801 = vmatpush.msra.mxu0 0.0
        %1802 = vmatpush.msra.mxu0 0.0
        %1803 = vmatpush.msra.mxu0 0.0
        %1804 = vmatpush.msra.mxu0 0.0
        %1805 = vmatpush.msra.mxu0 0.0
        %1806 = vmatpush.msra.mxu0 0.0
        %1807 = vmatpush.msra.mxu0 0.0
        %1808 = vmatpush.msra.mxu0 0.0
        %1809 = vmatpush.msra.mxu0 %v1564
        %1810 = vmatmul.f32.gmra.mxu0 %v1792
        %v1811 = vpop.f32.mrf.mxu0
        %v1812 = vadd.f32 0.0, %v1811
        %1813 = vdwg.mxu0
        %v1814 = vrot.slane %v1789, 4
        %v1815 = vsel %vm1215, %v1814, %v1743
        %v1816 = vrot.slane %v1743, 4
        %v1817 = vsel %vm1215, %v1789, %v1816
        %v1819 = vunpack.c.l.s4 1983009808
        %v1820 = vunpack.c.0.s8 %v1819
        %v1821 = vperm.slane %v1815, %v1820
        %v1823 = vunpack.c.l.s4 1983009808
        %v1824 = vunpack.c.0.s8 %v1823
        %v1825 = vperm.slane %v1817, %v1824
        %v1826 = vrot.slane %v1812, 4
        %v1827 = vsel %vm1215, %v1826, %v1766
        %v1828 = vrot.slane %v1766, 4
        %v1829 = vsel %vm1215, %v1812, %v1828
        %v1831 = vunpack.c.l.s4 1983009808
        %v1832 = vunpack.c.0.s8 %v1831
        %v1833 = vperm.slane %v1827, %v1832
        %v1835 = vunpack.c.l.s4 1983009808
        %v1836 = vunpack.c.0.s8 %v1835
        %v1837 = vperm.slane %v1829, %v1836
        %v1838 = vrot.slane %v1833, 4
        %v1839 = vsel %vm1215, %v1838, %v1821
        %v1840 = vrot.slane %v1821, 4
        %v1841 = vsel %vm1215, %v1833, %v1840
        %v1843 = vunpack.c.l.s4 1934713408
        %v1844 = vunpack.c.0.s8 %v1843
        %v1845 = vperm.slane %v1839, %v1844
        %v1847 = vunpack.c.l.s4 1934713408
        %v1848 = vunpack.c.0.s8 %v1847
        %v1849 = vperm.slane %v1841, %v1848
        %v1850 = vrot.slane %v1837, 4
        %v1851 = vsel %vm1215, %v1850, %v1825
        %v1852 = vrot.slane %v1825, 4
        %v1853 = vsel %vm1215, %v1837, %v1852
        %v1855 = vunpack.c.l.s4 1934713408
        %v1856 = vunpack.c.0.s8 %v1855
        %v1857 = vperm.slane %v1851, %v1856
        %v1859 = vunpack.c.l.s4 1934713408
        %v1860 = vunpack.c.0.s8 %v1859
        %v1861 = vperm.slane %v1853, %v1860
        %v1862 = vrot.slane %v1845, 4
        %v1863 = vsel %vm1215, 0.0, %v1862
        %v1864 = vrot.slane %v1849, 4
        %v1865 = vsel %vm1215, 0.0, %v1864
        %v1866 = vrot.slane %v1857, 4
        %v1867 = vsel %vm1215, 0.0, %v1866
        %v1868 = vrot.slane %v1861, 4
        %v1869 = vsel %vm1215, 0.0, %v1868
        %v1870 = vsel %vm1215, %v1864, %v1845
        %v1872 = vunpack.c.l.s4 1983009808
        %v1873 = vunpack.c.0.s8 %v1872
        %v1874 = vperm.slane %v1870, %v1873
        %v1875 = vrot.slane %v1865, 4
        %v1876 = vsel %vm1215, %v1875, %v1863
        %v1878 = vunpack.c.l.s4 1983009808
        %v1879 = vunpack.c.0.s8 %v1878
        %v1880 = vperm.slane %v1876, %v1879
        %v1881 = vsel %vm1215, %v1868, %v1857
        %v1883 = vunpack.c.l.s4 1983009808
        %v1884 = vunpack.c.0.s8 %v1883
        %v1885 = vperm.slane %v1881, %v1884
        %v1886 = vrot.slane %v1869, 4
        %v1887 = vsel %vm1215, %v1886, %v1867
        %v1889 = vunpack.c.l.s4 1983009808
        %v1890 = vunpack.c.0.s8 %v1889
        %v1891 = vperm.slane %v1887, %v1890
        %v1892 = vrot.slane %v1880, 4
        %v1893 = vsel %vm1215, %v1892, %v1874
        %v1894 = vrot.slane %v1874, 4
        %v1895 = vsel %vm1215, %v1880, %v1894
        %v1897 = vunpack.c.l.s4 1934713408
        %v1898 = vunpack.c.0.s8 %v1897
        %v1899 = vperm.slane %v1893, %v1898
        %v1901 = vunpack.c.l.s4 1934713408
        %v1902 = vunpack.c.0.s8 %v1901
        %v1903 = vperm.slane %v1895, %v1902
        %v1904 = vrot.slane %v1891, 4
        %v1905 = vsel %vm1215, %v1904, %v1885
        %v1906 = vrot.slane %v1885, 4
        %v1907 = vsel %vm1215, %v1891, %v1906
        %v1909 = vunpack.c.l.s4 1934713408
        %v1910 = vunpack.c.0.s8 %v1909
        %v1911 = vperm.slane %v1905, %v1910
        %v1913 = vunpack.c.l.s4 1934713408
        %v1914 = vunpack.c.0.s8 %v1913
        %v1915 = vperm.slane %v1907, %v1914
        %v1916 = vrot.slane %v1911, 4
        %v1917 = vsel %vm1215, %v1916, %v1899
        %v1918 = vrot.slane %v1899, 4
        %v1919 = vsel %vm1215, %v1911, %v1918
        %v1920 = vrot.slane %v1915, 4
        %v1921 = vsel %vm1215, %v1920, %v1903
        %v1922 = vrot.slane %v1903, 4
        %v1923 = vsel %vm1215, %v1915, %v1922
        %1925 = vrot.lane.b32.xlu0 %v1919, 8
        %v1926 = vpop.permute.xlu0 %1925
        %1929 = vrot.lane.b32.xlu0 %v1921, 16
        %v1930 = vpop.permute.xlu0 %1929
        %1933 = vrot.lane.b32.xlu0 %v1923, 24
        %v1934 = vpop.permute.xlu0 %1933
        %v1936 = vsel %vm1565, %v1917, %v1926
        %vm1937 = vcmask 130048
        %v1938 = vsel %vm1937, %v1936, %v1930
        %vm1939 = vcmask 195584
        %v1940 = vsel %vm1939, %v1938, %v1934
        %v1942 = vperm.slane %v1131, 0
        %v1945 = vsel %vm1074, %v1940, 0
        %1947 = vmatpush.msra.mxu0 0.0
        %1948 = vmatpush.msra.mxu0 0.0
        %1949 = vmatpush.msra.mxu0 0.0
        %1950 = vmatpush.msra.mxu0 0.0
        %1951 = vmatpush.msra.mxu0 0.0
        %1952 = vmatpush.msra.mxu0 0.0
        %1953 = vmatpush.msra.mxu0 0.0
        %1954 = vmatpush.msra.mxu0 0.0
        %1955 = vmatpush.msra.mxu0 0.0
        %1956 = vmatpush.msra.mxu0 0.0
        %1957 = vmatpush.msra.mxu0 0.0
        %1958 = vmatpush.msra.mxu0 0.0
        %1959 = vmatpush.msra.mxu0 %v1130
        %1960 = vmatpush.msra.mxu0 %v1129
        %1961 = vmatpush.msra.mxu0 %v1128
        %1962 = vmatpush.msra.mxu0 %v1127
        %1963 = vmatmul.f32.gmra.mxu0 %v1945
        %v1964 = vpop.f32.mrf.mxu0
        %v1965 = vadd.f32 %v1942, %v1964
        %1966 = vdwg.mxu0
        %v1967 = vadd.f32 %v1066, %v1965
        %s1968 = scalar_lea.vmem [#allocation10], 1
        %v1969 = vld [vmem:[%s1968] sm:$0x1]
        %s1970 = scalar_lea.vmem [#allocation11], 1
        %v1971 = vld [vmem:[%s1970] sm:$0x1]
        %v1972 = vsel %vm1074, %v1967, 0.0
        %1973 = vadd.xlane.f32.xlu0 %v1972
        %v1974 = vpop.xlane.xlu0 %1973
        %v1975 = vmul.f32 %v1974, %v1084
        %v1976 = vsub.f32 %v1967, %v1975
        %v1977 = vmul.f32 %v1976, %v1976
        %v1978 = vsel %vm1074, %v1977, 0.0
        %1979 = vadd.xlane.f32.xlu0 %v1978
        %v1980 = vpop.xlane.xlu0 %1979
        %v1981 = vmul.f32 %v1980, %v1084
        %v1982 = vadd.f32 %v1981, 1e-05
        %v1983 = vrsqrt.pop %v1982
        %v1984 = vmul.f32 %v1983, %v1982
        %v1985 = vmul.f32 %v1984, %v1983
        %v1986 = vmul.f32 0.5, %v1985
        %v1987 = vsub.f32 1.5, %v1986
        %v1988 = vmul.f32 %v1983, %v1987
        %vm1989 = vweird.f32 %v1982
        %vm1990 = vweird.f32 %v1983
        %vm1991 = vmor %vm1989, %vm1990
        %v1992 = vsel %vm1991, %v1983, %v1988
        %v1993 = vmul.f32 %v1976, %v1992
        %v1995 = vperm.slane %v1969, 0
        %v1997 = vmul.f32 %v1993, %v1995
        %v1999 = vperm.slane %v1971, 0
        %v2001 = vadd.f32 %v1997, %v1999
        %s2002 = scalar_lea.vmem %s9, 32
        %v2003 = vld [vmem:[%s2002] sm:$0xff]
        %v2004 = vld [vmem:[%s2002 + $0x8] sm:$0xff]
        %v2005 = vld [vmem:[%s2002 + $0x10] sm:$0xff]
        %v2006 = vld [vmem:[%s2002 + $0x18] sm:$0xff]
        %s2007 = scalar_lea.vmem [#allocation17], 1
        %v2008 = vld [vmem:[%s2007] sm:$0x1]
        %s2009 = scalar_lea.vmem [#allocation13], 32
        %v2010 = vld [vmem:[%s2009] sm:$0xff]
        %v2011 = vld [vmem:[%s2009 + $0x8] sm:$0xff]
        %v2012 = vld [vmem:[%s2009 + $0x10] sm:$0xff]
        %v2013 = vld [vmem:[%s2009 + $0x18] sm:$0xff]
        %s2014 = scalar_lea.vmem [#allocation19], 1
        %v2015 = vld [vmem:[%s2014] sm:$0x1]
        %s2016 = scalar_lea.vmem [#allocation14], 32
        %v2017 = vld [vmem:[%s2016] sm:$0xff]
        %v2018 = vld [vmem:[%s2016 + $0x8] sm:$0xff]
        %v2019 = vld [vmem:[%s2016 + $0x10] sm:$0xff]
        %v2020 = vld [vmem:[%s2016 + $0x18] sm:$0xff]
        %s2021 = scalar_lea.vmem [#allocation20], 1
        %v2022 = vld [vmem:[%s2021] sm:$0x1]
        %s2023 = scalar_lea.vmem [#allocation16], 32
        %v2024 = vld [vmem:[%s2023] sm:$0xff]
        %v2025 = vld [vmem:[%s2023 + $0x8] sm:$0xff]
        %v2026 = vld [vmem:[%s2023 + $0x10] sm:$0xff]
        %v2027 = vld [vmem:[%s2023 + $0x18] sm:$0xff]
        %s2028 = scalar_lea.vmem [#allocation22], 1
        %v2029 = vld [vmem:[%s2028] sm:$0x1]
        %v2031 = vperm.slane %v2008, 0
        %v2034 = vsel %vm1074, %v2001, 0
        %2036 = vmatpush.msra.mxu0 0.0
        %2037 = vmatpush.msra.mxu0 0.0
        %2038 = vmatpush.msra.mxu0 0.0
        %2039 = vmatpush.msra.mxu0 0.0
        %2040 = vmatpush.msra.mxu0 0.0
        %2041 = vmatpush.msra.mxu0 0.0
        %2042 = vmatpush.msra.mxu0 0.0
        %2043 = vmatpush.msra.mxu0 0.0
        %2044 = vmatpush.msra.mxu0 0.0
        %2045 = vmatpush.msra.mxu0 0.0
        %2046 = vmatpush.msra.mxu0 0.0
        %2047 = vmatpush.msra.mxu0 0.0
        %2048 = vmatpush.msra.mxu0 %v2006
        %2049 = vmatpush.msra.mxu0 %v2005
        %2050 = vmatpush.msra.mxu0 %v2004
        %2051 = vmatpush.msra.mxu0 %v2003
        %2052 = vmatmul.f32.gmra.mxu0 %v2034
        %v2053 = vpop.f32.mrf.mxu0
        %v2054 = vadd.f32 %v2031, %v2053
        %2055 = vdwg.mxu0
        %v2057 = vperm.slane %v2015, 0
        %v2060 = vsel %vm1074, %v1067, 0
        %2062 = vmatpush.msra.mxu0 0.0
        %2063 = vmatpush.msra.mxu0 0.0
        %2064 = vmatpush.msra.mxu0 0.0
        %2065 = vmatpush.msra.mxu0 0.0
        %2066 = vmatpush.msra.mxu0 0.0
        %2067 = vmatpush.msra.mxu0 0.0
        %2068 = vmatpush.msra.mxu0 0.0
        %2069 = vmatpush.msra.mxu0 0.0
        %2070 = vmatpush.msra.mxu0 0.0
        %2071 = vmatpush.msra.mxu0 0.0
        %2072 = vmatpush.msra.mxu0 0.0
        %2073 = vmatpush.msra.mxu0 0.0
        %2074 = vmatpush.msra.mxu0 %v2013
        %2075 = vmatpush.msra.mxu0 %v2012
        %2076 = vmatpush.msra.mxu0 %v2011
        %2077 = vmatpush.msra.mxu0 %v2010
        %2078 = vmatmul.f32.gmra.mxu0 %v2060
        %v2079 = vpop.f32.mrf.mxu0
        %v2080 = vadd.f32 %v2057, %v2079
        %2081 = vdwg.mxu0
        %v2083 = vperm.slane %v2022, 0
        %2085 = vmatpush.msra.mxu0 0.0
        %2086 = vmatpush.msra.mxu0 0.0
        %2087 = vmatpush.msra.mxu0 0.0
        %2088 = vmatpush.msra.mxu0 0.0
        %2089 = vmatpush.msra.mxu0 0.0
        %2090 = vmatpush.msra.mxu0 0.0
        %2091 = vmatpush.msra.mxu0 0.0
        %2092 = vmatpush.msra.mxu0 0.0
        %2093 = vmatpush.msra.mxu0 0.0
        %2094 = vmatpush.msra.mxu0 0.0
        %2095 = vmatpush.msra.mxu0 0.0
        %2096 = vmatpush.msra.mxu0 0.0
        %2097 = vmatpush.msra.mxu0 %v2020
        %2098 = vmatpush.msra.mxu0 %v2019
        %2099 = vmatpush.msra.mxu0 %v2018
        %2100 = vmatpush.msra.mxu0 %v2017
        %2101 = vmatmul.f32.gmra.mxu0 %v2060
        %v2102 = vpop.f32.mrf.mxu0
        %v2103 = vadd.f32 %v2083, %v2102
        %2104 = vdwg.mxu0
        %2106 = vrot.lane.b32.xlu0 %v2054, 120
        %v2107 = vpop.permute.xlu0 %2106
        %2109 = vrot.lane.b32.xlu0 %v2054, 112
        %v2110 = vpop.permute.xlu0 %2109
        %2112 = vrot.lane.b32.xlu0 %v2054, 104
        %v2113 = vpop.permute.xlu0 %2112
        %v2115 = vrot.slane %v2110, 4
        %v2116 = vsel %vm1215, %v2115, %v2054
        %v2117 = vrot.slane %v2054, 4
        %v2118 = vsel %vm1215, %v2110, %v2117
        %v2120 = vunpack.c.l.s4 1983009808
        %v2121 = vunpack.c.0.s8 %v2120
        %v2122 = vperm.slane %v2116, %v2121
        %v2124 = vunpack.c.l.s4 1983009808
        %v2125 = vunpack.c.0.s8 %v2124
        %v2126 = vperm.slane %v2118, %v2125
        %v2127 = vrot.slane %v2113, 4
        %v2128 = vsel %vm1215, %v2127, %v2107
        %v2129 = vrot.slane %v2107, 4
        %v2130 = vsel %vm1215, %v2113, %v2129
        %v2132 = vunpack.c.l.s4 1983009808
        %v2133 = vunpack.c.0.s8 %v2132
        %v2134 = vperm.slane %v2128, %v2133
        %v2136 = vunpack.c.l.s4 1983009808
        %v2137 = vunpack.c.0.s8 %v2136
        %v2138 = vperm.slane %v2130, %v2137
        %v2139 = vrot.slane %v2134, 4
        %v2140 = vsel %vm1215, %v2139, %v2122
        %v2141 = vrot.slane %v2122, 4
        %v2142 = vsel %vm1215, %v2134, %v2141
        %v2144 = vunpack.c.l.s4 1934713408
        %v2145 = vunpack.c.0.s8 %v2144
        %v2146 = vperm.slane %v2140, %v2145
        %v2148 = vunpack.c.l.s4 1934713408
        %v2149 = vunpack.c.0.s8 %v2148
        %v2150 = vperm.slane %v2142, %v2149
        %v2151 = vrot.slane %v2138, 4
        %v2152 = vsel %vm1215, %v2151, %v2126
        %v2153 = vrot.slane %v2126, 4
        %v2154 = vsel %vm1215, %v2138, %v2153
        %v2156 = vunpack.c.l.s4 1934713408
        %v2157 = vunpack.c.0.s8 %v2156
        %v2158 = vperm.slane %v2152, %v2157
        %v2160 = vunpack.c.l.s4 1934713408
        %v2161 = vunpack.c.0.s8 %v2160
        %v2162 = vperm.slane %v2154, %v2161
        %v2163 = vrot.slane %v2146, 4
        %v2164 = vsel %vm1215, 0.0, %v2163
        %v2165 = vrot.slane %v2150, 4
        %v2166 = vsel %vm1215, 0.0, %v2165
        %v2167 = vrot.slane %v2158, 4
        %v2168 = vsel %vm1215, 0.0, %v2167
        %v2169 = vrot.slane %v2162, 4
        %v2170 = vsel %vm1215, 0.0, %v2169
        %v2171 = vsel %vm1215, %v2165, %v2146
        %v2173 = vunpack.c.l.s4 1983009808
        %v2174 = vunpack.c.0.s8 %v2173
        %v2175 = vperm.slane %v2171, %v2174
        %v2176 = vrot.slane %v2166, 4
        %v2177 = vsel %vm1215, %v2176, %v2164
        %v2179 = vunpack.c.l.s4 1983009808
        %v2180 = vunpack.c.0.s8 %v2179
        %v2181 = vperm.slane %v2177, %v2180
        %v2182 = vsel %vm1215, %v2169, %v2158
        %v2184 = vunpack.c.l.s4 1983009808
        %v2185 = vunpack.c.0.s8 %v2184
        %v2186 = vperm.slane %v2182, %v2185
        %v2187 = vrot.slane %v2170, 4
        %v2188 = vsel %vm1215, %v2187, %v2168
        %v2190 = vunpack.c.l.s4 1983009808
        %v2191 = vunpack.c.0.s8 %v2190
        %v2192 = vperm.slane %v2188, %v2191
        %v2193 = vrot.slane %v2181, 4
        %v2194 = vsel %vm1215, %v2193, %v2175
        %v2195 = vrot.slane %v2175, 4
        %v2196 = vsel %vm1215, %v2181, %v2195
        %v2198 = vunpack.c.l.s4 1934713408
        %v2199 = vunpack.c.0.s8 %v2198
        %v2200 = vperm.slane %v2194, %v2199
        %v2202 = vunpack.c.l.s4 1934713408
        %v2203 = vunpack.c.0.s8 %v2202
        %v2204 = vperm.slane %v2196, %v2203
        %v2205 = vrot.slane %v2192, 4
        %v2206 = vsel %vm1215, %v2205, %v2186
        %v2207 = vrot.slane %v2186, 4
        %v2208 = vsel %vm1215, %v2192, %v2207
        %v2210 = vunpack.c.l.s4 1934713408
        %v2211 = vunpack.c.0.s8 %v2210
        %v2212 = vperm.slane %v2206, %v2211
        %v2214 = vunpack.c.l.s4 1934713408
        %v2215 = vunpack.c.0.s8 %v2214
        %v2216 = vperm.slane %v2208, %v2215
        %v2217 = vrot.slane %v2212, 4
        %v2218 = vsel %vm1215, %v2217, %v2200
        %v2219 = vrot.slane %v2200, 4
        %v2220 = vsel %vm1215, %v2212, %v2219
        %v2221 = vrot.slane %v2216, 4
        %v2222 = vsel %vm1215, %v2221, %v2204
        %v2223 = vrot.slane %v2204, 4
        %v2224 = vsel %vm1215, %v2216, %v2223
        %2226 = vrot.lane.b32.xlu0 %v2080, 120
        %v2227 = vpop.permute.xlu0 %2226
        %2229 = vrot.lane.b32.xlu0 %v2080, 112
        %v2230 = vpop.permute.xlu0 %2229
        %2232 = vrot.lane.b32.xlu0 %v2080, 104
        %v2233 = vpop.permute.xlu0 %2232
        %v2235 = vrot.slane %v2230, 4
        %v2236 = vsel %vm1215, %v2235, %v2080
        %v2237 = vrot.slane %v2080, 4
        %v2238 = vsel %vm1215, %v2230, %v2237
        %v2240 = vunpack.c.l.s4 1983009808
        %v2241 = vunpack.c.0.s8 %v2240
        %v2242 = vperm.slane %v2236, %v2241
        %v2244 = vunpack.c.l.s4 1983009808
        %v2245 = vunpack.c.0.s8 %v2244
        %v2246 = vperm.slane %v2238, %v2245
        %v2247 = vrot.slane %v2233, 4
        %v2248 = vsel %vm1215, %v2247, %v2227
        %v2249 = vrot.slane %v2227, 4
        %v2250 = vsel %vm1215, %v2233, %v2249
        %v2252 = vunpack.c.l.s4 1983009808
        %v2253 = vunpack.c.0.s8 %v2252
        %v2254 = vperm.slane %v2248, %v2253
        %v2256 = vunpack.c.l.s4 1983009808
        %v2257 = vunpack.c.0.s8 %v2256
        %v2258 = vperm.slane %v2250, %v2257
        %v2259 = vrot.slane %v2254, 4
        %v2260 = vsel %vm1215, %v2259, %v2242
        %v2261 = vrot.slane %v2242, 4
        %v2262 = vsel %vm1215, %v2254, %v2261
        %v2264 = vunpack.c.l.s4 1934713408
        %v2265 = vunpack.c.0.s8 %v2264
        %v2266 = vperm.slane %v2260, %v2265
        %v2268 = vunpack.c.l.s4 1934713408
        %v2269 = vunpack.c.0.s8 %v2268
        %v2270 = vperm.slane %v2262, %v2269
        %v2271 = vrot.slane %v2258, 4
        %v2272 = vsel %vm1215, %v2271, %v2246
        %v2273 = vrot.slane %v2246, 4
        %v2274 = vsel %vm1215, %v2258, %v2273
        %v2276 = vunpack.c.l.s4 1934713408
        %v2277 = vunpack.c.0.s8 %v2276
        %v2278 = vperm.slane %v2272, %v2277
        %v2280 = vunpack.c.l.s4 1934713408
        %v2281 = vunpack.c.0.s8 %v2280
        %v2282 = vperm.slane %v2274, %v2281
        %v2283 = vrot.slane %v2266, 4
        %v2284 = vsel %vm1215, 0.0, %v2283
        %v2285 = vrot.slane %v2270, 4
        %v2286 = vsel %vm1215, 0.0, %v2285
        %v2287 = vrot.slane %v2278, 4
        %v2288 = vsel %vm1215, 0.0, %v2287
        %v2289 = vrot.slane %v2282, 4
        %v2290 = vsel %vm1215, 0.0, %v2289
        %v2291 = vsel %vm1215, %v2285, %v2266
        %v2293 = vunpack.c.l.s4 1983009808
        %v2294 = vunpack.c.0.s8 %v2293
        %v2295 = vperm.slane %v2291, %v2294
        %v2296 = vrot.slane %v2286, 4
        %v2297 = vsel %vm1215, %v2296, %v2284
        %v2299 = vunpack.c.l.s4 1983009808
        %v2300 = vunpack.c.0.s8 %v2299
        %v2301 = vperm.slane %v2297, %v2300
        %v2302 = vsel %vm1215, %v2289, %v2278
        %v2304 = vunpack.c.l.s4 1983009808
        %v2305 = vunpack.c.0.s8 %v2304
        %v2306 = vperm.slane %v2302, %v2305
        %v2307 = vrot.slane %v2290, 4
        %v2308 = vsel %vm1215, %v2307, %v2288
        %v2310 = vunpack.c.l.s4 1983009808
        %v2311 = vunpack.c.0.s8 %v2310
        %v2312 = vperm.slane %v2308, %v2311
        %v2313 = vrot.slane %v2301, 4
        %v2314 = vsel %vm1215, %v2313, %v2295
        %v2315 = vrot.slane %v2295, 4
        %v2316 = vsel %vm1215, %v2301, %v2315
        %v2318 = vunpack.c.l.s4 1934713408
        %v2319 = vunpack.c.0.s8 %v2318
        %v2320 = vperm.slane %v2314, %v2319
        %v2322 = vunpack.c.l.s4 1934713408
        %v2323 = vunpack.c.0.s8 %v2322
        %v2324 = vperm.slane %v2316, %v2323
        %v2325 = vrot.slane %v2312, 4
        %v2326 = vsel %vm1215, %v2325, %v2306
        %v2327 = vrot.slane %v2306, 4
        %v2328 = vsel %vm1215, %v2312, %v2327
        %v2330 = vunpack.c.l.s4 1934713408
        %v2331 = vunpack.c.0.s8 %v2330
        %v2332 = vperm.slane %v2326, %v2331
        %v2334 = vunpack.c.l.s4 1934713408
        %v2335 = vunpack.c.0.s8 %v2334
        %v2336 = vperm.slane %v2328, %v2335
        %v2337 = vrot.slane %v2332, 4
        %v2338 = vsel %vm1215, %v2337, %v2320
        %v2339 = vrot.slane %v2320, 4
        %v2340 = vsel %vm1215, %v2332, %v2339
        %v2341 = vrot.slane %v2336, 4
        %v2342 = vsel %vm1215, %v2341, %v2324
        %v2343 = vrot.slane %v2324, 4
        %v2344 = vsel %vm1215, %v2336, %v2343
        %2346 = vrot.lane.b32.xlu0 %v2103, 120
        %v2347 = vpop.permute.xlu0 %2346
        %2349 = vrot.lane.b32.xlu0 %v2103, 112
        %v2350 = vpop.permute.xlu0 %2349
        %2352 = vrot.lane.b32.xlu0 %v2103, 104
        %v2353 = vpop.permute.xlu0 %2352
        %v2355 = vrot.slane %v2350, 4
        %v2356 = vsel %vm1215, %v2355, %v2103
        %v2357 = vrot.slane %v2103, 4
        %v2358 = vsel %vm1215, %v2350, %v2357
        %v2360 = vunpack.c.l.s4 1983009808
        %v2361 = vunpack.c.0.s8 %v2360
        %v2362 = vperm.slane %v2356, %v2361
        %v2364 = vunpack.c.l.s4 1983009808
        %v2365 = vunpack.c.0.s8 %v2364
        %v2366 = vperm.slane %v2358, %v2365
        %v2367 = vrot.slane %v2353, 4
        %v2368 = vsel %vm1215, %v2367, %v2347
        %v2369 = vrot.slane %v2347, 4
        %v2370 = vsel %vm1215, %v2353, %v2369
        %v2372 = vunpack.c.l.s4 1983009808
        %v2373 = vunpack.c.0.s8 %v2372
        %v2374 = vperm.slane %v2368, %v2373
        %v2376 = vunpack.c.l.s4 1983009808
        %v2377 = vunpack.c.0.s8 %v2376
        %v2378 = vperm.slane %v2370, %v2377
        %v2379 = vrot.slane %v2374, 4
        %v2380 = vsel %vm1215, %v2379, %v2362
        %v2381 = vrot.slane %v2362, 4
        %v2382 = vsel %vm1215, %v2374, %v2381
        %v2384 = vunpack.c.l.s4 1934713408
        %v2385 = vunpack.c.0.s8 %v2384
        %v2386 = vperm.slane %v2380, %v2385
        %v2388 = vunpack.c.l.s4 1934713408
        %v2389 = vunpack.c.0.s8 %v2388
        %v2390 = vperm.slane %v2382, %v2389
        %v2391 = vrot.slane %v2378, 4
        %v2392 = vsel %vm1215, %v2391, %v2366
        %v2393 = vrot.slane %v2366, 4
        %v2394 = vsel %vm1215, %v2378, %v2393
        %v2396 = vunpack.c.l.s4 1934713408
        %v2397 = vunpack.c.0.s8 %v2396
        %v2398 = vperm.slane %v2392, %v2397
        %v2400 = vunpack.c.l.s4 1934713408
        %v2401 = vunpack.c.0.s8 %v2400
        %v2402 = vperm.slane %v2394, %v2401
        %v2403 = vrot.slane %v2386, 4
        %v2404 = vsel %vm1215, 0.0, %v2403
        %v2405 = vrot.slane %v2390, 4
        %v2406 = vsel %vm1215, 0.0, %v2405
        %v2407 = vrot.slane %v2398, 4
        %v2408 = vsel %vm1215, 0.0, %v2407
        %v2409 = vrot.slane %v2402, 4
        %v2410 = vsel %vm1215, 0.0, %v2409
        %v2411 = vsel %vm1215, %v2405, %v2386
        %v2413 = vunpack.c.l.s4 1983009808
        %v2414 = vunpack.c.0.s8 %v2413
        %v2415 = vperm.slane %v2411, %v2414
        %v2416 = vrot.slane %v2406, 4
        %v2417 = vsel %vm1215, %v2416, %v2404
        %v2419 = vunpack.c.l.s4 1983009808
        %v2420 = vunpack.c.0.s8 %v2419
        %v2421 = vperm.slane %v2417, %v2420
        %v2422 = vsel %vm1215, %v2409, %v2398
        %v2424 = vunpack.c.l.s4 1983009808
        %v2425 = vunpack.c.0.s8 %v2424
        %v2426 = vperm.slane %v2422, %v2425
        %v2427 = vrot.slane %v2410, 4
        %v2428 = vsel %vm1215, %v2427, %v2408
        %v2430 = vunpack.c.l.s4 1983009808
        %v2431 = vunpack.c.0.s8 %v2430
        %v2432 = vperm.slane %v2428, %v2431
        %v2433 = vrot.slane %v2421, 4
        %v2434 = vsel %vm1215, %v2433, %v2415
        %v2435 = vrot.slane %v2415, 4
        %v2436 = vsel %vm1215, %v2421, %v2435
        %v2438 = vunpack.c.l.s4 1934713408
        %v2439 = vunpack.c.0.s8 %v2438
        %v2440 = vperm.slane %v2434, %v2439
        %v2442 = vunpack.c.l.s4 1934713408
        %v2443 = vunpack.c.0.s8 %v2442
        %v2444 = vperm.slane %v2436, %v2443
        %v2445 = vrot.slane %v2432, 4
        %v2446 = vsel %vm1215, %v2445, %v2426
        %v2447 = vrot.slane %v2426, 4
        %v2448 = vsel %vm1215, %v2432, %v2447
        %v2450 = vunpack.c.l.s4 1934713408
        %v2451 = vunpack.c.0.s8 %v2450
        %v2452 = vperm.slane %v2446, %v2451
        %v2454 = vunpack.c.l.s4 1934713408
        %v2455 = vunpack.c.0.s8 %v2454
        %v2456 = vperm.slane %v2448, %v2455
        %v2457 = vrot.slane %v2452, 4
        %v2458 = vsel %vm1215, %v2457, %v2440
        %v2459 = vrot.slane %v2440, 4
        %v2460 = vsel %vm1215, %v2452, %v2459
        %v2461 = vrot.slane %v2456, 4
        %v2462 = vsel %vm1215, %v2461, %v2444
        %v2463 = vrot.slane %v2444, 4
        %v2464 = vsel %vm1215, %v2456, %v2463
        %v2466 = vsel %vm1565, %v2218, 0
        %v2469 = vsel %vm1565, %v2338, 0
        %2471 = vmatpush.xpose.msra.mxu0 0.0
        %2472 = vmatpush.xpose.msra.mxu0 0.0
        %2473 = vmatpush.xpose.msra.mxu0 0.0
        %2474 = vmatpush.xpose.msra.mxu0 0.0
        %2475 = vmatpush.xpose.msra.mxu0 0.0
        %2476 = vmatpush.xpose.msra.mxu0 0.0
        %2477 = vmatpush.xpose.msra.mxu0 0.0
        %2478 = vmatpush.xpose.msra.mxu0 0.0
        %2479 = vmatpush.xpose.msra.mxu0 0.0
        %2480 = vmatpush.xpose.msra.mxu0 0.0
        %2481 = vmatpush.xpose.msra.mxu0 0.0
        %2482 = vmatpush.xpose.msra.mxu0 0.0
        %2483 = vmatpush.xpose.msra.mxu0 0.0
        %2484 = vmatpush.xpose.msra.mxu0 0.0
        %2485 = vmatpush.xpose.msra.mxu0 0.0
        %2486 = vmatpush.xpose.msra.mxu0 %v2469
        %2487 = vmatmul.f32.gmra.mxu0 %v2466
        %v2488 = vpop.f32.mrf.mxu0
        %v2489 = vadd.f32 0.0, %v2488
        %2490 = vdwg.mxu0
        %v2492 = vsel %vm1565, %v2220, 0
        %v2495 = vsel %vm1565, %v2340, 0
        %2497 = vmatpush.xpose.msra.mxu0 0.0
        %2498 = vmatpush.xpose.msra.mxu0 0.0
        %2499 = vmatpush.xpose.msra.mxu0 0.0
        %2500 = vmatpush.xpose.msra.mxu0 0.0
        %2501 = vmatpush.xpose.msra.mxu0 0.0
        %2502 = vmatpush.xpose.msra.mxu0 0.0
        %2503 = vmatpush.xpose.msra.mxu0 0.0
        %2504 = vmatpush.xpose.msra.mxu0 0.0
        %2505 = vmatpush.xpose.msra.mxu0 0.0
        %2506 = vmatpush.xpose.msra.mxu0 0.0
        %2507 = vmatpush.xpose.msra.mxu0 0.0
        %2508 = vmatpush.xpose.msra.mxu0 0.0
        %2509 = vmatpush.xpose.msra.mxu0 0.0
        %2510 = vmatpush.xpose.msra.mxu0 0.0
        %2511 = vmatpush.xpose.msra.mxu0 0.0
        %2512 = vmatpush.xpose.msra.mxu0 %v2495
        %2513 = vmatmul.f32.gmra.mxu0 %v2492
        %v2514 = vpop.f32.mrf.mxu0
        %v2515 = vadd.f32 0.0, %v2514
        %2516 = vdwg.mxu0
        %v2518 = vsel %vm1565, %v2222, 0
        %v2521 = vsel %vm1565, %v2342, 0
        %2523 = vmatpush.xpose.msra.mxu0 0.0
        %2524 = vmatpush.xpose.msra.mxu0 0.0
        %2525 = vmatpush.xpose.msra.mxu0 0.0
        %2526 = vmatpush.xpose.msra.mxu0 0.0
        %2527 = vmatpush.xpose.msra.mxu0 0.0
        %2528 = vmatpush.xpose.msra.mxu0 0.0
        %2529 = vmatpush.xpose.msra.mxu0 0.0
        %2530 = vmatpush.xpose.msra.mxu0 0.0
        %2531 = vmatpush.xpose.msra.mxu0 0.0
        %2532 = vmatpush.xpose.msra.mxu0 0.0
        %2533 = vmatpush.xpose.msra.mxu0 0.0
        %2534 = vmatpush.xpose.msra.mxu0 0.0
        %2535 = vmatpush.xpose.msra.mxu0 0.0
        %2536 = vmatpush.xpose.msra.mxu0 0.0
        %2537 = vmatpush.xpose.msra.mxu0 0.0
        %2538 = vmatpush.xpose.msra.mxu0 %v2521
        %2539 = vmatmul.f32.gmra.mxu0 %v2518
        %v2540 = vpop.f32.mrf.mxu0
        %v2541 = vadd.f32 0.0, %v2540
        %2542 = vdwg.mxu0
        %v2544 = vsel %vm1565, %v2224, 0
        %v2547 = vsel %vm1565, %v2344, 0
        %2549 = vmatpush.xpose.msra.mxu0 0.0
        %2550 = vmatpush.xpose.msra.mxu0 0.0
        %2551 = vmatpush.xpose.msra.mxu0 0.0
        %2552 = vmatpush.xpose.msra.mxu0 0.0
        %2553 = vmatpush.xpose.msra.mxu0 0.0
        %2554 = vmatpush.xpose.msra.mxu0 0.0
        %2555 = vmatpush.xpose.msra.mxu0 0.0
        %2556 = vmatpush.xpose.msra.mxu0 0.0
        %2557 = vmatpush.xpose.msra.mxu0 0.0
        %2558 = vmatpush.xpose.msra.mxu0 0.0
        %2559 = vmatpush.xpose.msra.mxu0 0.0
        %2560 = vmatpush.xpose.msra.mxu0 0.0
        %2561 = vmatpush.xpose.msra.mxu0 0.0
        %2562 = vmatpush.xpose.msra.mxu0 0.0
        %2563 = vmatpush.xpose.msra.mxu0 0.0
        %2564 = vmatpush.xpose.msra.mxu0 %v2547
        %2565 = vmatmul.f32.gmra.mxu0 %v2544
        %v2566 = vpop.f32.mrf.mxu0
        %v2567 = vadd.f32 0.0, %v2566
        %2568 = vdwg.mxu0
        %v2569 = vmul.f32 %v2489, 0.35355338
        %v2570 = vmul.f32 %v2515, 0.35355338
        %v2571 = vmul.f32 %v2541, 0.35355338
        %v2572 = vmul.f32 %v2567, 0.35355338
        %v2574 = vperm.slane %v1069, 0
        %v2576 = vadd.f32 %v2569, %v2574
        %v2577 = vadd.f32 %v2570, %v2574
        %v2578 = vadd.f32 %v2571, %v2574
        %v2579 = vadd.f32 %v2572, %v2574
        %v2580 = vsel %vm1565, %v2576, -inf
        %2581 = vmax.xlane.f32.xlu0 %v2580
        %v2582 = vpop.xlane.xlu0 %2581
        %v2583 = vsel %vm1565, %v2577, -inf
        %2584 = vmax.xlane.f32.xlu0 %v2583
        %v2585 = vpop.xlane.xlu0 %2584
        %v2586 = vsel %vm1565, %v2578, -inf
        %2587 = vmax.xlane.f32.xlu0 %v2586
        %v2588 = vpop.xlane.xlu0 %2587
        %v2589 = vsel %vm1565, %v2579, -inf
        %2590 = vmax.xlane.f32.xlu0 %v2589
        %v2591 = vpop.xlane.xlu0 %2590
        %v2592 = vsub.f32 %v2576, %v2582
        %v2593 = vsub.f32 %v2577, %v2585
        %v2594 = vsub.f32 %v2578, %v2588
        %v2595 = vsub.f32 %v2579, %v2591
        %v2596 = vmul.f32 %v2592, 1.442695
        %v2597 = vpow.pop %v2596
        %v2598 = vmul.f32 %v2593, 1.442695
        %v2599 = vpow.pop %v2598
        %v2600 = vmul.f32 %v2594, 1.442695
        %v2601 = vpow.pop %v2600
        %v2602 = vmul.f32 %v2595, 1.442695
        %v2603 = vpow.pop %v2602
        %v2604 = vsel %vm1565, %v2597, 0.0
        %2605 = vadd.xlane.f32.xlu0 %v2604
        %v2606 = vpop.xlane.xlu0 %2605
        %v2607 = vsel %vm1565, %v2599, 0.0
        %2608 = vadd.xlane.f32.xlu0 %v2607
        %v2609 = vpop.xlane.xlu0 %2608
        %v2610 = vsel %vm1565, %v2601, 0.0
        %2611 = vadd.xlane.f32.xlu0 %v2610
        %v2612 = vpop.xlane.xlu0 %2611
        %v2613 = vsel %vm1565, %v2603, 0.0
        %2614 = vadd.xlane.f32.xlu0 %v2613
        %v2615 = vpop.xlane.xlu0 %2614
        %v2616 = vrcp.pop %v2606
        %v2617 = vrcp.pop %v2609
        %v2618 = vrcp.pop %v2612
        %v2619 = vrcp.pop %v2615
        %v2620 = vmul.f32 %v2597, %v2616
        %v2621 = vmul.f32 %v2599, %v2617
        %v2622 = vmul.f32 %v2601, %v2618
        %v2623 = vmul.f32 %v2603, %v2619
        %v2625 = vsel %vm1565, %v2620, 0
        %2627 = vmatpush.msra.mxu0 0.0
        %2628 = vmatpush.msra.mxu0 0.0
        %2629 = vmatpush.msra.mxu0 0.0
        %2630 = vmatpush.msra.mxu0 0.0
        %2631 = vmatpush.msra.mxu0 0.0
        %2632 = vmatpush.msra.mxu0 0.0
        %2633 = vmatpush.msra.mxu0 0.0
        %2634 = vmatpush.msra.mxu0 0.0
        %2635 = vmatpush.msra.mxu0 0.0
        %2636 = vmatpush.msra.mxu0 0.0
        %2637 = vmatpush.msra.mxu0 0.0
        %2638 = vmatpush.msra.mxu0 0.0
        %2639 = vmatpush.msra.mxu0 0.0
        %2640 = vmatpush.msra.mxu0 0.0
        %2641 = vmatpush.msra.mxu0 0.0
        %2642 = vmatpush.msra.mxu0 %v2458
        %2643 = vmatmul.f32.gmra.mxu0 %v2625
        %v2644 = vpop.f32.mrf.mxu0
        %v2645 = vadd.f32 0.0, %v2644
        %2646 = vdwg.mxu0
        %v2648 = vsel %vm1565, %v2621, 0
        %2650 = vmatpush.msra.mxu0 0.0
        %2651 = vmatpush.msra.mxu0 0.0
        %2652 = vmatpush.msra.mxu0 0.0
        %2653 = vmatpush.msra.mxu0 0.0
        %2654 = vmatpush.msra.mxu0 0.0
        %2655 = vmatpush.msra.mxu0 0.0
        %2656 = vmatpush.msra.mxu0 0.0
        %2657 = vmatpush.msra.mxu0 0.0
        %2658 = vmatpush.msra.mxu0 0.0
        %2659 = vmatpush.msra.mxu0 0.0
        %2660 = vmatpush.msra.mxu0 0.0
        %2661 = vmatpush.msra.mxu0 0.0
        %2662 = vmatpush.msra.mxu0 0.0
        %2663 = vmatpush.msra.mxu0 0.0
        %2664 = vmatpush.msra.mxu0 0.0
        %2665 = vmatpush.msra.mxu0 %v2460
        %2666 = vmatmul.f32.gmra.mxu0 %v2648
        %v2667 = vpop.f32.mrf.mxu0
        %v2668 = vadd.f32 0.0, %v2667
        %2669 = vdwg.mxu0
        %v2671 = vsel %vm1565, %v2622, 0
        %2673 = vmatpush.msra.mxu0 0.0
        %2674 = vmatpush.msra.mxu0 0.0
        %2675 = vmatpush.msra.mxu0 0.0
        %2676 = vmatpush.msra.mxu0 0.0
        %2677 = vmatpush.msra.mxu0 0.0
        %2678 = vmatpush.msra.mxu0 0.0
        %2679 = vmatpush.msra.mxu0 0.0
        %2680 = vmatpush.msra.mxu0 0.0
        %2681 = vmatpush.msra.mxu0 0.0
        %2682 = vmatpush.msra.mxu0 0.0
        %2683 = vmatpush.msra.mxu0 0.0
        %2684 = vmatpush.msra.mxu0 0.0
        %2685 = vmatpush.msra.mxu0 0.0
        %2686 = vmatpush.msra.mxu0 0.0
        %2687 = vmatpush.msra.mxu0 0.0
        %2688 = vmatpush.msra.mxu0 %v2462
        %2689 = vmatmul.f32.gmra.mxu0 %v2671
        %v2690 = vpop.f32.mrf.mxu0
        %v2691 = vadd.f32 0.0, %v2690
        %2692 = vdwg.mxu0
        %v2694 = vsel %vm1565, %v2623, 0
        %2696 = vmatpush.msra.mxu0 0.0
        %2697 = vmatpush.msra.mxu0 0.0
        %2698 = vmatpush.msra.mxu0 0.0
        %2699 = vmatpush.msra.mxu0 0.0
        %2700 = vmatpush.msra.mxu0 0.0
        %2701 = vmatpush.msra.mxu0 0.0
        %2702 = vmatpush.msra.mxu0 0.0
        %2703 = vmatpush.msra.mxu0 0.0
        %2704 = vmatpush.msra.mxu0 0.0
        %2705 = vmatpush.msra.mxu0 0.0
        %2706 = vmatpush.msra.mxu0 0.0
        %2707 = vmatpush.msra.mxu0 0.0
        %2708 = vmatpush.msra.mxu0 0.0
        %2709 = vmatpush.msra.mxu0 0.0
        %2710 = vmatpush.msra.mxu0 0.0
        %2711 = vmatpush.msra.mxu0 %v2464
        %2712 = vmatmul.f32.gmra.mxu0 %v2694
        %v2713 = vpop.f32.mrf.mxu0
        %v2714 = vadd.f32 0.0, %v2713
        %2715 = vdwg.mxu0
        %v2716 = vrot.slane %v2691, 4
        %v2717 = vsel %vm1215, %v2716, %v2645
        %v2718 = vrot.slane %v2645, 4
        %v2719 = vsel %vm1215, %v2691, %v2718
        %v2721 = vunpack.c.l.s4 1983009808
        %v2722 = vunpack.c.0.s8 %v2721
        %v2723 = vperm.slane %v2717, %v2722
        %v2725 = vunpack.c.l.s4 1983009808
        %v2726 = vunpack.c.0.s8 %v2725
        %v2727 = vperm.slane %v2719, %v2726
        %v2728 = vrot.slane %v2714, 4
        %v2729 = vsel %vm1215, %v2728, %v2668
        %v2730 = vrot.slane %v2668, 4
        %v2731 = vsel %vm1215, %v2714, %v2730
        %v2733 = vunpack.c.l.s4 1983009808
        %v2734 = vunpack.c.0.s8 %v2733
        %v2735 = vperm.slane %v2729, %v2734
        %v2737 = vunpack.c.l.s4 1983009808
        %v2738 = vunpack.c.0.s8 %v2737
        %v2739 = vperm.slane %v2731, %v2738
        %v2740 = vrot.slane %v2735, 4
        %v2741 = vsel %vm1215, %v2740, %v2723
        %v2742 = vrot.slane %v2723, 4
        %v2743 = vsel %vm1215, %v2735, %v2742
        %v2745 = vunpack.c.l.s4 1934713408
        %v2746 = vunpack.c.0.s8 %v2745
        %v2747 = vperm.slane %v2741, %v2746
        %v2749 = vunpack.c.l.s4 1934713408
        %v2750 = vunpack.c.0.s8 %v2749
        %v2751 = vperm.slane %v2743, %v2750
        %v2752 = vrot.slane %v2739, 4
        %v2753 = vsel %vm1215, %v2752, %v2727
        %v2754 = vrot.slane %v2727, 4
        %v2755 = vsel %vm1215, %v2739, %v2754
        %v2757 = vunpack.c.l.s4 1934713408
        %v2758 = vunpack.c.0.s8 %v2757
        %v2759 = vperm.slane %v2753, %v2758
        %v2761 = vunpack.c.l.s4 1934713408
        %v2762 = vunpack.c.0.s8 %v2761
        %v2763 = vperm.slane %v2755, %v2762
        %v2764 = vrot.slane %v2747, 4
        %v2765 = vsel %vm1215, 0.0, %v2764
        %v2766 = vrot.slane %v2751, 4
        %v2767 = vsel %vm1215, 0.0, %v2766
        %v2768 = vrot.slane %v2759, 4
        %v2769 = vsel %vm1215, 0.0, %v2768
        %v2770 = vrot.slane %v2763, 4
        %v2771 = vsel %vm1215, 0.0, %v2770
        %v2772 = vsel %vm1215, %v2766, %v2747
        %v2774 = vunpack.c.l.s4 1983009808
        %v2775 = vunpack.c.0.s8 %v2774
        %v2776 = vperm.slane %v2772, %v2775
        %v2777 = vrot.slane %v2767, 4
        %v2778 = vsel %vm1215, %v2777, %v2765
        %v2780 = vunpack.c.l.s4 1983009808
        %v2781 = vunpack.c.0.s8 %v2780
        %v2782 = vperm.slane %v2778, %v2781
        %v2783 = vsel %vm1215, %v2770, %v2759
        %v2785 = vunpack.c.l.s4 1983009808
        %v2786 = vunpack.c.0.s8 %v2785
        %v2787 = vperm.slane %v2783, %v2786
        %v2788 = vrot.slane %v2771, 4
        %v2789 = vsel %vm1215, %v2788, %v2769
        %v2791 = vunpack.c.l.s4 1983009808
        %v2792 = vunpack.c.0.s8 %v2791
        %v2793 = vperm.slane %v2789, %v2792
        %v2794 = vrot.slane %v2782, 4
        %v2795 = vsel %vm1215, %v2794, %v2776
        %v2796 = vrot.slane %v2776, 4
        %v2797 = vsel %vm1215, %v2782, %v2796
        %v2799 = vunpack.c.l.s4 1934713408
        %v2800 = vunpack.c.0.s8 %v2799
        %v2801 = vperm.slane %v2795, %v2800
        %v2803 = vunpack.c.l.s4 1934713408
        %v2804 = vunpack.c.0.s8 %v2803
        %v2805 = vperm.slane %v2797, %v2804
        %v2806 = vrot.slane %v2793, 4
        %v2807 = vsel %vm1215, %v2806, %v2787
        %v2808 = vrot.slane %v2787, 4
        %v2809 = vsel %vm1215, %v2793, %v2808
        %v2811 = vunpack.c.l.s4 1934713408
        %v2812 = vunpack.c.0.s8 %v2811
        %v2813 = vperm.slane %v2807, %v2812
        %v2815 = vunpack.c.l.s4 1934713408
        %v2816 = vunpack.c.0.s8 %v2815
        %v2817 = vperm.slane %v2809, %v2816
        %v2818 = vrot.slane %v2813, 4
        %v2819 = vsel %vm1215, %v2818, %v2801
        %v2820 = vrot.slane %v2801, 4
        %v2821 = vsel %vm1215, %v2813, %v2820
        %v2822 = vrot.slane %v2817, 4
        %v2823 = vsel %vm1215, %v2822, %v2805
        %v2824 = vrot.slane %v2805, 4
        %v2825 = vsel %vm1215, %v2817, %v2824
        %2827 = vrot.lane.b32.xlu0 %v2821, 8
        %v2828 = vpop.permute.xlu0 %2827
        %2831 = vrot.lane.b32.xlu0 %v2823, 16
        %v2832 = vpop.permute.xlu0 %2831
        %2835 = vrot.lane.b32.xlu0 %v2825, 24
        %v2836 = vpop.permute.xlu0 %2835
        %v2838 = vsel %vm1565, %v2819, %v2828
        %v2839 = vsel %vm1937, %v2838, %v2832
        %v2840 = vsel %vm1939, %v2839, %v2836
        %v2842 = vperm.slane %v2029, 0
        %v2845 = vsel %vm1074, %v2840, 0
        %2847 = vmatpush.msra.mxu0 0.0
        %2848 = vmatpush.msra.mxu0 0.0
        %2849 = vmatpush.msra.mxu0 0.0
        %2850 = vmatpush.msra.mxu0 0.0
        %2851 = vmatpush.msra.mxu0 0.0
        %2852 = vmatpush.msra.mxu0 0.0
        %2853 = vmatpush.msra.mxu0 0.0
        %2854 = vmatpush.msra.mxu0 0.0
        %2855 = vmatpush.msra.mxu0 0.0
        %2856 = vmatpush.msra.mxu0 0.0
        %2857 = vmatpush.msra.mxu0 0.0
        %2858 = vmatpush.msra.mxu0 0.0
        %2859 = vmatpush.msra.mxu0 %v2027
        %2860 = vmatpush.msra.mxu0 %v2026
        %2861 = vmatpush.msra.mxu0 %v2025
        %2862 = vmatpush.msra.mxu0 %v2024
        %2863 = vmatmul.f32.gmra.mxu0 %v2845
        %v2864 = vpop.f32.mrf.mxu0
        %v2865 = vadd.f32 %v2842, %v2864
        %2866 = vdwg.mxu0
        %v2867 = vadd.f32 %v1967, %v2865
        %s2868 = scalar_lea.vmem [#allocation10], 2
        %v2869 = vld [vmem:[%s2868] sm:$0x1]
        %s2870 = scalar_lea.vmem [#allocation11], 2
        %v2871 = vld [vmem:[%s2870] sm:$0x1]
        %v2872 = vsel %vm1074, %v2867, 0.0
        %2873 = vadd.xlane.f32.xlu0 %v2872
        %v2874 = vpop.xlane.xlu0 %2873
        %v2875 = vmul.f32 %v2874, %v1084
        %v2876 = vsub.f32 %v2867, %v2875
        %v2877 = vmul.f32 %v2876, %v2876
        %v2878 = vsel %vm1074, %v2877, 0.0
        %2879 = vadd.xlane.f32.xlu0 %v2878
        %v2880 = vpop.xlane.xlu0 %2879
        %v2881 = vmul.f32 %v2880, %v1084
        %v2882 = vadd.f32 %v2881, 1e-05
        %v2883 = vrsqrt.pop %v2882
        %v2884 = vmul.f32 %v2883, %v2882
        %v2885 = vmul.f32 %v2884, %v2883
        %v2886 = vmul.f32 0.5, %v2885
        %v2887 = vsub.f32 1.5, %v2886
        %v2888 = vmul.f32 %v2883, %v2887
        %vm2889 = vweird.f32 %v2882
        %vm2890 = vweird.f32 %v2883
        %vm2891 = vmor %vm2889, %vm2890
        %v2892 = vsel %vm2891, %v2883, %v2888
        %v2893 = vmul.f32 %v2876, %v2892
        %v2895 = vperm.slane %v2869, 0
        %v2897 = vmul.f32 %v2893, %v2895
        %v2899 = vperm.slane %v2871, 0
        %v2901 = vadd.f32 %v2897, %v2899
        %s2902 = scalar_lea.vmem %s9, 64
        %v2903 = vld [vmem:[%s2902] sm:$0xff]
        %v2904 = vld [vmem:[%s2902 + $0x8] sm:$0xff]
        %v2905 = vld [vmem:[%s2902 + $0x10] sm:$0xff]
        %v2906 = vld [vmem:[%s2902 + $0x18] sm:$0xff]
        %s2907 = scalar_lea.vmem [#allocation17], 2
        %v2908 = vld [vmem:[%s2907] sm:$0x1]
        %s2909 = scalar_lea.vmem [#allocation13], 64
        %v2910 = vld [vmem:[%s2909] sm:$0xff]
        %v2911 = vld [vmem:[%s2909 + $0x8] sm:$0xff]
        %v2912 = vld [vmem:[%s2909 + $0x10] sm:$0xff]
        %v2913 = vld [vmem:[%s2909 + $0x18] sm:$0xff]
        %s2914 = scalar_lea.vmem [#allocation19], 2
        %v2915 = vld [vmem:[%s2914] sm:$0x1]
        %s2916 = scalar_lea.vmem [#allocation14], 64
        %v2917 = vld [vmem:[%s2916] sm:$0xff]
        %v2918 = vld [vmem:[%s2916 + $0x8] sm:$0xff]
        %v2919 = vld [vmem:[%s2916 + $0x10] sm:$0xff]
        %v2920 = vld [vmem:[%s2916 + $0x18] sm:$0xff]
        %s2921 = scalar_lea.vmem [#allocation20], 2
        %v2922 = vld [vmem:[%s2921] sm:$0x1]
        %s2923 = scalar_lea.vmem [#allocation16], 64
        %v2924 = vld [vmem:[%s2923] sm:$0xff]
        %v2925 = vld [vmem:[%s2923 + $0x8] sm:$0xff]
        %v2926 = vld [vmem:[%s2923 + $0x10] sm:$0xff]
        %v2927 = vld [vmem:[%s2923 + $0x18] sm:$0xff]
        %s2928 = scalar_lea.vmem [#allocation22], 2
        %v2929 = vld [vmem:[%s2928] sm:$0x1]
        %v2931 = vperm.slane %v2908, 0
        %v2934 = vsel %vm1074, %v2901, 0
        %2936 = vmatpush.msra.mxu0 0.0
        %2937 = vmatpush.msra.mxu0 0.0
        %2938 = vmatpush.msra.mxu0 0.0
        %2939 = vmatpush.msra.mxu0 0.0
        %2940 = vmatpush.msra.mxu0 0.0
        %2941 = vmatpush.msra.mxu0 0.0
        %2942 = vmatpush.msra.mxu0 0.0
        %2943 = vmatpush.msra.mxu0 0.0
        %2944 = vmatpush.msra.mxu0 0.0
        %2945 = vmatpush.msra.mxu0 0.0
        %2946 = vmatpush.msra.mxu0 0.0
        %2947 = vmatpush.msra.mxu0 0.0
        %2948 = vmatpush.msra.mxu0 %v2906
        %2949 = vmatpush.msra.mxu0 %v2905
        %2950 = vmatpush.msra.mxu0 %v2904
        %2951 = vmatpush.msra.mxu0 %v2903
        %2952 = vmatmul.f32.gmra.mxu0 %v2934
        %v2953 = vpop.f32.mrf.mxu0
        %v2954 = vadd.f32 %v2931, %v2953
        %2955 = vdwg.mxu0
        %v2957 = vperm.slane %v2915, 0
        %v2960 = vsel %vm1074, %v1070, 0
        %2962 = vmatpush.msra.mxu0 0.0
        %2963 = vmatpush.msra.mxu0 0.0
        %2964 = vmatpush.msra.mxu0 0.0
        %2965 = vmatpush.msra.mxu0 0.0
        %2966 = vmatpush.msra.mxu0 0.0
        %2967 = vmatpush.msra.mxu0 0.0
        %2968 = vmatpush.msra.mxu0 0.0
        %2969 = vmatpush.msra.mxu0 0.0
        %2970 = vmatpush.msra.mxu0 0.0
        %2971 = vmatpush.msra.mxu0 0.0
        %2972 = vmatpush.msra.mxu0 0.0
        %2973 = vmatpush.msra.mxu0 0.0
        %2974 = vmatpush.msra.mxu0 %v2913
        %2975 = vmatpush.msra.mxu0 %v2912
        %2976 = vmatpush.msra.mxu0 %v2911
        %2977 = vmatpush.msra.mxu0 %v2910
        %2978 = vmatmul.f32.gmra.mxu0 %v2960
        %v2979 = vpop.f32.mrf.mxu0
        %v2980 = vadd.f32 %v2957, %v2979
        %2981 = vdwg.mxu0
        %v2983 = vperm.slane %v2922, 0
        %2985 = vmatpush.msra.mxu0 0.0
        %2986 = vmatpush.msra.mxu0 0.0
        %2987 = vmatpush.msra.mxu0 0.0
        %2988 = vmatpush.msra.mxu0 0.0
        %2989 = vmatpush.msra.mxu0 0.0
        %2990 = vmatpush.msra.mxu0 0.0
        %2991 = vmatpush.msra.mxu0 0.0
        %2992 = vmatpush.msra.mxu0 0.0
        %2993 = vmatpush.msra.mxu0 0.0
        %2994 = vmatpush.msra.mxu0 0.0
        %2995 = vmatpush.msra.mxu0 0.0
        %2996 = vmatpush.msra.mxu0 0.0
        %2997 = vmatpush.msra.mxu0 %v2920
        %2998 = vmatpush.msra.mxu0 %v2919
        %2999 = vmatpush.msra.mxu0 %v2918
        %3000 = vmatpush.msra.mxu0 %v2917
        %3001 = vmatmul.f32.gmra.mxu0 %v2960
        %v3002 = vpop.f32.mrf.mxu0
        %v3003 = vadd.f32 %v2983, %v3002
        %3004 = vdwg.mxu0
        %3006 = vrot.lane.b32.xlu0 %v2954, 120
        %v3007 = vpop.permute.xlu0 %3006
        %3009 = vrot.lane.b32.xlu0 %v2954, 112
        %v3010 = vpop.permute.xlu0 %3009
        %3012 = vrot.lane.b32.xlu0 %v2954, 104
        %v3013 = vpop.permute.xlu0 %3012
        %v3015 = vrot.slane %v3010, 4
        %v3016 = vsel %vm1215, %v3015, %v2954
        %v3017 = vrot.slane %v2954, 4
        %v3018 = vsel %vm1215, %v3010, %v3017
        %v3020 = vunpack.c.l.s4 1983009808
        %v3021 = vunpack.c.0.s8 %v3020
        %v3022 = vperm.slane %v3016, %v3021
        %v3024 = vunpack.c.l.s4 1983009808
        %v3025 = vunpack.c.0.s8 %v3024
        %v3026 = vperm.slane %v3018, %v3025
        %v3027 = vrot.slane %v3013, 4
        %v3028 = vsel %vm1215, %v3027, %v3007
        %v3029 = vrot.slane %v3007, 4
        %v3030 = vsel %vm1215, %v3013, %v3029
        %v3032 = vunpack.c.l.s4 1983009808
        %v3033 = vunpack.c.0.s8 %v3032
        %v3034 = vperm.slane %v3028, %v3033
        %v3036 = vunpack.c.l.s4 1983009808
        %v3037 = vunpack.c.0.s8 %v3036
        %v3038 = vperm.slane %v3030, %v3037
        %v3039 = vrot.slane %v3034, 4
        %v3040 = vsel %vm1215, %v3039, %v3022
        %v3041 = vrot.slane %v3022, 4
        %v3042 = vsel %vm1215, %v3034, %v3041
        %v3044 = vunpack.c.l.s4 1934713408
        %v3045 = vunpack.c.0.s8 %v3044
        %v3046 = vperm.slane %v3040, %v3045
        %v3048 = vunpack.c.l.s4 1934713408
        %v3049 = vunpack.c.0.s8 %v3048
        %v3050 = vperm.slane %v3042, %v3049
        %v3051 = vrot.slane %v3038, 4
        %v3052 = vsel %vm1215, %v3051, %v3026
        %v3053 = vrot.slane %v3026, 4
        %v3054 = vsel %vm1215, %v3038, %v3053
        %v3056 = vunpack.c.l.s4 1934713408
        %v3057 = vunpack.c.0.s8 %v3056
        %v3058 = vperm.slane %v3052, %v3057
        %v3060 = vunpack.c.l.s4 1934713408
        %v3061 = vunpack.c.0.s8 %v3060
        %v3062 = vperm.slane %v3054, %v3061
        %v3063 = vrot.slane %v3046, 4
        %v3064 = vsel %vm1215, 0.0, %v3063
        %v3065 = vrot.slane %v3050, 4
        %v3066 = vsel %vm1215, 0.0, %v3065
        %v3067 = vrot.slane %v3058, 4
        %v3068 = vsel %vm1215, 0.0, %v3067
        %v3069 = vrot.slane %v3062, 4
        %v3070 = vsel %vm1215, 0.0, %v3069
        %v3071 = vsel %vm1215, %v3065, %v3046
        %v3073 = vunpack.c.l.s4 1983009808
        %v3074 = vunpack.c.0.s8 %v3073
        %v3075 = vperm.slane %v3071, %v3074
        %v3076 = vrot.slane %v3066, 4
        %v3077 = vsel %vm1215, %v3076, %v3064
        %v3079 = vunpack.c.l.s4 1983009808
        %v3080 = vunpack.c.0.s8 %v3079
        %v3081 = vperm.slane %v3077, %v3080
        %v3082 = vsel %vm1215, %v3069, %v3058
        %v3084 = vunpack.c.l.s4 1983009808
        %v3085 = vunpack.c.0.s8 %v3084
        %v3086 = vperm.slane %v3082, %v3085
        %v3087 = vrot.slane %v3070, 4
        %v3088 = vsel %vm1215, %v3087, %v3068
        %v3090 = vunpack.c.l.s4 1983009808
        %v3091 = vunpack.c.0.s8 %v3090
        %v3092 = vperm.slane %v3088, %v3091
        %v3093 = vrot.slane %v3081, 4
        %v3094 = vsel %vm1215, %v3093, %v3075
        %v3095 = vrot.slane %v3075, 4
        %v3096 = vsel %vm1215, %v3081, %v3095
        %v3098 = vunpack.c.l.s4 1934713408
        %v3099 = vunpack.c.0.s8 %v3098
        %v3100 = vperm.slane %v3094, %v3099
        %v3102 = vunpack.c.l.s4 1934713408
        %v3103 = vunpack.c.0.s8 %v3102
        %v3104 = vperm.slane %v3096, %v3103
        %v3105 = vrot.slane %v3092, 4
        %v3106 = vsel %vm1215, %v3105, %v3086
        %v3107 = vrot.slane %v3086, 4
        %v3108 = vsel %vm1215, %v3092, %v3107
        %v3110 = vunpack.c.l.s4 1934713408
        %v3111 = vunpack.c.0.s8 %v3110
        %v3112 = vperm.slane %v3106, %v3111
        %v3114 = vunpack.c.l.s4 1934713408
        %v3115 = vunpack.c.0.s8 %v3114
        %v3116 = vperm.slane %v3108, %v3115
        %v3117 = vrot.slane %v3112, 4
        %v3118 = vsel %vm1215, %v3117, %v3100
        %v3119 = vrot.slane %v3100, 4
        %v3120 = vsel %vm1215, %v3112, %v3119
        %v3121 = vrot.slane %v3116, 4
        %v3122 = vsel %vm1215, %v3121, %v3104
        %v3123 = vrot.slane %v3104, 4
        %v3124 = vsel %vm1215, %v3116, %v3123
        %3126 = vrot.lane.b32.xlu0 %v2980, 120
        %v3127 = vpop.permute.xlu0 %3126
        %3129 = vrot.lane.b32.xlu0 %v2980, 112
        %v3130 = vpop.permute.xlu0 %3129
        %3132 = vrot.lane.b32.xlu0 %v2980, 104
        %v3133 = vpop.permute.xlu0 %3132
        %v3135 = vrot.slane %v3130, 4
        %v3136 = vsel %vm1215, %v3135, %v2980
        %v3137 = vrot.slane %v2980, 4
        %v3138 = vsel %vm1215, %v3130, %v3137
        %v3140 = vunpack.c.l.s4 1983009808
        %v3141 = vunpack.c.0.s8 %v3140
        %v3142 = vperm.slane %v3136, %v3141
        %v3144 = vunpack.c.l.s4 1983009808
        %v3145 = vunpack.c.0.s8 %v3144
        %v3146 = vperm.slane %v3138, %v3145
        %v3147 = vrot.slane %v3133, 4
        %v3148 = vsel %vm1215, %v3147, %v3127
        %v3149 = vrot.slane %v3127, 4
        %v3150 = vsel %vm1215, %v3133, %v3149
        %v3152 = vunpack.c.l.s4 1983009808
        %v3153 = vunpack.c.0.s8 %v3152
        %v3154 = vperm.slane %v3148, %v3153
        %v3156 = vunpack.c.l.s4 1983009808
        %v3157 = vunpack.c.0.s8 %v3156
        %v3158 = vperm.slane %v3150, %v3157
        %v3159 = vrot.slane %v3154, 4
        %v3160 = vsel %vm1215, %v3159, %v3142
        %v3161 = vrot.slane %v3142, 4
        %v3162 = vsel %vm1215, %v3154, %v3161
        %v3164 = vunpack.c.l.s4 1934713408
        %v3165 = vunpack.c.0.s8 %v3164
        %v3166 = vperm.slane %v3160, %v3165
        %v3168 = vunpack.c.l.s4 1934713408
        %v3169 = vunpack.c.0.s8 %v3168
        %v3170 = vperm.slane %v3162, %v3169
        %v3171 = vrot.slane %v3158, 4
        %v3172 = vsel %vm1215, %v3171, %v3146
        %v3173 = vrot.slane %v3146, 4
        %v3174 = vsel %vm1215, %v3158, %v3173
        %v3176 = vunpack.c.l.s4 1934713408
        %v3177 = vunpack.c.0.s8 %v3176
        %v3178 = vperm.slane %v3172, %v3177
        %v3180 = vunpack.c.l.s4 1934713408
        %v3181 = vunpack.c.0.s8 %v3180
        %v3182 = vperm.slane %v3174, %v3181
        %v3183 = vrot.slane %v3166, 4
        %v3184 = vsel %vm1215, 0.0, %v3183
        %v3185 = vrot.slane %v3170, 4
        %v3186 = vsel %vm1215, 0.0, %v3185
        %v3187 = vrot.slane %v3178, 4
        %v3188 = vsel %vm1215, 0.0, %v3187
        %v3189 = vrot.slane %v3182, 4
        %v3190 = vsel %vm1215, 0.0, %v3189
        %v3191 = vsel %vm1215, %v3185, %v3166
        %v3193 = vunpack.c.l.s4 1983009808
        %v3194 = vunpack.c.0.s8 %v3193
        %v3195 = vperm.slane %v3191, %v3194
        %v3196 = vrot.slane %v3186, 4
        %v3197 = vsel %vm1215, %v3196, %v3184
        %v3199 = vunpack.c.l.s4 1983009808
        %v3200 = vunpack.c.0.s8 %v3199
        %v3201 = vperm.slane %v3197, %v3200
        %v3202 = vsel %vm1215, %v3189, %v3178
        %v3204 = vunpack.c.l.s4 1983009808
        %v3205 = vunpack.c.0.s8 %v3204
        %v3206 = vperm.slane %v3202, %v3205
        %v3207 = vrot.slane %v3190, 4
        %v3208 = vsel %vm1215, %v3207, %v3188
        %v3210 = vunpack.c.l.s4 1983009808
        %v3211 = vunpack.c.0.s8 %v3210
        %v3212 = vperm.slane %v3208, %v3211
        %v3213 = vrot.slane %v3201, 4
        %v3214 = vsel %vm1215, %v3213, %v3195
        %v3215 = vrot.slane %v3195, 4
        %v3216 = vsel %vm1215, %v3201, %v3215
        %v3218 = vunpack.c.l.s4 1934713408
        %v3219 = vunpack.c.0.s8 %v3218
        %v3220 = vperm.slane %v3214, %v3219
        %v3222 = vunpack.c.l.s4 1934713408
        %v3223 = vunpack.c.0.s8 %v3222
        %v3224 = vperm.slane %v3216, %v3223
        %v3225 = vrot.slane %v3212, 4
        %v3226 = vsel %vm1215, %v3225, %v3206
        %v3227 = vrot.slane %v3206, 4
        %v3228 = vsel %vm1215, %v3212, %v3227
        %v3230 = vunpack.c.l.s4 1934713408
        %v3231 = vunpack.c.0.s8 %v3230
        %v3232 = vperm.slane %v3226, %v3231
        %v3234 = vunpack.c.l.s4 1934713408
        %v3235 = vunpack.c.0.s8 %v3234
        %v3236 = vperm.slane %v3228, %v3235
        %v3237 = vrot.slane %v3232, 4
        %v3238 = vsel %vm1215, %v3237, %v3220
        %v3239 = vrot.slane %v3220, 4
        %v3240 = vsel %vm1215, %v3232, %v3239
        %v3241 = vrot.slane %v3236, 4
        %v3242 = vsel %vm1215, %v3241, %v3224
        %v3243 = vrot.slane %v3224, 4
        %v3244 = vsel %vm1215, %v3236, %v3243
        %3246 = vrot.lane.b32.xlu0 %v3003, 120
        %v3247 = vpop.permute.xlu0 %3246
        %3249 = vrot.lane.b32.xlu0 %v3003, 112
        %v3250 = vpop.permute.xlu0 %3249
        %3252 = vrot.lane.b32.xlu0 %v3003, 104
        %v3253 = vpop.permute.xlu0 %3252
        %v3255 = vrot.slane %v3250, 4
        %v3256 = vsel %vm1215, %v3255, %v3003
        %v3257 = vrot.slane %v3003, 4
        %v3258 = vsel %vm1215, %v3250, %v3257
        %v3260 = vunpack.c.l.s4 1983009808
        %v3261 = vunpack.c.0.s8 %v3260
        %v3262 = vperm.slane %v3256, %v3261
        %v3264 = vunpack.c.l.s4 1983009808
        %v3265 = vunpack.c.0.s8 %v3264
        %v3266 = vperm.slane %v3258, %v3265
        %v3267 = vrot.slane %v3253, 4
        %v3268 = vsel %vm1215, %v3267, %v3247
        %v3269 = vrot.slane %v3247, 4
        %v3270 = vsel %vm1215, %v3253, %v3269
        %v3272 = vunpack.c.l.s4 1983009808
        %v3273 = vunpack.c.0.s8 %v3272
        %v3274 = vperm.slane %v3268, %v3273
        %v3276 = vunpack.c.l.s4 1983009808
        %v3277 = vunpack.c.0.s8 %v3276
        %v3278 = vperm.slane %v3270, %v3277
        %v3279 = vrot.slane %v3274, 4
        %v3280 = vsel %vm1215, %v3279, %v3262
        %v3281 = vrot.slane %v3262, 4
        %v3282 = vsel %vm1215, %v3274, %v3281
        %v3284 = vunpack.c.l.s4 1934713408
        %v3285 = vunpack.c.0.s8 %v3284
        %v3286 = vperm.slane %v3280, %v3285
        %v3288 = vunpack.c.l.s4 1934713408
        %v3289 = vunpack.c.0.s8 %v3288
        %v3290 = vperm.slane %v3282, %v3289
        %v3291 = vrot.slane %v3278, 4
        %v3292 = vsel %vm1215, %v3291, %v3266
        %v3293 = vrot.slane %v3266, 4
        %v3294 = vsel %vm1215, %v3278, %v3293
        %v3296 = vunpack.c.l.s4 1934713408
        %v3297 = vunpack.c.0.s8 %v3296
        %v3298 = vperm.slane %v3292, %v3297
        %v3300 = vunpack.c.l.s4 1934713408
        %v3301 = vunpack.c.0.s8 %v3300
        %v3302 = vperm.slane %v3294, %v3301
        %v3303 = vrot.slane %v3286, 4
        %v3304 = vsel %vm1215, 0.0, %v3303
        %v3305 = vrot.slane %v3290, 4
        %v3306 = vsel %vm1215, 0.0, %v3305
        %v3307 = vrot.slane %v3298, 4
        %v3308 = vsel %vm1215, 0.0, %v3307
        %v3309 = vrot.slane %v3302, 4
        %v3310 = vsel %vm1215, 0.0, %v3309
        %v3311 = vsel %vm1215, %v3305, %v3286
        %v3313 = vunpack.c.l.s4 1983009808
        %v3314 = vunpack.c.0.s8 %v3313
        %v3315 = vperm.slane %v3311, %v3314
        %v3316 = vrot.slane %v3306, 4
        %v3317 = vsel %vm1215, %v3316, %v3304
        %v3319 = vunpack.c.l.s4 1983009808
        %v3320 = vunpack.c.0.s8 %v3319
        %v3321 = vperm.slane %v3317, %v3320
        %v3322 = vsel %vm1215, %v3309, %v3298
        %v3324 = vunpack.c.l.s4 1983009808
        %v3325 = vunpack.c.0.s8 %v3324
        %v3326 = vperm.slane %v3322, %v3325
        %v3327 = vrot.slane %v3310, 4
        %v3328 = vsel %vm1215, %v3327, %v3308
        %v3330 = vunpack.c.l.s4 1983009808
        %v3331 = vunpack.c.0.s8 %v3330
        %v3332 = vperm.slane %v3328, %v3331
        %v3333 = vrot.slane %v3321, 4
        %v3334 = vsel %vm1215, %v3333, %v3315
        %v3335 = vrot.slane %v3315, 4
        %v3336 = vsel %vm1215, %v3321, %v3335
        %v3338 = vunpack.c.l.s4 1934713408
        %v3339 = vunpack.c.0.s8 %v3338
        %v3340 = vperm.slane %v3334, %v3339
        %v3342 = vunpack.c.l.s4 1934713408
        %v3343 = vunpack.c.0.s8 %v3342
        %v3344 = vperm.slane %v3336, %v3343
        %v3345 = vrot.slane %v3332, 4
        %v3346 = vsel %vm1215, %v3345, %v3326
        %v3347 = vrot.slane %v3326, 4
        %v3348 = vsel %vm1215, %v3332, %v3347
        %v3350 = vunpack.c.l.s4 1934713408
        %v3351 = vunpack.c.0.s8 %v3350
        %v3352 = vperm.slane %v3346, %v3351
        %v3354 = vunpack.c.l.s4 1934713408
        %v3355 = vunpack.c.0.s8 %v3354
        %v3356 = vperm.slane %v3348, %v3355
        %v3357 = vrot.slane %v3352, 4
        %v3358 = vsel %vm1215, %v3357, %v3340
        %v3359 = vrot.slane %v3340, 4
        %v3360 = vsel %vm1215, %v3352, %v3359
        %v3361 = vrot.slane %v3356, 4
        %v3362 = vsel %vm1215, %v3361, %v3344
        %v3363 = vrot.slane %v3344, 4
        %v3364 = vsel %vm1215, %v3356, %v3363
        %v3366 = vsel %vm1565, %v3118, 0
        %v3369 = vsel %vm1565, %v3238, 0
        %3371 = vmatpush.xpose.msra.mxu0 0.0
        %3372 = vmatpush.xpose.msra.mxu0 0.0
        %3373 = vmatpush.xpose.msra.mxu0 0.0
        %3374 = vmatpush.xpose.msra.mxu0 0.0
        %3375 = vmatpush.xpose.msra.mxu0 0.0
        %3376 = vmatpush.xpose.msra.mxu0 0.0
        %3377 = vmatpush.xpose.msra.mxu0 0.0
        %3378 = vmatpush.xpose.msra.mxu0 0.0
        %3379 = vmatpush.xpose.msra.mxu0 0.0
        %3380 = vmatpush.xpose.msra.mxu0 0.0
        %3381 = vmatpush.xpose.msra.mxu0 0.0
        %3382 = vmatpush.xpose.msra.mxu0 0.0
        %3383 = vmatpush.xpose.msra.mxu0 0.0
        %3384 = vmatpush.xpose.msra.mxu0 0.0
        %3385 = vmatpush.xpose.msra.mxu0 0.0
        %3386 = vmatpush.xpose.msra.mxu0 %v3369
        %3387 = vmatmul.f32.gmra.mxu0 %v3366
        %v3388 = vpop.f32.mrf.mxu0
        %v3389 = vadd.f32 0.0, %v3388
        %3390 = vdwg.mxu0
        %v3392 = vsel %vm1565, %v3120, 0
        %v3395 = vsel %vm1565, %v3240, 0
        %3397 = vmatpush.xpose.msra.mxu0 0.0
        %3398 = vmatpush.xpose.msra.mxu0 0.0
        %3399 = vmatpush.xpose.msra.mxu0 0.0
        %3400 = vmatpush.xpose.msra.mxu0 0.0
        %3401 = vmatpush.xpose.msra.mxu0 0.0
        %3402 = vmatpush.xpose.msra.mxu0 0.0
        %3403 = vmatpush.xpose.msra.mxu0 0.0
        %3404 = vmatpush.xpose.msra.mxu0 0.0
        %3405 = vmatpush.xpose.msra.mxu0 0.0
        %3406 = vmatpush.xpose.msra.mxu0 0.0
        %3407 = vmatpush.xpose.msra.mxu0 0.0
        %3408 = vmatpush.xpose.msra.mxu0 0.0
        %3409 = vmatpush.xpose.msra.mxu0 0.0
        %3410 = vmatpush.xpose.msra.mxu0 0.0
        %3411 = vmatpush.xpose.msra.mxu0 0.0
        %3412 = vmatpush.xpose.msra.mxu0 %v3395
        %3413 = vmatmul.f32.gmra.mxu0 %v3392
        %v3414 = vpop.f32.mrf.mxu0
        %v3415 = vadd.f32 0.0, %v3414
        %3416 = vdwg.mxu0
        %v3418 = vsel %vm1565, %v3122, 0
        %v3421 = vsel %vm1565, %v3242, 0
        %3423 = vmatpush.xpose.msra.mxu0 0.0
        %3424 = vmatpush.xpose.msra.mxu0 0.0
        %3425 = vmatpush.xpose.msra.mxu0 0.0
        %3426 = vmatpush.xpose.msra.mxu0 0.0
        %3427 = vmatpush.xpose.msra.mxu0 0.0
        %3428 = vmatpush.xpose.msra.mxu0 0.0
        %3429 = vmatpush.xpose.msra.mxu0 0.0
        %3430 = vmatpush.xpose.msra.mxu0 0.0
        %3431 = vmatpush.xpose.msra.mxu0 0.0
        %3432 = vmatpush.xpose.msra.mxu0 0.0
        %3433 = vmatpush.xpose.msra.mxu0 0.0
        %3434 = vmatpush.xpose.msra.mxu0 0.0
        %3435 = vmatpush.xpose.msra.mxu0 0.0
        %3436 = vmatpush.xpose.msra.mxu0 0.0
        %3437 = vmatpush.xpose.msra.mxu0 0.0
        %3438 = vmatpush.xpose.msra.mxu0 %v3421
        %3439 = vmatmul.f32.gmra.mxu0 %v3418
        %v3440 = vpop.f32.mrf.mxu0
        %v3441 = vadd.f32 0.0, %v3440
        %3442 = vdwg.mxu0
        %v3444 = vsel %vm1565, %v3124, 0
        %v3447 = vsel %vm1565, %v3244, 0
        %3449 = vmatpush.xpose.msra.mxu0 0.0
        %3450 = vmatpush.xpose.msra.mxu0 0.0
        %3451 = vmatpush.xpose.msra.mxu0 0.0
        %3452 = vmatpush.xpose.msra.mxu0 0.0
        %3453 = vmatpush.xpose.msra.mxu0 0.0
        %3454 = vmatpush.xpose.msra.mxu0 0.0
        %3455 = vmatpush.xpose.msra.mxu0 0.0
        %3456 = vmatpush.xpose.msra.mxu0 0.0
        %3457 = vmatpush.xpose.msra.mxu0 0.0
        %3458 = vmatpush.xpose.msra.mxu0 0.0
        %3459 = vmatpush.xpose.msra.mxu0 0.0
        %3460 = vmatpush.xpose.msra.mxu0 0.0
        %3461 = vmatpush.xpose.msra.mxu0 0.0
        %3462 = vmatpush.xpose.msra.mxu0 0.0
        %3463 = vmatpush.xpose.msra.mxu0 0.0
        %3464 = vmatpush.xpose.msra.mxu0 %v3447
        %3465 = vmatmul.f32.gmra.mxu0 %v3444
        %v3466 = vpop.f32.mrf.mxu0
        %v3467 = vadd.f32 0.0, %v3466
        %3468 = vdwg.mxu0
        %v3469 = vmul.f32 %v3389, 0.35355338
        %v3470 = vmul.f32 %v3415, 0.35355338
        %v3471 = vmul.f32 %v3441, 0.35355338
        %v3472 = vmul.f32 %v3467, 0.35355338
        %v3474 = vperm.slane %v1071, 0
        %v3476 = vadd.f32 %v3469, %v3474
        %v3477 = vadd.f32 %v3470, %v3474
        %v3478 = vadd.f32 %v3471, %v3474
        %v3479 = vadd.f32 %v3472, %v3474
        %v3480 = vsel %vm1565, %v3476, -inf
        %3481 = vmax.xlane.f32.xlu0 %v3480
        %v3482 = vpop.xlane.xlu0 %3481
        %v3483 = vsel %vm1565, %v3477, -inf
        %3484 = vmax.xlane.f32.xlu0 %v3483
        %v3485 = vpop.xlane.xlu0 %3484
        %v3486 = vsel %vm1565, %v3478, -inf
        %3487 = vmax.xlane.f32.xlu0 %v3486
        %v3488 = vpop.xlane.xlu0 %3487
        %v3489 = vsel %vm1565, %v3479, -inf
        %3490 = vmax.xlane.f32.xlu0 %v3489
        %v3491 = vpop.xlane.xlu0 %3490
        %v3492 = vsub.f32 %v3476, %v3482
        %v3493 = vsub.f32 %v3477, %v3485
        %v3494 = vsub.f32 %v3478, %v3488
        %v3495 = vsub.f32 %v3479, %v3491
        %v3496 = vmul.f32 %v3492, 1.442695
        %v3497 = vpow.pop %v3496
        %v3498 = vmul.f32 %v3493, 1.442695
        %v3499 = vpow.pop %v3498
        %v3500 = vmul.f32 %v3494, 1.442695
        %v3501 = vpow.pop %v3500
        %v3502 = vmul.f32 %v3495, 1.442695
        %v3503 = vpow.pop %v3502
        %v3504 = vsel %vm1565, %v3497, 0.0
        %3505 = vadd.xlane.f32.xlu0 %v3504
        %v3506 = vpop.xlane.xlu0 %3505
        %v3507 = vsel %vm1565, %v3499, 0.0
        %3508 = vadd.xlane.f32.xlu0 %v3507
        %v3509 = vpop.xlane.xlu0 %3508
        %v3510 = vsel %vm1565, %v3501, 0.0
        %3511 = vadd.xlane.f32.xlu0 %v3510
        %v3512 = vpop.xlane.xlu0 %3511
        %v3513 = vsel %vm1565, %v3503, 0.0
        %3514 = vadd.xlane.f32.xlu0 %v3513
        %v3515 = vpop.xlane.xlu0 %3514
        %v3516 = vrcp.pop %v3506
        %v3517 = vrcp.pop %v3509
        %v3518 = vrcp.pop %v3512
        %v3519 = vrcp.pop %v3515
        %v3520 = vmul.f32 %v3497, %v3516
        %v3521 = vmul.f32 %v3499, %v3517
        %v3522 = vmul.f32 %v3501, %v3518
        %v3523 = vmul.f32 %v3503, %v3519
        %v3525 = vsel %vm1565, %v3520, 0
        %3527 = vmatpush.msra.mxu0 0.0
        %3528 = vmatpush.msra.mxu0 0.0
        %3529 = vmatpush.msra.mxu0 0.0
        %3530 = vmatpush.msra.mxu0 0.0
        %3531 = vmatpush.msra.mxu0 0.0
        %3532 = vmatpush.msra.mxu0 0.0
        %3533 = vmatpush.msra.mxu0 0.0
        %3534 = vmatpush.msra.mxu0 0.0
        %3535 = vmatpush.msra.mxu0 0.0
        %3536 = vmatpush.msra.mxu0 0.0
        %3537 = vmatpush.msra.mxu0 0.0
        %3538 = vmatpush.msra.mxu0 0.0
        %3539 = vmatpush.msra.mxu0 0.0
        %3540 = vmatpush.msra.mxu0 0.0
        %3541 = vmatpush.msra.mxu0 0.0
        %3542 = vmatpush.msra.mxu0 %v3358
        %3543 = vmatmul.f32.gmra.mxu0 %v3525
        %v3544 = vpop.f32.mrf.mxu0
        %v3545 = vadd.f32 0.0, %v3544
        %3546 = vdwg.mxu0
        %v3548 = vsel %vm1565, %v3521, 0
        %3550 = vmatpush.msra.mxu0 0.0
        %3551 = vmatpush.msra.mxu0 0.0
        %3552 = vmatpush.msra.mxu0 0.0
        %3553 = vmatpush.msra.mxu0 0.0
        %3554 = vmatpush.msra.mxu0 0.0
        %3555 = vmatpush.msra.mxu0 0.0
        %3556 = vmatpush.msra.mxu0 0.0
        %3557 = vmatpush.msra.mxu0 0.0
        %3558 = vmatpush.msra.mxu0 0.0
        %3559 = vmatpush.msra.mxu0 0.0
        %3560 = vmatpush.msra.mxu0 0.0
        %3561 = vmatpush.msra.mxu0 0.0
        %3562 = vmatpush.msra.mxu0 0.0
        %3563 = vmatpush.msra.mxu0 0.0
        %3564 = vmatpush.msra.mxu0 0.0
        %3565 = vmatpush.msra.mxu0 %v3360
        %3566 = vmatmul.f32.gmra.mxu0 %v3548
        %v3567 = vpop.f32.mrf.mxu0
        %v3568 = vadd.f32 0.0, %v3567
        %3569 = vdwg.mxu0
        %v3571 = vsel %vm1565, %v3522, 0
        %3573 = vmatpush.msra.mxu0 0.0
        %3574 = vmatpush.msra.mxu0 0.0
        %3575 = vmatpush.msra.mxu0 0.0
        %3576 = vmatpush.msra.mxu0 0.0
        %3577 = vmatpush.msra.mxu0 0.0
        %3578 = vmatpush.msra.mxu0 0.0
        %3579 = vmatpush.msra.mxu0 0.0
        %3580 = vmatpush.msra.mxu0 0.0
        %3581 = vmatpush.msra.mxu0 0.0
        %3582 = vmatpush.msra.mxu0 0.0
        %3583 = vmatpush.msra.mxu0 0.0
        %3584 = vmatpush.msra.mxu0 0.0
        %3585 = vmatpush.msra.mxu0 0.0
        %3586 = vmatpush.msra.mxu0 0.0
        %3587 = vmatpush.msra.mxu0 0.0
        %3588 = vmatpush.msra.mxu0 %v3362
        %3589 = vmatmul.f32.gmra.mxu0 %v3571
        %v3590 = vpop.f32.mrf.mxu0
        %v3591 = vadd.f32 0.0, %v3590
        %3592 = vdwg.mxu0
        %v3594 = vsel %vm1565, %v3523, 0
        %3596 = vmatpush.msra.mxu0 0.0
        %3597 = vmatpush.msra.mxu0 0.0
        %3598 = vmatpush.msra.mxu0 0.0
        %3599 = vmatpush.msra.mxu0 0.0
        %3600 = vmatpush.msra.mxu0 0.0
        %3601 = vmatpush.msra.mxu0 0.0
        %3602 = vmatpush.msra.mxu0 0.0
        %3603 = vmatpush.msra.mxu0 0.0
        %3604 = vmatpush.msra.mxu0 0.0
        %3605 = vmatpush.msra.mxu0 0.0
        %3606 = vmatpush.msra.mxu0 0.0
        %3607 = vmatpush.msra.mxu0 0.0
        %3608 = vmatpush.msra.mxu0 0.0
        %3609 = vmatpush.msra.mxu0 0.0
        %3610 = vmatpush.msra.mxu0 0.0
        %3611 = vmatpush.msra.mxu0 %v3364
        %3612 = vmatmul.f32.gmra.mxu0 %v3594
        %v3613 = vpop.f32.mrf.mxu0
        %v3614 = vadd.f32 0.0, %v3613
        %3615 = vdwg.mxu0
        %v3616 = vrot.slane %v3591, 4
        %v3617 = vsel %vm1215, %v3616, %v3545
        %v3618 = vrot.slane %v3545, 4
        %v3619 = vsel %vm1215, %v3591, %v3618
        %v3621 = vunpack.c.l.s4 1983009808
        %v3622 = vunpack.c.0.s8 %v3621
        %v3623 = vperm.slane %v3617, %v3622
        %v3625 = vunpack.c.l.s4 1983009808
        %v3626 = vunpack.c.0.s8 %v3625
        %v3627 = vperm.slane %v3619, %v3626
        %v3628 = vrot.slane %v3614, 4
        %v3629 = vsel %vm1215, %v3628, %v3568
        %v3630 = vrot.slane %v3568, 4
        %v3631 = vsel %vm1215, %v3614, %v3630
        %v3633 = vunpack.c.l.s4 1983009808
        %v3634 = vunpack.c.0.s8 %v3633
        %v3635 = vperm.slane %v3629, %v3634
        %v3637 = vunpack.c.l.s4 1983009808
        %v3638 = vunpack.c.0.s8 %v3637
        %v3639 = vperm.slane %v3631, %v3638
        %v3640 = vrot.slane %v3635, 4
        %v3641 = vsel %vm1215, %v3640, %v3623
        %v3642 = vrot.slane %v3623, 4
        %v3643 = vsel %vm1215, %v3635, %v3642
        %v3645 = vunpack.c.l.s4 1934713408
        %v3646 = vunpack.c.0.s8 %v3645
        %v3647 = vperm.slane %v3641, %v3646
        %v3649 = vunpack.c.l.s4 1934713408
        %v3650 = vunpack.c.0.s8 %v3649
        %v3651 = vperm.slane %v3643, %v3650
        %v3652 = vrot.slane %v3639, 4
        %v3653 = vsel %vm1215, %v3652, %v3627
        %v3654 = vrot.slane %v3627, 4
        %v3655 = vsel %vm1215, %v3639, %v3654
        %v3657 = vunpack.c.l.s4 1934713408
        %v3658 = vunpack.c.0.s8 %v3657
        %v3659 = vperm.slane %v3653, %v3658
        %v3661 = vunpack.c.l.s4 1934713408
        %v3662 = vunpack.c.0.s8 %v3661
        %v3663 = vperm.slane %v3655, %v3662
        %v3664 = vrot.slane %v3647, 4
        %v3665 = vsel %vm1215, 0.0, %v3664
        %v3666 = vrot.slane %v3651, 4
        %v3667 = vsel %vm1215, 0.0, %v3666
        %v3668 = vrot.slane %v3659, 4
        %v3669 = vsel %vm1215, 0.0, %v3668
        %v3670 = vrot.slane %v3663, 4
        %v3671 = vsel %vm1215, 0.0, %v3670
        %v3672 = vsel %vm1215, %v3666, %v3647
        %v3674 = vunpack.c.l.s4 1983009808
        %v3675 = vunpack.c.0.s8 %v3674
        %v3676 = vperm.slane %v3672, %v3675
        %v3677 = vrot.slane %v3667, 4
        %v3678 = vsel %vm1215, %v3677, %v3665
        %v3680 = vunpack.c.l.s4 1983009808
        %v3681 = vunpack.c.0.s8 %v3680
        %v3682 = vperm.slane %v3678, %v3681
        %v3683 = vsel %vm1215, %v3670, %v3659
        %v3685 = vunpack.c.l.s4 1983009808
        %v3686 = vunpack.c.0.s8 %v3685
        %v3687 = vperm.slane %v3683, %v3686
        %v3688 = vrot.slane %v3671, 4
        %v3689 = vsel %vm1215, %v3688, %v3669
        %v3691 = vunpack.c.l.s4 1983009808
        %v3692 = vunpack.c.0.s8 %v3691
        %v3693 = vperm.slane %v3689, %v3692
        %v3694 = vrot.slane %v3682, 4
        %v3695 = vsel %vm1215, %v3694, %v3676
        %v3696 = vrot.slane %v3676, 4
        %v3697 = vsel %vm1215, %v3682, %v3696
        %v3699 = vunpack.c.l.s4 1934713408
        %v3700 = vunpack.c.0.s8 %v3699
        %v3701 = vperm.slane %v3695, %v3700
        %v3703 = vunpack.c.l.s4 1934713408
        %v3704 = vunpack.c.0.s8 %v3703
        %v3705 = vperm.slane %v3697, %v3704
        %v3706 = vrot.slane %v3693, 4
        %v3707 = vsel %vm1215, %v3706, %v3687
        %v3708 = vrot.slane %v3687, 4
        %v3709 = vsel %vm1215, %v3693, %v3708
        %v3711 = vunpack.c.l.s4 1934713408
        %v3712 = vunpack.c.0.s8 %v3711
        %v3713 = vperm.slane %v3707, %v3712
        %v3715 = vunpack.c.l.s4 1934713408
        %v3716 = vunpack.c.0.s8 %v3715
        %v3717 = vperm.slane %v3709, %v3716
        %v3718 = vrot.slane %v3713, 4
        %v3719 = vsel %vm1215, %v3718, %v3701
        %v3720 = vrot.slane %v3701, 4
        %v3721 = vsel %vm1215, %v3713, %v3720
        %v3722 = vrot.slane %v3717, 4
        %v3723 = vsel %vm1215, %v3722, %v3705
        %v3724 = vrot.slane %v3705, 4
        %v3725 = vsel %vm1215, %v3717, %v3724
        %3727 = vrot.lane.b32.xlu0 %v3721, 8
        %v3728 = vpop.permute.xlu0 %3727
        %3731 = vrot.lane.b32.xlu0 %v3723, 16
        %v3732 = vpop.permute.xlu0 %3731
        %3735 = vrot.lane.b32.xlu0 %v3725, 24
        %v3736 = vpop.permute.xlu0 %3735
        %v3738 = vsel %vm1565, %v3719, %v3728
        %v3739 = vsel %vm1937, %v3738, %v3732
        %v3740 = vsel %vm1939, %v3739, %v3736
        %v3742 = vperm.slane %v2929, 0
        %v3745 = vsel %vm1074, %v3740, 0
        %3747 = vmatpush.msra.mxu0 0.0
        %3748 = vmatpush.msra.mxu0 0.0
        %3749 = vmatpush.msra.mxu0 0.0
        %3750 = vmatpush.msra.mxu0 0.0
        %3751 = vmatpush.msra.mxu0 0.0
        %3752 = vmatpush.msra.mxu0 0.0
        %3753 = vmatpush.msra.mxu0 0.0
        %3754 = vmatpush.msra.mxu0 0.0
        %3755 = vmatpush.msra.mxu0 0.0
        %3756 = vmatpush.msra.mxu0 0.0
        %3757 = vmatpush.msra.mxu0 0.0
        %3758 = vmatpush.msra.mxu0 0.0
        %3759 = vmatpush.msra.mxu0 %v2927
        %3760 = vmatpush.msra.mxu0 %v2926
        %3761 = vmatpush.msra.mxu0 %v2925
        %3762 = vmatpush.msra.mxu0 %v2924
        %3763 = vmatmul.f32.gmra.mxu0 %v3745
        %v3764 = vpop.f32.mrf.mxu0
        %v3765 = vadd.f32 %v3742, %v3764
        %3766 = vdwg.mxu0
        %v3767 = vadd.f32 %v2867, %v3765
        %s3768 = scalar_lea.vmem [#allocation10], 3
        %v3769 = vld [vmem:[%s3768] sm:$0x1]
        %s3770 = scalar_lea.vmem [#allocation11], 3
        %v3771 = vld [vmem:[%s3770] sm:$0x1]
        %v3772 = vsel %vm1074, %v3767, 0.0
        %3773 = vadd.xlane.f32.xlu0 %v3772
        %v3774 = vpop.xlane.xlu0 %3773
        %v3775 = vmul.f32 %v3774, %v1084
        %v3776 = vsub.f32 %v3767, %v3775
        %v3777 = vmul.f32 %v3776, %v3776
        %v3778 = vsel %vm1074, %v3777, 0.0
        %3779 = vadd.xlane.f32.xlu0 %v3778
        %v3780 = vpop.xlane.xlu0 %3779
        %v3781 = vmul.f32 %v3780, %v1084
        %v3782 = vadd.f32 %v3781, 1e-05
        %v3783 = vrsqrt.pop %v3782
        %v3784 = vmul.f32 %v3783, %v3782
        %v3785 = vmul.f32 %v3784, %v3783
        %v3786 = vmul.f32 0.5, %v3785
        %v3787 = vsub.f32 1.5, %v3786
        %v3788 = vmul.f32 %v3783, %v3787
        %vm3789 = vweird.f32 %v3782
        %vm3790 = vweird.f32 %v3783
        %vm3791 = vmor %vm3789, %vm3790
        %v3792 = vsel %vm3791, %v3783, %v3788
        %v3793 = vmul.f32 %v3776, %v3792
        %v3795 = vperm.slane %v3769, 0
        %v3797 = vmul.f32 %v3793, %v3795
        %v3799 = vperm.slane %v3771, 0
        %v3801 = vadd.f32 %v3797, %v3799
        %v3802 = vld [vmem:[%s17] sm:$0xff]
        %v3803 = vld [vmem:[%s17 + $0x8] sm:$0xff]
        %v3804 = vld [vmem:[%s17 + $0x10] sm:$0xff]
        %v3805 = vld [vmem:[%s17 + $0x18] sm:$0xff]
        %v3806 = vld [vmem:[#allocation23] sm:$0x1]
        %v3808 = vperm.slane %v3806, 0
        %v3811 = vsel %vm1074, %v3801, 0
        %3813 = vmatpush.msra.mxu0 0.0
        %3814 = vmatpush.msra.mxu0 0.0
        %3815 = vmatpush.msra.mxu0 0.0
        %3816 = vmatpush.msra.mxu0 0.0
        %3817 = vmatpush.msra.mxu0 0.0
        %3818 = vmatpush.msra.mxu0 0.0
        %3819 = vmatpush.msra.mxu0 0.0
        %3820 = vmatpush.msra.mxu0 0.0
        %3821 = vmatpush.msra.mxu0 0.0
        %3822 = vmatpush.msra.mxu0 0.0
        %3823 = vmatpush.msra.mxu0 0.0
        %3824 = vmatpush.msra.mxu0 0.0
        %3825 = vmatpush.msra.mxu0 %v3805
        %3826 = vmatpush.msra.mxu0 %v3804
        %3827 = vmatpush.msra.mxu0 %v3803
        %3828 = vmatpush.msra.mxu0 %v3802
        %3829 = vmatmul.f32.gmra.mxu0 %v3811
        %v3830 = vpop.f32.mrf.mxu0
        %v3831 = vadd.f32 %v3808, %v3830
        %3832 = vdwg.mxu0
        %v3833 = vmax.f32 %v3831, 0.0
        %v3834 = vld [vmem:[%s19] sm:$0xff]
        %v3835 = vld [vmem:[%s19 + $0x8] sm:$0xff]
        %v3836 = vld [vmem:[%s19 + $0x10] sm:$0xff]
        %v3837 = vld [vmem:[%s19 + $0x18] sm:$0xff]
        %v3838 = vld [vmem:[%s19 + $0x20] sm:$0xff]
        %v3839 = vld [vmem:[%s19 + $0x28] sm:$0xff]
        %v3840 = vld [vmem:[%s19 + $0x30] sm:$0xff]
        %v3841 = vld [vmem:[%s19 + $0x38] sm:$0xff]
        %v3843 = vsel %vm1042, %v3833, 0
        %3845 = vmatpush.msra.mxu0 0.0
        %3846 = vmatpush.msra.mxu0 0.0
        %3847 = vmatpush.msra.mxu0 0.0
        %3848 = vmatpush.msra.mxu0 0.0
        %3849 = vmatpush.msra.mxu0 0.0
        %3850 = vmatpush.msra.mxu0 0.0
        %3851 = vmatpush.msra.mxu0 0.0
        %3852 = vmatpush.msra.mxu0 0.0
        %3853 = vmatpush.msra.mxu0 %v3841
        %3854 = vmatpush.msra.mxu0 %v3840
        %3855 = vmatpush.msra.mxu0 %v3839
        %3856 = vmatpush.msra.mxu0 %v3838
        %3857 = vmatpush.msra.mxu0 %v3837
        %3858 = vmatpush.msra.mxu0 %v3836
        %3859 = vmatpush.msra.mxu0 %v3835
        %3860 = vmatpush.msra.mxu0 %v3834
        %3861 = vmatmul.f32.gmra.mxu0 %v3843
        %v3862 = vpop.f32.mrf.mxu0
        %v3863 = vadd.f32 0.0, %v3862
        %3864 = vdwg.mxu0
        %v3865 = vadd.f32 %v3767, %v3863
        %v3866 = vld [vmem:[%s20] sm:$0x1]
        %v3868 = vperm.slane %v3866, 0
        %v3870 = vadd.f32 %v3865, %v3868
        %s3871 = scalar_lea.vmem [#allocation10], 4
        %v3872 = vld [vmem:[%s3871] sm:$0x1]
        %s3873 = scalar_lea.vmem [#allocation11], 4
        %v3874 = vld [vmem:[%s3873] sm:$0x1]
        %v3875 = vsel %vm1074, %v3870, 0.0
        %3876 = vadd.xlane.f32.xlu0 %v3875
        %v3877 = vpop.xlane.xlu0 %3876
        %v3878 = vmul.f32 %v3877, %v1084
        %v3879 = vsub.f32 %v3870, %v3878
        %v3880 = vmul.f32 %v3879, %v3879
        %v3881 = vsel %vm1074, %v3880, 0.0
        %3882 = vadd.xlane.f32.xlu0 %v3881
        %v3883 = vpop.xlane.xlu0 %3882
        %v3884 = vmul.f32 %v3883, %v1084
        %v3885 = vadd.f32 %v3884, 1e-05
        %v3886 = vrsqrt.pop %v3885
        %v3887 = vmul.f32 %v3886, %v3885
        %v3888 = vmul.f32 %v3887, %v3886
        %v3889 = vmul.f32 0.5, %v3888
        %v3890 = vsub.f32 1.5, %v3889
        %v3891 = vmul.f32 %v3886, %v3890
        %vm3892 = vweird.f32 %v3885
        %vm3893 = vweird.f32 %v3886
        %vm3894 = vmor %vm3892, %vm3893
        %v3895 = vsel %vm3894, %v3886, %v3891
        %v3896 = vmul.f32 %v3879, %v3895
        %v3898 = vperm.slane %v3872, 0
        %v3900 = vmul.f32 %v3896, %v3898
        %v3902 = vperm.slane %v3874, 0
        %v3904 = vadd.f32 %v3900, %v3902
        %s3905 = scalar_lea.vmem %s9, 96
        %v3906 = vld [vmem:[%s3905] sm:$0xff]
        %v3907 = vld [vmem:[%s3905 + $0x8] sm:$0xff]
        %v3908 = vld [vmem:[%s3905 + $0x10] sm:$0xff]
        %v3909 = vld [vmem:[%s3905 + $0x18] sm:$0xff]
        %s3910 = scalar_lea.vmem [#allocation17], 3
        %v3911 = vld [vmem:[%s3910] sm:$0x1]
        %s3912 = scalar_lea.vmem [#allocation13], 96
        %v3913 = vld [vmem:[%s3912] sm:$0xff]
        %v3914 = vld [vmem:[%s3912 + $0x8] sm:$0xff]
        %v3915 = vld [vmem:[%s3912 + $0x10] sm:$0xff]
        %v3916 = vld [vmem:[%s3912 + $0x18] sm:$0xff]
        %s3917 = scalar_lea.vmem [#allocation19], 3
        %v3918 = vld [vmem:[%s3917] sm:$0x1]
        %s3919 = scalar_lea.vmem [#allocation14], 96
        %v3920 = vld [vmem:[%s3919] sm:$0xff]
        %v3921 = vld [vmem:[%s3919 + $0x8] sm:$0xff]
        %v3922 = vld [vmem:[%s3919 + $0x10] sm:$0xff]
        %v3923 = vld [vmem:[%s3919 + $0x18] sm:$0xff]
        %s3924 = scalar_lea.vmem [#allocation20], 3
        %v3925 = vld [vmem:[%s3924] sm:$0x1]
        %s3926 = scalar_lea.vmem [#allocation16], 96
        %v3927 = vld [vmem:[%s3926] sm:$0xff]
        %v3928 = vld [vmem:[%s3926 + $0x8] sm:$0xff]
        %v3929 = vld [vmem:[%s3926 + $0x10] sm:$0xff]
        %v3930 = vld [vmem:[%s3926 + $0x18] sm:$0xff]
        %s3931 = scalar_lea.vmem [#allocation22], 3
        %v3932 = vld [vmem:[%s3931] sm:$0x1]
        %v3934 = vperm.slane %v3911, 0
        %v3937 = vsel %vm1074, %v3904, 0
        %3939 = vmatpush.msra.mxu0 0.0
        %3940 = vmatpush.msra.mxu0 0.0
        %3941 = vmatpush.msra.mxu0 0.0
        %3942 = vmatpush.msra.mxu0 0.0
        %3943 = vmatpush.msra.mxu0 0.0
        %3944 = vmatpush.msra.mxu0 0.0
        %3945 = vmatpush.msra.mxu0 0.0
        %3946 = vmatpush.msra.mxu0 0.0
        %3947 = vmatpush.msra.mxu0 0.0
        %3948 = vmatpush.msra.mxu0 0.0
        %3949 = vmatpush.msra.mxu0 0.0
        %3950 = vmatpush.msra.mxu0 0.0
        %3951 = vmatpush.msra.mxu0 %v3909
        %3952 = vmatpush.msra.mxu0 %v3908
        %3953 = vmatpush.msra.mxu0 %v3907
        %3954 = vmatpush.msra.mxu0 %v3906
        %3955 = vmatmul.f32.gmra.mxu0 %v3937
        %v3956 = vpop.f32.mrf.mxu0
        %v3957 = vadd.f32 %v3934, %v3956
        %3958 = vdwg.mxu0
        %v3960 = vperm.slane %v3918, 0
        %3962 = vmatpush.msra.mxu0 0.0
        %3963 = vmatpush.msra.mxu0 0.0
        %3964 = vmatpush.msra.mxu0 0.0
        %3965 = vmatpush.msra.mxu0 0.0
        %3966 = vmatpush.msra.mxu0 0.0
        %3967 = vmatpush.msra.mxu0 0.0
        %3968 = vmatpush.msra.mxu0 0.0
        %3969 = vmatpush.msra.mxu0 0.0
        %3970 = vmatpush.msra.mxu0 0.0
        %3971 = vmatpush.msra.mxu0 0.0
        %3972 = vmatpush.msra.mxu0 0.0
        %3973 = vmatpush.msra.mxu0 0.0
        %3974 = vmatpush.msra.mxu0 %v3916
        %3975 = vmatpush.msra.mxu0 %v3915
        %3976 = vmatpush.msra.mxu0 %v3914
        %3977 = vmatpush.msra.mxu0 %v3913
        %3978 = vmatmul.f32.gmra.mxu0 %v3937
        %v3979 = vpop.f32.mrf.mxu0
        %v3980 = vadd.f32 %v3960, %v3979
        %3981 = vdwg.mxu0
        %v3983 = vperm.slane %v3925, 0
        %3985 = vmatpush.msra.mxu0 0.0
        %3986 = vmatpush.msra.mxu0 0.0
        %3987 = vmatpush.msra.mxu0 0.0
        %3988 = vmatpush.msra.mxu0 0.0
        %3989 = vmatpush.msra.mxu0 0.0
        %3990 = vmatpush.msra.mxu0 0.0
        %3991 = vmatpush.msra.mxu0 0.0
        %3992 = vmatpush.msra.mxu0 0.0
        %3993 = vmatpush.msra.mxu0 0.0
        %3994 = vmatpush.msra.mxu0 0.0
        %3995 = vmatpush.msra.mxu0 0.0
        %3996 = vmatpush.msra.mxu0 0.0
        %3997 = vmatpush.msra.mxu0 %v3923
        %3998 = vmatpush.msra.mxu0 %v3922
        %3999 = vmatpush.msra.mxu0 %v3921
        %4000 = vmatpush.msra.mxu0 %v3920
        %4001 = vmatmul.f32.gmra.mxu0 %v3937
        %v4002 = vpop.f32.mrf.mxu0
        %v4003 = vadd.f32 %v3983, %v4002
        %4004 = vdwg.mxu0
        %4006 = vrot.lane.b32.xlu0 %v3957, 120
        %v4007 = vpop.permute.xlu0 %4006
        %4009 = vrot.lane.b32.xlu0 %v3957, 112
        %v4010 = vpop.permute.xlu0 %4009
        %4012 = vrot.lane.b32.xlu0 %v3957, 104
        %v4013 = vpop.permute.xlu0 %4012
        %v4015 = vrot.slane %v4010, 4
        %v4016 = vsel %vm1215, %v4015, %v3957
        %v4017 = vrot.slane %v3957, 4
        %v4018 = vsel %vm1215, %v4010, %v4017
        %v4020 = vunpack.c.l.s4 1983009808
        %v4021 = vunpack.c.0.s8 %v4020
        %v4022 = vperm.slane %v4016, %v4021
        %v4024 = vunpack.c.l.s4 1983009808
        %v4025 = vunpack.c.0.s8 %v4024
        %v4026 = vperm.slane %v4018, %v4025
        %v4027 = vrot.slane %v4013, 4
        %v4028 = vsel %vm1215, %v4027, %v4007
        %v4029 = vrot.slane %v4007, 4
        %v4030 = vsel %vm1215, %v4013, %v4029
        %v4032 = vunpack.c.l.s4 1983009808
        %v4033 = vunpack.c.0.s8 %v4032
        %v4034 = vperm.slane %v4028, %v4033
        %v4036 = vunpack.c.l.s4 1983009808
        %v4037 = vunpack.c.0.s8 %v4036
        %v4038 = vperm.slane %v4030, %v4037
        %v4039 = vrot.slane %v4034, 4
        %v4040 = vsel %vm1215, %v4039, %v4022
        %v4041 = vrot.slane %v4022, 4
        %v4042 = vsel %vm1215, %v4034, %v4041
        %v4044 = vunpack.c.l.s4 1934713408
        %v4045 = vunpack.c.0.s8 %v4044
        %v4046 = vperm.slane %v4040, %v4045
        %v4048 = vunpack.c.l.s4 1934713408
        %v4049 = vunpack.c.0.s8 %v4048
        %v4050 = vperm.slane %v4042, %v4049
        %v4051 = vrot.slane %v4038, 4
        %v4052 = vsel %vm1215, %v4051, %v4026
        %v4053 = vrot.slane %v4026, 4
        %v4054 = vsel %vm1215, %v4038, %v4053
        %v4056 = vunpack.c.l.s4 1934713408
        %v4057 = vunpack.c.0.s8 %v4056
        %v4058 = vperm.slane %v4052, %v4057
        %v4060 = vunpack.c.l.s4 1934713408
        %v4061 = vunpack.c.0.s8 %v4060
        %v4062 = vperm.slane %v4054, %v4061
        %v4063 = vrot.slane %v4046, 4
        %v4064 = vsel %vm1215, 0.0, %v4063
        %v4065 = vrot.slane %v4050, 4
        %v4066 = vsel %vm1215, 0.0, %v4065
        %v4067 = vrot.slane %v4058, 4
        %v4068 = vsel %vm1215, 0.0, %v4067
        %v4069 = vrot.slane %v4062, 4
        %v4070 = vsel %vm1215, 0.0, %v4069
        %v4071 = vsel %vm1215, %v4065, %v4046
        %v4073 = vunpack.c.l.s4 1983009808
        %v4074 = vunpack.c.0.s8 %v4073
        %v4075 = vperm.slane %v4071, %v4074
        %v4076 = vrot.slane %v4066, 4
        %v4077 = vsel %vm1215, %v4076, %v4064
        %v4079 = vunpack.c.l.s4 1983009808
        %v4080 = vunpack.c.0.s8 %v4079
        %v4081 = vperm.slane %v4077, %v4080
        %v4082 = vsel %vm1215, %v4069, %v4058
        %v4084 = vunpack.c.l.s4 1983009808
        %v4085 = vunpack.c.0.s8 %v4084
        %v4086 = vperm.slane %v4082, %v4085
        %v4087 = vrot.slane %v4070, 4
        %v4088 = vsel %vm1215, %v4087, %v4068
        %v4090 = vunpack.c.l.s4 1983009808
        %v4091 = vunpack.c.0.s8 %v4090
        %v4092 = vperm.slane %v4088, %v4091
        %v4093 = vrot.slane %v4081, 4
        %v4094 = vsel %vm1215, %v4093, %v4075
        %v4095 = vrot.slane %v4075, 4
        %v4096 = vsel %vm1215, %v4081, %v4095
        %v4098 = vunpack.c.l.s4 1934713408
        %v4099 = vunpack.c.0.s8 %v4098
        %v4100 = vperm.slane %v4094, %v4099
        %v4102 = vunpack.c.l.s4 1934713408
        %v4103 = vunpack.c.0.s8 %v4102
        %v4104 = vperm.slane %v4096, %v4103
        %v4105 = vrot.slane %v4092, 4
        %v4106 = vsel %vm1215, %v4105, %v4086
        %v4107 = vrot.slane %v4086, 4
        %v4108 = vsel %vm1215, %v4092, %v4107
        %v4110 = vunpack.c.l.s4 1934713408
        %v4111 = vunpack.c.0.s8 %v4110
        %v4112 = vperm.slane %v4106, %v4111
        %v4114 = vunpack.c.l.s4 1934713408
        %v4115 = vunpack.c.0.s8 %v4114
        %v4116 = vperm.slane %v4108, %v4115
        %v4117 = vrot.slane %v4112, 4
        %v4118 = vsel %vm1215, %v4117, %v4100
        %v4119 = vrot.slane %v4100, 4
        %v4120 = vsel %vm1215, %v4112, %v4119
        %v4121 = vrot.slane %v4116, 4
        %v4122 = vsel %vm1215, %v4121, %v4104
        %v4123 = vrot.slane %v4104, 4
        %v4124 = vsel %vm1215, %v4116, %v4123
        %4126 = vrot.lane.b32.xlu0 %v3980, 120
        %v4127 = vpop.permute.xlu0 %4126
        %4129 = vrot.lane.b32.xlu0 %v3980, 112
        %v4130 = vpop.permute.xlu0 %4129
        %4132 = vrot.lane.b32.xlu0 %v3980, 104
        %v4133 = vpop.permute.xlu0 %4132
        %v4135 = vrot.slane %v4130, 4
        %v4136 = vsel %vm1215, %v4135, %v3980
        %v4137 = vrot.slane %v3980, 4
        %v4138 = vsel %vm1215, %v4130, %v4137
        %v4140 = vunpack.c.l.s4 1983009808
        %v4141 = vunpack.c.0.s8 %v4140
        %v4142 = vperm.slane %v4136, %v4141
        %v4144 = vunpack.c.l.s4 1983009808
        %v4145 = vunpack.c.0.s8 %v4144
        %v4146 = vperm.slane %v4138, %v4145
        %v4147 = vrot.slane %v4133, 4
        %v4148 = vsel %vm1215, %v4147, %v4127
        %v4149 = vrot.slane %v4127, 4
        %v4150 = vsel %vm1215, %v4133, %v4149
        %v4152 = vunpack.c.l.s4 1983009808
        %v4153 = vunpack.c.0.s8 %v4152
        %v4154 = vperm.slane %v4148, %v4153
        %v4156 = vunpack.c.l.s4 1983009808
        %v4157 = vunpack.c.0.s8 %v4156
        %v4158 = vperm.slane %v4150, %v4157
        %v4159 = vrot.slane %v4154, 4
        %v4160 = vsel %vm1215, %v4159, %v4142
        %v4161 = vrot.slane %v4142, 4
        %v4162 = vsel %vm1215, %v4154, %v4161
        %v4164 = vunpack.c.l.s4 1934713408
        %v4165 = vunpack.c.0.s8 %v4164
        %v4166 = vperm.slane %v4160, %v4165
        %v4168 = vunpack.c.l.s4 1934713408
        %v4169 = vunpack.c.0.s8 %v4168
        %v4170 = vperm.slane %v4162, %v4169
        %v4171 = vrot.slane %v4158, 4
        %v4172 = vsel %vm1215, %v4171, %v4146
        %v4173 = vrot.slane %v4146, 4
        %v4174 = vsel %vm1215, %v4158, %v4173
        %v4176 = vunpack.c.l.s4 1934713408
        %v4177 = vunpack.c.0.s8 %v4176
        %v4178 = vperm.slane %v4172, %v4177
        %v4180 = vunpack.c.l.s4 1934713408
        %v4181 = vunpack.c.0.s8 %v4180
        %v4182 = vperm.slane %v4174, %v4181
        %v4183 = vrot.slane %v4166, 4
        %v4184 = vsel %vm1215, 0.0, %v4183
        %v4185 = vrot.slane %v4170, 4
        %v4186 = vsel %vm1215, 0.0, %v4185
        %v4187 = vrot.slane %v4178, 4
        %v4188 = vsel %vm1215, 0.0, %v4187
        %v4189 = vrot.slane %v4182, 4
        %v4190 = vsel %vm1215, 0.0, %v4189
        %v4191 = vsel %vm1215, %v4185, %v4166
        %v4193 = vunpack.c.l.s4 1983009808
        %v4194 = vunpack.c.0.s8 %v4193
        %v4195 = vperm.slane %v4191, %v4194
        %v4196 = vrot.slane %v4186, 4
        %v4197 = vsel %vm1215, %v4196, %v4184
        %v4199 = vunpack.c.l.s4 1983009808
        %v4200 = vunpack.c.0.s8 %v4199
        %v4201 = vperm.slane %v4197, %v4200
        %v4202 = vsel %vm1215, %v4189, %v4178
        %v4204 = vunpack.c.l.s4 1983009808
        %v4205 = vunpack.c.0.s8 %v4204
        %v4206 = vperm.slane %v4202, %v4205
        %v4207 = vrot.slane %v4190, 4
        %v4208 = vsel %vm1215, %v4207, %v4188
        %v4210 = vunpack.c.l.s4 1983009808
        %v4211 = vunpack.c.0.s8 %v4210
        %v4212 = vperm.slane %v4208, %v4211
        %v4213 = vrot.slane %v4201, 4
        %v4214 = vsel %vm1215, %v4213, %v4195
        %v4215 = vrot.slane %v4195, 4
        %v4216 = vsel %vm1215, %v4201, %v4215
        %v4218 = vunpack.c.l.s4 1934713408
        %v4219 = vunpack.c.0.s8 %v4218
        %v4220 = vperm.slane %v4214, %v4219
        %v4222 = vunpack.c.l.s4 1934713408
        %v4223 = vunpack.c.0.s8 %v4222
        %v4224 = vperm.slane %v4216, %v4223
        %v4225 = vrot.slane %v4212, 4
        %v4226 = vsel %vm1215, %v4225, %v4206
        %v4227 = vrot.slane %v4206, 4
        %v4228 = vsel %vm1215, %v4212, %v4227
        %v4230 = vunpack.c.l.s4 1934713408
        %v4231 = vunpack.c.0.s8 %v4230
        %v4232 = vperm.slane %v4226, %v4231
        %v4234 = vunpack.c.l.s4 1934713408
        %v4235 = vunpack.c.0.s8 %v4234
        %v4236 = vperm.slane %v4228, %v4235
        %v4237 = vrot.slane %v4232, 4
        %v4238 = vsel %vm1215, %v4237, %v4220
        %v4239 = vrot.slane %v4220, 4
        %v4240 = vsel %vm1215, %v4232, %v4239
        %v4241 = vrot.slane %v4236, 4
        %v4242 = vsel %vm1215, %v4241, %v4224
        %v4243 = vrot.slane %v4224, 4
        %v4244 = vsel %vm1215, %v4236, %v4243
        %4246 = vrot.lane.b32.xlu0 %v4003, 120
        %v4247 = vpop.permute.xlu0 %4246
        %4249 = vrot.lane.b32.xlu0 %v4003, 112
        %v4250 = vpop.permute.xlu0 %4249
        %4252 = vrot.lane.b32.xlu0 %v4003, 104
        %v4253 = vpop.permute.xlu0 %4252
        %v4255 = vrot.slane %v4250, 4
        %v4256 = vsel %vm1215, %v4255, %v4003
        %v4257 = vrot.slane %v4003, 4
        %v4258 = vsel %vm1215, %v4250, %v4257
        %v4260 = vunpack.c.l.s4 1983009808
        %v4261 = vunpack.c.0.s8 %v4260
        %v4262 = vperm.slane %v4256, %v4261
        %v4264 = vunpack.c.l.s4 1983009808
        %v4265 = vunpack.c.0.s8 %v4264
        %v4266 = vperm.slane %v4258, %v4265
        %v4267 = vrot.slane %v4253, 4
        %v4268 = vsel %vm1215, %v4267, %v4247
        %v4269 = vrot.slane %v4247, 4
        %v4270 = vsel %vm1215, %v4253, %v4269
        %v4272 = vunpack.c.l.s4 1983009808
        %v4273 = vunpack.c.0.s8 %v4272
        %v4274 = vperm.slane %v4268, %v4273
        %v4276 = vunpack.c.l.s4 1983009808
        %v4277 = vunpack.c.0.s8 %v4276
        %v4278 = vperm.slane %v4270, %v4277
        %v4279 = vrot.slane %v4274, 4
        %v4280 = vsel %vm1215, %v4279, %v4262
        %v4281 = vrot.slane %v4262, 4
        %v4282 = vsel %vm1215, %v4274, %v4281
        %v4284 = vunpack.c.l.s4 1934713408
        %v4285 = vunpack.c.0.s8 %v4284
        %v4286 = vperm.slane %v4280, %v4285
        %v4288 = vunpack.c.l.s4 1934713408
        %v4289 = vunpack.c.0.s8 %v4288
        %v4290 = vperm.slane %v4282, %v4289
        %v4291 = vrot.slane %v4278, 4
        %v4292 = vsel %vm1215, %v4291, %v4266
        %v4293 = vrot.slane %v4266, 4
        %v4294 = vsel %vm1215, %v4278, %v4293
        %v4296 = vunpack.c.l.s4 1934713408
        %v4297 = vunpack.c.0.s8 %v4296
        %v4298 = vperm.slane %v4292, %v4297
        %v4300 = vunpack.c.l.s4 1934713408
        %v4301 = vunpack.c.0.s8 %v4300
        %v4302 = vperm.slane %v4294, %v4301
        %v4303 = vrot.slane %v4286, 4
        %v4304 = vsel %vm1215, 0.0, %v4303
        %v4305 = vrot.slane %v4290, 4
        %v4306 = vsel %vm1215, 0.0, %v4305
        %v4307 = vrot.slane %v4298, 4
        %v4308 = vsel %vm1215, 0.0, %v4307
        %v4309 = vrot.slane %v4302, 4
        %v4310 = vsel %vm1215, 0.0, %v4309
        %v4311 = vsel %vm1215, %v4305, %v4286
        %v4313 = vunpack.c.l.s4 1983009808
        %v4314 = vunpack.c.0.s8 %v4313
        %v4315 = vperm.slane %v4311, %v4314
        %v4316 = vrot.slane %v4306, 4
        %v4317 = vsel %vm1215, %v4316, %v4304
        %v4319 = vunpack.c.l.s4 1983009808
        %v4320 = vunpack.c.0.s8 %v4319
        %v4321 = vperm.slane %v4317, %v4320
        %v4322 = vsel %vm1215, %v4309, %v4298
        %v4324 = vunpack.c.l.s4 1983009808
        %v4325 = vunpack.c.0.s8 %v4324
        %v4326 = vperm.slane %v4322, %v4325
        %v4327 = vrot.slane %v4310, 4
        %v4328 = vsel %vm1215, %v4327, %v4308
        %v4330 = vunpack.c.l.s4 1983009808
        %v4331 = vunpack.c.0.s8 %v4330
        %v4332 = vperm.slane %v4328, %v4331
        %v4333 = vrot.slane %v4321, 4
        %v4334 = vsel %vm1215, %v4333, %v4315
        %v4335 = vrot.slane %v4315, 4
        %v4336 = vsel %vm1215, %v4321, %v4335
        %v4338 = vunpack.c.l.s4 1934713408
        %v4339 = vunpack.c.0.s8 %v4338
        %v4340 = vperm.slane %v4334, %v4339
        %v4342 = vunpack.c.l.s4 1934713408
        %v4343 = vunpack.c.0.s8 %v4342
        %v4344 = vperm.slane %v4336, %v4343
        %v4345 = vrot.slane %v4332, 4
        %v4346 = vsel %vm1215, %v4345, %v4326
        %v4347 = vrot.slane %v4326, 4
        %v4348 = vsel %vm1215, %v4332, %v4347
        %v4350 = vunpack.c.l.s4 1934713408
        %v4351 = vunpack.c.0.s8 %v4350
        %v4352 = vperm.slane %v4346, %v4351
        %v4354 = vunpack.c.l.s4 1934713408
        %v4355 = vunpack.c.0.s8 %v4354
        %v4356 = vperm.slane %v4348, %v4355
        %v4357 = vrot.slane %v4352, 4
        %v4358 = vsel %vm1215, %v4357, %v4340
        %v4359 = vrot.slane %v4340, 4
        %v4360 = vsel %vm1215, %v4352, %v4359
        %v4361 = vrot.slane %v4356, 4
        %v4362 = vsel %vm1215, %v4361, %v4344
        %v4363 = vrot.slane %v4344, 4
        %v4364 = vsel %vm1215, %v4356, %v4363
        %v4366 = vsel %vm1565, %v4118, 0
        %v4369 = vsel %vm1565, %v4238, 0
        %4371 = vmatpush.xpose.msra.mxu0 0.0
        %4372 = vmatpush.xpose.msra.mxu0 0.0
        %4373 = vmatpush.xpose.msra.mxu0 0.0
        %4374 = vmatpush.xpose.msra.mxu0 0.0
        %4375 = vmatpush.xpose.msra.mxu0 0.0
        %4376 = vmatpush.xpose.msra.mxu0 0.0
        %4377 = vmatpush.xpose.msra.mxu0 0.0
        %4378 = vmatpush.xpose.msra.mxu0 0.0
        %4379 = vmatpush.xpose.msra.mxu0 0.0
        %4380 = vmatpush.xpose.msra.mxu0 0.0
        %4381 = vmatpush.xpose.msra.mxu0 0.0
        %4382 = vmatpush.xpose.msra.mxu0 0.0
        %4383 = vmatpush.xpose.msra.mxu0 0.0
        %4384 = vmatpush.xpose.msra.mxu0 0.0
        %4385 = vmatpush.xpose.msra.mxu0 0.0
        %4386 = vmatpush.xpose.msra.mxu0 %v4369
        %4387 = vmatmul.f32.gmra.mxu0 %v4366
        %v4388 = vpop.f32.mrf.mxu0
        %v4389 = vadd.f32 0.0, %v4388
        %4390 = vdwg.mxu0
        %v4392 = vsel %vm1565, %v4120, 0
        %v4395 = vsel %vm1565, %v4240, 0
        %4397 = vmatpush.xpose.msra.mxu0 0.0
        %4398 = vmatpush.xpose.msra.mxu0 0.0
        %4399 = vmatpush.xpose.msra.mxu0 0.0
        %4400 = vmatpush.xpose.msra.mxu0 0.0
        %4401 = vmatpush.xpose.msra.mxu0 0.0
        %4402 = vmatpush.xpose.msra.mxu0 0.0
        %4403 = vmatpush.xpose.msra.mxu0 0.0
        %4404 = vmatpush.xpose.msra.mxu0 0.0
        %4405 = vmatpush.xpose.msra.mxu0 0.0
        %4406 = vmatpush.xpose.msra.mxu0 0.0
        %4407 = vmatpush.xpose.msra.mxu0 0.0
        %4408 = vmatpush.xpose.msra.mxu0 0.0
        %4409 = vmatpush.xpose.msra.mxu0 0.0
        %4410 = vmatpush.xpose.msra.mxu0 0.0
        %4411 = vmatpush.xpose.msra.mxu0 0.0
        %4412 = vmatpush.xpose.msra.mxu0 %v4395
        %4413 = vmatmul.f32.gmra.mxu0 %v4392
        %v4414 = vpop.f32.mrf.mxu0
        %v4415 = vadd.f32 0.0, %v4414
        %4416 = vdwg.mxu0
        %v4418 = vsel %vm1565, %v4122, 0
        %v4421 = vsel %vm1565, %v4242, 0
        %4423 = vmatpush.xpose.msra.mxu0 0.0
        %4424 = vmatpush.xpose.msra.mxu0 0.0
        %4425 = vmatpush.xpose.msra.mxu0 0.0
        %4426 = vmatpush.xpose.msra.mxu0 0.0
        %4427 = vmatpush.xpose.msra.mxu0 0.0
        %4428 = vmatpush.xpose.msra.mxu0 0.0
        %4429 = vmatpush.xpose.msra.mxu0 0.0
        %4430 = vmatpush.xpose.msra.mxu0 0.0
        %4431 = vmatpush.xpose.msra.mxu0 0.0
        %4432 = vmatpush.xpose.msra.mxu0 0.0
        %4433 = vmatpush.xpose.msra.mxu0 0.0
        %4434 = vmatpush.xpose.msra.mxu0 0.0
        %4435 = vmatpush.xpose.msra.mxu0 0.0
        %4436 = vmatpush.xpose.msra.mxu0 0.0
        %4437 = vmatpush.xpose.msra.mxu0 0.0
        %4438 = vmatpush.xpose.msra.mxu0 %v4421
        %4439 = vmatmul.f32.gmra.mxu0 %v4418
        %v4440 = vpop.f32.mrf.mxu0
        %v4441 = vadd.f32 0.0, %v4440
        %4442 = vdwg.mxu0
        %v4444 = vsel %vm1565, %v4124, 0
        %v4447 = vsel %vm1565, %v4244, 0
        %4449 = vmatpush.xpose.msra.mxu0 0.0
        %4450 = vmatpush.xpose.msra.mxu0 0.0
        %4451 = vmatpush.xpose.msra.mxu0 0.0
        %4452 = vmatpush.xpose.msra.mxu0 0.0
        %4453 = vmatpush.xpose.msra.mxu0 0.0
        %4454 = vmatpush.xpose.msra.mxu0 0.0
        %4455 = vmatpush.xpose.msra.mxu0 0.0
        %4456 = vmatpush.xpose.msra.mxu0 0.0
        %4457 = vmatpush.xpose.msra.mxu0 0.0
        %4458 = vmatpush.xpose.msra.mxu0 0.0
        %4459 = vmatpush.xpose.msra.mxu0 0.0
        %4460 = vmatpush.xpose.msra.mxu0 0.0
        %4461 = vmatpush.xpose.msra.mxu0 0.0
        %4462 = vmatpush.xpose.msra.mxu0 0.0
        %4463 = vmatpush.xpose.msra.mxu0 0.0
        %4464 = vmatpush.xpose.msra.mxu0 %v4447
        %4465 = vmatmul.f32.gmra.mxu0 %v4444
        %v4466 = vpop.f32.mrf.mxu0
        %v4467 = vadd.f32 0.0, %v4466
        %4468 = vdwg.mxu0
        %v4469 = vmul.f32 %v4389, 0.35355338
        %v4470 = vmul.f32 %v4415, 0.35355338
        %v4471 = vmul.f32 %v4441, 0.35355338
        %v4472 = vmul.f32 %v4467, 0.35355338
        %v4473 = vadd.f32 %v4469, %v1068
        %v4474 = vadd.f32 %v4470, %v1068
        %v4475 = vadd.f32 %v4471, %v1068
        %v4476 = vadd.f32 %v4472, %v1068
        %v4477 = vsel %vm1565, %v4473, -inf
        %4478 = vmax.xlane.f32.xlu0 %v4477
        %v4479 = vpop.xlane.xlu0 %4478
        %v4480 = vsel %vm1565, %v4474, -inf
        %4481 = vmax.xlane.f32.xlu0 %v4480
        %v4482 = vpop.xlane.xlu0 %4481
        %v4483 = vsel %vm1565, %v4475, -inf
        %4484 = vmax.xlane.f32.xlu0 %v4483
        %v4485 = vpop.xlane.xlu0 %4484
        %v4486 = vsel %vm1565, %v4476, -inf
        %4487 = vmax.xlane.f32.xlu0 %v4486
        %v4488 = vpop.xlane.xlu0 %4487
        %v4489 = vsub.f32 %v4473, %v4479
        %v4490 = vsub.f32 %v4474, %v4482
        %v4491 = vsub.f32 %v4475, %v4485
        %v4492 = vsub.f32 %v4476, %v4488
        %v4493 = vmul.f32 %v4489, 1.442695
        %v4494 = vpow.pop %v4493
        %v4495 = vmul.f32 %v4490, 1.442695
        %v4496 = vpow.pop %v4495
        %v4497 = vmul.f32 %v4491, 1.442695
        %v4498 = vpow.pop %v4497
        %v4499 = vmul.f32 %v4492, 1.442695
        %v4500 = vpow.pop %v4499
        %v4501 = vsel %vm1565, %v4494, 0.0
        %4502 = vadd.xlane.f32.xlu0 %v4501
        %v4503 = vpop.xlane.xlu0 %4502
        %v4504 = vsel %vm1565, %v4496, 0.0
        %4505 = vadd.xlane.f32.xlu0 %v4504
        %v4506 = vpop.xlane.xlu0 %4505
        %v4507 = vsel %vm1565, %v4498, 0.0
        %4508 = vadd.xlane.f32.xlu0 %v4507
        %v4509 = vpop.xlane.xlu0 %4508
        %v4510 = vsel %vm1565, %v4500, 0.0
        %4511 = vadd.xlane.f32.xlu0 %v4510
        %v4512 = vpop.xlane.xlu0 %4511
        %v4513 = vrcp.pop %v4503
        %v4514 = vrcp.pop %v4506
        %v4515 = vrcp.pop %v4509
        %v4516 = vrcp.pop %v4512
        %v4517 = vmul.f32 %v4494, %v4513
        %v4518 = vmul.f32 %v4496, %v4514
        %v4519 = vmul.f32 %v4498, %v4515
        %v4520 = vmul.f32 %v4500, %v4516
        %v4522 = vsel %vm1565, %v4517, 0
        %4524 = vmatpush.msra.mxu0 0.0
        %4525 = vmatpush.msra.mxu0 0.0
        %4526 = vmatpush.msra.mxu0 0.0
        %4527 = vmatpush.msra.mxu0 0.0
        %4528 = vmatpush.msra.mxu0 0.0
        %4529 = vmatpush.msra.mxu0 0.0
        %4530 = vmatpush.msra.mxu0 0.0
        %4531 = vmatpush.msra.mxu0 0.0
        %4532 = vmatpush.msra.mxu0 0.0
        %4533 = vmatpush.msra.mxu0 0.0
        %4534 = vmatpush.msra.mxu0 0.0
        %4535 = vmatpush.msra.mxu0 0.0
        %4536 = vmatpush.msra.mxu0 0.0
        %4537 = vmatpush.msra.mxu0 0.0
        %4538 = vmatpush.msra.mxu0 0.0
        %4539 = vmatpush.msra.mxu0 %v4358
        %4540 = vmatmul.f32.gmra.mxu0 %v4522
        %v4541 = vpop.f32.mrf.mxu0
        %v4542 = vadd.f32 0.0, %v4541
        %4543 = vdwg.mxu0
        %v4545 = vsel %vm1565, %v4518, 0
        %4547 = vmatpush.msra.mxu0 0.0
        %4548 = vmatpush.msra.mxu0 0.0
        %4549 = vmatpush.msra.mxu0 0.0
        %4550 = vmatpush.msra.mxu0 0.0
        %4551 = vmatpush.msra.mxu0 0.0
        %4552 = vmatpush.msra.mxu0 0.0
        %4553 = vmatpush.msra.mxu0 0.0
        %4554 = vmatpush.msra.mxu0 0.0
        %4555 = vmatpush.msra.mxu0 0.0
        %4556 = vmatpush.msra.mxu0 0.0
        %4557 = vmatpush.msra.mxu0 0.0
        %4558 = vmatpush.msra.mxu0 0.0
        %4559 = vmatpush.msra.mxu0 0.0
        %4560 = vmatpush.msra.mxu0 0.0
        %4561 = vmatpush.msra.mxu0 0.0
        %4562 = vmatpush.msra.mxu0 %v4360
        %4563 = vmatmul.f32.gmra.mxu0 %v4545
        %v4564 = vpop.f32.mrf.mxu0
        %v4565 = vadd.f32 0.0, %v4564
        %4566 = vdwg.mxu0
        %v4568 = vsel %vm1565, %v4519, 0
        %4570 = vmatpush.msra.mxu0 0.0
        %4571 = vmatpush.msra.mxu0 0.0
        %4572 = vmatpush.msra.mxu0 0.0
        %4573 = vmatpush.msra.mxu0 0.0
        %4574 = vmatpush.msra.mxu0 0.0
        %4575 = vmatpush.msra.mxu0 0.0
        %4576 = vmatpush.msra.mxu0 0.0
        %4577 = vmatpush.msra.mxu0 0.0
        %4578 = vmatpush.msra.mxu0 0.0
        %4579 = vmatpush.msra.mxu0 0.0
        %4580 = vmatpush.msra.mxu0 0.0
        %4581 = vmatpush.msra.mxu0 0.0
        %4582 = vmatpush.msra.mxu0 0.0
        %4583 = vmatpush.msra.mxu0 0.0
        %4584 = vmatpush.msra.mxu0 0.0
        %4585 = vmatpush.msra.mxu0 %v4362
        %4586 = vmatmul.f32.gmra.mxu0 %v4568
        %v4587 = vpop.f32.mrf.mxu0
        %v4588 = vadd.f32 0.0, %v4587
        %4589 = vdwg.mxu0
        %v4591 = vsel %vm1565, %v4520, 0
        %4593 = vmatpush.msra.mxu0 0.0
        %4594 = vmatpush.msra.mxu0 0.0
        %4595 = vmatpush.msra.mxu0 0.0
        %4596 = vmatpush.msra.mxu0 0.0
        %4597 = vmatpush.msra.mxu0 0.0
        %4598 = vmatpush.msra.mxu0 0.0
        %4599 = vmatpush.msra.mxu0 0.0
        %4600 = vmatpush.msra.mxu0 0.0
        %4601 = vmatpush.msra.mxu0 0.0
        %4602 = vmatpush.msra.mxu0 0.0
        %4603 = vmatpush.msra.mxu0 0.0
        %4604 = vmatpush.msra.mxu0 0.0
        %4605 = vmatpush.msra.mxu0 0.0
        %4606 = vmatpush.msra.mxu0 0.0
        %4607 = vmatpush.msra.mxu0 0.0
        %4608 = vmatpush.msra.mxu0 %v4364
        %4609 = vmatmul.f32.gmra.mxu0 %v4591
        %v4610 = vpop.f32.mrf.mxu0
        %v4611 = vadd.f32 0.0, %v4610
        %4612 = vdwg.mxu0
        %v4613 = vrot.slane %v4588, 4
        %v4614 = vsel %vm1215, %v4613, %v4542
        %v4615 = vrot.slane %v4542, 4
        %v4616 = vsel %vm1215, %v4588, %v4615
        %v4618 = vunpack.c.l.s4 1983009808
        %v4619 = vunpack.c.0.s8 %v4618
        %v4620 = vperm.slane %v4614, %v4619
        %v4622 = vunpack.c.l.s4 1983009808
        %v4623 = vunpack.c.0.s8 %v4622
        %v4624 = vperm.slane %v4616, %v4623
        %v4625 = vrot.slane %v4611, 4
        %v4626 = vsel %vm1215, %v4625, %v4565
        %v4627 = vrot.slane %v4565, 4
        %v4628 = vsel %vm1215, %v4611, %v4627
        %v4630 = vunpack.c.l.s4 1983009808
        %v4631 = vunpack.c.0.s8 %v4630
        %v4632 = vperm.slane %v4626, %v4631
        %v4634 = vunpack.c.l.s4 1983009808
        %v4635 = vunpack.c.0.s8 %v4634
        %v4636 = vperm.slane %v4628, %v4635
        %v4637 = vrot.slane %v4632, 4
        %v4638 = vsel %vm1215, %v4637, %v4620
        %v4639 = vrot.slane %v4620, 4
        %v4640 = vsel %vm1215, %v4632, %v4639
        %v4642 = vunpack.c.l.s4 1934713408
        %v4643 = vunpack.c.0.s8 %v4642
        %v4644 = vperm.slane %v4638, %v4643
        %v4646 = vunpack.c.l.s4 1934713408
        %v4647 = vunpack.c.0.s8 %v4646
        %v4648 = vperm.slane %v4640, %v4647
        %v4649 = vrot.slane %v4636, 4
        %v4650 = vsel %vm1215, %v4649, %v4624
        %v4651 = vrot.slane %v4624, 4
        %v4652 = vsel %vm1215, %v4636, %v4651
        %v4654 = vunpack.c.l.s4 1934713408
        %v4655 = vunpack.c.0.s8 %v4654
        %v4656 = vperm.slane %v4650, %v4655
        %v4658 = vunpack.c.l.s4 1934713408
        %v4659 = vunpack.c.0.s8 %v4658
        %v4660 = vperm.slane %v4652, %v4659
        %v4661 = vrot.slane %v4644, 4
        %v4662 = vsel %vm1215, 0.0, %v4661
        %v4663 = vrot.slane %v4648, 4
        %v4664 = vsel %vm1215, 0.0, %v4663
        %v4665 = vrot.slane %v4656, 4
        %v4666 = vsel %vm1215, 0.0, %v4665
        %v4667 = vrot.slane %v4660, 4
        %v4668 = vsel %vm1215, 0.0, %v4667
        %v4669 = vsel %vm1215, %v4663, %v4644
        %v4671 = vunpack.c.l.s4 1983009808
        %v4672 = vunpack.c.0.s8 %v4671
        %v4673 = vperm.slane %v4669, %v4672
        %v4674 = vrot.slane %v4664, 4
        %v4675 = vsel %vm1215, %v4674, %v4662
        %v4677 = vunpack.c.l.s4 1983009808
        %v4678 = vunpack.c.0.s8 %v4677
        %v4679 = vperm.slane %v4675, %v4678
        %v4680 = vsel %vm1215, %v4667, %v4656
        %v4682 = vunpack.c.l.s4 1983009808
        %v4683 = vunpack.c.0.s8 %v4682
        %v4684 = vperm.slane %v4680, %v4683
        %v4685 = vrot.slane %v4668, 4
        %v4686 = vsel %vm1215, %v4685, %v4666
        %v4688 = vunpack.c.l.s4 1983009808
        %v4689 = vunpack.c.0.s8 %v4688
        %v4690 = vperm.slane %v4686, %v4689
        %v4691 = vrot.slane %v4679, 4
        %v4692 = vsel %vm1215, %v4691, %v4673
        %v4693 = vrot.slane %v4673, 4
        %v4694 = vsel %vm1215, %v4679, %v4693
        %v4696 = vunpack.c.l.s4 1934713408
        %v4697 = vunpack.c.0.s8 %v4696
        %v4698 = vperm.slane %v4692, %v4697
        %v4700 = vunpack.c.l.s4 1934713408
        %v4701 = vunpack.c.0.s8 %v4700
        %v4702 = vperm.slane %v4694, %v4701
        %v4703 = vrot.slane %v4690, 4
        %v4704 = vsel %vm1215, %v4703, %v4684
        %v4705 = vrot.slane %v4684, 4
        %v4706 = vsel %vm1215, %v4690, %v4705
        %v4708 = vunpack.c.l.s4 1934713408
        %v4709 = vunpack.c.0.s8 %v4708
        %v4710 = vperm.slane %v4704, %v4709
        %v4712 = vunpack.c.l.s4 1934713408
        %v4713 = vunpack.c.0.s8 %v4712
        %v4714 = vperm.slane %v4706, %v4713
        %v4715 = vrot.slane %v4710, 4
        %v4716 = vsel %vm1215, %v4715, %v4698
        %v4717 = vrot.slane %v4698, 4
        %v4718 = vsel %vm1215, %v4710, %v4717
        %v4719 = vrot.slane %v4714, 4
        %v4720 = vsel %vm1215, %v4719, %v4702
        %v4721 = vrot.slane %v4702, 4
        %v4722 = vsel %vm1215, %v4714, %v4721
        %4724 = vrot.lane.b32.xlu0 %v4718, 8
        %v4725 = vpop.permute.xlu0 %4724
        %4728 = vrot.lane.b32.xlu0 %v4720, 16
        %v4729 = vpop.permute.xlu0 %4728
        %4732 = vrot.lane.b32.xlu0 %v4722, 24
        %v4733 = vpop.permute.xlu0 %4732
        %v4735 = vsel %vm1565, %v4716, %v4725
        %v4736 = vsel %vm1937, %v4735, %v4729
        %v4737 = vsel %vm1939, %v4736, %v4733
        %v4739 = vperm.slane %v3932, 0
        %v4742 = vsel %vm1074, %v4737, 0
        %4744 = vmatpush.msra.mxu0 0.0
        %4745 = vmatpush.msra.mxu0 0.0
        %4746 = vmatpush.msra.mxu0 0.0
        %4747 = vmatpush.msra.mxu0 0.0
        %4748 = vmatpush.msra.mxu0 0.0
        %4749 = vmatpush.msra.mxu0 0.0
        %4750 = vmatpush.msra.mxu0 0.0
        %4751 = vmatpush.msra.mxu0 0.0
        %4752 = vmatpush.msra.mxu0 0.0
        %4753 = vmatpush.msra.mxu0 0.0
        %4754 = vmatpush.msra.mxu0 0.0
        %4755 = vmatpush.msra.mxu0 0.0
        %4756 = vmatpush.msra.mxu0 %v3930
        %4757 = vmatpush.msra.mxu0 %v3929
        %4758 = vmatpush.msra.mxu0 %v3928
        %4759 = vmatpush.msra.mxu0 %v3927
        %4760 = vmatmul.f32.gmra.mxu0 %v4742
        %v4761 = vpop.f32.mrf.mxu0
        %v4762 = vadd.f32 %v4739, %v4761
        %4763 = vdwg.mxu0
        %v4764 = vadd.f32 %v3870, %v4762
        %s4765 = scalar_lea.vmem [#allocation10], 5
        %v4766 = vld [vmem:[%s4765] sm:$0x1]
        %s4767 = scalar_lea.vmem [#allocation11], 5
        %v4768 = vld [vmem:[%s4767] sm:$0x1]
        %v4769 = vsel %vm1074, %v4764, 0.0
        %4770 = vadd.xlane.f32.xlu0 %v4769
        %v4771 = vpop.xlane.xlu0 %4770
        %v4772 = vmul.f32 %v4771, %v1084
        %v4773 = vsub.f32 %v4764, %v4772
        %v4774 = vmul.f32 %v4773, %v4773
        %v4775 = vsel %vm1074, %v4774, 0.0
        %4776 = vadd.xlane.f32.xlu0 %v4775
        %v4777 = vpop.xlane.xlu0 %4776
        %v4778 = vmul.f32 %v4777, %v1084
        %v4779 = vadd.f32 %v4778, 1e-05
        %v4780 = vrsqrt.pop %v4779
        %v4781 = vmul.f32 %v4780, %v4779
        %v4782 = vmul.f32 %v4781, %v4780
        %v4783 = vmul.f32 0.5, %v4782
        %v4784 = vsub.f32 1.5, %v4783
        %v4785 = vmul.f32 %v4780, %v4784
        %vm4786 = vweird.f32 %v4779
        %vm4787 = vweird.f32 %v4780
        %vm4788 = vmor %vm4786, %vm4787
        %v4789 = vsel %vm4788, %v4780, %v4785
        %v4790 = vmul.f32 %v4773, %v4789
        %v4792 = vperm.slane %v4766, 0
        %v4794 = vmul.f32 %v4790, %v4792
        %v4796 = vperm.slane %v4768, 0
        %v4798 = vadd.f32 %v4794, %v4796
        %s4799 = scalar_lea.vmem %s9, 128
        %v4800 = vld [vmem:[%s4799] sm:$0xff]
        %v4801 = vld [vmem:[%s4799 + $0x8] sm:$0xff]
        %v4802 = vld [vmem:[%s4799 + $0x10] sm:$0xff]
        %v4803 = vld [vmem:[%s4799 + $0x18] sm:$0xff]
        %s4804 = scalar_lea.vmem [#allocation17], 4
        %v4805 = vld [vmem:[%s4804] sm:$0x1]
        %s4806 = scalar_lea.vmem [#allocation13], 128
        %v4807 = vld [vmem:[%s4806] sm:$0xff]
        %v4808 = vld [vmem:[%s4806 + $0x8] sm:$0xff]
        %v4809 = vld [vmem:[%s4806 + $0x10] sm:$0xff]
        %v4810 = vld [vmem:[%s4806 + $0x18] sm:$0xff]
        %s4811 = scalar_lea.vmem [#allocation19], 4
        %v4812 = vld [vmem:[%s4811] sm:$0x1]
        %s4813 = scalar_lea.vmem [#allocation14], 128
        %v4814 = vld [vmem:[%s4813] sm:$0xff]
        %v4815 = vld [vmem:[%s4813 + $0x8] sm:$0xff]
        %v4816 = vld [vmem:[%s4813 + $0x10] sm:$0xff]
        %v4817 = vld [vmem:[%s4813 + $0x18] sm:$0xff]
        %s4818 = scalar_lea.vmem [#allocation20], 4
        %v4819 = vld [vmem:[%s4818] sm:$0x1]
        %s4820 = scalar_lea.vmem [#allocation16], 128
        %v4821 = vld [vmem:[%s4820] sm:$0xff]
        %v4822 = vld [vmem:[%s4820 + $0x8] sm:$0xff]
        %v4823 = vld [vmem:[%s4820 + $0x10] sm:$0xff]
        %v4824 = vld [vmem:[%s4820 + $0x18] sm:$0xff]
        %s4825 = scalar_lea.vmem [#allocation22], 4
        %v4826 = vld [vmem:[%s4825] sm:$0x1]
        %v4828 = vperm.slane %v4805, 0
        %v4831 = vsel %vm1074, %v4798, 0
        %4833 = vmatpush.msra.mxu0 0.0
        %4834 = vmatpush.msra.mxu0 0.0
        %4835 = vmatpush.msra.mxu0 0.0
        %4836 = vmatpush.msra.mxu0 0.0
        %4837 = vmatpush.msra.mxu0 0.0
        %4838 = vmatpush.msra.mxu0 0.0
        %4839 = vmatpush.msra.mxu0 0.0
        %4840 = vmatpush.msra.mxu0 0.0
        %4841 = vmatpush.msra.mxu0 0.0
        %4842 = vmatpush.msra.mxu0 0.0
        %4843 = vmatpush.msra.mxu0 0.0
        %4844 = vmatpush.msra.mxu0 0.0
        %4845 = vmatpush.msra.mxu0 %v4803
        %4846 = vmatpush.msra.mxu0 %v4802
        %4847 = vmatpush.msra.mxu0 %v4801
        %4848 = vmatpush.msra.mxu0 %v4800
        %4849 = vmatmul.f32.gmra.mxu0 %v4831
        %v4850 = vpop.f32.mrf.mxu0
        %v4851 = vadd.f32 %v4828, %v4850
        %4852 = vdwg.mxu0
        %v4854 = vperm.slane %v4812, 0
        %4856 = vmatpush.msra.mxu0 0.0
        %4857 = vmatpush.msra.mxu0 0.0
        %4858 = vmatpush.msra.mxu0 0.0
        %4859 = vmatpush.msra.mxu0 0.0
        %4860 = vmatpush.msra.mxu0 0.0
        %4861 = vmatpush.msra.mxu0 0.0
        %4862 = vmatpush.msra.mxu0 0.0
        %4863 = vmatpush.msra.mxu0 0.0
        %4864 = vmatpush.msra.mxu0 0.0
        %4865 = vmatpush.msra.mxu0 0.0
        %4866 = vmatpush.msra.mxu0 0.0
        %4867 = vmatpush.msra.mxu0 0.0
        %4868 = vmatpush.msra.mxu0 %v4810
        %4869 = vmatpush.msra.mxu0 %v4809
        %4870 = vmatpush.msra.mxu0 %v4808
        %4871 = vmatpush.msra.mxu0 %v4807
        %4872 = vmatmul.f32.gmra.mxu0 %v2060
        %v4873 = vpop.f32.mrf.mxu0
        %v4874 = vadd.f32 %v4854, %v4873
        %4875 = vdwg.mxu0
        %v4877 = vperm.slane %v4819, 0
        %4879 = vmatpush.msra.mxu0 0.0
        %4880 = vmatpush.msra.mxu0 0.0
        %4881 = vmatpush.msra.mxu0 0.0
        %4882 = vmatpush.msra.mxu0 0.0
        %4883 = vmatpush.msra.mxu0 0.0
        %4884 = vmatpush.msra.mxu0 0.0
        %4885 = vmatpush.msra.mxu0 0.0
        %4886 = vmatpush.msra.mxu0 0.0
        %4887 = vmatpush.msra.mxu0 0.0
        %4888 = vmatpush.msra.mxu0 0.0
        %4889 = vmatpush.msra.mxu0 0.0
        %4890 = vmatpush.msra.mxu0 0.0
        %4891 = vmatpush.msra.mxu0 %v4817
        %4892 = vmatpush.msra.mxu0 %v4816
        %4893 = vmatpush.msra.mxu0 %v4815
        %4894 = vmatpush.msra.mxu0 %v4814
        %4895 = vmatmul.f32.gmra.mxu0 %v2060
        %v4896 = vpop.f32.mrf.mxu0
        %v4897 = vadd.f32 %v4877, %v4896
        %4898 = vdwg.mxu0
        %4900 = vrot.lane.b32.xlu0 %v4851, 120
        %v4901 = vpop.permute.xlu0 %4900
        %4903 = vrot.lane.b32.xlu0 %v4851, 112
        %v4904 = vpop.permute.xlu0 %4903
        %4906 = vrot.lane.b32.xlu0 %v4851, 104
        %v4907 = vpop.permute.xlu0 %4906
        %v4909 = vrot.slane %v4904, 4
        %v4910 = vsel %vm1215, %v4909, %v4851
        %v4911 = vrot.slane %v4851, 4
        %v4912 = vsel %vm1215, %v4904, %v4911
        %v4914 = vunpack.c.l.s4 1983009808
        %v4915 = vunpack.c.0.s8 %v4914
        %v4916 = vperm.slane %v4910, %v4915
        %v4918 = vunpack.c.l.s4 1983009808
        %v4919 = vunpack.c.0.s8 %v4918
        %v4920 = vperm.slane %v4912, %v4919
        %v4921 = vrot.slane %v4907, 4
        %v4922 = vsel %vm1215, %v4921, %v4901
        %v4923 = vrot.slane %v4901, 4
        %v4924 = vsel %vm1215, %v4907, %v4923
        %v4926 = vunpack.c.l.s4 1983009808
        %v4927 = vunpack.c.0.s8 %v4926
        %v4928 = vperm.slane %v4922, %v4927
        %v4930 = vunpack.c.l.s4 1983009808
        %v4931 = vunpack.c.0.s8 %v4930
        %v4932 = vperm.slane %v4924, %v4931
        %v4933 = vrot.slane %v4928, 4
        %v4934 = vsel %vm1215, %v4933, %v4916
        %v4935 = vrot.slane %v4916, 4
        %v4936 = vsel %vm1215, %v4928, %v4935
        %v4938 = vunpack.c.l.s4 1934713408
        %v4939 = vunpack.c.0.s8 %v4938
        %v4940 = vperm.slane %v4934, %v4939
        %v4942 = vunpack.c.l.s4 1934713408
        %v4943 = vunpack.c.0.s8 %v4942
        %v4944 = vperm.slane %v4936, %v4943
        %v4945 = vrot.slane %v4932, 4
        %v4946 = vsel %vm1215, %v4945, %v4920
        %v4947 = vrot.slane %v4920, 4
        %v4948 = vsel %vm1215, %v4932, %v4947
        %v4950 = vunpack.c.l.s4 1934713408
        %v4951 = vunpack.c.0.s8 %v4950
        %v4952 = vperm.slane %v4946, %v4951
        %v4954 = vunpack.c.l.s4 1934713408
        %v4955 = vunpack.c.0.s8 %v4954
        %v4956 = vperm.slane %v4948, %v4955
        %v4957 = vrot.slane %v4940, 4
        %v4958 = vsel %vm1215, 0.0, %v4957
        %v4959 = vrot.slane %v4944, 4
        %v4960 = vsel %vm1215, 0.0, %v4959
        %v4961 = vrot.slane %v4952, 4
        %v4962 = vsel %vm1215, 0.0, %v4961
        %v4963 = vrot.slane %v4956, 4
        %v4964 = vsel %vm1215, 0.0, %v4963
        %v4965 = vsel %vm1215, %v4959, %v4940
        %v4967 = vunpack.c.l.s4 1983009808
        %v4968 = vunpack.c.0.s8 %v4967
        %v4969 = vperm.slane %v4965, %v4968
        %v4970 = vrot.slane %v4960, 4
        %v4971 = vsel %vm1215, %v4970, %v4958
        %v4973 = vunpack.c.l.s4 1983009808
        %v4974 = vunpack.c.0.s8 %v4973
        %v4975 = vperm.slane %v4971, %v4974
        %v4976 = vsel %vm1215, %v4963, %v4952
        %v4978 = vunpack.c.l.s4 1983009808
        %v4979 = vunpack.c.0.s8 %v4978
        %v4980 = vperm.slane %v4976, %v4979
        %v4981 = vrot.slane %v4964, 4
        %v4982 = vsel %vm1215, %v4981, %v4962
        %v4984 = vunpack.c.l.s4 1983009808
        %v4985 = vunpack.c.0.s8 %v4984
        %v4986 = vperm.slane %v4982, %v4985
        %v4987 = vrot.slane %v4975, 4
        %v4988 = vsel %vm1215, %v4987, %v4969
        %v4989 = vrot.slane %v4969, 4
        %v4990 = vsel %vm1215, %v4975, %v4989
        %v4992 = vunpack.c.l.s4 1934713408
        %v4993 = vunpack.c.0.s8 %v4992
        %v4994 = vperm.slane %v4988, %v4993
        %v4996 = vunpack.c.l.s4 1934713408
        %v4997 = vunpack.c.0.s8 %v4996
        %v4998 = vperm.slane %v4990, %v4997
        %v4999 = vrot.slane %v4986, 4
        %v5000 = vsel %vm1215, %v4999, %v4980
        %v5001 = vrot.slane %v4980, 4
        %v5002 = vsel %vm1215, %v4986, %v5001
        %v5004 = vunpack.c.l.s4 1934713408
        %v5005 = vunpack.c.0.s8 %v5004
        %v5006 = vperm.slane %v5000, %v5005
        %v5008 = vunpack.c.l.s4 1934713408
        %v5009 = vunpack.c.0.s8 %v5008
        %v5010 = vperm.slane %v5002, %v5009
        %v5011 = vrot.slane %v5006, 4
        %v5012 = vsel %vm1215, %v5011, %v4994
        %v5013 = vrot.slane %v4994, 4
        %v5014 = vsel %vm1215, %v5006, %v5013
        %v5015 = vrot.slane %v5010, 4
        %v5016 = vsel %vm1215, %v5015, %v4998
        %v5017 = vrot.slane %v4998, 4
        %v5018 = vsel %vm1215, %v5010, %v5017
        %5020 = vrot.lane.b32.xlu0 %v4874, 120
        %v5021 = vpop.permute.xlu0 %5020
        %5023 = vrot.lane.b32.xlu0 %v4874, 112
        %v5024 = vpop.permute.xlu0 %5023
        %5026 = vrot.lane.b32.xlu0 %v4874, 104
        %v5027 = vpop.permute.xlu0 %5026
        %v5029 = vrot.slane %v5024, 4
        %v5030 = vsel %vm1215, %v5029, %v4874
        %v5031 = vrot.slane %v4874, 4
        %v5032 = vsel %vm1215, %v5024, %v5031
        %v5034 = vunpack.c.l.s4 1983009808
        %v5035 = vunpack.c.0.s8 %v5034
        %v5036 = vperm.slane %v5030, %v5035
        %v5038 = vunpack.c.l.s4 1983009808
        %v5039 = vunpack.c.0.s8 %v5038
        %v5040 = vperm.slane %v5032, %v5039
        %v5041 = vrot.slane %v5027, 4
        %v5042 = vsel %vm1215, %v5041, %v5021
        %v5043 = vrot.slane %v5021, 4
        %v5044 = vsel %vm1215, %v5027, %v5043
        %v5046 = vunpack.c.l.s4 1983009808
        %v5047 = vunpack.c.0.s8 %v5046
        %v5048 = vperm.slane %v5042, %v5047
        %v5050 = vunpack.c.l.s4 1983009808
        %v5051 = vunpack.c.0.s8 %v5050
        %v5052 = vperm.slane %v5044, %v5051
        %v5053 = vrot.slane %v5048, 4
        %v5054 = vsel %vm1215, %v5053, %v5036
        %v5055 = vrot.slane %v5036, 4
        %v5056 = vsel %vm1215, %v5048, %v5055
        %v5058 = vunpack.c.l.s4 1934713408
        %v5059 = vunpack.c.0.s8 %v5058
        %v5060 = vperm.slane %v5054, %v5059
        %v5062 = vunpack.c.l.s4 1934713408
        %v5063 = vunpack.c.0.s8 %v5062
        %v5064 = vperm.slane %v5056, %v5063
        %v5065 = vrot.slane %v5052, 4
        %v5066 = vsel %vm1215, %v5065, %v5040
        %v5067 = vrot.slane %v5040, 4
        %v5068 = vsel %vm1215, %v5052, %v5067
        %v5070 = vunpack.c.l.s4 1934713408
        %v5071 = vunpack.c.0.s8 %v5070
        %v5072 = vperm.slane %v5066, %v5071
        %v5074 = vunpack.c.l.s4 1934713408
        %v5075 = vunpack.c.0.s8 %v5074
        %v5076 = vperm.slane %v5068, %v5075
        %v5077 = vrot.slane %v5060, 4
        %v5078 = vsel %vm1215, 0.0, %v5077
        %v5079 = vrot.slane %v5064, 4
        %v5080 = vsel %vm1215, 0.0, %v5079
        %v5081 = vrot.slane %v5072, 4
        %v5082 = vsel %vm1215, 0.0, %v5081
        %v5083 = vrot.slane %v5076, 4
        %v5084 = vsel %vm1215, 0.0, %v5083
        %v5085 = vsel %vm1215, %v5079, %v5060
        %v5087 = vunpack.c.l.s4 1983009808
        %v5088 = vunpack.c.0.s8 %v5087
        %v5089 = vperm.slane %v5085, %v5088
        %v5090 = vrot.slane %v5080, 4
        %v5091 = vsel %vm1215, %v5090, %v5078
        %v5093 = vunpack.c.l.s4 1983009808
        %v5094 = vunpack.c.0.s8 %v5093
        %v5095 = vperm.slane %v5091, %v5094
        %v5096 = vsel %vm1215, %v5083, %v5072
        %v5098 = vunpack.c.l.s4 1983009808
        %v5099 = vunpack.c.0.s8 %v5098
        %v5100 = vperm.slane %v5096, %v5099
        %v5101 = vrot.slane %v5084, 4
        %v5102 = vsel %vm1215, %v5101, %v5082
        %v5104 = vunpack.c.l.s4 1983009808
        %v5105 = vunpack.c.0.s8 %v5104
        %v5106 = vperm.slane %v5102, %v5105
        %v5107 = vrot.slane %v5095, 4
        %v5108 = vsel %vm1215, %v5107, %v5089
        %v5109 = vrot.slane %v5089, 4
        %v5110 = vsel %vm1215, %v5095, %v5109
        %v5112 = vunpack.c.l.s4 1934713408
        %v5113 = vunpack.c.0.s8 %v5112
        %v5114 = vperm.slane %v5108, %v5113
        %v5116 = vunpack.c.l.s4 1934713408
        %v5117 = vunpack.c.0.s8 %v5116
        %v5118 = vperm.slane %v5110, %v5117
        %v5119 = vrot.slane %v5106, 4
        %v5120 = vsel %vm1215, %v5119, %v5100
        %v5121 = vrot.slane %v5100, 4
        %v5122 = vsel %vm1215, %v5106, %v5121
        %v5124 = vunpack.c.l.s4 1934713408
        %v5125 = vunpack.c.0.s8 %v5124
        %v5126 = vperm.slane %v5120, %v5125
        %v5128 = vunpack.c.l.s4 1934713408
        %v5129 = vunpack.c.0.s8 %v5128
        %v5130 = vperm.slane %v5122, %v5129
        %v5131 = vrot.slane %v5126, 4
        %v5132 = vsel %vm1215, %v5131, %v5114
        %v5133 = vrot.slane %v5114, 4
        %v5134 = vsel %vm1215, %v5126, %v5133
        %v5135 = vrot.slane %v5130, 4
        %v5136 = vsel %vm1215, %v5135, %v5118
        %v5137 = vrot.slane %v5118, 4
        %v5138 = vsel %vm1215, %v5130, %v5137
        %5140 = vrot.lane.b32.xlu0 %v4897, 120
        %v5141 = vpop.permute.xlu0 %5140
        %5143 = vrot.lane.b32.xlu0 %v4897, 112
        %v5144 = vpop.permute.xlu0 %5143
        %5146 = vrot.lane.b32.xlu0 %v4897, 104
        %v5147 = vpop.permute.xlu0 %5146
        %v5149 = vrot.slane %v5144, 4
        %v5150 = vsel %vm1215, %v5149, %v4897
        %v5151 = vrot.slane %v4897, 4
        %v5152 = vsel %vm1215, %v5144, %v5151
        %v5154 = vunpack.c.l.s4 1983009808
        %v5155 = vunpack.c.0.s8 %v5154
        %v5156 = vperm.slane %v5150, %v5155
        %v5158 = vunpack.c.l.s4 1983009808
        %v5159 = vunpack.c.0.s8 %v5158
        %v5160 = vperm.slane %v5152, %v5159
        %v5161 = vrot.slane %v5147, 4
        %v5162 = vsel %vm1215, %v5161, %v5141
        %v5163 = vrot.slane %v5141, 4
        %v5164 = vsel %vm1215, %v5147, %v5163
        %v5166 = vunpack.c.l.s4 1983009808
        %v5167 = vunpack.c.0.s8 %v5166
        %v5168 = vperm.slane %v5162, %v5167
        %v5170 = vunpack.c.l.s4 1983009808
        %v5171 = vunpack.c.0.s8 %v5170
        %v5172 = vperm.slane %v5164, %v5171
        %v5173 = vrot.slane %v5168, 4
        %v5174 = vsel %vm1215, %v5173, %v5156
        %v5175 = vrot.slane %v5156, 4
        %v5176 = vsel %vm1215, %v5168, %v5175
        %v5178 = vunpack.c.l.s4 1934713408
        %v5179 = vunpack.c.0.s8 %v5178
        %v5180 = vperm.slane %v5174, %v5179
        %v5182 = vunpack.c.l.s4 1934713408
        %v5183 = vunpack.c.0.s8 %v5182
        %v5184 = vperm.slane %v5176, %v5183
        %v5185 = vrot.slane %v5172, 4
        %v5186 = vsel %vm1215, %v5185, %v5160
        %v5187 = vrot.slane %v5160, 4
        %v5188 = vsel %vm1215, %v5172, %v5187
        %v5190 = vunpack.c.l.s4 1934713408
        %v5191 = vunpack.c.0.s8 %v5190
        %v5192 = vperm.slane %v5186, %v5191
        %v5194 = vunpack.c.l.s4 1934713408
        %v5195 = vunpack.c.0.s8 %v5194
        %v5196 = vperm.slane %v5188, %v5195
        %v5197 = vrot.slane %v5180, 4
        %v5198 = vsel %vm1215, 0.0, %v5197
        %v5199 = vrot.slane %v5184, 4
        %v5200 = vsel %vm1215, 0.0, %v5199
        %v5201 = vrot.slane %v5192, 4
        %v5202 = vsel %vm1215, 0.0, %v5201
        %v5203 = vrot.slane %v5196, 4
        %v5204 = vsel %vm1215, 0.0, %v5203
        %v5205 = vsel %vm1215, %v5199, %v5180
        %v5207 = vunpack.c.l.s4 1983009808
        %v5208 = vunpack.c.0.s8 %v5207
        %v5209 = vperm.slane %v5205, %v5208
        %v5210 = vrot.slane %v5200, 4
        %v5211 = vsel %vm1215, %v5210, %v5198
        %v5213 = vunpack.c.l.s4 1983009808
        %v5214 = vunpack.c.0.s8 %v5213
        %v5215 = vperm.slane %v5211, %v5214
        %v5216 = vsel %vm1215, %v5203, %v5192
        %v5218 = vunpack.c.l.s4 1983009808
        %v5219 = vunpack.c.0.s8 %v5218
        %v5220 = vperm.slane %v5216, %v5219
        %v5221 = vrot.slane %v5204, 4
        %v5222 = vsel %vm1215, %v5221, %v5202
        %v5224 = vunpack.c.l.s4 1983009808
        %v5225 = vunpack.c.0.s8 %v5224
        %v5226 = vperm.slane %v5222, %v5225
        %v5227 = vrot.slane %v5215, 4
        %v5228 = vsel %vm1215, %v5227, %v5209
        %v5229 = vrot.slane %v5209, 4
        %v5230 = vsel %vm1215, %v5215, %v5229
        %v5232 = vunpack.c.l.s4 1934713408
        %v5233 = vunpack.c.0.s8 %v5232
        %v5234 = vperm.slane %v5228, %v5233
        %v5236 = vunpack.c.l.s4 1934713408
        %v5237 = vunpack.c.0.s8 %v5236
        %v5238 = vperm.slane %v5230, %v5237
        %v5239 = vrot.slane %v5226, 4
        %v5240 = vsel %vm1215, %v5239, %v5220
        %v5241 = vrot.slane %v5220, 4
        %v5242 = vsel %vm1215, %v5226, %v5241
        %v5244 = vunpack.c.l.s4 1934713408
        %v5245 = vunpack.c.0.s8 %v5244
        %v5246 = vperm.slane %v5240, %v5245
        %v5248 = vunpack.c.l.s4 1934713408
        %v5249 = vunpack.c.0.s8 %v5248
        %v5250 = vperm.slane %v5242, %v5249
        %v5251 = vrot.slane %v5246, 4
        %v5252 = vsel %vm1215, %v5251, %v5234
        %v5253 = vrot.slane %v5234, 4
        %v5254 = vsel %vm1215, %v5246, %v5253
        %v5255 = vrot.slane %v5250, 4
        %v5256 = vsel %vm1215, %v5255, %v5238
        %v5257 = vrot.slane %v5238, 4
        %v5258 = vsel %vm1215, %v5250, %v5257
        %v5260 = vsel %vm1565, %v5012, 0
        %v5263 = vsel %vm1565, %v5132, 0
        %5265 = vmatpush.xpose.msra.mxu0 0.0
        %5266 = vmatpush.xpose.msra.mxu0 0.0
        %5267 = vmatpush.xpose.msra.mxu0 0.0
        %5268 = vmatpush.xpose.msra.mxu0 0.0
        %5269 = vmatpush.xpose.msra.mxu0 0.0
        %5270 = vmatpush.xpose.msra.mxu0 0.0
        %5271 = vmatpush.xpose.msra.mxu0 0.0
        %5272 = vmatpush.xpose.msra.mxu0 0.0
        %5273 = vmatpush.xpose.msra.mxu0 0.0
        %5274 = vmatpush.xpose.msra.mxu0 0.0
        %5275 = vmatpush.xpose.msra.mxu0 0.0
        %5276 = vmatpush.xpose.msra.mxu0 0.0
        %5277 = vmatpush.xpose.msra.mxu0 0.0
        %5278 = vmatpush.xpose.msra.mxu0 0.0
        %5279 = vmatpush.xpose.msra.mxu0 0.0
        %5280 = vmatpush.xpose.msra.mxu0 %v5263
        %5281 = vmatmul.f32.gmra.mxu0 %v5260
        %v5282 = vpop.f32.mrf.mxu0
        %v5283 = vadd.f32 0.0, %v5282
        %5284 = vdwg.mxu0
        %v5286 = vsel %vm1565, %v5014, 0
        %v5289 = vsel %vm1565, %v5134, 0
        %5291 = vmatpush.xpose.msra.mxu0 0.0
        %5292 = vmatpush.xpose.msra.mxu0 0.0
        %5293 = vmatpush.xpose.msra.mxu0 0.0
        %5294 = vmatpush.xpose.msra.mxu0 0.0
        %5295 = vmatpush.xpose.msra.mxu0 0.0
        %5296 = vmatpush.xpose.msra.mxu0 0.0
        %5297 = vmatpush.xpose.msra.mxu0 0.0
        %5298 = vmatpush.xpose.msra.mxu0 0.0
        %5299 = vmatpush.xpose.msra.mxu0 0.0
        %5300 = vmatpush.xpose.msra.mxu0 0.0
        %5301 = vmatpush.xpose.msra.mxu0 0.0
        %5302 = vmatpush.xpose.msra.mxu0 0.0
        %5303 = vmatpush.xpose.msra.mxu0 0.0
        %5304 = vmatpush.xpose.msra.mxu0 0.0
        %5305 = vmatpush.xpose.msra.mxu0 0.0
        %5306 = vmatpush.xpose.msra.mxu0 %v5289
        %5307 = vmatmul.f32.gmra.mxu0 %v5286
        %v5308 = vpop.f32.mrf.mxu0
        %v5309 = vadd.f32 0.0, %v5308
        %5310 = vdwg.mxu0
        %v5312 = vsel %vm1565, %v5016, 0
        %v5315 = vsel %vm1565, %v5136, 0
        %5317 = vmatpush.xpose.msra.mxu0 0.0
        %5318 = vmatpush.xpose.msra.mxu0 0.0
        %5319 = vmatpush.xpose.msra.mxu0 0.0
        %5320 = vmatpush.xpose.msra.mxu0 0.0
        %5321 = vmatpush.xpose.msra.mxu0 0.0
        %5322 = vmatpush.xpose.msra.mxu0 0.0
        %5323 = vmatpush.xpose.msra.mxu0 0.0
        %5324 = vmatpush.xpose.msra.mxu0 0.0
        %5325 = vmatpush.xpose.msra.mxu0 0.0
        %5326 = vmatpush.xpose.msra.mxu0 0.0
        %5327 = vmatpush.xpose.msra.mxu0 0.0
        %5328 = vmatpush.xpose.msra.mxu0 0.0
        %5329 = vmatpush.xpose.msra.mxu0 0.0
        %5330 = vmatpush.xpose.msra.mxu0 0.0
        %5331 = vmatpush.xpose.msra.mxu0 0.0
        %5332 = vmatpush.xpose.msra.mxu0 %v5315
        %5333 = vmatmul.f32.gmra.mxu0 %v5312
        %v5334 = vpop.f32.mrf.mxu0
        %v5335 = vadd.f32 0.0, %v5334
        %5336 = vdwg.mxu0
        %v5338 = vsel %vm1565, %v5018, 0
        %v5341 = vsel %vm1565, %v5138, 0
        %5343 = vmatpush.xpose.msra.mxu0 0.0
        %5344 = vmatpush.xpose.msra.mxu0 0.0
        %5345 = vmatpush.xpose.msra.mxu0 0.0
        %5346 = vmatpush.xpose.msra.mxu0 0.0
        %5347 = vmatpush.xpose.msra.mxu0 0.0
        %5348 = vmatpush.xpose.msra.mxu0 0.0
        %5349 = vmatpush.xpose.msra.mxu0 0.0
        %5350 = vmatpush.xpose.msra.mxu0 0.0
        %5351 = vmatpush.xpose.msra.mxu0 0.0
        %5352 = vmatpush.xpose.msra.mxu0 0.0
        %5353 = vmatpush.xpose.msra.mxu0 0.0
        %5354 = vmatpush.xpose.msra.mxu0 0.0
        %5355 = vmatpush.xpose.msra.mxu0 0.0
        %5356 = vmatpush.xpose.msra.mxu0 0.0
        %5357 = vmatpush.xpose.msra.mxu0 0.0
        %5358 = vmatpush.xpose.msra.mxu0 %v5341
        %5359 = vmatmul.f32.gmra.mxu0 %v5338
        %v5360 = vpop.f32.mrf.mxu0
        %v5361 = vadd.f32 0.0, %v5360
        %5362 = vdwg.mxu0
        %v5363 = vmul.f32 %v5283, 0.35355338
        %v5364 = vmul.f32 %v5309, 0.35355338
        %v5365 = vmul.f32 %v5335, 0.35355338
        %v5366 = vmul.f32 %v5361, 0.35355338
        %v5367 = vadd.f32 %v5363, %v2574
        %v5368 = vadd.f32 %v5364, %v2574
        %v5369 = vadd.f32 %v5365, %v2574
        %v5370 = vadd.f32 %v5366, %v2574
        %v5371 = vsel %vm1565, %v5367, -inf
        %5372 = vmax.xlane.f32.xlu0 %v5371
        %v5373 = vpop.xlane.xlu0 %5372
        %v5374 = vsel %vm1565, %v5368, -inf
        %5375 = vmax.xlane.f32.xlu0 %v5374
        %v5376 = vpop.xlane.xlu0 %5375
        %v5377 = vsel %vm1565, %v5369, -inf
        %5378 = vmax.xlane.f32.xlu0 %v5377
        %v5379 = vpop.xlane.xlu0 %5378
        %v5380 = vsel %vm1565, %v5370, -inf
        %5381 = vmax.xlane.f32.xlu0 %v5380
        %v5382 = vpop.xlane.xlu0 %5381
        %v5383 = vsub.f32 %v5367, %v5373
        %v5384 = vsub.f32 %v5368, %v5376
        %v5385 = vsub.f32 %v5369, %v5379
        %v5386 = vsub.f32 %v5370, %v5382
        %v5387 = vmul.f32 %v5383, 1.442695
        %v5388 = vpow.pop %v5387
        %v5389 = vmul.f32 %v5384, 1.442695
        %v5390 = vpow.pop %v5389
        %v5391 = vmul.f32 %v5385, 1.442695
        %v5392 = vpow.pop %v5391
        %v5393 = vmul.f32 %v5386, 1.442695
        %v5394 = vpow.pop %v5393
        %v5395 = vsel %vm1565, %v5388, 0.0
        %5396 = vadd.xlane.f32.xlu0 %v5395
        %v5397 = vpop.xlane.xlu0 %5396
        %v5398 = vsel %vm1565, %v5390, 0.0
        %5399 = vadd.xlane.f32.xlu0 %v5398
        %v5400 = vpop.xlane.xlu0 %5399
        %v5401 = vsel %vm1565, %v5392, 0.0
        %5402 = vadd.xlane.f32.xlu0 %v5401
        %v5403 = vpop.xlane.xlu0 %5402
        %v5404 = vsel %vm1565, %v5394, 0.0
        %5405 = vadd.xlane.f32.xlu0 %v5404
        %v5406 = vpop.xlane.xlu0 %5405
        %v5407 = vrcp.pop %v5397
        %v5408 = vrcp.pop %v5400
        %v5409 = vrcp.pop %v5403
        %v5410 = vrcp.pop %v5406
        %v5411 = vmul.f32 %v5388, %v5407
        %v5412 = vmul.f32 %v5390, %v5408
        %v5413 = vmul.f32 %v5392, %v5409
        %v5414 = vmul.f32 %v5394, %v5410
        %v5416 = vsel %vm1565, %v5411, 0
        %5418 = vmatpush.msra.mxu0 0.0
        %5419 = vmatpush.msra.mxu0 0.0
        %5420 = vmatpush.msra.mxu0 0.0
        %5421 = vmatpush.msra.mxu0 0.0
        %5422 = vmatpush.msra.mxu0 0.0
        %5423 = vmatpush.msra.mxu0 0.0
        %5424 = vmatpush.msra.mxu0 0.0
        %5425 = vmatpush.msra.mxu0 0.0
        %5426 = vmatpush.msra.mxu0 0.0
        %5427 = vmatpush.msra.mxu0 0.0
        %5428 = vmatpush.msra.mxu0 0.0
        %5429 = vmatpush.msra.mxu0 0.0
        %5430 = vmatpush.msra.mxu0 0.0
        %5431 = vmatpush.msra.mxu0 0.0
        %5432 = vmatpush.msra.mxu0 0.0
        %5433 = vmatpush.msra.mxu0 %v5252
        %5434 = vmatmul.f32.gmra.mxu0 %v5416
        %v5435 = vpop.f32.mrf.mxu0
        %v5436 = vadd.f32 0.0, %v5435
        %5437 = vdwg.mxu0
        %v5439 = vsel %vm1565, %v5412, 0
        %5441 = vmatpush.msra.mxu0 0.0
        %5442 = vmatpush.msra.mxu0 0.0
        %5443 = vmatpush.msra.mxu0 0.0
        %5444 = vmatpush.msra.mxu0 0.0
        %5445 = vmatpush.msra.mxu0 0.0
        %5446 = vmatpush.msra.mxu0 0.0
        %5447 = vmatpush.msra.mxu0 0.0
        %5448 = vmatpush.msra.mxu0 0.0
        %5449 = vmatpush.msra.mxu0 0.0
        %5450 = vmatpush.msra.mxu0 0.0
        %5451 = vmatpush.msra.mxu0 0.0
        %5452 = vmatpush.msra.mxu0 0.0
        %5453 = vmatpush.msra.mxu0 0.0
        %5454 = vmatpush.msra.mxu0 0.0
        %5455 = vmatpush.msra.mxu0 0.0
        %5456 = vmatpush.msra.mxu0 %v5254
        %5457 = vmatmul.f32.gmra.mxu0 %v5439
        %v5458 = vpop.f32.mrf.mxu0
        %v5459 = vadd.f32 0.0, %v5458
        %5460 = vdwg.mxu0
        %v5462 = vsel %vm1565, %v5413, 0
        %5464 = vmatpush.msra.mxu0 0.0
        %5465 = vmatpush.msra.mxu0 0.0
        %5466 = vmatpush.msra.mxu0 0.0
        %5467 = vmatpush.msra.mxu0 0.0
        %5468 = vmatpush.msra.mxu0 0.0
        %5469 = vmatpush.msra.mxu0 0.0
        %5470 = vmatpush.msra.mxu0 0.0
        %5471 = vmatpush.msra.mxu0 0.0
        %5472 = vmatpush.msra.mxu0 0.0
        %5473 = vmatpush.msra.mxu0 0.0
        %5474 = vmatpush.msra.mxu0 0.0
        %5475 = vmatpush.msra.mxu0 0.0
        %5476 = vmatpush.msra.mxu0 0.0
        %5477 = vmatpush.msra.mxu0 0.0
        %5478 = vmatpush.msra.mxu0 0.0
        %5479 = vmatpush.msra.mxu0 %v5256
        %5480 = vmatmul.f32.gmra.mxu0 %v5462
        %v5481 = vpop.f32.mrf.mxu0
        %v5482 = vadd.f32 0.0, %v5481
        %5483 = vdwg.mxu0
        %v5485 = vsel %vm1565, %v5414, 0
        %5487 = vmatpush.msra.mxu0 0.0
        %5488 = vmatpush.msra.mxu0 0.0
        %5489 = vmatpush.msra.mxu0 0.0
        %5490 = vmatpush.msra.mxu0 0.0
        %5491 = vmatpush.msra.mxu0 0.0
        %5492 = vmatpush.msra.mxu0 0.0
        %5493 = vmatpush.msra.mxu0 0.0
        %5494 = vmatpush.msra.mxu0 0.0
        %5495 = vmatpush.msra.mxu0 0.0
        %5496 = vmatpush.msra.mxu0 0.0
        %5497 = vmatpush.msra.mxu0 0.0
        %5498 = vmatpush.msra.mxu0 0.0
        %5499 = vmatpush.msra.mxu0 0.0
        %5500 = vmatpush.msra.mxu0 0.0
        %5501 = vmatpush.msra.mxu0 0.0
        %5502 = vmatpush.msra.mxu0 %v5258
        %5503 = vmatmul.f32.gmra.mxu0 %v5485
        %v5504 = vpop.f32.mrf.mxu0
        %v5505 = vadd.f32 0.0, %v5504
        %5506 = vdwg.mxu0
        %v5507 = vrot.slane %v5482, 4
        %v5508 = vsel %vm1215, %v5507, %v5436
        %v5509 = vrot.slane %v5436, 4
        %v5510 = vsel %vm1215, %v5482, %v5509
        %v5512 = vunpack.c.l.s4 1983009808
        %v5513 = vunpack.c.0.s8 %v5512
        %v5514 = vperm.slane %v5508, %v5513
        %v5516 = vunpack.c.l.s4 1983009808
        %v5517 = vunpack.c.0.s8 %v5516
        %v5518 = vperm.slane %v5510, %v5517
        %v5519 = vrot.slane %v5505, 4
        %v5520 = vsel %vm1215, %v5519, %v5459
        %v5521 = vrot.slane %v5459, 4
        %v5522 = vsel %vm1215, %v5505, %v5521
        %v5524 = vunpack.c.l.s4 1983009808
        %v5525 = vunpack.c.0.s8 %v5524
        %v5526 = vperm.slane %v5520, %v5525
        %v5528 = vunpack.c.l.s4 1983009808
        %v5529 = vunpack.c.0.s8 %v5528
        %v5530 = vperm.slane %v5522, %v5529
        %v5531 = vrot.slane %v5526, 4
        %v5532 = vsel %vm1215, %v5531, %v5514
        %v5533 = vrot.slane %v5514, 4
        %v5534 = vsel %vm1215, %v5526, %v5533
        %v5536 = vunpack.c.l.s4 1934713408
        %v5537 = vunpack.c.0.s8 %v5536
        %v5538 = vperm.slane %v5532, %v5537
        %v5540 = vunpack.c.l.s4 1934713408
        %v5541 = vunpack.c.0.s8 %v5540
        %v5542 = vperm.slane %v5534, %v5541
        %v5543 = vrot.slane %v5530, 4
        %v5544 = vsel %vm1215, %v5543, %v5518
        %v5545 = vrot.slane %v5518, 4
        %v5546 = vsel %vm1215, %v5530, %v5545
        %v5548 = vunpack.c.l.s4 1934713408
        %v5549 = vunpack.c.0.s8 %v5548
        %v5550 = vperm.slane %v5544, %v5549
        %v5552 = vunpack.c.l.s4 1934713408
        %v5553 = vunpack.c.0.s8 %v5552
        %v5554 = vperm.slane %v5546, %v5553
        %v5555 = vrot.slane %v5538, 4
        %v5556 = vsel %vm1215, 0.0, %v5555
        %v5557 = vrot.slane %v5542, 4
        %v5558 = vsel %vm1215, 0.0, %v5557
        %v5559 = vrot.slane %v5550, 4
        %v5560 = vsel %vm1215, 0.0, %v5559
        %v5561 = vrot.slane %v5554, 4
        %v5562 = vsel %vm1215, 0.0, %v5561
        %v5563 = vsel %vm1215, %v5557, %v5538
        %v5565 = vunpack.c.l.s4 1983009808
        %v5566 = vunpack.c.0.s8 %v5565
        %v5567 = vperm.slane %v5563, %v5566
        %v5568 = vrot.slane %v5558, 4
        %v5569 = vsel %vm1215, %v5568, %v5556
        %v5571 = vunpack.c.l.s4 1983009808
        %v5572 = vunpack.c.0.s8 %v5571
        %v5573 = vperm.slane %v5569, %v5572
        %v5574 = vsel %vm1215, %v5561, %v5550
        %v5576 = vunpack.c.l.s4 1983009808
        %v5577 = vunpack.c.0.s8 %v5576
        %v5578 = vperm.slane %v5574, %v5577
        %v5579 = vrot.slane %v5562, 4
        %v5580 = vsel %vm1215, %v5579, %v5560
        %v5582 = vunpack.c.l.s4 1983009808
        %v5583 = vunpack.c.0.s8 %v5582
        %v5584 = vperm.slane %v5580, %v5583
        %v5585 = vrot.slane %v5573, 4
        %v5586 = vsel %vm1215, %v5585, %v5567
        %v5587 = vrot.slane %v5567, 4
        %v5588 = vsel %vm1215, %v5573, %v5587
        %v5590 = vunpack.c.l.s4 1934713408
        %v5591 = vunpack.c.0.s8 %v5590
        %v5592 = vperm.slane %v5586, %v5591
        %v5594 = vunpack.c.l.s4 1934713408
        %v5595 = vunpack.c.0.s8 %v5594
        %v5596 = vperm.slane %v5588, %v5595
        %v5597 = vrot.slane %v5584, 4
        %v5598 = vsel %vm1215, %v5597, %v5578
        %v5599 = vrot.slane %v5578, 4
        %v5600 = vsel %vm1215, %v5584, %v5599
        %v5602 = vunpack.c.l.s4 1934713408
        %v5603 = vunpack.c.0.s8 %v5602
        %v5604 = vperm.slane %v5598, %v5603
        %v5606 = vunpack.c.l.s4 1934713408
        %v5607 = vunpack.c.0.s8 %v5606
        %v5608 = vperm.slane %v5600, %v5607
        %v5609 = vrot.slane %v5604, 4
        %v5610 = vsel %vm1215, %v5609, %v5592
        %v5611 = vrot.slane %v5592, 4
        %v5612 = vsel %vm1215, %v5604, %v5611
        %v5613 = vrot.slane %v5608, 4
        %v5614 = vsel %vm1215, %v5613, %v5596
        %v5615 = vrot.slane %v5596, 4
        %v5616 = vsel %vm1215, %v5608, %v5615
        %5618 = vrot.lane.b32.xlu0 %v5612, 8
        %v5619 = vpop.permute.xlu0 %5618
        %5622 = vrot.lane.b32.xlu0 %v5614, 16
        %v5623 = vpop.permute.xlu0 %5622
        %5626 = vrot.lane.b32.xlu0 %v5616, 24
        %v5627 = vpop.permute.xlu0 %5626
        %v5629 = vsel %vm1565, %v5610, %v5619
        %v5630 = vsel %vm1937, %v5629, %v5623
        %v5631 = vsel %vm1939, %v5630, %v5627
        %v5633 = vperm.slane %v4826, 0
        %v5636 = vsel %vm1074, %v5631, 0
        %5638 = vmatpush.msra.mxu0 0.0
        %5639 = vmatpush.msra.mxu0 0.0
        %5640 = vmatpush.msra.mxu0 0.0
        %5641 = vmatpush.msra.mxu0 0.0
        %5642 = vmatpush.msra.mxu0 0.0
        %5643 = vmatpush.msra.mxu0 0.0
        %5644 = vmatpush.msra.mxu0 0.0
        %5645 = vmatpush.msra.mxu0 0.0
        %5646 = vmatpush.msra.mxu0 0.0
        %5647 = vmatpush.msra.mxu0 0.0
        %5648 = vmatpush.msra.mxu0 0.0
        %5649 = vmatpush.msra.mxu0 0.0
        %5650 = vmatpush.msra.mxu0 %v4824
        %5651 = vmatpush.msra.mxu0 %v4823
        %5652 = vmatpush.msra.mxu0 %v4822
        %5653 = vmatpush.msra.mxu0 %v4821
        %5654 = vmatmul.f32.gmra.mxu0 %v5636
        %v5655 = vpop.f32.mrf.mxu0
        %v5656 = vadd.f32 %v5633, %v5655
        %5657 = vdwg.mxu0
        %v5658 = vadd.f32 %v4764, %v5656
        %s5659 = scalar_lea.vmem [#allocation10], 6
        %v5660 = vld [vmem:[%s5659] sm:$0x1]
        %s5661 = scalar_lea.vmem [#allocation11], 6
        %v5662 = vld [vmem:[%s5661] sm:$0x1]
        %v5663 = vsel %vm1074, %v5658, 0.0
        %5664 = vadd.xlane.f32.xlu0 %v5663
        %v5665 = vpop.xlane.xlu0 %5664
        %v5666 = vmul.f32 %v5665, %v1084
        %v5667 = vsub.f32 %v5658, %v5666
        %v5668 = vmul.f32 %v5667, %v5667
        %v5669 = vsel %vm1074, %v5668, 0.0
        %5670 = vadd.xlane.f32.xlu0 %v5669
        %v5671 = vpop.xlane.xlu0 %5670
        %v5672 = vmul.f32 %v5671, %v1084
        %v5673 = vadd.f32 %v5672, 1e-05
        %v5674 = vrsqrt.pop %v5673
        %v5675 = vmul.f32 %v5674, %v5673
        %v5676 = vmul.f32 %v5675, %v5674
        %v5677 = vmul.f32 0.5, %v5676
        %v5678 = vsub.f32 1.5, %v5677
        %v5679 = vmul.f32 %v5674, %v5678
        %vm5680 = vweird.f32 %v5673
        %vm5681 = vweird.f32 %v5674
        %vm5682 = vmor %vm5680, %vm5681
        %v5683 = vsel %vm5682, %v5674, %v5679
        %v5684 = vmul.f32 %v5667, %v5683
        %v5686 = vperm.slane %v5660, 0
        %v5688 = vmul.f32 %v5684, %v5686
        %v5690 = vperm.slane %v5662, 0
        %v5692 = vadd.f32 %v5688, %v5690
        %s5693 = scalar_lea.vmem %s9, 160
        %v5694 = vld [vmem:[%s5693] sm:$0xff]
        %v5695 = vld [vmem:[%s5693 + $0x8] sm:$0xff]
        %v5696 = vld [vmem:[%s5693 + $0x10] sm:$0xff]
        %v5697 = vld [vmem:[%s5693 + $0x18] sm:$0xff]
        %s5698 = scalar_lea.vmem [#allocation17], 5
        %v5699 = vld [vmem:[%s5698] sm:$0x1]
        %s5700 = scalar_lea.vmem [#allocation13], 160
        %v5701 = vld [vmem:[%s5700] sm:$0xff]
        %v5702 = vld [vmem:[%s5700 + $0x8] sm:$0xff]
        %v5703 = vld [vmem:[%s5700 + $0x10] sm:$0xff]
        %v5704 = vld [vmem:[%s5700 + $0x18] sm:$0xff]
        %s5705 = scalar_lea.vmem [#allocation19], 5
        %v5706 = vld [vmem:[%s5705] sm:$0x1]
        %s5707 = scalar_lea.vmem [#allocation14], 160
        %v5708 = vld [vmem:[%s5707] sm:$0xff]
        %v5709 = vld [vmem:[%s5707 + $0x8] sm:$0xff]
        %v5710 = vld [vmem:[%s5707 + $0x10] sm:$0xff]
        %v5711 = vld [vmem:[%s5707 + $0x18] sm:$0xff]
        %s5712 = scalar_lea.vmem [#allocation20], 5
        %v5713 = vld [vmem:[%s5712] sm:$0x1]
        %s5714 = scalar_lea.vmem [#allocation16], 160
        %v5715 = vld [vmem:[%s5714] sm:$0xff]
        %v5716 = vld [vmem:[%s5714 + $0x8] sm:$0xff]
        %v5717 = vld [vmem:[%s5714 + $0x10] sm:$0xff]
        %v5718 = vld [vmem:[%s5714 + $0x18] sm:$0xff]
        %s5719 = scalar_lea.vmem [#allocation22], 5
        %v5720 = vld [vmem:[%s5719] sm:$0x1]
        %v5722 = vperm.slane %v5699, 0
        %v5725 = vsel %vm1074, %v5692, 0
        %5727 = vmatpush.msra.mxu0 0.0
        %5728 = vmatpush.msra.mxu0 0.0
        %5729 = vmatpush.msra.mxu0 0.0
        %5730 = vmatpush.msra.mxu0 0.0
        %5731 = vmatpush.msra.mxu0 0.0
        %5732 = vmatpush.msra.mxu0 0.0
        %5733 = vmatpush.msra.mxu0 0.0
        %5734 = vmatpush.msra.mxu0 0.0
        %5735 = vmatpush.msra.mxu0 0.0
        %5736 = vmatpush.msra.mxu0 0.0
        %5737 = vmatpush.msra.mxu0 0.0
        %5738 = vmatpush.msra.mxu0 0.0
        %5739 = vmatpush.msra.mxu0 %v5697
        %5740 = vmatpush.msra.mxu0 %v5696
        %5741 = vmatpush.msra.mxu0 %v5695
        %5742 = vmatpush.msra.mxu0 %v5694
        %5743 = vmatmul.f32.gmra.mxu0 %v5725
        %v5744 = vpop.f32.mrf.mxu0
        %v5745 = vadd.f32 %v5722, %v5744
        %5746 = vdwg.mxu0
        %v5748 = vperm.slane %v5706, 0
        %5750 = vmatpush.msra.mxu0 0.0
        %5751 = vmatpush.msra.mxu0 0.0
        %5752 = vmatpush.msra.mxu0 0.0
        %5753 = vmatpush.msra.mxu0 0.0
        %5754 = vmatpush.msra.mxu0 0.0
        %5755 = vmatpush.msra.mxu0 0.0
        %5756 = vmatpush.msra.mxu0 0.0
        %5757 = vmatpush.msra.mxu0 0.0
        %5758 = vmatpush.msra.mxu0 0.0
        %5759 = vmatpush.msra.mxu0 0.0
        %5760 = vmatpush.msra.mxu0 0.0
        %5761 = vmatpush.msra.mxu0 0.0
        %5762 = vmatpush.msra.mxu0 %v5704
        %5763 = vmatpush.msra.mxu0 %v5703
        %5764 = vmatpush.msra.mxu0 %v5702
        %5765 = vmatpush.msra.mxu0 %v5701
        %5766 = vmatmul.f32.gmra.mxu0 %v2960
        %v5767 = vpop.f32.mrf.mxu0
        %v5768 = vadd.f32 %v5748, %v5767
        %5769 = vdwg.mxu0
        %v5771 = vperm.slane %v5713, 0
        %5773 = vmatpush.msra.mxu0 0.0
        %5774 = vmatpush.msra.mxu0 0.0
        %5775 = vmatpush.msra.mxu0 0.0
        %5776 = vmatpush.msra.mxu0 0.0
        %5777 = vmatpush.msra.mxu0 0.0
        %5778 = vmatpush.msra.mxu0 0.0
        %5779 = vmatpush.msra.mxu0 0.0
        %5780 = vmatpush.msra.mxu0 0.0
        %5781 = vmatpush.msra.mxu0 0.0
        %5782 = vmatpush.msra.mxu0 0.0
        %5783 = vmatpush.msra.mxu0 0.0
        %5784 = vmatpush.msra.mxu0 0.0
        %5785 = vmatpush.msra.mxu0 %v5711
        %5786 = vmatpush.msra.mxu0 %v5710
        %5787 = vmatpush.msra.mxu0 %v5709
        %5788 = vmatpush.msra.mxu0 %v5708
        %5789 = vmatmul.f32.gmra.mxu0 %v2960
        %v5790 = vpop.f32.mrf.mxu0
        %v5791 = vadd.f32 %v5771, %v5790
        %5792 = vdwg.mxu0
        %5794 = vrot.lane.b32.xlu0 %v5745, 120
        %v5795 = vpop.permute.xlu0 %5794
        %5797 = vrot.lane.b32.xlu0 %v5745, 112
        %v5798 = vpop.permute.xlu0 %5797
        %5800 = vrot.lane.b32.xlu0 %v5745, 104
        %v5801 = vpop.permute.xlu0 %5800
        %v5803 = vrot.slane %v5798, 4
        %v5804 = vsel %vm1215, %v5803, %v5745
        %v5805 = vrot.slane %v5745, 4
        %v5806 = vsel %vm1215, %v5798, %v5805
        %v5808 = vunpack.c.l.s4 1983009808
        %v5809 = vunpack.c.0.s8 %v5808
        %v5810 = vperm.slane %v5804, %v5809
        %v5812 = vunpack.c.l.s4 1983009808
        %v5813 = vunpack.c.0.s8 %v5812
        %v5814 = vperm.slane %v5806, %v5813
        %v5815 = vrot.slane %v5801, 4
        %v5816 = vsel %vm1215, %v5815, %v5795
        %v5817 = vrot.slane %v5795, 4
        %v5818 = vsel %vm1215, %v5801, %v5817
        %v5820 = vunpack.c.l.s4 1983009808
        %v5821 = vunpack.c.0.s8 %v5820
        %v5822 = vperm.slane %v5816, %v5821
        %v5824 = vunpack.c.l.s4 1983009808
        %v5825 = vunpack.c.0.s8 %v5824
        %v5826 = vperm.slane %v5818, %v5825
        %v5827 = vrot.slane %v5822, 4
        %v5828 = vsel %vm1215, %v5827, %v5810
        %v5829 = vrot.slane %v5810, 4
        %v5830 = vsel %vm1215, %v5822, %v5829
        %v5832 = vunpack.c.l.s4 1934713408
        %v5833 = vunpack.c.0.s8 %v5832
        %v5834 = vperm.slane %v5828, %v5833
        %v5836 = vunpack.c.l.s4 1934713408
        %v5837 = vunpack.c.0.s8 %v5836
        %v5838 = vperm.slane %v5830, %v5837
        %v5839 = vrot.slane %v5826, 4
        %v5840 = vsel %vm1215, %v5839, %v5814
        %v5841 = vrot.slane %v5814, 4
        %v5842 = vsel %vm1215, %v5826, %v5841
        %v5844 = vunpack.c.l.s4 1934713408
        %v5845 = vunpack.c.0.s8 %v5844
        %v5846 = vperm.slane %v5840, %v5845
        %v5848 = vunpack.c.l.s4 1934713408
        %v5849 = vunpack.c.0.s8 %v5848
        %v5850 = vperm.slane %v5842, %v5849
        %v5851 = vrot.slane %v5834, 4
        %v5852 = vsel %vm1215, 0.0, %v5851
        %v5853 = vrot.slane %v5838, 4
        %v5854 = vsel %vm1215, 0.0, %v5853
        %v5855 = vrot.slane %v5846, 4
        %v5856 = vsel %vm1215, 0.0, %v5855
        %v5857 = vrot.slane %v5850, 4
        %v5858 = vsel %vm1215, 0.0, %v5857
        %v5859 = vsel %vm1215, %v5853, %v5834
        %v5861 = vunpack.c.l.s4 1983009808
        %v5862 = vunpack.c.0.s8 %v5861
        %v5863 = vperm.slane %v5859, %v5862
        %v5864 = vrot.slane %v5854, 4
        %v5865 = vsel %vm1215, %v5864, %v5852
        %v5867 = vunpack.c.l.s4 1983009808
        %v5868 = vunpack.c.0.s8 %v5867
        %v5869 = vperm.slane %v5865, %v5868
        %v5870 = vsel %vm1215, %v5857, %v5846
        %v5872 = vunpack.c.l.s4 1983009808
        %v5873 = vunpack.c.0.s8 %v5872
        %v5874 = vperm.slane %v5870, %v5873
        %v5875 = vrot.slane %v5858, 4
        %v5876 = vsel %vm1215, %v5875, %v5856
        %v5878 = vunpack.c.l.s4 1983009808
        %v5879 = vunpack.c.0.s8 %v5878
        %v5880 = vperm.slane %v5876, %v5879
        %v5881 = vrot.slane %v5869, 4
        %v5882 = vsel %vm1215, %v5881, %v5863
        %v5883 = vrot.slane %v5863, 4
        %v5884 = vsel %vm1215, %v5869, %v5883
        %v5886 = vunpack.c.l.s4 1934713408
        %v5887 = vunpack.c.0.s8 %v5886
        %v5888 = vperm.slane %v5882, %v5887
        %v5890 = vunpack.c.l.s4 1934713408
        %v5891 = vunpack.c.0.s8 %v5890
        %v5892 = vperm.slane %v5884, %v5891
        %v5893 = vrot.slane %v5880, 4
        %v5894 = vsel %vm1215, %v5893, %v5874
        %v5895 = vrot.slane %v5874, 4
        %v5896 = vsel %vm1215, %v5880, %v5895
        %v5898 = vunpack.c.l.s4 1934713408
        %v5899 = vunpack.c.0.s8 %v5898
        %v5900 = vperm.slane %v5894, %v5899
        %v5902 = vunpack.c.l.s4 1934713408
        %v5903 = vunpack.c.0.s8 %v5902
        %v5904 = vperm.slane %v5896, %v5903
        %v5905 = vrot.slane %v5900, 4
        %v5906 = vsel %vm1215, %v5905, %v5888
        %v5907 = vrot.slane %v5888, 4
        %v5908 = vsel %vm1215, %v5900, %v5907
        %v5909 = vrot.slane %v5904, 4
        %v5910 = vsel %vm1215, %v5909, %v5892
        %v5911 = vrot.slane %v5892, 4
        %v5912 = vsel %vm1215, %v5904, %v5911
        %5914 = vrot.lane.b32.xlu0 %v5768, 120
        %v5915 = vpop.permute.xlu0 %5914
        %5917 = vrot.lane.b32.xlu0 %v5768, 112
        %v5918 = vpop.permute.xlu0 %5917
        %5920 = vrot.lane.b32.xlu0 %v5768, 104
        %v5921 = vpop.permute.xlu0 %5920
        %v5923 = vrot.slane %v5918, 4
        %v5924 = vsel %vm1215, %v5923, %v5768
        %v5925 = vrot.slane %v5768, 4
        %v5926 = vsel %vm1215, %v5918, %v5925
        %v5928 = vunpack.c.l.s4 1983009808
        %v5929 = vunpack.c.0.s8 %v5928
        %v5930 = vperm.slane %v5924, %v5929
        %v5932 = vunpack.c.l.s4 1983009808
        %v5933 = vunpack.c.0.s8 %v5932
        %v5934 = vperm.slane %v5926, %v5933
        %v5935 = vrot.slane %v5921, 4
        %v5936 = vsel %vm1215, %v5935, %v5915
        %v5937 = vrot.slane %v5915, 4
        %v5938 = vsel %vm1215, %v5921, %v5937
        %v5940 = vunpack.c.l.s4 1983009808
        %v5941 = vunpack.c.0.s8 %v5940
        %v5942 = vperm.slane %v5936, %v5941
        %v5944 = vunpack.c.l.s4 1983009808
        %v5945 = vunpack.c.0.s8 %v5944
        %v5946 = vperm.slane %v5938, %v5945
        %v5947 = vrot.slane %v5942, 4
        %v5948 = vsel %vm1215, %v5947, %v5930
        %v5949 = vrot.slane %v5930, 4
        %v5950 = vsel %vm1215, %v5942, %v5949
        %v5952 = vunpack.c.l.s4 1934713408
        %v5953 = vunpack.c.0.s8 %v5952
        %v5954 = vperm.slane %v5948, %v5953
        %v5956 = vunpack.c.l.s4 1934713408
        %v5957 = vunpack.c.0.s8 %v5956
        %v5958 = vperm.slane %v5950, %v5957
        %v5959 = vrot.slane %v5946, 4
        %v5960 = vsel %vm1215, %v5959, %v5934
        %v5961 = vrot.slane %v5934, 4
        %v5962 = vsel %vm1215, %v5946, %v5961
        %v5964 = vunpack.c.l.s4 1934713408
        %v5965 = vunpack.c.0.s8 %v5964
        %v5966 = vperm.slane %v5960, %v5965
        %v5968 = vunpack.c.l.s4 1934713408
        %v5969 = vunpack.c.0.s8 %v5968
        %v5970 = vperm.slane %v5962, %v5969
        %v5971 = vrot.slane %v5954, 4
        %v5972 = vsel %vm1215, 0.0, %v5971
        %v5973 = vrot.slane %v5958, 4
        %v5974 = vsel %vm1215, 0.0, %v5973
        %v5975 = vrot.slane %v5966, 4
        %v5976 = vsel %vm1215, 0.0, %v5975
        %v5977 = vrot.slane %v5970, 4
        %v5978 = vsel %vm1215, 0.0, %v5977
        %v5979 = vsel %vm1215, %v5973, %v5954
        %v5981 = vunpack.c.l.s4 1983009808
        %v5982 = vunpack.c.0.s8 %v5981
        %v5983 = vperm.slane %v5979, %v5982
        %v5984 = vrot.slane %v5974, 4
        %v5985 = vsel %vm1215, %v5984, %v5972
        %v5987 = vunpack.c.l.s4 1983009808
        %v5988 = vunpack.c.0.s8 %v5987
        %v5989 = vperm.slane %v5985, %v5988
        %v5990 = vsel %vm1215, %v5977, %v5966
        %v5992 = vunpack.c.l.s4 1983009808
        %v5993 = vunpack.c.0.s8 %v5992
        %v5994 = vperm.slane %v5990, %v5993
        %v5995 = vrot.slane %v5978, 4
        %v5996 = vsel %vm1215, %v5995, %v5976
        %v5998 = vunpack.c.l.s4 1983009808
        %v5999 = vunpack.c.0.s8 %v5998
        %v6000 = vperm.slane %v5996, %v5999
        %v6001 = vrot.slane %v5989, 4
        %v6002 = vsel %vm1215, %v6001, %v5983
        %v6003 = vrot.slane %v5983, 4
        %v6004 = vsel %vm1215, %v5989, %v6003
        %v6006 = vunpack.c.l.s4 1934713408
        %v6007 = vunpack.c.0.s8 %v6006
        %v6008 = vperm.slane %v6002, %v6007
        %v6010 = vunpack.c.l.s4 1934713408
        %v6011 = vunpack.c.0.s8 %v6010
        %v6012 = vperm.slane %v6004, %v6011
        %v6013 = vrot.slane %v6000, 4
        %v6014 = vsel %vm1215, %v6013, %v5994
        %v6015 = vrot.slane %v5994, 4
        %v6016 = vsel %vm1215, %v6000, %v6015
        %v6018 = vunpack.c.l.s4 1934713408
        %v6019 = vunpack.c.0.s8 %v6018
        %v6020 = vperm.slane %v6014, %v6019
        %v6022 = vunpack.c.l.s4 1934713408
        %v6023 = vunpack.c.0.s8 %v6022
        %v6024 = vperm.slane %v6016, %v6023
        %v6025 = vrot.slane %v6020, 4
        %v6026 = vsel %vm1215, %v6025, %v6008
        %v6027 = vrot.slane %v6008, 4
        %v6028 = vsel %vm1215, %v6020, %v6027
        %v6029 = vrot.slane %v6024, 4
        %v6030 = vsel %vm1215, %v6029, %v6012
        %v6031 = vrot.slane %v6012, 4
        %v6032 = vsel %vm1215, %v6024, %v6031
        %6034 = vrot.lane.b32.xlu0 %v5791, 120
        %v6035 = vpop.permute.xlu0 %6034
        %6037 = vrot.lane.b32.xlu0 %v5791, 112
        %v6038 = vpop.permute.xlu0 %6037
        %6040 = vrot.lane.b32.xlu0 %v5791, 104
        %v6041 = vpop.permute.xlu0 %6040
        %v6043 = vrot.slane %v6038, 4
        %v6044 = vsel %vm1215, %v6043, %v5791
        %v6045 = vrot.slane %v5791, 4
        %v6046 = vsel %vm1215, %v6038, %v6045
        %v6048 = vunpack.c.l.s4 1983009808
        %v6049 = vunpack.c.0.s8 %v6048
        %v6050 = vperm.slane %v6044, %v6049
        %v6052 = vunpack.c.l.s4 1983009808
        %v6053 = vunpack.c.0.s8 %v6052
        %v6054 = vperm.slane %v6046, %v6053
        %v6055 = vrot.slane %v6041, 4
        %v6056 = vsel %vm1215, %v6055, %v6035
        %v6057 = vrot.slane %v6035, 4
        %v6058 = vsel %vm1215, %v6041, %v6057
        %v6060 = vunpack.c.l.s4 1983009808
        %v6061 = vunpack.c.0.s8 %v6060
        %v6062 = vperm.slane %v6056, %v6061
        %v6064 = vunpack.c.l.s4 1983009808
        %v6065 = vunpack.c.0.s8 %v6064
        %v6066 = vperm.slane %v6058, %v6065
        %v6067 = vrot.slane %v6062, 4
        %v6068 = vsel %vm1215, %v6067, %v6050
        %v6069 = vrot.slane %v6050, 4
        %v6070 = vsel %vm1215, %v6062, %v6069
        %v6072 = vunpack.c.l.s4 1934713408
        %v6073 = vunpack.c.0.s8 %v6072
        %v6074 = vperm.slane %v6068, %v6073
        %v6076 = vunpack.c.l.s4 1934713408
        %v6077 = vunpack.c.0.s8 %v6076
        %v6078 = vperm.slane %v6070, %v6077
        %v6079 = vrot.slane %v6066, 4
        %v6080 = vsel %vm1215, %v6079, %v6054
        %v6081 = vrot.slane %v6054, 4
        %v6082 = vsel %vm1215, %v6066, %v6081
        %v6084 = vunpack.c.l.s4 1934713408
        %v6085 = vunpack.c.0.s8 %v6084
        %v6086 = vperm.slane %v6080, %v6085
        %v6088 = vunpack.c.l.s4 1934713408
        %v6089 = vunpack.c.0.s8 %v6088
        %v6090 = vperm.slane %v6082, %v6089
        %v6091 = vrot.slane %v6074, 4
        %v6092 = vsel %vm1215, 0.0, %v6091
        %v6093 = vrot.slane %v6078, 4
        %v6094 = vsel %vm1215, 0.0, %v6093
        %v6095 = vrot.slane %v6086, 4
        %v6096 = vsel %vm1215, 0.0, %v6095
        %v6097 = vrot.slane %v6090, 4
        %v6098 = vsel %vm1215, 0.0, %v6097
        %v6099 = vsel %vm1215, %v6093, %v6074
        %v6101 = vunpack.c.l.s4 1983009808
        %v6102 = vunpack.c.0.s8 %v6101
        %v6103 = vperm.slane %v6099, %v6102
        %v6104 = vrot.slane %v6094, 4
        %v6105 = vsel %vm1215, %v6104, %v6092
        %v6107 = vunpack.c.l.s4 1983009808
        %v6108 = vunpack.c.0.s8 %v6107
        %v6109 = vperm.slane %v6105, %v6108
        %v6110 = vsel %vm1215, %v6097, %v6086
        %v6112 = vunpack.c.l.s4 1983009808
        %v6113 = vunpack.c.0.s8 %v6112
        %v6114 = vperm.slane %v6110, %v6113
        %v6115 = vrot.slane %v6098, 4
        %v6116 = vsel %vm1215, %v6115, %v6096
        %v6118 = vunpack.c.l.s4 1983009808
        %v6119 = vunpack.c.0.s8 %v6118
        %v6120 = vperm.slane %v6116, %v6119
        %v6121 = vrot.slane %v6109, 4
        %v6122 = vsel %vm1215, %v6121, %v6103
        %v6123 = vrot.slane %v6103, 4
        %v6124 = vsel %vm1215, %v6109, %v6123
        %v6126 = vunpack.c.l.s4 1934713408
        %v6127 = vunpack.c.0.s8 %v6126
        %v6128 = vperm.slane %v6122, %v6127
        %v6130 = vunpack.c.l.s4 1934713408
        %v6131 = vunpack.c.0.s8 %v6130
        %v6132 = vperm.slane %v6124, %v6131
        %v6133 = vrot.slane %v6120, 4
        %v6134 = vsel %vm1215, %v6133, %v6114
        %v6135 = vrot.slane %v6114, 4
        %v6136 = vsel %vm1215, %v6120, %v6135
        %v6138 = vunpack.c.l.s4 1934713408
        %v6139 = vunpack.c.0.s8 %v6138
        %v6140 = vperm.slane %v6134, %v6139
        %v6142 = vunpack.c.l.s4 1934713408
        %v6143 = vunpack.c.0.s8 %v6142
        %v6144 = vperm.slane %v6136, %v6143
        %v6145 = vrot.slane %v6140, 4
        %v6146 = vsel %vm1215, %v6145, %v6128
        %v6147 = vrot.slane %v6128, 4
        %v6148 = vsel %vm1215, %v6140, %v6147
        %v6149 = vrot.slane %v6144, 4
        %v6150 = vsel %vm1215, %v6149, %v6132
        %v6151 = vrot.slane %v6132, 4
        %v6152 = vsel %vm1215, %v6144, %v6151
        %v6154 = vsel %vm1565, %v5906, 0
        %v6157 = vsel %vm1565, %v6026, 0
        %6159 = vmatpush.xpose.msra.mxu0 0.0
        %6160 = vmatpush.xpose.msra.mxu0 0.0
        %6161 = vmatpush.xpose.msra.mxu0 0.0
        %6162 = vmatpush.xpose.msra.mxu0 0.0
        %6163 = vmatpush.xpose.msra.mxu0 0.0
        %6164 = vmatpush.xpose.msra.mxu0 0.0
        %6165 = vmatpush.xpose.msra.mxu0 0.0
        %6166 = vmatpush.xpose.msra.mxu0 0.0
        %6167 = vmatpush.xpose.msra.mxu0 0.0
        %6168 = vmatpush.xpose.msra.mxu0 0.0
        %6169 = vmatpush.xpose.msra.mxu0 0.0
        %6170 = vmatpush.xpose.msra.mxu0 0.0
        %6171 = vmatpush.xpose.msra.mxu0 0.0
        %6172 = vmatpush.xpose.msra.mxu0 0.0
        %6173 = vmatpush.xpose.msra.mxu0 0.0
        %6174 = vmatpush.xpose.msra.mxu0 %v6157
        %6175 = vmatmul.f32.gmra.mxu0 %v6154
        %v6176 = vpop.f32.mrf.mxu0
        %v6177 = vadd.f32 0.0, %v6176
        %6178 = vdwg.mxu0
        %v6180 = vsel %vm1565, %v5908, 0
        %v6183 = vsel %vm1565, %v6028, 0
        %6185 = vmatpush.xpose.msra.mxu0 0.0
        %6186 = vmatpush.xpose.msra.mxu0 0.0
        %6187 = vmatpush.xpose.msra.mxu0 0.0
        %6188 = vmatpush.xpose.msra.mxu0 0.0
        %6189 = vmatpush.xpose.msra.mxu0 0.0
        %6190 = vmatpush.xpose.msra.mxu0 0.0
        %6191 = vmatpush.xpose.msra.mxu0 0.0
        %6192 = vmatpush.xpose.msra.mxu0 0.0
        %6193 = vmatpush.xpose.msra.mxu0 0.0
        %6194 = vmatpush.xpose.msra.mxu0 0.0
        %6195 = vmatpush.xpose.msra.mxu0 0.0
        %6196 = vmatpush.xpose.msra.mxu0 0.0
        %6197 = vmatpush.xpose.msra.mxu0 0.0
        %6198 = vmatpush.xpose.msra.mxu0 0.0
        %6199 = vmatpush.xpose.msra.mxu0 0.0
        %6200 = vmatpush.xpose.msra.mxu0 %v6183
        %6201 = vmatmul.f32.gmra.mxu0 %v6180
        %v6202 = vpop.f32.mrf.mxu0
        %v6203 = vadd.f32 0.0, %v6202
        %6204 = vdwg.mxu0
        %v6206 = vsel %vm1565, %v5910, 0
        %v6209 = vsel %vm1565, %v6030, 0
        %6211 = vmatpush.xpose.msra.mxu0 0.0
        %6212 = vmatpush.xpose.msra.mxu0 0.0
        %6213 = vmatpush.xpose.msra.mxu0 0.0
        %6214 = vmatpush.xpose.msra.mxu0 0.0
        %6215 = vmatpush.xpose.msra.mxu0 0.0
        %6216 = vmatpush.xpose.msra.mxu0 0.0
        %6217 = vmatpush.xpose.msra.mxu0 0.0
        %6218 = vmatpush.xpose.msra.mxu0 0.0
        %6219 = vmatpush.xpose.msra.mxu0 0.0
        %6220 = vmatpush.xpose.msra.mxu0 0.0
        %6221 = vmatpush.xpose.msra.mxu0 0.0
        %6222 = vmatpush.xpose.msra.mxu0 0.0
        %6223 = vmatpush.xpose.msra.mxu0 0.0
        %6224 = vmatpush.xpose.msra.mxu0 0.0
        %6225 = vmatpush.xpose.msra.mxu0 0.0
        %6226 = vmatpush.xpose.msra.mxu0 %v6209
        %6227 = vmatmul.f32.gmra.mxu0 %v6206
        %v6228 = vpop.f32.mrf.mxu0
        %v6229 = vadd.f32 0.0, %v6228
        %6230 = vdwg.mxu0
        %v6232 = vsel %vm1565, %v5912, 0
        %v6235 = vsel %vm1565, %v6032, 0
        %6237 = vmatpush.xpose.msra.mxu0 0.0
        %6238 = vmatpush.xpose.msra.mxu0 0.0
        %6239 = vmatpush.xpose.msra.mxu0 0.0
        %6240 = vmatpush.xpose.msra.mxu0 0.0
        %6241 = vmatpush.xpose.msra.mxu0 0.0
        %6242 = vmatpush.xpose.msra.mxu0 0.0
        %6243 = vmatpush.xpose.msra.mxu0 0.0
        %6244 = vmatpush.xpose.msra.mxu0 0.0
        %6245 = vmatpush.xpose.msra.mxu0 0.0
        %6246 = vmatpush.xpose.msra.mxu0 0.0
        %6247 = vmatpush.xpose.msra.mxu0 0.0
        %6248 = vmatpush.xpose.msra.mxu0 0.0
        %6249 = vmatpush.xpose.msra.mxu0 0.0
        %6250 = vmatpush.xpose.msra.mxu0 0.0
        %6251 = vmatpush.xpose.msra.mxu0 0.0
        %6252 = vmatpush.xpose.msra.mxu0 %v6235
        %6253 = vmatmul.f32.gmra.mxu0 %v6232
        %v6254 = vpop.f32.mrf.mxu0
        %v6255 = vadd.f32 0.0, %v6254
        %6256 = vdwg.mxu0
        %v6257 = vmul.f32 %v6177, 0.35355338
        %v6258 = vmul.f32 %v6203, 0.35355338
        %v6259 = vmul.f32 %v6229, 0.35355338
        %v6260 = vmul.f32 %v6255, 0.35355338
        %v6261 = vadd.f32 %v6257, %v3474
        %v6262 = vadd.f32 %v6258, %v3474
        %v6263 = vadd.f32 %v6259, %v3474
        %v6264 = vadd.f32 %v6260, %v3474
        %v6265 = vsel %vm1565, %v6261, -inf
        %6266 = vmax.xlane.f32.xlu0 %v6265
        %v6267 = vpop.xlane.xlu0 %6266
        %v6268 = vsel %vm1565, %v6262, -inf
        %6269 = vmax.xlane.f32.xlu0 %v6268
        %v6270 = vpop.xlane.xlu0 %6269
        %v6271 = vsel %vm1565, %v6263, -inf
        %6272 = vmax.xlane.f32.xlu0 %v6271
        %v6273 = vpop.xlane.xlu0 %6272
        %v6274 = vsel %vm1565, %v6264, -inf
        %6275 = vmax.xlane.f32.xlu0 %v6274
        %v6276 = vpop.xlane.xlu0 %6275
        %v6277 = vsub.f32 %v6261, %v6267
        %v6278 = vsub.f32 %v6262, %v6270
        %v6279 = vsub.f32 %v6263, %v6273
        %v6280 = vsub.f32 %v6264, %v6276
        %v6281 = vmul.f32 %v6277, 1.442695
        %v6282 = vpow.pop %v6281
        %v6283 = vmul.f32 %v6278, 1.442695
        %v6284 = vpow.pop %v6283
        %v6285 = vmul.f32 %v6279, 1.442695
        %v6286 = vpow.pop %v6285
        %v6287 = vmul.f32 %v6280, 1.442695
        %v6288 = vpow.pop %v6287
        %v6289 = vsel %vm1565, %v6282, 0.0
        %6290 = vadd.xlane.f32.xlu0 %v6289
        %v6291 = vpop.xlane.xlu0 %6290
        %v6292 = vsel %vm1565, %v6284, 0.0
        %6293 = vadd.xlane.f32.xlu0 %v6292
        %v6294 = vpop.xlane.xlu0 %6293
        %v6295 = vsel %vm1565, %v6286, 0.0
        %6296 = vadd.xlane.f32.xlu0 %v6295
        %v6297 = vpop.xlane.xlu0 %6296
        %v6298 = vsel %vm1565, %v6288, 0.0
        %6299 = vadd.xlane.f32.xlu0 %v6298
        %v6300 = vpop.xlane.xlu0 %6299
        %v6301 = vrcp.pop %v6291
        %v6302 = vrcp.pop %v6294
        %v6303 = vrcp.pop %v6297
        %v6304 = vrcp.pop %v6300
        %v6305 = vmul.f32 %v6282, %v6301
        %v6306 = vmul.f32 %v6284, %v6302
        %v6307 = vmul.f32 %v6286, %v6303
        %v6308 = vmul.f32 %v6288, %v6304
        %v6310 = vsel %vm1565, %v6305, 0
        %6312 = vmatpush.msra.mxu0 0.0
        %6313 = vmatpush.msra.mxu0 0.0
        %6314 = vmatpush.msra.mxu0 0.0
        %6315 = vmatpush.msra.mxu0 0.0
        %6316 = vmatpush.msra.mxu0 0.0
        %6317 = vmatpush.msra.mxu0 0.0
        %6318 = vmatpush.msra.mxu0 0.0
        %6319 = vmatpush.msra.mxu0 0.0
        %6320 = vmatpush.msra.mxu0 0.0
        %6321 = vmatpush.msra.mxu0 0.0
        %6322 = vmatpush.msra.mxu0 0.0
        %6323 = vmatpush.msra.mxu0 0.0
        %6324 = vmatpush.msra.mxu0 0.0
        %6325 = vmatpush.msra.mxu0 0.0
        %6326 = vmatpush.msra.mxu0 0.0
        %6327 = vmatpush.msra.mxu0 %v6146
        %6328 = vmatmul.f32.gmra.mxu0 %v6310
        %v6329 = vpop.f32.mrf.mxu0
        %v6330 = vadd.f32 0.0, %v6329
        %6331 = vdwg.mxu0
        %v6333 = vsel %vm1565, %v6306, 0
        %6335 = vmatpush.msra.mxu0 0.0
        %6336 = vmatpush.msra.mxu0 0.0
        %6337 = vmatpush.msra.mxu0 0.0
        %6338 = vmatpush.msra.mxu0 0.0
        %6339 = vmatpush.msra.mxu0 0.0
        %6340 = vmatpush.msra.mxu0 0.0
        %6341 = vmatpush.msra.mxu0 0.0
        %6342 = vmatpush.msra.mxu0 0.0
        %6343 = vmatpush.msra.mxu0 0.0
        %6344 = vmatpush.msra.mxu0 0.0
        %6345 = vmatpush.msra.mxu0 0.0
        %6346 = vmatpush.msra.mxu0 0.0
        %6347 = vmatpush.msra.mxu0 0.0
        %6348 = vmatpush.msra.mxu0 0.0
        %6349 = vmatpush.msra.mxu0 0.0
        %6350 = vmatpush.msra.mxu0 %v6148
        %6351 = vmatmul.f32.gmra.mxu0 %v6333
        %v6352 = vpop.f32.mrf.mxu0
        %v6353 = vadd.f32 0.0, %v6352
        %6354 = vdwg.mxu0
        %v6356 = vsel %vm1565, %v6307, 0
        %6358 = vmatpush.msra.mxu0 0.0
        %6359 = vmatpush.msra.mxu0 0.0
        %6360 = vmatpush.msra.mxu0 0.0
        %6361 = vmatpush.msra.mxu0 0.0
        %6362 = vmatpush.msra.mxu0 0.0
        %6363 = vmatpush.msra.mxu0 0.0
        %6364 = vmatpush.msra.mxu0 0.0
        %6365 = vmatpush.msra.mxu0 0.0
        %6366 = vmatpush.msra.mxu0 0.0
        %6367 = vmatpush.msra.mxu0 0.0
        %6368 = vmatpush.msra.mxu0 0.0
        %6369 = vmatpush.msra.mxu0 0.0
        %6370 = vmatpush.msra.mxu0 0.0
        %6371 = vmatpush.msra.mxu0 0.0
        %6372 = vmatpush.msra.mxu0 0.0
        %6373 = vmatpush.msra.mxu0 %v6150
        %6374 = vmatmul.f32.gmra.mxu0 %v6356
        %v6375 = vpop.f32.mrf.mxu0
        %v6376 = vadd.f32 0.0, %v6375
        %6377 = vdwg.mxu0
        %v6379 = vsel %vm1565, %v6308, 0
        %6381 = vmatpush.msra.mxu0 0.0
        %6382 = vmatpush.msra.mxu0 0.0
        %6383 = vmatpush.msra.mxu0 0.0
        %6384 = vmatpush.msra.mxu0 0.0
        %6385 = vmatpush.msra.mxu0 0.0
        %6386 = vmatpush.msra.mxu0 0.0
        %6387 = vmatpush.msra.mxu0 0.0
        %6388 = vmatpush.msra.mxu0 0.0
        %6389 = vmatpush.msra.mxu0 0.0
        %6390 = vmatpush.msra.mxu0 0.0
        %6391 = vmatpush.msra.mxu0 0.0
        %6392 = vmatpush.msra.mxu0 0.0
        %6393 = vmatpush.msra.mxu0 0.0
        %6394 = vmatpush.msra.mxu0 0.0
        %6395 = vmatpush.msra.mxu0 0.0
        %6396 = vmatpush.msra.mxu0 %v6152
        %6397 = vmatmul.f32.gmra.mxu0 %v6379
        %v6398 = vpop.f32.mrf.mxu0
        %v6399 = vadd.f32 0.0, %v6398
        %6400 = vdwg.mxu0
        %v6401 = vrot.slane %v6376, 4
        %v6402 = vsel %vm1215, %v6401, %v6330
        %v6403 = vrot.slane %v6330, 4
        %v6404 = vsel %vm1215, %v6376, %v6403
        %v6406 = vunpack.c.l.s4 1983009808
        %v6407 = vunpack.c.0.s8 %v6406
        %v6408 = vperm.slane %v6402, %v6407
        %v6410 = vunpack.c.l.s4 1983009808
        %v6411 = vunpack.c.0.s8 %v6410
        %v6412 = vperm.slane %v6404, %v6411
        %v6413 = vrot.slane %v6399, 4
        %v6414 = vsel %vm1215, %v6413, %v6353
        %v6415 = vrot.slane %v6353, 4
        %v6416 = vsel %vm1215, %v6399, %v6415
        %v6418 = vunpack.c.l.s4 1983009808
        %v6419 = vunpack.c.0.s8 %v6418
        %v6420 = vperm.slane %v6414, %v6419
        %v6422 = vunpack.c.l.s4 1983009808
        %v6423 = vunpack.c.0.s8 %v6422
        %v6424 = vperm.slane %v6416, %v6423
        %v6425 = vrot.slane %v6420, 4
        %v6426 = vsel %vm1215, %v6425, %v6408
        %v6427 = vrot.slane %v6408, 4
        %v6428 = vsel %vm1215, %v6420, %v6427
        %v6430 = vunpack.c.l.s4 1934713408
        %v6431 = vunpack.c.0.s8 %v6430
        %v6432 = vperm.slane %v6426, %v6431
        %v6434 = vunpack.c.l.s4 1934713408
        %v6435 = vunpack.c.0.s8 %v6434
        %v6436 = vperm.slane %v6428, %v6435
        %v6437 = vrot.slane %v6424, 4
        %v6438 = vsel %vm1215, %v6437, %v6412
        %v6439 = vrot.slane %v6412, 4
        %v6440 = vsel %vm1215, %v6424, %v6439
        %v6442 = vunpack.c.l.s4 1934713408
        %v6443 = vunpack.c.0.s8 %v6442
        %v6444 = vperm.slane %v6438, %v6443
        %v6446 = vunpack.c.l.s4 1934713408
        %v6447 = vunpack.c.0.s8 %v6446
        %v6448 = vperm.slane %v6440, %v6447
        %v6449 = vrot.slane %v6432, 4
        %v6450 = vsel %vm1215, 0.0, %v6449
        %v6451 = vrot.slane %v6436, 4
        %v6452 = vsel %vm1215, 0.0, %v6451
        %v6453 = vrot.slane %v6444, 4
        %v6454 = vsel %vm1215, 0.0, %v6453
        %v6455 = vrot.slane %v6448, 4
        %v6456 = vsel %vm1215, 0.0, %v6455
        %v6457 = vsel %vm1215, %v6451, %v6432
        %v6459 = vunpack.c.l.s4 1983009808
        %v6460 = vunpack.c.0.s8 %v6459
        %v6461 = vperm.slane %v6457, %v6460
        %v6462 = vrot.slane %v6452, 4
        %v6463 = vsel %vm1215, %v6462, %v6450
        %v6465 = vunpack.c.l.s4 1983009808
        %v6466 = vunpack.c.0.s8 %v6465
        %v6467 = vperm.slane %v6463, %v6466
        %v6468 = vsel %vm1215, %v6455, %v6444
        %v6470 = vunpack.c.l.s4 1983009808
        %v6471 = vunpack.c.0.s8 %v6470
        %v6472 = vperm.slane %v6468, %v6471
        %v6473 = vrot.slane %v6456, 4
        %v6474 = vsel %vm1215, %v6473, %v6454
        %v6476 = vunpack.c.l.s4 1983009808
        %v6477 = vunpack.c.0.s8 %v6476
        %v6478 = vperm.slane %v6474, %v6477
        %v6479 = vrot.slane %v6467, 4
        %v6480 = vsel %vm1215, %v6479, %v6461
        %v6481 = vrot.slane %v6461, 4
        %v6482 = vsel %vm1215, %v6467, %v6481
        %v6484 = vunpack.c.l.s4 1934713408
        %v6485 = vunpack.c.0.s8 %v6484
        %v6486 = vperm.slane %v6480, %v6485
        %v6488 = vunpack.c.l.s4 1934713408
        %v6489 = vunpack.c.0.s8 %v6488
        %v6490 = vperm.slane %v6482, %v6489
        %v6491 = vrot.slane %v6478, 4
        %v6492 = vsel %vm1215, %v6491, %v6472
        %v6493 = vrot.slane %v6472, 4
        %v6494 = vsel %vm1215, %v6478, %v6493
        %v6496 = vunpack.c.l.s4 1934713408
        %v6497 = vunpack.c.0.s8 %v6496
        %v6498 = vperm.slane %v6492, %v6497
        %v6500 = vunpack.c.l.s4 1934713408
        %v6501 = vunpack.c.0.s8 %v6500
        %v6502 = vperm.slane %v6494, %v6501
        %v6503 = vrot.slane %v6498, 4
        %v6504 = vsel %vm1215, %v6503, %v6486
        %v6505 = vrot.slane %v6486, 4
        %v6506 = vsel %vm1215, %v6498, %v6505
        %v6507 = vrot.slane %v6502, 4
        %v6508 = vsel %vm1215, %v6507, %v6490
        %v6509 = vrot.slane %v6490, 4
        %v6510 = vsel %vm1215, %v6502, %v6509
        %6512 = vrot.lane.b32.xlu0 %v6506, 8
        %v6513 = vpop.permute.xlu0 %6512
        %6516 = vrot.lane.b32.xlu0 %v6508, 16
        %v6517 = vpop.permute.xlu0 %6516
        %6520 = vrot.lane.b32.xlu0 %v6510, 24
        %v6521 = vpop.permute.xlu0 %6520
        %v6523 = vsel %vm1565, %v6504, %v6513
        %v6524 = vsel %vm1937, %v6523, %v6517
        %v6525 = vsel %vm1939, %v6524, %v6521
        %v6527 = vperm.slane %v5720, 0
        %v6530 = vsel %vm1074, %v6525, 0
        %6532 = vmatpush.msra.mxu0 0.0
        %6533 = vmatpush.msra.mxu0 0.0
        %6534 = vmatpush.msra.mxu0 0.0
        %6535 = vmatpush.msra.mxu0 0.0
        %6536 = vmatpush.msra.mxu0 0.0
        %6537 = vmatpush.msra.mxu0 0.0
        %6538 = vmatpush.msra.mxu0 0.0
        %6539 = vmatpush.msra.mxu0 0.0
        %6540 = vmatpush.msra.mxu0 0.0
        %6541 = vmatpush.msra.mxu0 0.0
        %6542 = vmatpush.msra.mxu0 0.0
        %6543 = vmatpush.msra.mxu0 0.0
        %6544 = vmatpush.msra.mxu0 %v5718
        %6545 = vmatpush.msra.mxu0 %v5717
        %6546 = vmatpush.msra.mxu0 %v5716
        %6547 = vmatpush.msra.mxu0 %v5715
        %6548 = vmatmul.f32.gmra.mxu0 %v6530
        %v6549 = vpop.f32.mrf.mxu0
        %v6550 = vadd.f32 %v6527, %v6549
        %6551 = vdwg.mxu0
        %v6552 = vadd.f32 %v5658, %v6550
        %s6553 = scalar_lea.vmem [#allocation10], 7
        %v6554 = vld [vmem:[%s6553] sm:$0x1]
        %s6555 = scalar_lea.vmem [#allocation11], 7
        %v6556 = vld [vmem:[%s6555] sm:$0x1]
        %v6557 = vsel %vm1074, %v6552, 0.0
        %6558 = vadd.xlane.f32.xlu0 %v6557
        %v6559 = vpop.xlane.xlu0 %6558
        %v6560 = vmul.f32 %v6559, %v1084
        %v6561 = vsub.f32 %v6552, %v6560
        %v6562 = vmul.f32 %v6561, %v6561
        %v6563 = vsel %vm1074, %v6562, 0.0
        %6564 = vadd.xlane.f32.xlu0 %v6563
        %v6565 = vpop.xlane.xlu0 %6564
        %v6566 = vmul.f32 %v6565, %v1084
        %v6567 = vadd.f32 %v6566, 1e-05
        %v6568 = vrsqrt.pop %v6567
        %v6569 = vmul.f32 %v6568, %v6567
        %v6570 = vmul.f32 %v6569, %v6568
        %v6571 = vmul.f32 0.5, %v6570
        %v6572 = vsub.f32 1.5, %v6571
        %v6573 = vmul.f32 %v6568, %v6572
        %vm6574 = vweird.f32 %v6567
        %vm6575 = vweird.f32 %v6568
        %vm6576 = vmor %vm6574, %vm6575
        %v6577 = vsel %vm6576, %v6568, %v6573
        %v6578 = vmul.f32 %v6561, %v6577
        %v6580 = vperm.slane %v6554, 0
        %v6582 = vmul.f32 %v6578, %v6580
        %v6584 = vperm.slane %v6556, 0
        %v6586 = vadd.f32 %v6582, %v6584
        %s6587 = scalar_lea.vmem %s17, 32
        %v6588 = vld [vmem:[%s6587] sm:$0xff]
        %v6589 = vld [vmem:[%s6587 + $0x8] sm:$0xff]
        %v6590 = vld [vmem:[%s6587 + $0x10] sm:$0xff]
        %v6591 = vld [vmem:[%s6587 + $0x18] sm:$0xff]
        %s6592 = scalar_lea.vmem [#allocation23], 1
        %v6593 = vld [vmem:[%s6592] sm:$0x1]
        %v6595 = vperm.slane %v6593, 0
        %v6598 = vsel %vm1074, %v6586, 0
        %6600 = vmatpush.msra.mxu0 0.0
        %6601 = vmatpush.msra.mxu0 0.0
        %6602 = vmatpush.msra.mxu0 0.0
        %6603 = vmatpush.msra.mxu0 0.0
        %6604 = vmatpush.msra.mxu0 0.0
        %6605 = vmatpush.msra.mxu0 0.0
        %6606 = vmatpush.msra.mxu0 0.0
        %6607 = vmatpush.msra.mxu0 0.0
        %6608 = vmatpush.msra.mxu0 0.0
        %6609 = vmatpush.msra.mxu0 0.0
        %6610 = vmatpush.msra.mxu0 0.0
        %6611 = vmatpush.msra.mxu0 0.0
        %6612 = vmatpush.msra.mxu0 %v6591
        %6613 = vmatpush.msra.mxu0 %v6590
        %6614 = vmatpush.msra.mxu0 %v6589
        %6615 = vmatpush.msra.mxu0 %v6588
        %6616 = vmatmul.f32.gmra.mxu0 %v6598
        %v6617 = vpop.f32.mrf.mxu0
        %v6618 = vadd.f32 %v6595, %v6617
        %6619 = vdwg.mxu0
        %v6620 = vmax.f32 %v6618, 0.0
        %s6621 = scalar_lea.vmem %s19, 64
        %v6622 = vld [vmem:[%s6621] sm:$0xff]
        %v6623 = vld [vmem:[%s6621 + $0x8] sm:$0xff]
        %v6624 = vld [vmem:[%s6621 + $0x10] sm:$0xff]
        %v6625 = vld [vmem:[%s6621 + $0x18] sm:$0xff]
        %v6626 = vld [vmem:[%s6621 + $0x20] sm:$0xff]
        %v6627 = vld [vmem:[%s6621 + $0x28] sm:$0xff]
        %v6628 = vld [vmem:[%s6621 + $0x30] sm:$0xff]
        %v6629 = vld [vmem:[%s6621 + $0x38] sm:$0xff]
        %v6631 = vsel %vm1042, %v6620, 0
        %6633 = vmatpush.msra.mxu0 0.0
        %6634 = vmatpush.msra.mxu0 0.0
        %6635 = vmatpush.msra.mxu0 0.0
        %6636 = vmatpush.msra.mxu0 0.0
        %6637 = vmatpush.msra.mxu0 0.0
        %6638 = vmatpush.msra.mxu0 0.0
        %6639 = vmatpush.msra.mxu0 0.0
        %6640 = vmatpush.msra.mxu0 0.0
        %6641 = vmatpush.msra.mxu0 %v6629
        %6642 = vmatpush.msra.mxu0 %v6628
        %6643 = vmatpush.msra.mxu0 %v6627
        %6644 = vmatpush.msra.mxu0 %v6626
        %6645 = vmatpush.msra.mxu0 %v6625
        %6646 = vmatpush.msra.mxu0 %v6624
        %6647 = vmatpush.msra.mxu0 %v6623
        %6648 = vmatpush.msra.mxu0 %v6622
        %6649 = vmatmul.f32.gmra.mxu0 %v6631
        %v6650 = vpop.f32.mrf.mxu0
        %v6651 = vadd.f32 0.0, %v6650
        %6652 = vdwg.mxu0
        %v6653 = vadd.f32 %v6552, %v6651
        %s6654 = scalar_lea.vmem %s20, 1
        %v6655 = vld [vmem:[%s6654] sm:$0x1]
        %v6657 = vperm.slane %v6655, 0
        %v6659 = vadd.f32 %v6653, %v6657
        %v6660 = vld [vmem:[%s21] sm:$0x1]
        %v6661 = vld [vmem:[%s22] sm:$0x1]
        %v6662 = vsel %vm1074, %v6659, 0.0
        %6663 = vadd.xlane.f32.xlu0 %v6662
        %v6664 = vpop.xlane.xlu0 %6663
        %v6665 = vmul.f32 %v6664, %v1084
        %v6666 = vsub.f32 %v6659, %v6665
        %v6667 = vmul.f32 %v6666, %v6666
        %v6668 = vsel %vm1074, %v6667, 0.0
        %6669 = vadd.xlane.f32.xlu0 %v6668
        %v6670 = vpop.xlane.xlu0 %6669
        %v6671 = vmul.f32 %v6670, %v1084
        %v6672 = vadd.f32 %v6671, 1e-05
        %v6673 = vrsqrt.pop %v6672
        %v6674 = vmul.f32 %v6673, %v6672
        %v6675 = vmul.f32 %v6674, %v6673
        %v6676 = vmul.f32 0.5, %v6675
        %v6677 = vsub.f32 1.5, %v6676
        %v6678 = vmul.f32 %v6673, %v6677
        %vm6679 = vweird.f32 %v6672
        %vm6680 = vweird.f32 %v6673
        %vm6681 = vmor %vm6679, %vm6680
        %v6682 = vsel %vm6681, %v6673, %v6678
        %v6683 = vmul.f32 %v6666, %v6682
        %v6685 = vperm.slane %v6660, 0
        %v6687 = vmul.f32 %v6683, %v6685
        %v6689 = vperm.slane %v6661, 0
        %v6691 = vadd.f32 %v6687, %v6689
        %6692 = vst.msk [vmem:[%s1020] sm:$0xff] %vm1074, %v6691
        %s6693 = sand.u32 %s562, 1
        %s6694 = scalar_lea.sflag [#allocation4], %s6693
        %s6695 = sand.u32 %s562, 1
        %s6696 = smul.addr %s6695, 8
        %s6697 = scalar_lea.vmem [#allocation25], %s6696
        // Predicated region
        $region173: #{tpu_custom_call.1} parent=111 // pred_check
          %p6698 = pneg %p572
        $region174: #{tpu_custom_call.1} parent=111 // pred_check_branch
          %6700 = sbr.rel (%p6698) target = $region176
        $region175: #{tpu_custom_call.1} parent=111 // pred_region
          %6702 = vsyncadd %s6694, 0
          %s6703 = smul.addr %s46, 8
          %s6704 = scalar_lea.hbm %s23, %s6703
          %s6706 = sshll.u32 %s6697, 4
          %s6707 = int_to_ptr.vmem [resolvable:$true] %s6706
          %s6708 = sshll.u32 %s6704, 4
          %s6709 = int_to_ptr.hbm [resolvable:$true] %s6708
          %6711 = dma.vmem_to_hbm [thread:$0]  %s6707, 128, %s6709, %s6694
        $region176: #{tpu_custom_call.1} parent=111 // pred_fallthru
          _
      $region112: #{tpu_custom_call.1} parent=5 // pred_fallthru
        _
      %p6712 = scmp.le.s32.totalorder 2, %s41
      // Predicated region
      $region177: #{tpu_custom_call.1} parent=5 // pred_check
        %p6713 = pneg %p6712
      $region178: #{tpu_custom_call.1} parent=5 // pred_check_branch
        %6715 = sbr.rel (%p6713) target = $region180
      $region179: #{tpu_custom_call.1} parent=5 // pred_region
        %s6716 = ssub.s32 %s41, 2
        // Predicated region
        $region181: #{tpu_custom_call.1} parent=179 // pred_check
          %p6717 = pneg %p578
        $region182: #{tpu_custom_call.1} parent=179 // pred_check_branch
          %6719 = sbr.rel (%p6717) target = $region184
        $region183: #{tpu_custom_call.1} parent=179 // pred_region
          %s6720 = sand.u32 %s563, 1
          %s6721 = scalar_lea.sflag [#allocation4], %s6720
          %s6722 = sand.u32 %s563, 1
          %s6723 = smul.addr %s6722, 8
          %s6724 = scalar_lea.vmem [#allocation25], %s6723
          %6726 = dma.done %s6721, 128
        $region184: #{tpu_custom_call.1} parent=179 // pred_fallthru
          _
      $region180: #{tpu_custom_call.1} parent=5 // pred_fallthru
        _
    $region6: #{tpu_custom_call.1} parent=1 // loop_footer
      %s45 = sadd.s32 1, %s41
    $region7: #{tpu_custom_call.1} parent=1 // loop_footer_branch
      %40 = sbr.rel target = $region3
    $region8: #{tpu_custom_call.1} parent=1 // loop_exit
      _
    %6727 = vsyncpa [#allocation3], 1
    %s6728 = scalar_lea.sflag [#allocation3], 1
    %6729 = vsyncpa %s6728, 1
    %6730 = vsyncpa [#allocation6], 1
    %6731 = vsyncpa [#allocation12], 1
    %6732 = vsyncpa [#allocation15], 1
    %6733 = vsyncpa [#allocation18], 1
    %6734 = vsyncpa [#allocation21], 1
    %6735 = vsyncpa [#allocation24], 1
    %6736 = vsyncpa [#allocation4], 1
    %s6737 = scalar_lea.sflag [#allocation4], 1
    %6738 = vsyncpa %s6737, 1

</llo_original>
